<compile_context>
chip_gen: v6e
topology: v6e:2x2x1
jax: 0.10.0
libtpu: 0.0.40
codegen_flags: <defaults>
</compile_context>

<pallas_src>
import functools

import jax
import jax.numpy as jnp
from jax.experimental import pallas as pl
from jax.experimental.pallas import tpu as pltpu

# ---------------- configuration (small, consistent with the module) ----------
NUM_TOKENS = 64
DIM = 32
DEPTH = 2
HEADS = 4
DIM_HEAD = 8          # heads * dim_head == DIM
FF_MULT = 4
MAX_PAUSE = 2
BATCH = 2
SEQ = 8

VPAD = 128                      # vocab padded to a full lane width for stores
EPS = 1e-12                     # F.normalize denominator clamp
NEG_BIG = -1e30                 # finite mask fill; exp() underflows to exactly 0
SCALE = DIM ** -0.5             # reference CausalAttention uses dim ** -0.5


# ---------------- in-kernel math helpers -------------------------------------
def _rmsnorm(x, gamma):
    # F.normalize(x, dim=-1) * sqrt(dim) * gamma
    d = x.shape[-1]
    norm = jnp.sqrt(jnp.sum(x * x, axis=-1, keepdims=True))
    return x / jnp.maximum(norm, EPS) * (d ** 0.5) * gamma


def _erf(x):
    # float32-accurate erf (Abramowitz & Stegun 7.1.26, |err| < 1.5e-7), built
    # from exp/mul/add only so it lowers on Mosaic (exact-GELU of nn.GELU()).
    a1, a2, a3, a4, a5 = (0.254829592, -0.284496736, 1.421413741,
                          -1.453152027, 1.061405429)
    p = 0.3275911
    sgn = jnp.where(x >= 0.0, 1.0, -1.0)
    ax = jnp.abs(x)
    t = 1.0 / (1.0 + p * ax)
    poly = ((((a5 * t + a4) * t + a3) * t + a2) * t + a1) * t
    return sgn * (1.0 - poly * jnp.exp(-ax * ax))


def _gelu_exact(x):
    return 0.5 * x * (1.0 + _erf(x * (2.0 ** -0.5)))


def _softmax(x):
    m = jnp.max(x, axis=-1, keepdims=True)
    e = jnp.exp(x - m)
    return e / jnp.sum(e, axis=-1, keepdims=True)


def _attention(x, gamma, wqkv, wout, invalid_mask, heads, dim_head):
    """Causal multi-head attention on a 2-D slab of rows.

    `invalid_mask` (rows, rows) marks sim entries to mask out, which lets the
    same code serve the main sequence (strict-upper causal mask) and the
    slot-major packed pause sequences (block-diagonal causal mask).
    Head outputs are accumulated through per-head slices of W_out (no concat).
    """
    hd = heads * dim_head
    xn = _rmsnorm(x, gamma)
    qkv = jnp.dot(xn, wqkv, preferred_element_type=jnp.float32)   # (R, 3*hd)
    out = jnp.zeros((x.shape[0], wout.shape[1]), jnp.float32)
    for h in range(heads):
        s0 = h * dim_head
        q = qkv[:, s0:s0 + dim_head] * SCALE
        k = qkv[:, hd + s0:hd + s0 + dim_head]
        v = qkv[:, 2 * hd + s0:2 * hd + s0 + dim_head]
        # q @ k^T without materializing a transpose ("NT" dot_general).
        sim = jax.lax.dot_general(q, k, (((1,), (1,)), ((), ())),
                                  preferred_element_type=jnp.float32)
        sim = jnp.where(invalid_mask, NEG_BIG, sim)
        attn = _softmax(sim)
        o_h = jnp.dot(attn, v, preferred_element_type=jnp.float32)
        out = out + jnp.dot(o_h, wout[s0:s0 + dim_head, :],
                            preferred_element_type=jnp.float32)
    return out


def _feedforward(x, gamma, w1, b1, w2, b2, shift):
    # ShiftTokens: second half of the features is shifted "down" by `shift`
    # rows (1 row for the main sequence; SEQ rows == one pause slot for the
    # slot-major packed pause slab), zero-filled at the top.
    half = x.shape[-1] // 2
    x1 = x[:, :half]
    x2 = x[:, half:]
    x2s = jnp.concatenate(
        [jnp.zeros((shift, half), x.dtype), x2[:-shift, :]], axis=0)
    xs = jnp.concatenate([x1, x2s], axis=-1)
    xn = _rmsnorm(xs, gamma)
    h = jnp.dot(xn, w1, preferred_element_type=jnp.float32) + b1
    h = _gelu_exact(h)
    return jnp.dot(h, w2, preferred_element_type=jnp.float32) + b2


# ---------------- fused forward kernel ----------------------------------------
def fused_forward_kernel(x_ref, pause_ref,
                         a_gamma_ref, wqkv_ref, wout_ref,
                         f_gamma_ref, w1_ref, b1_ref, w2_ref, b2_ref,
                         i_gamma_ref, i_w_ref, i_b_ref,
                         l_gamma_ref, l_w_ref,
                         o_ref, *, heads, dim_head):
    n = x_ref.shape[1]                 # main sequence length
    d = x_ref.shape[2]                 # model dim
    n_pause = pause_ref.shape[0]       # MAX_PAUSE
    n_slots = 1 + n_pause
    m = n_slots * n                    # rows of the packed pause slab
    depth = wqkv_ref.shape[0]

    x = x_ref[0]                                       # (n, d)
    ptoks = pause_ref[...]                             # (P, d)
    # pause state: one (n, d) slab per pause slot (broadcast of learned tokens)
    p = [jnp.broadcast_to(ptoks[s:s + 1, :], (n, d)) for s in range(n_pause)]

    # strictly-causal mask for the main sequence (triu(1))
    row = jax.lax.broadcasted_iota(jnp.int32, (n, n), 0)
    col = jax.lax.broadcasted_iota(jnp.int32, (n, n), 1)
    main_invalid = col > row

    # pause-branch mask for the slot-major layout (row = slot*n + position):
    # allowed(r, c) <=> same position and slot_c <= slot_r <=> (r - c) in
    # {0, n, 2n, ...} — built from iota, subtraction and equality only.
    prow = jax.lax.broadcasted_iota(jnp.int32, (m, m), 0)
    pcol = jax.lax.broadcasted_iota(jnp.int32, (m, m), 1)
    diff = prow - pcol
    allowed = diff == 0
    for s in range(1, n_slots):
        allowed = jnp.logical_or(allowed, diff == s * n)
    pause_invalid = jnp.logical_not(allowed)

    for l in range(depth):
        a_gamma, wqkv, wout = a_gamma_ref[l], wqkv_ref[l], wout_ref[l]
        f_gamma, w1, b1 = f_gamma_ref[l], w1_ref[l], b1_ref[l]
        w2, b2 = w2_ref[l], b2_ref[l]

        # ---- main sequence ----
        x = x + _attention(x, a_gamma, wqkv, wout, main_invalid,
                           heads, dim_head)
        x = _feedforward(x, f_gamma, w1, b1, w2, b2, shift=1) + x

        # ---- pause ("thinking") sequences: all positions batched at once ----
        xp = jnp.concatenate([x] + p, axis=0)          # (m, d) slot-major
        xp = xp + _attention(xp, a_gamma, wqkv, wout, pause_invalid,
                             heads, dim_head)
        xp = _feedforward(xp, f_gamma, w1, b1, w2, b2, shift=n) + xp
        x = xp[:n]
        p = [xp[(s + 1) * n:(s + 2) * n] for s in range(n_pause)]

        # ---- integrate previous position's last pause thought ----
        p_last = p[-1]                                 # pause_lengths is None
        p_shift = jnp.concatenate(
            [jnp.zeros((1, d), x.dtype), p_last[:-1, :]], axis=0)
        xn = _rmsnorm(x, i_gamma_ref[...])
        pn = _rmsnorm(p_shift, i_gamma_ref[...])
        stacked = jnp.concatenate([xn, pn], axis=-1)   # (n, 2d)
        x = x + (jnp.dot(stacked, i_w_ref[...],
                         preferred_element_type=jnp.float32) + i_b_ref[...])

    # ---- to_logits on [x, p0, p1, ...] (slot-major, vocab padded to 128) ----
    final = jnp.concatenate([x] + p, axis=0)           # (m, d)
    fn = _rmsnorm(final, l_gamma_ref[...])
    o_ref[0] = jnp.dot(fn, l_w_ref[...], preferred_element_type=jnp.float32)


# ---------------- parameters & forward ----------------------------------------
def init_params(key):
    keys = iter(jax.random.split(key, 16))

    def nrm(shape, std=0.02):
        return jax.random.normal(next(keys), shape, jnp.float32) * std

    hd = HEADS * DIM_HEAD
    di = DIM * FF_MULT
    return {
        "token_emb": jax.random.normal(next(keys), (NUM_TOKENS, DIM), jnp.float32),
        "pause_tokens": jax.random.normal(next(keys), (MAX_PAUSE, DIM), jnp.float32),
        # per-layer weights stacked along a leading DEPTH axis
        "attn_gamma": jnp.ones((DEPTH, 1, DIM), jnp.float32),
        "wqkv": nrm((DEPTH, DIM, 3 * hd)),
        "wout": nrm((DEPTH, hd, DIM)),
        "ff_gamma": jnp.ones((DEPTH, 1, DIM), jnp.float32),
        "w1": nrm((DEPTH, DIM, di)),
        "b1": jnp.zeros((DEPTH, 1, di), jnp.float32),
        "w2": nrm((DEPTH, di, DIM)),
        "b2": jnp.zeros((DEPTH, 1, DIM), jnp.float32),
        # integrate-previous-thought
        "int_gamma": jnp.ones((1, DIM), jnp.float32),
        "int_w": nrm((2 * DIM, DIM)),
        "int_b": jnp.zeros((1, DIM), jnp.float32),
        # to_logits
        "log_gamma": jnp.ones((1, DIM), jnp.float32),
        "log_w": nrm((DIM, NUM_TOKENS)),
    }


def pause_transformer_forward(tokens, params):
    # tokens: (b, n) int32  ->  logits: (b, n, 1 + MAX_PAUSE, NUM_TOKENS)
    b, n = tokens.shape
    d = DIM
    n_slots = 1 + MAX_PAUSE
    m = n_slots * n

    x_emb = params["token_emb"][tokens]                      # (b, n, d) gather
    log_w = params["log_w"]
    v = log_w.shape[1]
    log_w_pad = jnp.pad(log_w, ((0, 0), (0, VPAD - v)))      # lane-dense logits

    def const_spec(arr):
        nd = arr.ndim
        return pl.BlockSpec(arr.shape, lambda i, nd=nd: (0,) * nd)

    inputs = (x_emb, params["pause_tokens"],
              params["attn_gamma"], params["wqkv"], params["wout"],
              params["ff_gamma"], params["w1"], params["b1"],
              params["w2"], params["b2"],
              params["int_gamma"], params["int_w"], params["int_b"],
              params["log_gamma"], log_w_pad)

    in_specs = [pl.BlockSpec((1, n, d), lambda i: (i, 0, 0))]
    in_specs += [const_spec(a) for a in inputs[1:]]

    kernel = functools.partial(fused_forward_kernel,
                               heads=HEADS, dim_head=DIM_HEAD)
    out = pl.pallas_call(
        kernel,
        out_shape=jax.ShapeDtypeStruct((b, m, VPAD), jnp.float32),
        grid=(b,),
        in_specs=in_specs,
        out_specs=pl.BlockSpec((1, m, VPAD), lambda i: (i, 0, 0)),
        compiler_params=pltpu.CompilerParams(
            dimension_semantics=("parallel",)),
    )(*inputs)

    # slot-major (b, (1+P)*n, VPAD) -> (b, n, 1+P, vocab)
    logits = out.reshape(b, n_slots, n, VPAD)
    logits = jnp.transpose(logits, (0, 2, 1, 3))[..., :v]
    return logits


# TODO(synk): only the default forward path is implemented (return logits);
# return_loss / return_logit_entropy / pause_lengths / arrest_pausing variants
# are plain-JAX glue around the same fused kernel and are omitted here.

if __name__ == "__main__":
    key = jax.random.PRNGKey(0)
    pkey, tkey = jax.random.split(key)
    params = init_params(pkey)
    tokens = jax.random.randint(tkey, (BATCH, SEQ), 0, NUM_TOKENS, dtype=jnp.int32)

    fwd = jax.jit(pause_transformer_forward)
    logits = jax.block_until_ready(fwd(tokens, params))
    assert logits.shape == (BATCH, SEQ, 1 + MAX_PAUSE, NUM_TOKENS)
    assert bool(jnp.all(jnp.isfinite(logits)))
    print("KERNEL_OK")
</pallas_src>

<mosaic_0001>
module attributes {stable_mosaic.version = 11 : i64} {
  func.func @fused_forward_kernel(%arg0: i32, %arg1: memref<1x8x32xf32, #tpu.memory_space<vmem>>, %arg2: memref<2x32xf32, #tpu.memory_space<vmem>>, %arg3: memref<2x1x32xf32, #tpu.memory_space<vmem>>, %arg4: memref<2x32x96xf32, #tpu.memory_space<vmem>>, %arg5: memref<2x32x32xf32, #tpu.memory_space<vmem>>, %arg6: memref<2x1x32xf32, #tpu.memory_space<vmem>>, %arg7: memref<2x32x128xf32, #tpu.memory_space<vmem>>, %arg8: memref<2x1x128xf32, #tpu.memory_space<vmem>>, %arg9: memref<2x128x32xf32, #tpu.memory_space<vmem>>, %arg10: memref<2x1x32xf32, #tpu.memory_space<vmem>>, %arg11: memref<1x32xf32, #tpu.memory_space<vmem>>, %arg12: memref<64x32xf32, #tpu.memory_space<vmem>>, %arg13: memref<1x32xf32, #tpu.memory_space<vmem>>, %arg14: memref<1x32xf32, #tpu.memory_space<vmem>>, %arg15: memref<32x128xf32, #tpu.memory_space<vmem>>, %arg16: memref<1x24x128xf32, #tpu.memory_space<vmem>>) attributes {dimension_semantics = [#tpu.dimension_semantics<parallel>], iteration_bounds = array<i64: 2>, scalar_prefetch = 0 : i64, scratch_operands = 0 : i64, tpu.core_type = #tpu.core_type<tc>, window_params = [{transform_indices = @transform_0, window_bounds = array<i64: 1, 8, 32>}, {pipeline_mode = #tpu.pipeline_mode<synchronous>, transform_indices = @transform_1, window_bounds = array<i64: 2, 32>}, {pipeline_mode = #tpu.pipeline_mode<synchronous>, transform_indices = @transform_2, window_bounds = array<i64: 2, 1, 32>}, {pipeline_mode = #tpu.pipeline_mode<synchronous>, transform_indices = @transform_3, window_bounds = array<i64: 2, 32, 96>}, {pipeline_mode = #tpu.pipeline_mode<synchronous>, transform_indices = @transform_4, window_bounds = array<i64: 2, 32, 32>}, {pipeline_mode = #tpu.pipeline_mode<synchronous>, transform_indices = @transform_5, window_bounds = array<i64: 2, 1, 32>}, {pipeline_mode = #tpu.pipeline_mode<synchronous>, transform_indices = @transform_6, window_bounds = array<i64: 2, 32, 128>}, {pipeline_mode = #tpu.pipeline_mode<synchronous>, transform_indices = @transform_7, window_bounds = array<i64: 2, 1, 128>}, {pipeline_mode = #tpu.pipeline_mode<synchronous>, transform_indices = @transform_8, window_bounds = array<i64: 2, 128, 32>}, {pipeline_mode = #tpu.pipeline_mode<synchronous>, transform_indices = @transform_9, window_bounds = array<i64: 2, 1, 32>}, {pipeline_mode = #tpu.pipeline_mode<synchronous>, transform_indices = @transform_10, window_bounds = array<i64: 1, 32>}, {pipeline_mode = #tpu.pipeline_mode<synchronous>, transform_indices = @transform_11, window_bounds = array<i64: 64, 32>}, {pipeline_mode = #tpu.pipeline_mode<synchronous>, transform_indices = @transform_12, window_bounds = array<i64: 1, 32>}, {pipeline_mode = #tpu.pipeline_mode<synchronous>, transform_indices = @transform_13, window_bounds = array<i64: 1, 32>}, {pipeline_mode = #tpu.pipeline_mode<synchronous>, transform_indices = @transform_14, window_bounds = array<i64: 32, 128>}, {transform_indices = @transform_15, window_bounds = array<i64: 1, 24, 128>}]} {
    %c0 = arith.constant 0 : index
    %c0_0 = arith.constant 0 : index
    %c0_1 = arith.constant 0 : index
    %0 = vector.load %arg1[%c0, %c0_0, %c0_1] : memref<1x8x32xf32, #tpu.memory_space<vmem>>, vector<1x8x32xf32>
    %1 = vector.shape_cast %0 : vector<1x8x32xf32> to vector<8x32xf32>
    %c0_2 = arith.constant 0 : index
    %c0_3 = arith.constant 0 : index
    %2 = vector.load %arg2[%c0_2, %c0_3] : memref<2x32xf32, #tpu.memory_space<vmem>>, vector<2x32xf32>
    %3 = vector.extract_strided_slice %2 {offsets = [0, 0], sizes = [1, 32], strides = [1, 1]} : vector<2x32xf32> to vector<1x32xf32>
    %4 = vector.shape_cast %3 : vector<1x32xf32> to vector<1x32xf32>
    %5 = vector.broadcast %4 : vector<1x32xf32> to vector<8x32xf32>
    %6 = vector.extract_strided_slice %2 {offsets = [1, 0], sizes = [1, 32], strides = [1, 1]} : vector<2x32xf32> to vector<1x32xf32>
    %7 = vector.shape_cast %6 : vector<1x32xf32> to vector<1x32xf32>
    %8 = vector.broadcast %7 : vector<1x32xf32> to vector<8x32xf32>
    %9 = tpu.iota {dimensions = array<i32: 0>} : vector<8x8xi32>
    %10 = tpu.iota {dimensions = array<i32: 1>} : vector<8x8xi32>
    %11 = arith.cmpi sgt, %10, %9 : vector<8x8xi32>
    %12 = tpu.iota {dimensions = array<i32: 0>} : vector<24x24xi32>
    %13 = tpu.iota {dimensions = array<i32: 1>} : vector<24x24xi32>
    %14 = arith.subi %12, %13 : vector<24x24xi32>
    %c0_i32 = arith.constant 0 : i32
    %15 = vector.broadcast %c0_i32 : i32 to vector<24x24xi32>
    %16 = arith.cmpi eq, %14, %15 : vector<24x24xi32>
    %c8_i32 = arith.constant 8 : i32
    %17 = vector.broadcast %c8_i32 : i32 to vector<24x24xi32>
    %18 = arith.cmpi eq, %14, %17 : vector<24x24xi32>
    %19 = arith.ori %16, %18 : vector<24x24xi1>
    %c16_i32 = arith.constant 16 : i32
    %20 = vector.broadcast %c16_i32 : i32 to vector<24x24xi32>
    %21 = arith.cmpi eq, %14, %20 : vector<24x24xi32>
    %22 = arith.ori %19, %21 : vector<24x24xi1>
    %cst = arith.constant dense<true> : vector<24x24xi1>
    %23 = arith.xori %22, %cst : vector<24x24xi1>
    %c0_4 = arith.constant 0 : index
    %c0_5 = arith.constant 0 : index
    %c0_6 = arith.constant 0 : index
    %24 = vector.load %arg3[%c0_4, %c0_5, %c0_6] : memref<2x1x32xf32, #tpu.memory_space<vmem>>, vector<1x1x32xf32>
    %25 = vector.shape_cast %24 : vector<1x1x32xf32> to vector<1x32xf32>
    %c0_7 = arith.constant 0 : index
    %c0_8 = arith.constant 0 : index
    %c0_9 = arith.constant 0 : index
    %26 = vector.load %arg4[%c0_7, %c0_8, %c0_9] : memref<2x32x96xf32, #tpu.memory_space<vmem>>, vector<1x32x96xf32>
    %27 = vector.shape_cast %26 : vector<1x32x96xf32> to vector<32x96xf32>
    %c0_10 = arith.constant 0 : index
    %c0_11 = arith.constant 0 : index
    %c0_12 = arith.constant 0 : index
    %28 = vector.load %arg5[%c0_10, %c0_11, %c0_12] : memref<2x32x32xf32, #tpu.memory_space<vmem>>, vector<1x32x32xf32>
    %29 = vector.shape_cast %28 : vector<1x32x32xf32> to vector<32x32xf32>
    %c0_13 = arith.constant 0 : index
    %c0_14 = arith.constant 0 : index
    %c0_15 = arith.constant 0 : index
    %30 = vector.load %arg6[%c0_13, %c0_14, %c0_15] : memref<2x1x32xf32, #tpu.memory_space<vmem>>, vector<1x1x32xf32>
    %31 = vector.shape_cast %30 : vector<1x1x32xf32> to vector<1x32xf32>
    %c0_16 = arith.constant 0 : index
    %c0_17 = arith.constant 0 : index
    %c0_18 = arith.constant 0 : index
    %32 = vector.load %arg7[%c0_16, %c0_17, %c0_18] : memref<2x32x128xf32, #tpu.memory_space<vmem>>, vector<1x32x128xf32>
    %33 = vector.shape_cast %32 : vector<1x32x128xf32> to vector<32x128xf32>
    %c0_19 = arith.constant 0 : index
    %c0_20 = arith.constant 0 : index
    %c0_21 = arith.constant 0 : index
    %34 = vector.load %arg8[%c0_19, %c0_20, %c0_21] : memref<2x1x128xf32, #tpu.memory_space<vmem>>, vector<1x1x128xf32>
    %35 = vector.shape_cast %34 : vector<1x1x128xf32> to vector<1x128xf32>
    %c0_22 = arith.constant 0 : index
    %c0_23 = arith.constant 0 : index
    %c0_24 = arith.constant 0 : index
    %36 = vector.load %arg9[%c0_22, %c0_23, %c0_24] : memref<2x128x32xf32, #tpu.memory_space<vmem>>, vector<1x128x32xf32>
    %37 = vector.shape_cast %36 : vector<1x128x32xf32> to vector<128x32xf32>
    %c0_25 = arith.constant 0 : index
    %c0_26 = arith.constant 0 : index
    %c0_27 = arith.constant 0 : index
    %38 = vector.load %arg10[%c0_25, %c0_26, %c0_27] : memref<2x1x32xf32, #tpu.memory_space<vmem>>, vector<1x1x32xf32>
    %39 = vector.shape_cast %38 : vector<1x1x32xf32> to vector<1x32xf32>
    %40 = arith.mulf %1, %1 : vector<8x32xf32>
    %cst_28 = arith.constant dense<0.000000e+00> : vector<8xf32>
    %41 = vector.multi_reduction <add>, %40, %cst_28 [1] : vector<8x32xf32> to vector<8xf32>
    %42 = vector.shape_cast %41 : vector<8xf32> to vector<8x1xf32>
    %43 = math.sqrt %42 : vector<8x1xf32>
    %cst_29 = arith.constant 9.99999996E-13 : f32
    %44 = vector.broadcast %cst_29 : f32 to vector<8x1xf32>
    %45 = arith.maximumf %43, %44 : vector<8x1xf32>
    %46 = vector.broadcast %45 : vector<8x1xf32> to vector<8x32xf32>
    %47 = arith.divf %1, %46 : vector<8x32xf32>
    %cst_30 = arith.constant 5.65685415 : f32
    %48 = vector.broadcast %cst_30 : f32 to vector<8x32xf32>
    %49 = arith.mulf %47, %48 : vector<8x32xf32>
    %50 = vector.broadcast %25 : vector<1x32xf32> to vector<8x32xf32>
    %51 = arith.mulf %49, %50 : vector<8x32xf32>
    %cst_31 = arith.constant dense<0.000000e+00> : vector<8x96xf32>
    %52 = tpu.matmul %51, %27, %cst_31 {dimension_numbers = #tpu.dot_dimension_numbers<[1], [0], [0], [1], [0, 0, 1, 1], [], []>} : vector<8x32xf32>, vector<32x96xf32>, vector<8x96xf32> -> vector<8x96xf32>
    %cst_32 = arith.constant 0.000000e+00 : f32
    %53 = vector.broadcast %cst_32 : f32 to vector<8x32xf32>
    %54 = vector.extract_strided_slice %52 {offsets = [0, 0], sizes = [8, 8], strides = [1, 1]} : vector<8x96xf32> to vector<8x8xf32>
    %cst_33 = arith.constant 0.176776692 : f32
    %55 = vector.broadcast %cst_33 : f32 to vector<8x8xf32>
    %56 = arith.mulf %54, %55 : vector<8x8xf32>
    %57 = vector.extract_strided_slice %52 {offsets = [0, 32], sizes = [8, 8], strides = [1, 1]} : vector<8x96xf32> to vector<8x8xf32>
    %58 = vector.extract_strided_slice %52 {offsets = [0, 64], sizes = [8, 8], strides = [1, 1]} : vector<8x96xf32> to vector<8x8xf32>
    %cst_34 = arith.constant dense<0.000000e+00> : vector<8x8xf32>
    %59 = tpu.matmul %56, %57, %cst_34 {dimension_numbers = #tpu.dot_dimension_numbers<[1], [1], [0], [0], [0, 0, 1, 0], [], []>} : vector<8x8xf32>, vector<8x8xf32>, vector<8x8xf32> -> vector<8x8xf32>
    %cst_35 = arith.constant -1.000000e+30 : f32
    %60 = vector.broadcast %cst_35 : f32 to vector<8x8xf32>
    %61 = arith.select %11, %60, %59 : vector<8x8xi1>, vector<8x8xf32>
    %cst_36 = arith.constant dense<0xFF800000> : vector<8xf32>
    %62 = vector.multi_reduction <maximumf>, %61, %cst_36 [1] : vector<8x8xf32> to vector<8xf32>
    %63 = vector.shape_cast %62 : vector<8xf32> to vector<8x1xf32>
    %64 = vector.broadcast %63 : vector<8x1xf32> to vector<8x8xf32>
    %65 = arith.subf %61, %64 : vector<8x8xf32>
    %66 = math.exp %65 : vector<8x8xf32>
    %cst_37 = arith.constant dense<0.000000e+00> : vector<8xf32>
    %67 = vector.multi_reduction <add>, %66, %cst_37 [1] : vector<8x8xf32> to vector<8xf32>
    %68 = vector.shape_cast %67 : vector<8xf32> to vector<8x1xf32>
    %69 = vector.broadcast %68 : vector<8x1xf32> to vector<8x8xf32>
    %70 = arith.divf %66, %69 : vector<8x8xf32>
    %cst_38 = arith.constant dense<0.000000e+00> : vector<8x8xf32>
    %71 = tpu.matmul %70, %58, %cst_38 {dimension_numbers = #tpu.dot_dimension_numbers<[1], [0], [0], [1], [0, 0, 1, 1], [], []>} : vector<8x8xf32>, vector<8x8xf32>, vector<8x8xf32> -> vector<8x8xf32>
    %72 = vector.extract_strided_slice %29 {offsets = [0, 0], sizes = [8, 32], strides = [1, 1]} : vector<32x32xf32> to vector<8x32xf32>
    %cst_39 = arith.constant dense<0.000000e+00> : vector<8x32xf32>
    %73 = tpu.matmul %71, %72, %cst_39 {dimension_numbers = #tpu.dot_dimension_numbers<[1], [0], [0], [1], [0, 0, 1, 1], [], []>} : vector<8x8xf32>, vector<8x32xf32>, vector<8x32xf32> -> vector<8x32xf32>
    %74 = arith.addf %53, %73 : vector<8x32xf32>
    %75 = vector.extract_strided_slice %52 {offsets = [0, 8], sizes = [8, 8], strides = [1, 1]} : vector<8x96xf32> to vector<8x8xf32>
    %cst_40 = arith.constant 0.176776692 : f32
    %76 = vector.broadcast %cst_40 : f32 to vector<8x8xf32>
    %77 = arith.mulf %75, %76 : vector<8x8xf32>
    %78 = vector.extract_strided_slice %52 {offsets = [0, 40], sizes = [8, 8], strides = [1, 1]} : vector<8x96xf32> to vector<8x8xf32>
    %79 = vector.extract_strided_slice %52 {offsets = [0, 72], sizes = [8, 8], strides = [1, 1]} : vector<8x96xf32> to vector<8x8xf32>
    %cst_41 = arith.constant dense<0.000000e+00> : vector<8x8xf32>
    %80 = tpu.matmul %77, %78, %cst_41 {dimension_numbers = #tpu.dot_dimension_numbers<[1], [1], [0], [0], [0, 0, 1, 0], [], []>} : vector<8x8xf32>, vector<8x8xf32>, vector<8x8xf32> -> vector<8x8xf32>
    %cst_42 = arith.constant -1.000000e+30 : f32
    %81 = vector.broadcast %cst_42 : f32 to vector<8x8xf32>
    %82 = arith.select %11, %81, %80 : vector<8x8xi1>, vector<8x8xf32>
    %cst_43 = arith.constant dense<0xFF800000> : vector<8xf32>
    %83 = vector.multi_reduction <maximumf>, %82, %cst_43 [1] : vector<8x8xf32> to vector<8xf32>
    %84 = vector.shape_cast %83 : vector<8xf32> to vector<8x1xf32>
    %85 = vector.broadcast %84 : vector<8x1xf32> to vector<8x8xf32>
    %86 = arith.subf %82, %85 : vector<8x8xf32>
    %87 = math.exp %86 : vector<8x8xf32>
    %cst_44 = arith.constant dense<0.000000e+00> : vector<8xf32>
    %88 = vector.multi_reduction <add>, %87, %cst_44 [1] : vector<8x8xf32> to vector<8xf32>
    %89 = vector.shape_cast %88 : vector<8xf32> to vector<8x1xf32>
    %90 = vector.broadcast %89 : vector<8x1xf32> to vector<8x8xf32>
    %91 = arith.divf %87, %90 : vector<8x8xf32>
    %cst_45 = arith.constant dense<0.000000e+00> : vector<8x8xf32>
    %92 = tpu.matmul %91, %79, %cst_45 {dimension_numbers = #tpu.dot_dimension_numbers<[1], [0], [0], [1], [0, 0, 1, 1], [], []>} : vector<8x8xf32>, vector<8x8xf32>, vector<8x8xf32> -> vector<8x8xf32>
    %93 = vector.extract_strided_slice %29 {offsets = [8, 0], sizes = [8, 32], strides = [1, 1]} : vector<32x32xf32> to vector<8x32xf32>
    %cst_46 = arith.constant dense<0.000000e+00> : vector<8x32xf32>
    %94 = tpu.matmul %92, %93, %cst_46 {dimension_numbers = #tpu.dot_dimension_numbers<[1], [0], [0], [1], [0, 0, 1, 1], [], []>} : vector<8x8xf32>, vector<8x32xf32>, vector<8x32xf32> -> vector<8x32xf32>
    %95 = arith.addf %74, %94 : vector<8x32xf32>
    %96 = vector.extract_strided_slice %52 {offsets = [0, 16], sizes = [8, 8], strides = [1, 1]} : vector<8x96xf32> to vector<8x8xf32>
    %cst_47 = arith.constant 0.176776692 : f32
    %97 = vector.broadcast %cst_47 : f32 to vector<8x8xf32>
    %98 = arith.mulf %96, %97 : vector<8x8xf32>
    %99 = vector.extract_strided_slice %52 {offsets = [0, 48], sizes = [8, 8], strides = [1, 1]} : vector<8x96xf32> to vector<8x8xf32>
    %100 = vector.extract_strided_slice %52 {offsets = [0, 80], sizes = [8, 8], strides = [1, 1]} : vector<8x96xf32> to vector<8x8xf32>
    %cst_48 = arith.constant dense<0.000000e+00> : vector<8x8xf32>
    %101 = tpu.matmul %98, %99, %cst_48 {dimension_numbers = #tpu.dot_dimension_numbers<[1], [1], [0], [0], [0, 0, 1, 0], [], []>} : vector<8x8xf32>, vector<8x8xf32>, vector<8x8xf32> -> vector<8x8xf32>
    %cst_49 = arith.constant -1.000000e+30 : f32
    %102 = vector.broadcast %cst_49 : f32 to vector<8x8xf32>
    %103 = arith.select %11, %102, %101 : vector<8x8xi1>, vector<8x8xf32>
    %cst_50 = arith.constant dense<0xFF800000> : vector<8xf32>
    %104 = vector.multi_reduction <maximumf>, %103, %cst_50 [1] : vector<8x8xf32> to vector<8xf32>
    %105 = vector.shape_cast %104 : vector<8xf32> to vector<8x1xf32>
    %106 = vector.broadcast %105 : vector<8x1xf32> to vector<8x8xf32>
    %107 = arith.subf %103, %106 : vector<8x8xf32>
    %108 = math.exp %107 : vector<8x8xf32>
    %cst_51 = arith.constant dense<0.000000e+00> : vector<8xf32>
    %109 = vector.multi_reduction <add>, %108, %cst_51 [1] : vector<8x8xf32> to vector<8xf32>
    %110 = vector.shape_cast %109 : vector<8xf32> to vector<8x1xf32>
    %111 = vector.broadcast %110 : vector<8x1xf32> to vector<8x8xf32>
    %112 = arith.divf %108, %111 : vector<8x8xf32>
    %cst_52 = arith.constant dense<0.000000e+00> : vector<8x8xf32>
    %113 = tpu.matmul %112, %100, %cst_52 {dimension_numbers = #tpu.dot_dimension_numbers<[1], [0], [0], [1], [0, 0, 1, 1], [], []>} : vector<8x8xf32>, vector<8x8xf32>, vector<8x8xf32> -> vector<8x8xf32>
    %114 = vector.extract_strided_slice %29 {offsets = [16, 0], sizes = [8, 32], strides = [1, 1]} : vector<32x32xf32> to vector<8x32xf32>
    %cst_53 = arith.constant dense<0.000000e+00> : vector<8x32xf32>
    %115 = tpu.matmul %113, %114, %cst_53 {dimension_numbers = #tpu.dot_dimension_numbers<[1], [0], [0], [1], [0, 0, 1, 1], [], []>} : vector<8x8xf32>, vector<8x32xf32>, vector<8x32xf32> -> vector<8x32xf32>
    %116 = arith.addf %95, %115 : vector<8x32xf32>
    %117 = vector.extract_strided_slice %52 {offsets = [0, 24], sizes = [8, 8], strides = [1, 1]} : vector<8x96xf32> to vector<8x8xf32>
    %cst_54 = arith.constant 0.176776692 : f32
    %118 = vector.broadcast %cst_54 : f32 to vector<8x8xf32>
    %119 = arith.mulf %117, %118 : vector<8x8xf32>
    %120 = vector.extract_strided_slice %52 {offsets = [0, 56], sizes = [8, 8], strides = [1, 1]} : vector<8x96xf32> to vector<8x8xf32>
    %121 = vector.extract_strided_slice %52 {offsets = [0, 88], sizes = [8, 8], strides = [1, 1]} : vector<8x96xf32> to vector<8x8xf32>
    %cst_55 = arith.constant dense<0.000000e+00> : vector<8x8xf32>
    %122 = tpu.matmul %119, %120, %cst_55 {dimension_numbers = #tpu.dot_dimension_numbers<[1], [1], [0], [0], [0, 0, 1, 0], [], []>} : vector<8x8xf32>, vector<8x8xf32>, vector<8x8xf32> -> vector<8x8xf32>
    %cst_56 = arith.constant -1.000000e+30 : f32
    %123 = vector.broadcast %cst_56 : f32 to vector<8x8xf32>
    %124 = arith.select %11, %123, %122 : vector<8x8xi1>, vector<8x8xf32>
    %cst_57 = arith.constant dense<0xFF800000> : vector<8xf32>
    %125 = vector.multi_reduction <maximumf>, %124, %cst_57 [1] : vector<8x8xf32> to vector<8xf32>
    %126 = vector.shape_cast %125 : vector<8xf32> to vector<8x1xf32>
    %127 = vector.broadcast %126 : vector<8x1xf32> to vector<8x8xf32>
    %128 = arith.subf %124, %127 : vector<8x8xf32>
    %129 = math.exp %128 : vector<8x8xf32>
    %cst_58 = arith.constant dense<0.000000e+00> : vector<8xf32>
    %130 = vector.multi_reduction <add>, %129, %cst_58 [1] : vector<8x8xf32> to vector<8xf32>
    %131 = vector.shape_cast %130 : vector<8xf32> to vector<8x1xf32>
    %132 = vector.broadcast %131 : vector<8x1xf32> to vector<8x8xf32>
    %133 = arith.divf %129, %132 : vector<8x8xf32>
    %cst_59 = arith.constant dense<0.000000e+00> : vector<8x8xf32>
    %134 = tpu.matmul %133, %121, %cst_59 {dimension_numbers = #tpu.dot_dimension_numbers<[1], [0], [0], [1], [0, 0, 1, 1], [], []>} : vector<8x8xf32>, vector<8x8xf32>, vector<8x8xf32> -> vector<8x8xf32>
    %135 = vector.extract_strided_slice %29 {offsets = [24, 0], sizes = [8, 32], strides = [1, 1]} : vector<32x32xf32> to vector<8x32xf32>
    %cst_60 = arith.constant dense<0.000000e+00> : vector<8x32xf32>
    %136 = tpu.matmul %134, %135, %cst_60 {dimension_numbers = #tpu.dot_dimension_numbers<[1], [0], [0], [1], [0, 0, 1, 1], [], []>} : vector<8x8xf32>, vector<8x32xf32>, vector<8x32xf32> -> vector<8x32xf32>
    %137 = arith.addf %116, %136 : vector<8x32xf32>
    %138 = arith.addf %1, %137 : vector<8x32xf32>
    %139 = vector.extract_strided_slice %138 {offsets = [0, 0], sizes = [8, 16], strides = [1, 1]} : vector<8x32xf32> to vector<8x16xf32>
    %140 = vector.extract_strided_slice %138 {offsets = [0, 16], sizes = [8, 16], strides = [1, 1]} : vector<8x32xf32> to vector<8x16xf32>
    %cst_61 = arith.constant 0.000000e+00 : f32
    %141 = vector.broadcast %cst_61 : f32 to vector<1x16xf32>
    %142 = vector.extract_strided_slice %140 {offsets = [0, 0], sizes = [7, 16], strides = [1, 1]} : vector<8x16xf32> to vector<7x16xf32>
    %143 = tpu.concatenate %141, %142 in 0 : vector<1x16xf32>, vector<7x16xf32> -> vector<8x16xf32>
    %144 = tpu.concatenate %139, %143 in 1 : vector<8x16xf32>, vector<8x16xf32> -> vector<8x32xf32>
    %145 = arith.mulf %144, %144 : vector<8x32xf32>
    %cst_62 = arith.constant dense<0.000000e+00> : vector<8xf32>
    %146 = vector.multi_reduction <add>, %145, %cst_62 [1] : vector<8x32xf32> to vector<8xf32>
    %147 = vector.shape_cast %146 : vector<8xf32> to vector<8x1xf32>
    %148 = math.sqrt %147 : vector<8x1xf32>
    %cst_63 = arith.constant 9.99999996E-13 : f32
    %149 = vector.broadcast %cst_63 : f32 to vector<8x1xf32>
    %150 = arith.maximumf %148, %149 : vector<8x1xf32>
    %151 = vector.broadcast %150 : vector<8x1xf32> to vector<8x32xf32>
    %152 = arith.divf %144, %151 : vector<8x32xf32>
    %cst_64 = arith.constant 5.65685415 : f32
    %153 = vector.broadcast %cst_64 : f32 to vector<8x32xf32>
    %154 = arith.mulf %152, %153 : vector<8x32xf32>
    %155 = vector.broadcast %31 : vector<1x32xf32> to vector<8x32xf32>
    %156 = arith.mulf %154, %155 : vector<8x32xf32>
    %cst_65 = arith.constant dense<0.000000e+00> : vector<8x128xf32>
    %157 = tpu.matmul %156, %33, %cst_65 {dimension_numbers = #tpu.dot_dimension_numbers<[1], [0], [0], [1], [0, 0, 1, 1], [], []>} : vector<8x32xf32>, vector<32x128xf32>, vector<8x128xf32> -> vector<8x128xf32>
    %158 = vector.broadcast %35 : vector<1x128xf32> to vector<8x128xf32>
    %159 = arith.addf %157, %158 : vector<8x128xf32>
    %cst_66 = arith.constant 5.000000e-01 : f32
    %160 = vector.broadcast %cst_66 : f32 to vector<8x128xf32>
    %161 = arith.mulf %160, %159 : vector<8x128xf32>
    %cst_67 = arith.constant 0.707106769 : f32
    %162 = vector.broadcast %cst_67 : f32 to vector<8x128xf32>
    %163 = arith.mulf %159, %162 : vector<8x128xf32>
    %cst_68 = arith.constant 0.000000e+00 : f32
    %164 = vector.broadcast %cst_68 : f32 to vector<8x128xf32>
    %165 = arith.cmpf oge, %163, %164 : vector<8x128xf32>
    %cst_69 = arith.constant 1.000000e+00 : f32
    %cst_70 = arith.constant -1.000000e+00 : f32
    %166 = vector.broadcast %cst_69 : f32 to vector<8x128xf32>
    %167 = vector.broadcast %cst_70 : f32 to vector<8x128xf32>
    %168 = arith.select %165, %166, %167 : vector<8x128xi1>, vector<8x128xf32>
    %169 = math.absf %163 : vector<8x128xf32>
    %cst_71 = arith.constant 0.327591091 : f32
    %170 = vector.broadcast %cst_71 : f32 to vector<8x128xf32>
    %171 = arith.mulf %170, %169 : vector<8x128xf32>
    %cst_72 = arith.constant 1.000000e+00 : f32
    %172 = vector.broadcast %cst_72 : f32 to vector<8x128xf32>
    %173 = arith.addf %172, %171 : vector<8x128xf32>
    %cst_73 = arith.constant 1.000000e+00 : f32
    %174 = vector.broadcast %cst_73 : f32 to vector<8x128xf32>
    %175 = arith.divf %174, %173 : vector<8x128xf32>
    %cst_74 = arith.constant 1.06140542 : f32
    %176 = vector.broadcast %cst_74 : f32 to vector<8x128xf32>
    %177 = arith.mulf %176, %175 : vector<8x128xf32>
    %cst_75 = arith.constant -1.45315206 : f32
    %178 = vector.broadcast %cst_75 : f32 to vector<8x128xf32>
    %179 = arith.addf %177, %178 : vector<8x128xf32>
    %180 = arith.mulf %179, %175 : vector<8x128xf32>
    %cst_76 = arith.constant 1.42141378 : f32
    %181 = vector.broadcast %cst_76 : f32 to vector<8x128xf32>
    %182 = arith.addf %180, %181 : vector<8x128xf32>
    %183 = arith.mulf %182, %175 : vector<8x128xf32>
    %cst_77 = arith.constant -0.284496725 : f32
    %184 = vector.broadcast %cst_77 : f32 to vector<8x128xf32>
    %185 = arith.addf %183, %184 : vector<8x128xf32>
    %186 = arith.mulf %185, %175 : vector<8x128xf32>
    %cst_78 = arith.constant 0.254829586 : f32
    %187 = vector.broadcast %cst_78 : f32 to vector<8x128xf32>
    %188 = arith.addf %186, %187 : vector<8x128xf32>
    %189 = arith.mulf %188, %175 : vector<8x128xf32>
    %cst_79 = arith.constant 0.000000e+00 : f32
    %190 = vector.broadcast %cst_79 : f32 to vector<8x128xf32>
    %191 = arith.subf %190, %169 : vector<8x128xf32>
    %192 = arith.mulf %191, %169 : vector<8x128xf32>
    %193 = math.exp %192 : vector<8x128xf32>
    %194 = arith.mulf %189, %193 : vector<8x128xf32>
    %cst_80 = arith.constant 1.000000e+00 : f32
    %195 = vector.broadcast %cst_80 : f32 to vector<8x128xf32>
    %196 = arith.subf %195, %194 : vector<8x128xf32>
    %197 = arith.mulf %168, %196 : vector<8x128xf32>
    %cst_81 = arith.constant 1.000000e+00 : f32
    %198 = vector.broadcast %cst_81 : f32 to vector<8x128xf32>
    %199 = arith.addf %198, %197 : vector<8x128xf32>
    %200 = arith.mulf %161, %199 : vector<8x128xf32>
    %cst_82 = arith.constant dense<0.000000e+00> : vector<8x32xf32>
    %201 = tpu.matmul %200, %37, %cst_82 {dimension_numbers = #tpu.dot_dimension_numbers<[1], [0], [0], [1], [0, 0, 1, 1], [], []>} : vector<8x128xf32>, vector<128x32xf32>, vector<8x32xf32> -> vector<8x32xf32>
    %202 = vector.broadcast %39 : vector<1x32xf32> to vector<8x32xf32>
    %203 = arith.addf %201, %202 : vector<8x32xf32>
    %204 = arith.addf %203, %138 : vector<8x32xf32>
    %205 = tpu.concatenate %204, %5, %8 in 0 : vector<8x32xf32>, vector<8x32xf32>, vector<8x32xf32> -> vector<24x32xf32>
    %206 = arith.mulf %205, %205 : vector<24x32xf32>
    %cst_83 = arith.constant dense<0.000000e+00> : vector<24xf32>
    %207 = vector.multi_reduction <add>, %206, %cst_83 [1] : vector<24x32xf32> to vector<24xf32>
    %208 = vector.shape_cast %207 : vector<24xf32> to vector<24x1xf32>
    %209 = math.sqrt %208 : vector<24x1xf32>
    %cst_84 = arith.constant 9.99999996E-13 : f32
    %210 = vector.broadcast %cst_84 : f32 to vector<24x1xf32>
    %211 = arith.maximumf %209, %210 : vector<24x1xf32>
    %212 = vector.broadcast %211 : vector<24x1xf32> to vector<24x32xf32>
    %213 = arith.divf %205, %212 : vector<24x32xf32>
    %cst_85 = arith.constant 5.65685415 : f32
    %214 = vector.broadcast %cst_85 : f32 to vector<24x32xf32>
    %215 = arith.mulf %213, %214 : vector<24x32xf32>
    %216 = vector.broadcast %25 : vector<1x32xf32> to vector<24x32xf32>
    %217 = arith.mulf %215, %216 : vector<24x32xf32>
    %cst_86 = arith.constant dense<0.000000e+00> : vector<24x96xf32>
    %218 = tpu.matmul %217, %27, %cst_86 {dimension_numbers = #tpu.dot_dimension_numbers<[1], [0], [0], [1], [0, 0, 1, 1], [], []>} : vector<24x32xf32>, vector<32x96xf32>, vector<24x96xf32> -> vector<24x96xf32>
    %cst_87 = arith.constant 0.000000e+00 : f32
    %219 = vector.broadcast %cst_87 : f32 to vector<24x32xf32>
    %220 = vector.extract_strided_slice %218 {offsets = [0, 0], sizes = [24, 8], strides = [1, 1]} : vector<24x96xf32> to vector<24x8xf32>
    %cst_88 = arith.constant 0.176776692 : f32
    %221 = vector.broadcast %cst_88 : f32 to vector<24x8xf32>
    %222 = arith.mulf %220, %221 : vector<24x8xf32>
    %223 = vector.extract_strided_slice %218 {offsets = [0, 32], sizes = [24, 8], strides = [1, 1]} : vector<24x96xf32> to vector<24x8xf32>
    %224 = vector.extract_strided_slice %218 {offsets = [0, 64], sizes = [24, 8], strides = [1, 1]} : vector<24x96xf32> to vector<24x8xf32>
    %cst_89 = arith.constant dense<0.000000e+00> : vector<24x24xf32>
    %225 = tpu.matmul %222, %223, %cst_89 {dimension_numbers = #tpu.dot_dimension_numbers<[1], [1], [0], [0], [0, 0, 1, 0], [], []>} : vector<24x8xf32>, vector<24x8xf32>, vector<24x24xf32> -> vector<24x24xf32>
    %cst_90 = arith.constant -1.000000e+30 : f32
    %226 = vector.broadcast %cst_90 : f32 to vector<24x24xf32>
    %227 = arith.select %23, %226, %225 : vector<24x24xi1>, vector<24x24xf32>
    %cst_91 = arith.constant dense<0xFF800000> : vector<24xf32>
    %228 = vector.multi_reduction <maximumf>, %227, %cst_91 [1] : vector<24x24xf32> to vector<24xf32>
    %229 = vector.shape_cast %228 : vector<24xf32> to vector<24x1xf32>
    %230 = vector.broadcast %229 : vector<24x1xf32> to vector<24x24xf32>
    %231 = arith.subf %227, %230 : vector<24x24xf32>
    %232 = math.exp %231 : vector<24x24xf32>
    %cst_92 = arith.constant dense<0.000000e+00> : vector<24xf32>
    %233 = vector.multi_reduction <add>, %232, %cst_92 [1] : vector<24x24xf32> to vector<24xf32>
    %234 = vector.shape_cast %233 : vector<24xf32> to vector<24x1xf32>
    %235 = vector.broadcast %234 : vector<24x1xf32> to vector<24x24xf32>
    %236 = arith.divf %232, %235 : vector<24x24xf32>
    %cst_93 = arith.constant dense<0.000000e+00> : vector<24x8xf32>
    %237 = tpu.matmul %236, %224, %cst_93 {dimension_numbers = #tpu.dot_dimension_numbers<[1], [0], [0], [1], [0, 0, 1, 1], [], []>} : vector<24x24xf32>, vector<24x8xf32>, vector<24x8xf32> -> vector<24x8xf32>
    %238 = vector.extract_strided_slice %29 {offsets = [0, 0], sizes = [8, 32], strides = [1, 1]} : vector<32x32xf32> to vector<8x32xf32>
    %cst_94 = arith.constant dense<0.000000e+00> : vector<24x32xf32>
    %239 = tpu.matmul %237, %238, %cst_94 {dimension_numbers = #tpu.dot_dimension_numbers<[1], [0], [0], [1], [0, 0, 1, 1], [], []>} : vector<24x8xf32>, vector<8x32xf32>, vector<24x32xf32> -> vector<24x32xf32>
    %240 = arith.addf %219, %239 : vector<24x32xf32>
    %241 = vector.extract_strided_slice %218 {offsets = [0, 8], sizes = [24, 8], strides = [1, 1]} : vector<24x96xf32> to vector<24x8xf32>
    %cst_95 = arith.constant 0.176776692 : f32
    %242 = vector.broadcast %cst_95 : f32 to vector<24x8xf32>
    %243 = arith.mulf %241, %242 : vector<24x8xf32>
    %244 = vector.extract_strided_slice %218 {offsets = [0, 40], sizes = [24, 8], strides = [1, 1]} : vector<24x96xf32> to vector<24x8xf32>
    %245 = vector.extract_strided_slice %218 {offsets = [0, 72], sizes = [24, 8], strides = [1, 1]} : vector<24x96xf32> to vector<24x8xf32>
    %cst_96 = arith.constant dense<0.000000e+00> : vector<24x24xf32>
    %246 = tpu.matmul %243, %244, %cst_96 {dimension_numbers = #tpu.dot_dimension_numbers<[1], [1], [0], [0], [0, 0, 1, 0], [], []>} : vector<24x8xf32>, vector<24x8xf32>, vector<24x24xf32> -> vector<24x24xf32>
    %cst_97 = arith.constant -1.000000e+30 : f32
    %247 = vector.broadcast %cst_97 : f32 to vector<24x24xf32>
    %248 = arith.select %23, %247, %246 : vector<24x24xi1>, vector<24x24xf32>
    %cst_98 = arith.constant dense<0xFF800000> : vector<24xf32>
    %249 = vector.multi_reduction <maximumf>, %248, %cst_98 [1] : vector<24x24xf32> to vector<24xf32>
    %250 = vector.shape_cast %249 : vector<24xf32> to vector<24x1xf32>
    %251 = vector.broadcast %250 : vector<24x1xf32> to vector<24x24xf32>
    %252 = arith.subf %248, %251 : vector<24x24xf32>
    %253 = math.exp %252 : vector<24x24xf32>
    %cst_99 = arith.constant dense<0.000000e+00> : vector<24xf32>
    %254 = vector.multi_reduction <add>, %253, %cst_99 [1] : vector<24x24xf32> to vector<24xf32>
    %255 = vector.shape_cast %254 : vector<24xf32> to vector<24x1xf32>
    %256 = vector.broadcast %255 : vector<24x1xf32> to vector<24x24xf32>
    %257 = arith.divf %253, %256 : vector<24x24xf32>
    %cst_100 = arith.constant dense<0.000000e+00> : vector<24x8xf32>
    %258 = tpu.matmul %257, %245, %cst_100 {dimension_numbers = #tpu.dot_dimension_numbers<[1], [0], [0], [1], [0, 0, 1, 1], [], []>} : vector<24x24xf32>, vector<24x8xf32>, vector<24x8xf32> -> vector<24x8xf32>
    %259 = vector.extract_strided_slice %29 {offsets = [8, 0], sizes = [8, 32], strides = [1, 1]} : vector<32x32xf32> to vector<8x32xf32>
    %cst_101 = arith.constant dense<0.000000e+00> : vector<24x32xf32>
    %260 = tpu.matmul %258, %259, %cst_101 {dimension_numbers = #tpu.dot_dimension_numbers<[1], [0], [0], [1], [0, 0, 1, 1], [], []>} : vector<24x8xf32>, vector<8x32xf32>, vector<24x32xf32> -> vector<24x32xf32>
    %261 = arith.addf %240, %260 : vector<24x32xf32>
    %262 = vector.extract_strided_slice %218 {offsets = [0, 16], sizes = [24, 8], strides = [1, 1]} : vector<24x96xf32> to vector<24x8xf32>
    %cst_102 = arith.constant 0.176776692 : f32
    %263 = vector.broadcast %cst_102 : f32 to vector<24x8xf32>
    %264 = arith.mulf %262, %263 : vector<24x8xf32>
    %265 = vector.extract_strided_slice %218 {offsets = [0, 48], sizes = [24, 8], strides = [1, 1]} : vector<24x96xf32> to vector<24x8xf32>
    %266 = vector.extract_strided_slice %218 {offsets = [0, 80], sizes = [24, 8], strides = [1, 1]} : vector<24x96xf32> to vector<24x8xf32>
    %cst_103 = arith.constant dense<0.000000e+00> : vector<24x24xf32>
    %267 = tpu.matmul %264, %265, %cst_103 {dimension_numbers = #tpu.dot_dimension_numbers<[1], [1], [0], [0], [0, 0, 1, 0], [], []>} : vector<24x8xf32>, vector<24x8xf32>, vector<24x24xf32> -> vector<24x24xf32>
    %cst_104 = arith.constant -1.000000e+30 : f32
    %268 = vector.broadcast %cst_104 : f32 to vector<24x24xf32>
    %269 = arith.select %23, %268, %267 : vector<24x24xi1>, vector<24x24xf32>
    %cst_105 = arith.constant dense<0xFF800000> : vector<24xf32>
    %270 = vector.multi_reduction <maximumf>, %269, %cst_105 [1] : vector<24x24xf32> to vector<24xf32>
    %271 = vector.shape_cast %270 : vector<24xf32> to vector<24x1xf32>
    %272 = vector.broadcast %271 : vector<24x1xf32> to vector<24x24xf32>
    %273 = arith.subf %269, %272 : vector<24x24xf32>
    %274 = math.exp %273 : vector<24x24xf32>
    %cst_106 = arith.constant dense<0.000000e+00> : vector<24xf32>
    %275 = vector.multi_reduction <add>, %274, %cst_106 [1] : vector<24x24xf32> to vector<24xf32>
    %276 = vector.shape_cast %275 : vector<24xf32> to vector<24x1xf32>
    %277 = vector.broadcast %276 : vector<24x1xf32> to vector<24x24xf32>
    %278 = arith.divf %274, %277 : vector<24x24xf32>
    %cst_107 = arith.constant dense<0.000000e+00> : vector<24x8xf32>
    %279 = tpu.matmul %278, %266, %cst_107 {dimension_numbers = #tpu.dot_dimension_numbers<[1], [0], [0], [1], [0, 0, 1, 1], [], []>} : vector<24x24xf32>, vector<24x8xf32>, vector<24x8xf32> -> vector<24x8xf32>
    %280 = vector.extract_strided_slice %29 {offsets = [16, 0], sizes = [8, 32], strides = [1, 1]} : vector<32x32xf32> to vector<8x32xf32>
    %cst_108 = arith.constant dense<0.000000e+00> : vector<24x32xf32>
    %281 = tpu.matmul %279, %280, %cst_108 {dimension_numbers = #tpu.dot_dimension_numbers<[1], [0], [0], [1], [0, 0, 1, 1], [], []>} : vector<24x8xf32>, vector<8x32xf32>, vector<24x32xf32> -> vector<24x32xf32>
    %282 = arith.addf %261, %281 : vector<24x32xf32>
    %283 = vector.extract_strided_slice %218 {offsets = [0, 24], sizes = [24, 8], strides = [1, 1]} : vector<24x96xf32> to vector<24x8xf32>
    %cst_109 = arith.constant 0.176776692 : f32
    %284 = vector.broadcast %cst_109 : f32 to vector<24x8xf32>
    %285 = arith.mulf %283, %284 : vector<24x8xf32>
    %286 = vector.extract_strided_slice %218 {offsets = [0, 56], sizes = [24, 8], strides = [1, 1]} : vector<24x96xf32> to vector<24x8xf32>
    %287 = vector.extract_strided_slice %218 {offsets = [0, 88], sizes = [24, 8], strides = [1, 1]} : vector<24x96xf32> to vector<24x8xf32>
    %cst_110 = arith.constant dense<0.000000e+00> : vector<24x24xf32>
    %288 = tpu.matmul %285, %286, %cst_110 {dimension_numbers = #tpu.dot_dimension_numbers<[1], [1], [0], [0], [0, 0, 1, 0], [], []>} : vector<24x8xf32>, vector<24x8xf32>, vector<24x24xf32> -> vector<24x24xf32>
    %cst_111 = arith.constant -1.000000e+30 : f32
    %289 = vector.broadcast %cst_111 : f32 to vector<24x24xf32>
    %290 = arith.select %23, %289, %288 : vector<24x24xi1>, vector<24x24xf32>
    %cst_112 = arith.constant dense<0xFF800000> : vector<24xf32>
    %291 = vector.multi_reduction <maximumf>, %290, %cst_112 [1] : vector<24x24xf32> to vector<24xf32>
    %292 = vector.shape_cast %291 : vector<24xf32> to vector<24x1xf32>
    %293 = vector.broadcast %292 : vector<24x1xf32> to vector<24x24xf32>
    %294 = arith.subf %290, %293 : vector<24x24xf32>
    %295 = math.exp %294 : vector<24x24xf32>
    %cst_113 = arith.constant dense<0.000000e+00> : vector<24xf32>
    %296 = vector.multi_reduction <add>, %295, %cst_113 [1] : vector<24x24xf32> to vector<24xf32>
    %297 = vector.shape_cast %296 : vector<24xf32> to vector<24x1xf32>
    %298 = vector.broadcast %297 : vector<24x1xf32> to vector<24x24xf32>
    %299 = arith.divf %295, %298 : vector<24x24xf32>
    %cst_114 = arith.constant dense<0.000000e+00> : vector<24x8xf32>
    %300 = tpu.matmul %299, %287, %cst_114 {dimension_numbers = #tpu.dot_dimension_numbers<[1], [0], [0], [1], [0, 0, 1, 1], [], []>} : vector<24x24xf32>, vector<24x8xf32>, vector<24x8xf32> -> vector<24x8xf32>
    %301 = vector.extract_strided_slice %29 {offsets = [24, 0], sizes = [8, 32], strides = [1, 1]} : vector<32x32xf32> to vector<8x32xf32>
    %cst_115 = arith.constant dense<0.000000e+00> : vector<24x32xf32>
    %302 = tpu.matmul %300, %301, %cst_115 {dimension_numbers = #tpu.dot_dimension_numbers<[1], [0], [0], [1], [0, 0, 1, 1], [], []>} : vector<24x8xf32>, vector<8x32xf32>, vector<24x32xf32> -> vector<24x32xf32>
    %303 = arith.addf %282, %302 : vector<24x32xf32>
    %304 = arith.addf %205, %303 : vector<24x32xf32>
    %305 = vector.extract_strided_slice %304 {offsets = [0, 0], sizes = [24, 16], strides = [1, 1]} : vector<24x32xf32> to vector<24x16xf32>
    %306 = vector.extract_strided_slice %304 {offsets = [0, 16], sizes = [24, 16], strides = [1, 1]} : vector<24x32xf32> to vector<24x16xf32>
    %cst_116 = arith.constant 0.000000e+00 : f32
    %307 = vector.broadcast %cst_116 : f32 to vector<8x16xf32>
    %308 = vector.extract_strided_slice %306 {offsets = [0, 0], sizes = [16, 16], strides = [1, 1]} : vector<24x16xf32> to vector<16x16xf32>
    %309 = tpu.concatenate %307, %308 in 0 : vector<8x16xf32>, vector<16x16xf32> -> vector<24x16xf32>
    %310 = tpu.concatenate %305, %309 in 1 : vector<24x16xf32>, vector<24x16xf32> -> vector<24x32xf32>
    %311 = arith.mulf %310, %310 : vector<24x32xf32>
    %cst_117 = arith.constant dense<0.000000e+00> : vector<24xf32>
    %312 = vector.multi_reduction <add>, %311, %cst_117 [1] : vector<24x32xf32> to vector<24xf32>
    %313 = vector.shape_cast %312 : vector<24xf32> to vector<24x1xf32>
    %314 = math.sqrt %313 : vector<24x1xf32>
    %cst_118 = arith.constant 9.99999996E-13 : f32
    %315 = vector.broadcast %cst_118 : f32 to vector<24x1xf32>
    %316 = arith.maximumf %314, %315 : vector<24x1xf32>
    %317 = vector.broadcast %316 : vector<24x1xf32> to vector<24x32xf32>
    %318 = arith.divf %310, %317 : vector<24x32xf32>
    %cst_119 = arith.constant 5.65685415 : f32
    %319 = vector.broadcast %cst_119 : f32 to vector<24x32xf32>
    %320 = arith.mulf %318, %319 : vector<24x32xf32>
    %321 = vector.broadcast %31 : vector<1x32xf32> to vector<24x32xf32>
    %322 = arith.mulf %320, %321 : vector<24x32xf32>
    %cst_120 = arith.constant dense<0.000000e+00> : vector<24x128xf32>
    %323 = tpu.matmul %322, %33, %cst_120 {dimension_numbers = #tpu.dot_dimension_numbers<[1], [0], [0], [1], [0, 0, 1, 1], [], []>} : vector<24x32xf32>, vector<32x128xf32>, vector<24x128xf32> -> vector<24x128xf32>
    %324 = vector.broadcast %35 : vector<1x128xf32> to vector<24x128xf32>
    %325 = arith.addf %323, %324 : vector<24x128xf32>
    %cst_121 = arith.constant 5.000000e-01 : f32
    %326 = vector.broadcast %cst_121 : f32 to vector<24x128xf32>
    %327 = arith.mulf %326, %325 : vector<24x128xf32>
    %cst_122 = arith.constant 0.707106769 : f32
    %328 = vector.broadcast %cst_122 : f32 to vector<24x128xf32>
    %329 = arith.mulf %325, %328 : vector<24x128xf32>
    %cst_123 = arith.constant 0.000000e+00 : f32
    %330 = vector.broadcast %cst_123 : f32 to vector<24x128xf32>
    %331 = arith.cmpf oge, %329, %330 : vector<24x128xf32>
    %cst_124 = arith.constant 1.000000e+00 : f32
    %cst_125 = arith.constant -1.000000e+00 : f32
    %332 = vector.broadcast %cst_124 : f32 to vector<24x128xf32>
    %333 = vector.broadcast %cst_125 : f32 to vector<24x128xf32>
    %334 = arith.select %331, %332, %333 : vector<24x128xi1>, vector<24x128xf32>
    %335 = math.absf %329 : vector<24x128xf32>
    %cst_126 = arith.constant 0.327591091 : f32
    %336 = vector.broadcast %cst_126 : f32 to vector<24x128xf32>
    %337 = arith.mulf %336, %335 : vector<24x128xf32>
    %cst_127 = arith.constant 1.000000e+00 : f32
    %338 = vector.broadcast %cst_127 : f32 to vector<24x128xf32>
    %339 = arith.addf %338, %337 : vector<24x128xf32>
    %cst_128 = arith.constant 1.000000e+00 : f32
    %340 = vector.broadcast %cst_128 : f32 to vector<24x128xf32>
    %341 = arith.divf %340, %339 : vector<24x128xf32>
    %cst_129 = arith.constant 1.06140542 : f32
    %342 = vector.broadcast %cst_129 : f32 to vector<24x128xf32>
    %343 = arith.mulf %342, %341 : vector<24x128xf32>
    %cst_130 = arith.constant -1.45315206 : f32
    %344 = vector.broadcast %cst_130 : f32 to vector<24x128xf32>
    %345 = arith.addf %343, %344 : vector<24x128xf32>
    %346 = arith.mulf %345, %341 : vector<24x128xf32>
    %cst_131 = arith.constant 1.42141378 : f32
    %347 = vector.broadcast %cst_131 : f32 to vector<24x128xf32>
    %348 = arith.addf %346, %347 : vector<24x128xf32>
    %349 = arith.mulf %348, %341 : vector<24x128xf32>
    %cst_132 = arith.constant -0.284496725 : f32
    %350 = vector.broadcast %cst_132 : f32 to vector<24x128xf32>
    %351 = arith.addf %349, %350 : vector<24x128xf32>
    %352 = arith.mulf %351, %341 : vector<24x128xf32>
    %cst_133 = arith.constant 0.254829586 : f32
    %353 = vector.broadcast %cst_133 : f32 to vector<24x128xf32>
    %354 = arith.addf %352, %353 : vector<24x128xf32>
    %355 = arith.mulf %354, %341 : vector<24x128xf32>
    %cst_134 = arith.constant 0.000000e+00 : f32
    %356 = vector.broadcast %cst_134 : f32 to vector<24x128xf32>
    %357 = arith.subf %356, %335 : vector<24x128xf32>
    %358 = arith.mulf %357, %335 : vector<24x128xf32>
    %359 = math.exp %358 : vector<24x128xf32>
    %360 = arith.mulf %355, %359 : vector<24x128xf32>
    %cst_135 = arith.constant 1.000000e+00 : f32
    %361 = vector.broadcast %cst_135 : f32 to vector<24x128xf32>
    %362 = arith.subf %361, %360 : vector<24x128xf32>
    %363 = arith.mulf %334, %362 : vector<24x128xf32>
    %cst_136 = arith.constant 1.000000e+00 : f32
    %364 = vector.broadcast %cst_136 : f32 to vector<24x128xf32>
    %365 = arith.addf %364, %363 : vector<24x128xf32>
    %366 = arith.mulf %327, %365 : vector<24x128xf32>
    %cst_137 = arith.constant dense<0.000000e+00> : vector<24x32xf32>
    %367 = tpu.matmul %366, %37, %cst_137 {dimension_numbers = #tpu.dot_dimension_numbers<[1], [0], [0], [1], [0, 0, 1, 1], [], []>} : vector<24x128xf32>, vector<128x32xf32>, vector<24x32xf32> -> vector<24x32xf32>
    %368 = vector.broadcast %39 : vector<1x32xf32> to vector<24x32xf32>
    %369 = arith.addf %367, %368 : vector<24x32xf32>
    %370 = arith.addf %369, %304 : vector<24x32xf32>
    %371 = vector.extract_strided_slice %370 {offsets = [0, 0], sizes = [8, 32], strides = [1, 1]} : vector<24x32xf32> to vector<8x32xf32>
    %372 = vector.extract_strided_slice %370 {offsets = [8, 0], sizes = [8, 32], strides = [1, 1]} : vector<24x32xf32> to vector<8x32xf32>
    %373 = vector.extract_strided_slice %370 {offsets = [16, 0], sizes = [8, 32], strides = [1, 1]} : vector<24x32xf32> to vector<8x32xf32>
    %cst_138 = arith.constant 0.000000e+00 : f32
    %374 = vector.broadcast %cst_138 : f32 to vector<1x32xf32>
    %375 = vector.extract_strided_slice %373 {offsets = [0, 0], sizes = [7, 32], strides = [1, 1]} : vector<8x32xf32> to vector<7x32xf32>
    %376 = tpu.concatenate %374, %375 in 0 : vector<1x32xf32>, vector<7x32xf32> -> vector<8x32xf32>
    %c0_139 = arith.constant 0 : index
    %c0_140 = arith.constant 0 : index
    %377 = vector.load %arg11[%c0_139, %c0_140] : memref<1x32xf32, #tpu.memory_space<vmem>>, vector<1x32xf32>
    %378 = arith.mulf %371, %371 : vector<8x32xf32>
    %cst_141 = arith.constant dense<0.000000e+00> : vector<8xf32>
    %379 = vector.multi_reduction <add>, %378, %cst_141 [1] : vector<8x32xf32> to vector<8xf32>
    %380 = vector.shape_cast %379 : vector<8xf32> to vector<8x1xf32>
    %381 = math.sqrt %380 : vector<8x1xf32>
    %cst_142 = arith.constant 9.99999996E-13 : f32
    %382 = vector.broadcast %cst_142 : f32 to vector<8x1xf32>
    %383 = arith.maximumf %381, %382 : vector<8x1xf32>
    %384 = vector.broadcast %383 : vector<8x1xf32> to vector<8x32xf32>
    %385 = arith.divf %371, %384 : vector<8x32xf32>
    %cst_143 = arith.constant 5.65685415 : f32
    %386 = vector.broadcast %cst_143 : f32 to vector<8x32xf32>
    %387 = arith.mulf %385, %386 : vector<8x32xf32>
    %388 = vector.broadcast %377 : vector<1x32xf32> to vector<8x32xf32>
    %389 = arith.mulf %387, %388 : vector<8x32xf32>
    %c0_144 = arith.constant 0 : index
    %c0_145 = arith.constant 0 : index
    %390 = vector.load %arg11[%c0_144, %c0_145] : memref<1x32xf32, #tpu.memory_space<vmem>>, vector<1x32xf32>
    %391 = arith.mulf %376, %376 : vector<8x32xf32>
    %cst_146 = arith.constant dense<0.000000e+00> : vector<8xf32>
    %392 = vector.multi_reduction <add>, %391, %cst_146 [1] : vector<8x32xf32> to vector<8xf32>
    %393 = vector.shape_cast %392 : vector<8xf32> to vector<8x1xf32>
    %394 = math.sqrt %393 : vector<8x1xf32>
    %cst_147 = arith.constant 9.99999996E-13 : f32
    %395 = vector.broadcast %cst_147 : f32 to vector<8x1xf32>
    %396 = arith.maximumf %394, %395 : vector<8x1xf32>
    %397 = vector.broadcast %396 : vector<8x1xf32> to vector<8x32xf32>
    %398 = arith.divf %376, %397 : vector<8x32xf32>
    %cst_148 = arith.constant 5.65685415 : f32
    %399 = vector.broadcast %cst_148 : f32 to vector<8x32xf32>
    %400 = arith.mulf %398, %399 : vector<8x32xf32>
    %401 = vector.broadcast %390 : vector<1x32xf32> to vector<8x32xf32>
    %402 = arith.mulf %400, %401 : vector<8x32xf32>
    %403 = tpu.concatenate %389, %402 in 1 : vector<8x32xf32>, vector<8x32xf32> -> vector<8x64xf32>
    %c0_149 = arith.constant 0 : index
    %c0_150 = arith.constant 0 : index
    %404 = vector.load %arg12[%c0_149, %c0_150] : memref<64x32xf32, #tpu.memory_space<vmem>>, vector<64x32xf32>
    %cst_151 = arith.constant dense<0.000000e+00> : vector<8x32xf32>
    %405 = tpu.matmul %403, %404, %cst_151 {dimension_numbers = #tpu.dot_dimension_numbers<[1], [0], [0], [1], [0, 0, 1, 1], [], []>} : vector<8x64xf32>, vector<64x32xf32>, vector<8x32xf32> -> vector<8x32xf32>
    %c0_152 = arith.constant 0 : index
    %c0_153 = arith.constant 0 : index
    %406 = vector.load %arg13[%c0_152, %c0_153] : memref<1x32xf32, #tpu.memory_space<vmem>>, vector<1x32xf32>
    %407 = vector.broadcast %406 : vector<1x32xf32> to vector<8x32xf32>
    %408 = arith.addf %405, %407 : vector<8x32xf32>
    %409 = arith.addf %371, %408 : vector<8x32xf32>
    %c1 = arith.constant 1 : index
    %c0_154 = arith.constant 0 : index
    %c0_155 = arith.constant 0 : index
    %410 = vector.load %arg3[%c1, %c0_154, %c0_155] : memref<2x1x32xf32, #tpu.memory_space<vmem>>, vector<1x1x32xf32>
    %411 = vector.shape_cast %410 : vector<1x1x32xf32> to vector<1x32xf32>
    %c1_156 = arith.constant 1 : index
    %c0_157 = arith.constant 0 : index
    %c0_158 = arith.constant 0 : index
    %412 = vector.load %arg4[%c1_156, %c0_157, %c0_158] : memref<2x32x96xf32, #tpu.memory_space<vmem>>, vector<1x32x96xf32>
    %413 = vector.shape_cast %412 : vector<1x32x96xf32> to vector<32x96xf32>
    %c1_159 = arith.constant 1 : index
    %c0_160 = arith.constant 0 : index
    %c0_161 = arith.constant 0 : index
    %414 = vector.load %arg5[%c1_159, %c0_160, %c0_161] : memref<2x32x32xf32, #tpu.memory_space<vmem>>, vector<1x32x32xf32>
    %415 = vector.shape_cast %414 : vector<1x32x32xf32> to vector<32x32xf32>
    %c1_162 = arith.constant 1 : index
    %c0_163 = arith.constant 0 : index
    %c0_164 = arith.constant 0 : index
    %416 = vector.load %arg6[%c1_162, %c0_163, %c0_164] : memref<2x1x32xf32, #tpu.memory_space<vmem>>, vector<1x1x32xf32>
    %417 = vector.shape_cast %416 : vector<1x1x32xf32> to vector<1x32xf32>
    %c1_165 = arith.constant 1 : index
    %c0_166 = arith.constant 0 : index
    %c0_167 = arith.constant 0 : index
    %418 = vector.load %arg7[%c1_165, %c0_166, %c0_167] : memref<2x32x128xf32, #tpu.memory_space<vmem>>, vector<1x32x128xf32>
    %419 = vector.shape_cast %418 : vector<1x32x128xf32> to vector<32x128xf32>
    %c1_168 = arith.constant 1 : index
    %c0_169 = arith.constant 0 : index
    %c0_170 = arith.constant 0 : index
    %420 = vector.load %arg8[%c1_168, %c0_169, %c0_170] : memref<2x1x128xf32, #tpu.memory_space<vmem>>, vector<1x1x128xf32>
    %421 = vector.shape_cast %420 : vector<1x1x128xf32> to vector<1x128xf32>
    %c1_171 = arith.constant 1 : index
    %c0_172 = arith.constant 0 : index
    %c0_173 = arith.constant 0 : index
    %422 = vector.load %arg9[%c1_171, %c0_172, %c0_173] : memref<2x128x32xf32, #tpu.memory_space<vmem>>, vector<1x128x32xf32>
    %423 = vector.shape_cast %422 : vector<1x128x32xf32> to vector<128x32xf32>
    %c1_174 = arith.constant 1 : index
    %c0_175 = arith.constant 0 : index
    %c0_176 = arith.constant 0 : index
    %424 = vector.load %arg10[%c1_174, %c0_175, %c0_176] : memref<2x1x32xf32, #tpu.memory_space<vmem>>, vector<1x1x32xf32>
    %425 = vector.shape_cast %424 : vector<1x1x32xf32> to vector<1x32xf32>
    %426 = arith.mulf %409, %409 : vector<8x32xf32>
    %cst_177 = arith.constant dense<0.000000e+00> : vector<8xf32>
    %427 = vector.multi_reduction <add>, %426, %cst_177 [1] : vector<8x32xf32> to vector<8xf32>
    %428 = vector.shape_cast %427 : vector<8xf32> to vector<8x1xf32>
    %429 = math.sqrt %428 : vector<8x1xf32>
    %cst_178 = arith.constant 9.99999996E-13 : f32
    %430 = vector.broadcast %cst_178 : f32 to vector<8x1xf32>
    %431 = arith.maximumf %429, %430 : vector<8x1xf32>
    %432 = vector.broadcast %431 : vector<8x1xf32> to vector<8x32xf32>
    %433 = arith.divf %409, %432 : vector<8x32xf32>
    %cst_179 = arith.constant 5.65685415 : f32
    %434 = vector.broadcast %cst_179 : f32 to vector<8x32xf32>
    %435 = arith.mulf %433, %434 : vector<8x32xf32>
    %436 = vector.broadcast %411 : vector<1x32xf32> to vector<8x32xf32>
    %437 = arith.mulf %435, %436 : vector<8x32xf32>
    %cst_180 = arith.constant dense<0.000000e+00> : vector<8x96xf32>
    %438 = tpu.matmul %437, %413, %cst_180 {dimension_numbers = #tpu.dot_dimension_numbers<[1], [0], [0], [1], [0, 0, 1, 1], [], []>} : vector<8x32xf32>, vector<32x96xf32>, vector<8x96xf32> -> vector<8x96xf32>
    %cst_181 = arith.constant 0.000000e+00 : f32
    %439 = vector.broadcast %cst_181 : f32 to vector<8x32xf32>
    %440 = vector.extract_strided_slice %438 {offsets = [0, 0], sizes = [8, 8], strides = [1, 1]} : vector<8x96xf32> to vector<8x8xf32>
    %cst_182 = arith.constant 0.176776692 : f32
    %441 = vector.broadcast %cst_182 : f32 to vector<8x8xf32>
    %442 = arith.mulf %440, %441 : vector<8x8xf32>
    %443 = vector.extract_strided_slice %438 {offsets = [0, 32], sizes = [8, 8], strides = [1, 1]} : vector<8x96xf32> to vector<8x8xf32>
    %444 = vector.extract_strided_slice %438 {offsets = [0, 64], sizes = [8, 8], strides = [1, 1]} : vector<8x96xf32> to vector<8x8xf32>
    %cst_183 = arith.constant dense<0.000000e+00> : vector<8x8xf32>
    %445 = tpu.matmul %442, %443, %cst_183 {dimension_numbers = #tpu.dot_dimension_numbers<[1], [1], [0], [0], [0, 0, 1, 0], [], []>} : vector<8x8xf32>, vector<8x8xf32>, vector<8x8xf32> -> vector<8x8xf32>
    %cst_184 = arith.constant -1.000000e+30 : f32
    %446 = vector.broadcast %cst_184 : f32 to vector<8x8xf32>
    %447 = arith.select %11, %446, %445 : vector<8x8xi1>, vector<8x8xf32>
    %cst_185 = arith.constant dense<0xFF800000> : vector<8xf32>
    %448 = vector.multi_reduction <maximumf>, %447, %cst_185 [1] : vector<8x8xf32> to vector<8xf32>
    %449 = vector.shape_cast %448 : vector<8xf32> to vector<8x1xf32>
    %450 = vector.broadcast %449 : vector<8x1xf32> to vector<8x8xf32>
    %451 = arith.subf %447, %450 : vector<8x8xf32>
    %452 = math.exp %451 : vector<8x8xf32>
    %cst_186 = arith.constant dense<0.000000e+00> : vector<8xf32>
    %453 = vector.multi_reduction <add>, %452, %cst_186 [1] : vector<8x8xf32> to vector<8xf32>
    %454 = vector.shape_cast %453 : vector<8xf32> to vector<8x1xf32>
    %455 = vector.broadcast %454 : vector<8x1xf32> to vector<8x8xf32>
    %456 = arith.divf %452, %455 : vector<8x8xf32>
    %cst_187 = arith.constant dense<0.000000e+00> : vector<8x8xf32>
    %457 = tpu.matmul %456, %444, %cst_187 {dimension_numbers = #tpu.dot_dimension_numbers<[1], [0], [0], [1], [0, 0, 1, 1], [], []>} : vector<8x8xf32>, vector<8x8xf32>, vector<8x8xf32> -> vector<8x8xf32>
    %458 = vector.extract_strided_slice %415 {offsets = [0, 0], sizes = [8, 32], strides = [1, 1]} : vector<32x32xf32> to vector<8x32xf32>
    %cst_188 = arith.constant dense<0.000000e+00> : vector<8x32xf32>
    %459 = tpu.matmul %457, %458, %cst_188 {dimension_numbers = #tpu.dot_dimension_numbers<[1], [0], [0], [1], [0, 0, 1, 1], [], []>} : vector<8x8xf32>, vector<8x32xf32>, vector<8x32xf32> -> vector<8x32xf32>
    %460 = arith.addf %439, %459 : vector<8x32xf32>
    %461 = vector.extract_strided_slice %438 {offsets = [0, 8], sizes = [8, 8], strides = [1, 1]} : vector<8x96xf32> to vector<8x8xf32>
    %cst_189 = arith.constant 0.176776692 : f32
    %462 = vector.broadcast %cst_189 : f32 to vector<8x8xf32>
    %463 = arith.mulf %461, %462 : vector<8x8xf32>
    %464 = vector.extract_strided_slice %438 {offsets = [0, 40], sizes = [8, 8], strides = [1, 1]} : vector<8x96xf32> to vector<8x8xf32>
    %465 = vector.extract_strided_slice %438 {offsets = [0, 72], sizes = [8, 8], strides = [1, 1]} : vector<8x96xf32> to vector<8x8xf32>
    %cst_190 = arith.constant dense<0.000000e+00> : vector<8x8xf32>
    %466 = tpu.matmul %463, %464, %cst_190 {dimension_numbers = #tpu.dot_dimension_numbers<[1], [1], [0], [0], [0, 0, 1, 0], [], []>} : vector<8x8xf32>, vector<8x8xf32>, vector<8x8xf32> -> vector<8x8xf32>
    %cst_191 = arith.constant -1.000000e+30 : f32
    %467 = vector.broadcast %cst_191 : f32 to vector<8x8xf32>
    %468 = arith.select %11, %467, %466 : vector<8x8xi1>, vector<8x8xf32>
    %cst_192 = arith.constant dense<0xFF800000> : vector<8xf32>
    %469 = vector.multi_reduction <maximumf>, %468, %cst_192 [1] : vector<8x8xf32> to vector<8xf32>
    %470 = vector.shape_cast %469 : vector<8xf32> to vector<8x1xf32>
    %471 = vector.broadcast %470 : vector<8x1xf32> to vector<8x8xf32>
    %472 = arith.subf %468, %471 : vector<8x8xf32>
    %473 = math.exp %472 : vector<8x8xf32>
    %cst_193 = arith.constant dense<0.000000e+00> : vector<8xf32>
    %474 = vector.multi_reduction <add>, %473, %cst_193 [1] : vector<8x8xf32> to vector<8xf32>
    %475 = vector.shape_cast %474 : vector<8xf32> to vector<8x1xf32>
    %476 = vector.broadcast %475 : vector<8x1xf32> to vector<8x8xf32>
    %477 = arith.divf %473, %476 : vector<8x8xf32>
    %cst_194 = arith.constant dense<0.000000e+00> : vector<8x8xf32>
    %478 = tpu.matmul %477, %465, %cst_194 {dimension_numbers = #tpu.dot_dimension_numbers<[1], [0], [0], [1], [0, 0, 1, 1], [], []>} : vector<8x8xf32>, vector<8x8xf32>, vector<8x8xf32> -> vector<8x8xf32>
    %479 = vector.extract_strided_slice %415 {offsets = [8, 0], sizes = [8, 32], strides = [1, 1]} : vector<32x32xf32> to vector<8x32xf32>
    %cst_195 = arith.constant dense<0.000000e+00> : vector<8x32xf32>
    %480 = tpu.matmul %478, %479, %cst_195 {dimension_numbers = #tpu.dot_dimension_numbers<[1], [0], [0], [1], [0, 0, 1, 1], [], []>} : vector<8x8xf32>, vector<8x32xf32>, vector<8x32xf32> -> vector<8x32xf32>
    %481 = arith.addf %460, %480 : vector<8x32xf32>
    %482 = vector.extract_strided_slice %438 {offsets = [0, 16], sizes = [8, 8], strides = [1, 1]} : vector<8x96xf32> to vector<8x8xf32>
    %cst_196 = arith.constant 0.176776692 : f32
    %483 = vector.broadcast %cst_196 : f32 to vector<8x8xf32>
    %484 = arith.mulf %482, %483 : vector<8x8xf32>
    %485 = vector.extract_strided_slice %438 {offsets = [0, 48], sizes = [8, 8], strides = [1, 1]} : vector<8x96xf32> to vector<8x8xf32>
    %486 = vector.extract_strided_slice %438 {offsets = [0, 80], sizes = [8, 8], strides = [1, 1]} : vector<8x96xf32> to vector<8x8xf32>
    %cst_197 = arith.constant dense<0.000000e+00> : vector<8x8xf32>
    %487 = tpu.matmul %484, %485, %cst_197 {dimension_numbers = #tpu.dot_dimension_numbers<[1], [1], [0], [0], [0, 0, 1, 0], [], []>} : vector<8x8xf32>, vector<8x8xf32>, vector<8x8xf32> -> vector<8x8xf32>
    %cst_198 = arith.constant -1.000000e+30 : f32
    %488 = vector.broadcast %cst_198 : f32 to vector<8x8xf32>
    %489 = arith.select %11, %488, %487 : vector<8x8xi1>, vector<8x8xf32>
    %cst_199 = arith.constant dense<0xFF800000> : vector<8xf32>
    %490 = vector.multi_reduction <maximumf>, %489, %cst_199 [1] : vector<8x8xf32> to vector<8xf32>
    %491 = vector.shape_cast %490 : vector<8xf32> to vector<8x1xf32>
    %492 = vector.broadcast %491 : vector<8x1xf32> to vector<8x8xf32>
    %493 = arith.subf %489, %492 : vector<8x8xf32>
    %494 = math.exp %493 : vector<8x8xf32>
    %cst_200 = arith.constant dense<0.000000e+00> : vector<8xf32>
    %495 = vector.multi_reduction <add>, %494, %cst_200 [1] : vector<8x8xf32> to vector<8xf32>
    %496 = vector.shape_cast %495 : vector<8xf32> to vector<8x1xf32>
    %497 = vector.broadcast %496 : vector<8x1xf32> to vector<8x8xf32>
    %498 = arith.divf %494, %497 : vector<8x8xf32>
    %cst_201 = arith.constant dense<0.000000e+00> : vector<8x8xf32>
    %499 = tpu.matmul %498, %486, %cst_201 {dimension_numbers = #tpu.dot_dimension_numbers<[1], [0], [0], [1], [0, 0, 1, 1], [], []>} : vector<8x8xf32>, vector<8x8xf32>, vector<8x8xf32> -> vector<8x8xf32>
    %500 = vector.extract_strided_slice %415 {offsets = [16, 0], sizes = [8, 32], strides = [1, 1]} : vector<32x32xf32> to vector<8x32xf32>
    %cst_202 = arith.constant dense<0.000000e+00> : vector<8x32xf32>
    %501 = tpu.matmul %499, %500, %cst_202 {dimension_numbers = #tpu.dot_dimension_numbers<[1], [0], [0], [1], [0, 0, 1, 1], [], []>} : vector<8x8xf32>, vector<8x32xf32>, vector<8x32xf32> -> vector<8x32xf32>
    %502 = arith.addf %481, %501 : vector<8x32xf32>
    %503 = vector.extract_strided_slice %438 {offsets = [0, 24], sizes = [8, 8], strides = [1, 1]} : vector<8x96xf32> to vector<8x8xf32>
    %cst_203 = arith.constant 0.176776692 : f32
    %504 = vector.broadcast %cst_203 : f32 to vector<8x8xf32>
    %505 = arith.mulf %503, %504 : vector<8x8xf32>
    %506 = vector.extract_strided_slice %438 {offsets = [0, 56], sizes = [8, 8], strides = [1, 1]} : vector<8x96xf32> to vector<8x8xf32>
    %507 = vector.extract_strided_slice %438 {offsets = [0, 88], sizes = [8, 8], strides = [1, 1]} : vector<8x96xf32> to vector<8x8xf32>
    %cst_204 = arith.constant dense<0.000000e+00> : vector<8x8xf32>
    %508 = tpu.matmul %505, %506, %cst_204 {dimension_numbers = #tpu.dot_dimension_numbers<[1], [1], [0], [0], [0, 0, 1, 0], [], []>} : vector<8x8xf32>, vector<8x8xf32>, vector<8x8xf32> -> vector<8x8xf32>
    %cst_205 = arith.constant -1.000000e+30 : f32
    %509 = vector.broadcast %cst_205 : f32 to vector<8x8xf32>
    %510 = arith.select %11, %509, %508 : vector<8x8xi1>, vector<8x8xf32>
    %cst_206 = arith.constant dense<0xFF800000> : vector<8xf32>
    %511 = vector.multi_reduction <maximumf>, %510, %cst_206 [1] : vector<8x8xf32> to vector<8xf32>
    %512 = vector.shape_cast %511 : vector<8xf32> to vector<8x1xf32>
    %513 = vector.broadcast %512 : vector<8x1xf32> to vector<8x8xf32>
    %514 = arith.subf %510, %513 : vector<8x8xf32>
    %515 = math.exp %514 : vector<8x8xf32>
    %cst_207 = arith.constant dense<0.000000e+00> : vector<8xf32>
    %516 = vector.multi_reduction <add>, %515, %cst_207 [1] : vector<8x8xf32> to vector<8xf32>
    %517 = vector.shape_cast %516 : vector<8xf32> to vector<8x1xf32>
    %518 = vector.broadcast %517 : vector<8x1xf32> to vector<8x8xf32>
    %519 = arith.divf %515, %518 : vector<8x8xf32>
    %cst_208 = arith.constant dense<0.000000e+00> : vector<8x8xf32>
    %520 = tpu.matmul %519, %507, %cst_208 {dimension_numbers = #tpu.dot_dimension_numbers<[1], [0], [0], [1], [0, 0, 1, 1], [], []>} : vector<8x8xf32>, vector<8x8xf32>, vector<8x8xf32> -> vector<8x8xf32>
    %521 = vector.extract_strided_slice %415 {offsets = [24, 0], sizes = [8, 32], strides = [1, 1]} : vector<32x32xf32> to vector<8x32xf32>
    %cst_209 = arith.constant dense<0.000000e+00> : vector<8x32xf32>
    %522 = tpu.matmul %520, %521, %cst_209 {dimension_numbers = #tpu.dot_dimension_numbers<[1], [0], [0], [1], [0, 0, 1, 1], [], []>} : vector<8x8xf32>, vector<8x32xf32>, vector<8x32xf32> -> vector<8x32xf32>
    %523 = arith.addf %502, %522 : vector<8x32xf32>
    %524 = arith.addf %409, %523 : vector<8x32xf32>
    %525 = vector.extract_strided_slice %524 {offsets = [0, 0], sizes = [8, 16], strides = [1, 1]} : vector<8x32xf32> to vector<8x16xf32>
    %526 = vector.extract_strided_slice %524 {offsets = [0, 16], sizes = [8, 16], strides = [1, 1]} : vector<8x32xf32> to vector<8x16xf32>
    %cst_210 = arith.constant 0.000000e+00 : f32
    %527 = vector.broadcast %cst_210 : f32 to vector<1x16xf32>
    %528 = vector.extract_strided_slice %526 {offsets = [0, 0], sizes = [7, 16], strides = [1, 1]} : vector<8x16xf32> to vector<7x16xf32>
    %529 = tpu.concatenate %527, %528 in 0 : vector<1x16xf32>, vector<7x16xf32> -> vector<8x16xf32>
    %530 = tpu.concatenate %525, %529 in 1 : vector<8x16xf32>, vector<8x16xf32> -> vector<8x32xf32>
    %531 = arith.mulf %530, %530 : vector<8x32xf32>
    %cst_211 = arith.constant dense<0.000000e+00> : vector<8xf32>
    %532 = vector.multi_reduction <add>, %531, %cst_211 [1] : vector<8x32xf32> to vector<8xf32>
    %533 = vector.shape_cast %532 : vector<8xf32> to vector<8x1xf32>
    %534 = math.sqrt %533 : vector<8x1xf32>
    %cst_212 = arith.constant 9.99999996E-13 : f32
    %535 = vector.broadcast %cst_212 : f32 to vector<8x1xf32>
    %536 = arith.maximumf %534, %535 : vector<8x1xf32>
    %537 = vector.broadcast %536 : vector<8x1xf32> to vector<8x32xf32>
    %538 = arith.divf %530, %537 : vector<8x32xf32>
    %cst_213 = arith.constant 5.65685415 : f32
    %539 = vector.broadcast %cst_213 : f32 to vector<8x32xf32>
    %540 = arith.mulf %538, %539 : vector<8x32xf32>
    %541 = vector.broadcast %417 : vector<1x32xf32> to vector<8x32xf32>
    %542 = arith.mulf %540, %541 : vector<8x32xf32>
    %cst_214 = arith.constant dense<0.000000e+00> : vector<8x128xf32>
    %543 = tpu.matmul %542, %419, %cst_214 {dimension_numbers = #tpu.dot_dimension_numbers<[1], [0], [0], [1], [0, 0, 1, 1], [], []>} : vector<8x32xf32>, vector<32x128xf32>, vector<8x128xf32> -> vector<8x128xf32>
    %544 = vector.broadcast %421 : vector<1x128xf32> to vector<8x128xf32>
    %545 = arith.addf %543, %544 : vector<8x128xf32>
    %cst_215 = arith.constant 5.000000e-01 : f32
    %546 = vector.broadcast %cst_215 : f32 to vector<8x128xf32>
    %547 = arith.mulf %546, %545 : vector<8x128xf32>
    %cst_216 = arith.constant 0.707106769 : f32
    %548 = vector.broadcast %cst_216 : f32 to vector<8x128xf32>
    %549 = arith.mulf %545, %548 : vector<8x128xf32>
    %cst_217 = arith.constant 0.000000e+00 : f32
    %550 = vector.broadcast %cst_217 : f32 to vector<8x128xf32>
    %551 = arith.cmpf oge, %549, %550 : vector<8x128xf32>
    %cst_218 = arith.constant 1.000000e+00 : f32
    %cst_219 = arith.constant -1.000000e+00 : f32
    %552 = vector.broadcast %cst_218 : f32 to vector<8x128xf32>
    %553 = vector.broadcast %cst_219 : f32 to vector<8x128xf32>
    %554 = arith.select %551, %552, %553 : vector<8x128xi1>, vector<8x128xf32>
    %555 = math.absf %549 : vector<8x128xf32>
    %cst_220 = arith.constant 0.327591091 : f32
    %556 = vector.broadcast %cst_220 : f32 to vector<8x128xf32>
    %557 = arith.mulf %556, %555 : vector<8x128xf32>
    %cst_221 = arith.constant 1.000000e+00 : f32
    %558 = vector.broadcast %cst_221 : f32 to vector<8x128xf32>
    %559 = arith.addf %558, %557 : vector<8x128xf32>
    %cst_222 = arith.constant 1.000000e+00 : f32
    %560 = vector.broadcast %cst_222 : f32 to vector<8x128xf32>
    %561 = arith.divf %560, %559 : vector<8x128xf32>
    %cst_223 = arith.constant 1.06140542 : f32
    %562 = vector.broadcast %cst_223 : f32 to vector<8x128xf32>
    %563 = arith.mulf %562, %561 : vector<8x128xf32>
    %cst_224 = arith.constant -1.45315206 : f32
    %564 = vector.broadcast %cst_224 : f32 to vector<8x128xf32>
    %565 = arith.addf %563, %564 : vector<8x128xf32>
    %566 = arith.mulf %565, %561 : vector<8x128xf32>
    %cst_225 = arith.constant 1.42141378 : f32
    %567 = vector.broadcast %cst_225 : f32 to vector<8x128xf32>
    %568 = arith.addf %566, %567 : vector<8x128xf32>
    %569 = arith.mulf %568, %561 : vector<8x128xf32>
    %cst_226 = arith.constant -0.284496725 : f32
    %570 = vector.broadcast %cst_226 : f32 to vector<8x128xf32>
    %571 = arith.addf %569, %570 : vector<8x128xf32>
    %572 = arith.mulf %571, %561 : vector<8x128xf32>
    %cst_227 = arith.constant 0.254829586 : f32
    %573 = vector.broadcast %cst_227 : f32 to vector<8x128xf32>
    %574 = arith.addf %572, %573 : vector<8x128xf32>
    %575 = arith.mulf %574, %561 : vector<8x128xf32>
    %cst_228 = arith.constant 0.000000e+00 : f32
    %576 = vector.broadcast %cst_228 : f32 to vector<8x128xf32>
    %577 = arith.subf %576, %555 : vector<8x128xf32>
    %578 = arith.mulf %577, %555 : vector<8x128xf32>
    %579 = math.exp %578 : vector<8x128xf32>
    %580 = arith.mulf %575, %579 : vector<8x128xf32>
    %cst_229 = arith.constant 1.000000e+00 : f32
    %581 = vector.broadcast %cst_229 : f32 to vector<8x128xf32>
    %582 = arith.subf %581, %580 : vector<8x128xf32>
    %583 = arith.mulf %554, %582 : vector<8x128xf32>
    %cst_230 = arith.constant 1.000000e+00 : f32
    %584 = vector.broadcast %cst_230 : f32 to vector<8x128xf32>
    %585 = arith.addf %584, %583 : vector<8x128xf32>
    %586 = arith.mulf %547, %585 : vector<8x128xf32>
    %cst_231 = arith.constant dense<0.000000e+00> : vector<8x32xf32>
    %587 = tpu.matmul %586, %423, %cst_231 {dimension_numbers = #tpu.dot_dimension_numbers<[1], [0], [0], [1], [0, 0, 1, 1], [], []>} : vector<8x128xf32>, vector<128x32xf32>, vector<8x32xf32> -> vector<8x32xf32>
    %588 = vector.broadcast %425 : vector<1x32xf32> to vector<8x32xf32>
    %589 = arith.addf %587, %588 : vector<8x32xf32>
    %590 = arith.addf %589, %524 : vector<8x32xf32>
    %591 = tpu.concatenate %590, %372, %373 in 0 : vector<8x32xf32>, vector<8x32xf32>, vector<8x32xf32> -> vector<24x32xf32>
    %592 = arith.mulf %591, %591 : vector<24x32xf32>
    %cst_232 = arith.constant dense<0.000000e+00> : vector<24xf32>
    %593 = vector.multi_reduction <add>, %592, %cst_232 [1] : vector<24x32xf32> to vector<24xf32>
    %594 = vector.shape_cast %593 : vector<24xf32> to vector<24x1xf32>
    %595 = math.sqrt %594 : vector<24x1xf32>
    %cst_233 = arith.constant 9.99999996E-13 : f32
    %596 = vector.broadcast %cst_233 : f32 to vector<24x1xf32>
    %597 = arith.maximumf %595, %596 : vector<24x1xf32>
    %598 = vector.broadcast %597 : vector<24x1xf32> to vector<24x32xf32>
    %599 = arith.divf %591, %598 : vector<24x32xf32>
    %cst_234 = arith.constant 5.65685415 : f32
    %600 = vector.broadcast %cst_234 : f32 to vector<24x32xf32>
    %601 = arith.mulf %599, %600 : vector<24x32xf32>
    %602 = vector.broadcast %411 : vector<1x32xf32> to vector<24x32xf32>
    %603 = arith.mulf %601, %602 : vector<24x32xf32>
    %cst_235 = arith.constant dense<0.000000e+00> : vector<24x96xf32>
    %604 = tpu.matmul %603, %413, %cst_235 {dimension_numbers = #tpu.dot_dimension_numbers<[1], [0], [0], [1], [0, 0, 1, 1], [], []>} : vector<24x32xf32>, vector<32x96xf32>, vector<24x96xf32> -> vector<24x96xf32>
    %cst_236 = arith.constant 0.000000e+00 : f32
    %605 = vector.broadcast %cst_236 : f32 to vector<24x32xf32>
    %606 = vector.extract_strided_slice %604 {offsets = [0, 0], sizes = [24, 8], strides = [1, 1]} : vector<24x96xf32> to vector<24x8xf32>
    %cst_237 = arith.constant 0.176776692 : f32
    %607 = vector.broadcast %cst_237 : f32 to vector<24x8xf32>
    %608 = arith.mulf %606, %607 : vector<24x8xf32>
    %609 = vector.extract_strided_slice %604 {offsets = [0, 32], sizes = [24, 8], strides = [1, 1]} : vector<24x96xf32> to vector<24x8xf32>
    %610 = vector.extract_strided_slice %604 {offsets = [0, 64], sizes = [24, 8], strides = [1, 1]} : vector<24x96xf32> to vector<24x8xf32>
    %cst_238 = arith.constant dense<0.000000e+00> : vector<24x24xf32>
    %611 = tpu.matmul %608, %609, %cst_238 {dimension_numbers = #tpu.dot_dimension_numbers<[1], [1], [0], [0], [0, 0, 1, 0], [], []>} : vector<24x8xf32>, vector<24x8xf32>, vector<24x24xf32> -> vector<24x24xf32>
    %cst_239 = arith.constant -1.000000e+30 : f32
    %612 = vector.broadcast %cst_239 : f32 to vector<24x24xf32>
    %613 = arith.select %23, %612, %611 : vector<24x24xi1>, vector<24x24xf32>
    %cst_240 = arith.constant dense<0xFF800000> : vector<24xf32>
    %614 = vector.multi_reduction <maximumf>, %613, %cst_240 [1] : vector<24x24xf32> to vector<24xf32>
    %615 = vector.shape_cast %614 : vector<24xf32> to vector<24x1xf32>
    %616 = vector.broadcast %615 : vector<24x1xf32> to vector<24x24xf32>
    %617 = arith.subf %613, %616 : vector<24x24xf32>
    %618 = math.exp %617 : vector<24x24xf32>
    %cst_241 = arith.constant dense<0.000000e+00> : vector<24xf32>
    %619 = vector.multi_reduction <add>, %618, %cst_241 [1] : vector<24x24xf32> to vector<24xf32>
    %620 = vector.shape_cast %619 : vector<24xf32> to vector<24x1xf32>
    %621 = vector.broadcast %620 : vector<24x1xf32> to vector<24x24xf32>
    %622 = arith.divf %618, %621 : vector<24x24xf32>
    %cst_242 = arith.constant dense<0.000000e+00> : vector<24x8xf32>
    %623 = tpu.matmul %622, %610, %cst_242 {dimension_numbers = #tpu.dot_dimension_numbers<[1], [0], [0], [1], [0, 0, 1, 1], [], []>} : vector<24x24xf32>, vector<24x8xf32>, vector<24x8xf32> -> vector<24x8xf32>
    %624 = vector.extract_strided_slice %415 {offsets = [0, 0], sizes = [8, 32], strides = [1, 1]} : vector<32x32xf32> to vector<8x32xf32>
    %cst_243 = arith.constant dense<0.000000e+00> : vector<24x32xf32>
    %625 = tpu.matmul %623, %624, %cst_243 {dimension_numbers = #tpu.dot_dimension_numbers<[1], [0], [0], [1], [0, 0, 1, 1], [], []>} : vector<24x8xf32>, vector<8x32xf32>, vector<24x32xf32> -> vector<24x32xf32>
    %626 = arith.addf %605, %625 : vector<24x32xf32>
    %627 = vector.extract_strided_slice %604 {offsets = [0, 8], sizes = [24, 8], strides = [1, 1]} : vector<24x96xf32> to vector<24x8xf32>
    %cst_244 = arith.constant 0.176776692 : f32
    %628 = vector.broadcast %cst_244 : f32 to vector<24x8xf32>
    %629 = arith.mulf %627, %628 : vector<24x8xf32>
    %630 = vector.extract_strided_slice %604 {offsets = [0, 40], sizes = [24, 8], strides = [1, 1]} : vector<24x96xf32> to vector<24x8xf32>
    %631 = vector.extract_strided_slice %604 {offsets = [0, 72], sizes = [24, 8], strides = [1, 1]} : vector<24x96xf32> to vector<24x8xf32>
    %cst_245 = arith.constant dense<0.000000e+00> : vector<24x24xf32>
    %632 = tpu.matmul %629, %630, %cst_245 {dimension_numbers = #tpu.dot_dimension_numbers<[1], [1], [0], [0], [0, 0, 1, 0], [], []>} : vector<24x8xf32>, vector<24x8xf32>, vector<24x24xf32> -> vector<24x24xf32>
    %cst_246 = arith.constant -1.000000e+30 : f32
    %633 = vector.broadcast %cst_246 : f32 to vector<24x24xf32>
    %634 = arith.select %23, %633, %632 : vector<24x24xi1>, vector<24x24xf32>
    %cst_247 = arith.constant dense<0xFF800000> : vector<24xf32>
    %635 = vector.multi_reduction <maximumf>, %634, %cst_247 [1] : vector<24x24xf32> to vector<24xf32>
    %636 = vector.shape_cast %635 : vector<24xf32> to vector<24x1xf32>
    %637 = vector.broadcast %636 : vector<24x1xf32> to vector<24x24xf32>
    %638 = arith.subf %634, %637 : vector<24x24xf32>
    %639 = math.exp %638 : vector<24x24xf32>
    %cst_248 = arith.constant dense<0.000000e+00> : vector<24xf32>
    %640 = vector.multi_reduction <add>, %639, %cst_248 [1] : vector<24x24xf32> to vector<24xf32>
    %641 = vector.shape_cast %640 : vector<24xf32> to vector<24x1xf32>
    %642 = vector.broadcast %641 : vector<24x1xf32> to vector<24x24xf32>
    %643 = arith.divf %639, %642 : vector<24x24xf32>
    %cst_249 = arith.constant dense<0.000000e+00> : vector<24x8xf32>
    %644 = tpu.matmul %643, %631, %cst_249 {dimension_numbers = #tpu.dot_dimension_numbers<[1], [0], [0], [1], [0, 0, 1, 1], [], []>} : vector<24x24xf32>, vector<24x8xf32>, vector<24x8xf32> -> vector<24x8xf32>
    %645 = vector.extract_strided_slice %415 {offsets = [8, 0], sizes = [8, 32], strides = [1, 1]} : vector<32x32xf32> to vector<8x32xf32>
    %cst_250 = arith.constant dense<0.000000e+00> : vector<24x32xf32>
    %646 = tpu.matmul %644, %645, %cst_250 {dimension_numbers = #tpu.dot_dimension_numbers<[1], [0], [0], [1], [0, 0, 1, 1], [], []>} : vector<24x8xf32>, vector<8x32xf32>, vector<24x32xf32> -> vector<24x32xf32>
    %647 = arith.addf %626, %646 : vector<24x32xf32>
    %648 = vector.extract_strided_slice %604 {offsets = [0, 16], sizes = [24, 8], strides = [1, 1]} : vector<24x96xf32> to vector<24x8xf32>
    %cst_251 = arith.constant 0.176776692 : f32
    %649 = vector.broadcast %cst_251 : f32 to vector<24x8xf32>
    %650 = arith.mulf %648, %649 : vector<24x8xf32>
    %651 = vector.extract_strided_slice %604 {offsets = [0, 48], sizes = [24, 8], strides = [1, 1]} : vector<24x96xf32> to vector<24x8xf32>
    %652 = vector.extract_strided_slice %604 {offsets = [0, 80], sizes = [24, 8], strides = [1, 1]} : vector<24x96xf32> to vector<24x8xf32>
    %cst_252 = arith.constant dense<0.000000e+00> : vector<24x24xf32>
    %653 = tpu.matmul %650, %651, %cst_252 {dimension_numbers = #tpu.dot_dimension_numbers<[1], [1], [0], [0], [0, 0, 1, 0], [], []>} : vector<24x8xf32>, vector<24x8xf32>, vector<24x24xf32> -> vector<24x24xf32>
    %cst_253 = arith.constant -1.000000e+30 : f32
    %654 = vector.broadcast %cst_253 : f32 to vector<24x24xf32>
    %655 = arith.select %23, %654, %653 : vector<24x24xi1>, vector<24x24xf32>
    %cst_254 = arith.constant dense<0xFF800000> : vector<24xf32>
    %656 = vector.multi_reduction <maximumf>, %655, %cst_254 [1] : vector<24x24xf32> to vector<24xf32>
    %657 = vector.shape_cast %656 : vector<24xf32> to vector<24x1xf32>
    %658 = vector.broadcast %657 : vector<24x1xf32> to vector<24x24xf32>
    %659 = arith.subf %655, %658 : vector<24x24xf32>
    %660 = math.exp %659 : vector<24x24xf32>
    %cst_255 = arith.constant dense<0.000000e+00> : vector<24xf32>
    %661 = vector.multi_reduction <add>, %660, %cst_255 [1] : vector<24x24xf32> to vector<24xf32>
    %662 = vector.shape_cast %661 : vector<24xf32> to vector<24x1xf32>
    %663 = vector.broadcast %662 : vector<24x1xf32> to vector<24x24xf32>
    %664 = arith.divf %660, %663 : vector<24x24xf32>
    %cst_256 = arith.constant dense<0.000000e+00> : vector<24x8xf32>
    %665 = tpu.matmul %664, %652, %cst_256 {dimension_numbers = #tpu.dot_dimension_numbers<[1], [0], [0], [1], [0, 0, 1, 1], [], []>} : vector<24x24xf32>, vector<24x8xf32>, vector<24x8xf32> -> vector<24x8xf32>
    %666 = vector.extract_strided_slice %415 {offsets = [16, 0], sizes = [8, 32], strides = [1, 1]} : vector<32x32xf32> to vector<8x32xf32>
    %cst_257 = arith.constant dense<0.000000e+00> : vector<24x32xf32>
    %667 = tpu.matmul %665, %666, %cst_257 {dimension_numbers = #tpu.dot_dimension_numbers<[1], [0], [0], [1], [0, 0, 1, 1], [], []>} : vector<24x8xf32>, vector<8x32xf32>, vector<24x32xf32> -> vector<24x32xf32>
    %668 = arith.addf %647, %667 : vector<24x32xf32>
    %669 = vector.extract_strided_slice %604 {offsets = [0, 24], sizes = [24, 8], strides = [1, 1]} : vector<24x96xf32> to vector<24x8xf32>
    %cst_258 = arith.constant 0.176776692 : f32
    %670 = vector.broadcast %cst_258 : f32 to vector<24x8xf32>
    %671 = arith.mulf %669, %670 : vector<24x8xf32>
    %672 = vector.extract_strided_slice %604 {offsets = [0, 56], sizes = [24, 8], strides = [1, 1]} : vector<24x96xf32> to vector<24x8xf32>
    %673 = vector.extract_strided_slice %604 {offsets = [0, 88], sizes = [24, 8], strides = [1, 1]} : vector<24x96xf32> to vector<24x8xf32>
    %cst_259 = arith.constant dense<0.000000e+00> : vector<24x24xf32>
    %674 = tpu.matmul %671, %672, %cst_259 {dimension_numbers = #tpu.dot_dimension_numbers<[1], [1], [0], [0], [0, 0, 1, 0], [], []>} : vector<24x8xf32>, vector<24x8xf32>, vector<24x24xf32> -> vector<24x24xf32>
    %cst_260 = arith.constant -1.000000e+30 : f32
    %675 = vector.broadcast %cst_260 : f32 to vector<24x24xf32>
    %676 = arith.select %23, %675, %674 : vector<24x24xi1>, vector<24x24xf32>
    %cst_261 = arith.constant dense<0xFF800000> : vector<24xf32>
    %677 = vector.multi_reduction <maximumf>, %676, %cst_261 [1] : vector<24x24xf32> to vector<24xf32>
    %678 = vector.shape_cast %677 : vector<24xf32> to vector<24x1xf32>
    %679 = vector.broadcast %678 : vector<24x1xf32> to vector<24x24xf32>
    %680 = arith.subf %676, %679 : vector<24x24xf32>
    %681 = math.exp %680 : vector<24x24xf32>
    %cst_262 = arith.constant dense<0.000000e+00> : vector<24xf32>
    %682 = vector.multi_reduction <add>, %681, %cst_262 [1] : vector<24x24xf32> to vector<24xf32>
    %683 = vector.shape_cast %682 : vector<24xf32> to vector<24x1xf32>
    %684 = vector.broadcast %683 : vector<24x1xf32> to vector<24x24xf32>
    %685 = arith.divf %681, %684 : vector<24x24xf32>
    %cst_263 = arith.constant dense<0.000000e+00> : vector<24x8xf32>
    %686 = tpu.matmul %685, %673, %cst_263 {dimension_numbers = #tpu.dot_dimension_numbers<[1], [0], [0], [1], [0, 0, 1, 1], [], []>} : vector<24x24xf32>, vector<24x8xf32>, vector<24x8xf32> -> vector<24x8xf32>
    %687 = vector.extract_strided_slice %415 {offsets = [24, 0], sizes = [8, 32], strides = [1, 1]} : vector<32x32xf32> to vector<8x32xf32>
    %cst_264 = arith.constant dense<0.000000e+00> : vector<24x32xf32>
    %688 = tpu.matmul %686, %687, %cst_264 {dimension_numbers = #tpu.dot_dimension_numbers<[1], [0], [0], [1], [0, 0, 1, 1], [], []>} : vector<24x8xf32>, vector<8x32xf32>, vector<24x32xf32> -> vector<24x32xf32>
    %689 = arith.addf %668, %688 : vector<24x32xf32>
    %690 = arith.addf %591, %689 : vector<24x32xf32>
    %691 = vector.extract_strided_slice %690 {offsets = [0, 0], sizes = [24, 16], strides = [1, 1]} : vector<24x32xf32> to vector<24x16xf32>
    %692 = vector.extract_strided_slice %690 {offsets = [0, 16], sizes = [24, 16], strides = [1, 1]} : vector<24x32xf32> to vector<24x16xf32>
    %cst_265 = arith.constant 0.000000e+00 : f32
    %693 = vector.broadcast %cst_265 : f32 to vector<8x16xf32>
    %694 = vector.extract_strided_slice %692 {offsets = [0, 0], sizes = [16, 16], strides = [1, 1]} : vector<24x16xf32> to vector<16x16xf32>
    %695 = tpu.concatenate %693, %694 in 0 : vector<8x16xf32>, vector<16x16xf32> -> vector<24x16xf32>
    %696 = tpu.concatenate %691, %695 in 1 : vector<24x16xf32>, vector<24x16xf32> -> vector<24x32xf32>
    %697 = arith.mulf %696, %696 : vector<24x32xf32>
    %cst_266 = arith.constant dense<0.000000e+00> : vector<24xf32>
    %698 = vector.multi_reduction <add>, %697, %cst_266 [1] : vector<24x32xf32> to vector<24xf32>
    %699 = vector.shape_cast %698 : vector<24xf32> to vector<24x1xf32>
    %700 = math.sqrt %699 : vector<24x1xf32>
    %cst_267 = arith.constant 9.99999996E-13 : f32
    %701 = vector.broadcast %cst_267 : f32 to vector<24x1xf32>
    %702 = arith.maximumf %700, %701 : vector<24x1xf32>
    %703 = vector.broadcast %702 : vector<24x1xf32> to vector<24x32xf32>
    %704 = arith.divf %696, %703 : vector<24x32xf32>
    %cst_268 = arith.constant 5.65685415 : f32
    %705 = vector.broadcast %cst_268 : f32 to vector<24x32xf32>
    %706 = arith.mulf %704, %705 : vector<24x32xf32>
    %707 = vector.broadcast %417 : vector<1x32xf32> to vector<24x32xf32>
    %708 = arith.mulf %706, %707 : vector<24x32xf32>
    %cst_269 = arith.constant dense<0.000000e+00> : vector<24x128xf32>
    %709 = tpu.matmul %708, %419, %cst_269 {dimension_numbers = #tpu.dot_dimension_numbers<[1], [0], [0], [1], [0, 0, 1, 1], [], []>} : vector<24x32xf32>, vector<32x128xf32>, vector<24x128xf32> -> vector<24x128xf32>
    %710 = vector.broadcast %421 : vector<1x128xf32> to vector<24x128xf32>
    %711 = arith.addf %709, %710 : vector<24x128xf32>
    %cst_270 = arith.constant 5.000000e-01 : f32
    %712 = vector.broadcast %cst_270 : f32 to vector<24x128xf32>
    %713 = arith.mulf %712, %711 : vector<24x128xf32>
    %cst_271 = arith.constant 0.707106769 : f32
    %714 = vector.broadcast %cst_271 : f32 to vector<24x128xf32>
    %715 = arith.mulf %711, %714 : vector<24x128xf32>
    %cst_272 = arith.constant 0.000000e+00 : f32
    %716 = vector.broadcast %cst_272 : f32 to vector<24x128xf32>
    %717 = arith.cmpf oge, %715, %716 : vector<24x128xf32>
    %cst_273 = arith.constant 1.000000e+00 : f32
    %cst_274 = arith.constant -1.000000e+00 : f32
    %718 = vector.broadcast %cst_273 : f32 to vector<24x128xf32>
    %719 = vector.broadcast %cst_274 : f32 to vector<24x128xf32>
    %720 = arith.select %717, %718, %719 : vector<24x128xi1>, vector<24x128xf32>
    %721 = math.absf %715 : vector<24x128xf32>
    %cst_275 = arith.constant 0.327591091 : f32
    %722 = vector.broadcast %cst_275 : f32 to vector<24x128xf32>
    %723 = arith.mulf %722, %721 : vector<24x128xf32>
    %cst_276 = arith.constant 1.000000e+00 : f32
    %724 = vector.broadcast %cst_276 : f32 to vector<24x128xf32>
    %725 = arith.addf %724, %723 : vector<24x128xf32>
    %cst_277 = arith.constant 1.000000e+00 : f32
    %726 = vector.broadcast %cst_277 : f32 to vector<24x128xf32>
    %727 = arith.divf %726, %725 : vector<24x128xf32>
    %cst_278 = arith.constant 1.06140542 : f32
    %728 = vector.broadcast %cst_278 : f32 to vector<24x128xf32>
    %729 = arith.mulf %728, %727 : vector<24x128xf32>
    %cst_279 = arith.constant -1.45315206 : f32
    %730 = vector.broadcast %cst_279 : f32 to vector<24x128xf32>
    %731 = arith.addf %729, %730 : vector<24x128xf32>
    %732 = arith.mulf %731, %727 : vector<24x128xf32>
    %cst_280 = arith.constant 1.42141378 : f32
    %733 = vector.broadcast %cst_280 : f32 to vector<24x128xf32>
    %734 = arith.addf %732, %733 : vector<24x128xf32>
    %735 = arith.mulf %734, %727 : vector<24x128xf32>
    %cst_281 = arith.constant -0.284496725 : f32
    %736 = vector.broadcast %cst_281 : f32 to vector<24x128xf32>
    %737 = arith.addf %735, %736 : vector<24x128xf32>
    %738 = arith.mulf %737, %727 : vector<24x128xf32>
    %cst_282 = arith.constant 0.254829586 : f32
    %739 = vector.broadcast %cst_282 : f32 to vector<24x128xf32>
    %740 = arith.addf %738, %739 : vector<24x128xf32>
    %741 = arith.mulf %740, %727 : vector<24x128xf32>
    %cst_283 = arith.constant 0.000000e+00 : f32
    %742 = vector.broadcast %cst_283 : f32 to vector<24x128xf32>
    %743 = arith.subf %742, %721 : vector<24x128xf32>
    %744 = arith.mulf %743, %721 : vector<24x128xf32>
    %745 = math.exp %744 : vector<24x128xf32>
    %746 = arith.mulf %741, %745 : vector<24x128xf32>
    %cst_284 = arith.constant 1.000000e+00 : f32
    %747 = vector.broadcast %cst_284 : f32 to vector<24x128xf32>
    %748 = arith.subf %747, %746 : vector<24x128xf32>
    %749 = arith.mulf %720, %748 : vector<24x128xf32>
    %cst_285 = arith.constant 1.000000e+00 : f32
    %750 = vector.broadcast %cst_285 : f32 to vector<24x128xf32>
    %751 = arith.addf %750, %749 : vector<24x128xf32>
    %752 = arith.mulf %713, %751 : vector<24x128xf32>
    %cst_286 = arith.constant dense<0.000000e+00> : vector<24x32xf32>
    %753 = tpu.matmul %752, %423, %cst_286 {dimension_numbers = #tpu.dot_dimension_numbers<[1], [0], [0], [1], [0, 0, 1, 1], [], []>} : vector<24x128xf32>, vector<128x32xf32>, vector<24x32xf32> -> vector<24x32xf32>
    %754 = vector.broadcast %425 : vector<1x32xf32> to vector<24x32xf32>
    %755 = arith.addf %753, %754 : vector<24x32xf32>
    %756 = arith.addf %755, %690 : vector<24x32xf32>
    %757 = vector.extract_strided_slice %756 {offsets = [0, 0], sizes = [8, 32], strides = [1, 1]} : vector<24x32xf32> to vector<8x32xf32>
    %758 = vector.extract_strided_slice %756 {offsets = [8, 0], sizes = [8, 32], strides = [1, 1]} : vector<24x32xf32> to vector<8x32xf32>
    %759 = vector.extract_strided_slice %756 {offsets = [16, 0], sizes = [8, 32], strides = [1, 1]} : vector<24x32xf32> to vector<8x32xf32>
    %cst_287 = arith.constant 0.000000e+00 : f32
    %760 = vector.broadcast %cst_287 : f32 to vector<1x32xf32>
    %761 = vector.extract_strided_slice %759 {offsets = [0, 0], sizes = [7, 32], strides = [1, 1]} : vector<8x32xf32> to vector<7x32xf32>
    %762 = tpu.concatenate %760, %761 in 0 : vector<1x32xf32>, vector<7x32xf32> -> vector<8x32xf32>
    %c0_288 = arith.constant 0 : index
    %c0_289 = arith.constant 0 : index
    %763 = vector.load %arg11[%c0_288, %c0_289] : memref<1x32xf32, #tpu.memory_space<vmem>>, vector<1x32xf32>
    %764 = arith.mulf %757, %757 : vector<8x32xf32>
    %cst_290 = arith.constant dense<0.000000e+00> : vector<8xf32>
    %765 = vector.multi_reduction <add>, %764, %cst_290 [1] : vector<8x32xf32> to vector<8xf32>
    %766 = vector.shape_cast %765 : vector<8xf32> to vector<8x1xf32>
    %767 = math.sqrt %766 : vector<8x1xf32>
    %cst_291 = arith.constant 9.99999996E-13 : f32
    %768 = vector.broadcast %cst_291 : f32 to vector<8x1xf32>
    %769 = arith.maximumf %767, %768 : vector<8x1xf32>
    %770 = vector.broadcast %769 : vector<8x1xf32> to vector<8x32xf32>
    %771 = arith.divf %757, %770 : vector<8x32xf32>
    %cst_292 = arith.constant 5.65685415 : f32
    %772 = vector.broadcast %cst_292 : f32 to vector<8x32xf32>
    %773 = arith.mulf %771, %772 : vector<8x32xf32>
    %774 = vector.broadcast %763 : vector<1x32xf32> to vector<8x32xf32>
    %775 = arith.mulf %773, %774 : vector<8x32xf32>
    %c0_293 = arith.constant 0 : index
    %c0_294 = arith.constant 0 : index
    %776 = vector.load %arg11[%c0_293, %c0_294] : memref<1x32xf32, #tpu.memory_space<vmem>>, vector<1x32xf32>
    %777 = arith.mulf %762, %762 : vector<8x32xf32>
    %cst_295 = arith.constant dense<0.000000e+00> : vector<8xf32>
    %778 = vector.multi_reduction <add>, %777, %cst_295 [1] : vector<8x32xf32> to vector<8xf32>
    %779 = vector.shape_cast %778 : vector<8xf32> to vector<8x1xf32>
    %780 = math.sqrt %779 : vector<8x1xf32>
    %cst_296 = arith.constant 9.99999996E-13 : f32
    %781 = vector.broadcast %cst_296 : f32 to vector<8x1xf32>
    %782 = arith.maximumf %780, %781 : vector<8x1xf32>
    %783 = vector.broadcast %782 : vector<8x1xf32> to vector<8x32xf32>
    %784 = arith.divf %762, %783 : vector<8x32xf32>
    %cst_297 = arith.constant 5.65685415 : f32
    %785 = vector.broadcast %cst_297 : f32 to vector<8x32xf32>
    %786 = arith.mulf %784, %785 : vector<8x32xf32>
    %787 = vector.broadcast %776 : vector<1x32xf32> to vector<8x32xf32>
    %788 = arith.mulf %786, %787 : vector<8x32xf32>
    %789 = tpu.concatenate %775, %788 in 1 : vector<8x32xf32>, vector<8x32xf32> -> vector<8x64xf32>
    %c0_298 = arith.constant 0 : index
    %c0_299 = arith.constant 0 : index
    %790 = vector.load %arg12[%c0_298, %c0_299] : memref<64x32xf32, #tpu.memory_space<vmem>>, vector<64x32xf32>
    %cst_300 = arith.constant dense<0.000000e+00> : vector<8x32xf32>
    %791 = tpu.matmul %789, %790, %cst_300 {dimension_numbers = #tpu.dot_dimension_numbers<[1], [0], [0], [1], [0, 0, 1, 1], [], []>} : vector<8x64xf32>, vector<64x32xf32>, vector<8x32xf32> -> vector<8x32xf32>
    %c0_301 = arith.constant 0 : index
    %c0_302 = arith.constant 0 : index
    %792 = vector.load %arg13[%c0_301, %c0_302] : memref<1x32xf32, #tpu.memory_space<vmem>>, vector<1x32xf32>
    %793 = vector.broadcast %792 : vector<1x32xf32> to vector<8x32xf32>
    %794 = arith.addf %791, %793 : vector<8x32xf32>
    %795 = arith.addf %757, %794 : vector<8x32xf32>
    %796 = tpu.concatenate %795, %758, %759 in 0 : vector<8x32xf32>, vector<8x32xf32>, vector<8x32xf32> -> vector<24x32xf32>
    %c0_303 = arith.constant 0 : index
    %c0_304 = arith.constant 0 : index
    %797 = vector.load %arg14[%c0_303, %c0_304] : memref<1x32xf32, #tpu.memory_space<vmem>>, vector<1x32xf32>
    %798 = arith.mulf %796, %796 : vector<24x32xf32>
    %cst_305 = arith.constant dense<0.000000e+00> : vector<24xf32>
    %799 = vector.multi_reduction <add>, %798, %cst_305 [1] : vector<24x32xf32> to vector<24xf32>
    %800 = vector.shape_cast %799 : vector<24xf32> to vector<24x1xf32>
    %801 = math.sqrt %800 : vector<24x1xf32>
    %cst_306 = arith.constant 9.99999996E-13 : f32
    %802 = vector.broadcast %cst_306 : f32 to vector<24x1xf32>
    %803 = arith.maximumf %801, %802 : vector<24x1xf32>
    %804 = vector.broadcast %803 : vector<24x1xf32> to vector<24x32xf32>
    %805 = arith.divf %796, %804 : vector<24x32xf32>
    %cst_307 = arith.constant 5.65685415 : f32
    %806 = vector.broadcast %cst_307 : f32 to vector<24x32xf32>
    %807 = arith.mulf %805, %806 : vector<24x32xf32>
    %808 = vector.broadcast %797 : vector<1x32xf32> to vector<24x32xf32>
    %809 = arith.mulf %807, %808 : vector<24x32xf32>
    %c0_308 = arith.constant 0 : index
    %c0_309 = arith.constant 0 : index
    %810 = vector.load %arg15[%c0_308, %c0_309] : memref<32x128xf32, #tpu.memory_space<vmem>>, vector<32x128xf32>
    %cst_310 = arith.constant dense<0.000000e+00> : vector<24x128xf32>
    %811 = tpu.matmul %809, %810, %cst_310 {dimension_numbers = #tpu.dot_dimension_numbers<[1], [0], [0], [1], [0, 0, 1, 1], [], []>} : vector<24x32xf32>, vector<32x128xf32>, vector<24x128xf32> -> vector<24x128xf32>
    %c0_311 = arith.constant 0 : index
    %c0_312 = arith.constant 0 : index
    %c0_313 = arith.constant 0 : index
    %812 = vector.load %arg16[%c0_311, %c0_312, %c0_313] : memref<1x24x128xf32, #tpu.memory_space<vmem>>, vector<1x24x128xf32>
    %813 = vector.shape_cast %812 : vector<1x24x128xf32> to vector<24x128xf32>
    %814 = vector.shape_cast %811 : vector<24x128xf32> to vector<1x24x128xf32>
    tpu.vector_store %arg16[%c0_311, %c0_312, %c0_313], %814 {strides = array<i32>} : memref<1x24x128xf32, #tpu.memory_space<vmem>>, vector<1x24x128xf32>,
    return
  }
  func.func @transform_0(%arg0: i32) -> (i32, i32, i32) {
    %c0_i32 = arith.constant 0 : i32
    %c0_i32_0 = arith.constant 0 : i32
    %c0_i32_1 = arith.constant 0 : i32
    return %arg0, %c0_i32, %c0_i32_0 : i32, i32, i32
  }
  func.func @transform_1(%arg0: i32) -> (i32, i32) {
    %c0_i32 = arith.constant 0 : i32
    %c0_i32_0 = arith.constant 0 : i32
    %c0_i32_1 = arith.constant 0 : i32
    return %c0_i32, %c0_i32_0 : i32, i32
  }
  func.func @transform_2(%arg0: i32) -> (i32, i32, i32) {
    %c0_i32 = arith.constant 0 : i32
    %c0_i32_0 = arith.constant 0 : i32
    %c0_i32_1 = arith.constant 0 : i32
    %c0_i32_2 = arith.constant 0 : i32
    return %c0_i32, %c0_i32_0, %c0_i32_1 : i32, i32, i32
  }
  func.func @transform_3(%arg0: i32) -> (i32, i32, i32) {
    %c0_i32 = arith.constant 0 : i32
    %c0_i32_0 = arith.constant 0 : i32
    %c0_i32_1 = arith.constant 0 : i32
    %c0_i32_2 = arith.constant 0 : i32
    return %c0_i32, %c0_i32_0, %c0_i32_1 : i32, i32, i32
  }
  func.func @transform_4(%arg0: i32) -> (i32, i32, i32) {
    %c0_i32 = arith.constant 0 : i32
    %c0_i32_0 = arith.constant 0 : i32
    %c0_i32_1 = arith.constant 0 : i32
    %c0_i32_2 = arith.constant 0 : i32
    return %c0_i32, %c0_i32_0, %c0_i32_1 : i32, i32, i32
  }
  func.func @transform_5(%arg0: i32) -> (i32, i32, i32) {
    %c0_i32 = arith.constant 0 : i32
    %c0_i32_0 = arith.constant 0 : i32
    %c0_i32_1 = arith.constant 0 : i32
    %c0_i32_2 = arith.constant 0 : i32
    return %c0_i32, %c0_i32_0, %c0_i32_1 : i32, i32, i32
  }
  func.func @transform_6(%arg0: i32) -> (i32, i32, i32) {
    %c0_i32 = arith.constant 0 : i32
    %c0_i32_0 = arith.constant 0 : i32
    %c0_i32_1 = arith.constant 0 : i32
    %c0_i32_2 = arith.constant 0 : i32
    return %c0_i32, %c0_i32_0, %c0_i32_1 : i32, i32, i32
  }
  func.func @transform_7(%arg0: i32) -> (i32, i32, i32) {
    %c0_i32 = arith.constant 0 : i32
    %c0_i32_0 = arith.constant 0 : i32
    %c0_i32_1 = arith.constant 0 : i32
    %c0_i32_2 = arith.constant 0 : i32
    return %c0_i32, %c0_i32_0, %c0_i32_1 : i32, i32, i32
  }
  func.func @transform_8(%arg0: i32) -> (i32, i32, i32) {
    %c0_i32 = arith.constant 0 : i32
    %c0_i32_0 = arith.constant 0 : i32
    %c0_i32_1 = arith.constant 0 : i32
    %c0_i32_2 = arith.constant 0 : i32
    return %c0_i32, %c0_i32_0, %c0_i32_1 : i32, i32, i32
  }
  func.func @transform_9(%arg0: i32) -> (i32, i32, i32) {
    %c0_i32 = arith.constant 0 : i32
    %c0_i32_0 = arith.constant 0 : i32
    %c0_i32_1 = arith.constant 0 : i32
    %c0_i32_2 = arith.constant 0 : i32
    return %c0_i32, %c0_i32_0, %c0_i32_1 : i32, i32, i32
  }
  func.func @transform_10(%arg0: i32) -> (i32, i32) {
    %c0_i32 = arith.constant 0 : i32
    %c0_i32_0 = arith.constant 0 : i32
    %c0_i32_1 = arith.constant 0 : i32
    return %c0_i32, %c0_i32_0 : i32, i32
  }
  func.func @transform_11(%arg0: i32) -> (i32, i32) {
    %c0_i32 = arith.constant 0 : i32
    %c0_i32_0 = arith.constant 0 : i32
    %c0_i32_1 = arith.constant 0 : i32
    return %c0_i32, %c0_i32_0 : i32, i32
  }
  func.func @transform_12(%arg0: i32) -> (i32, i32) {
    %c0_i32 = arith.constant 0 : i32
    %c0_i32_0 = arith.constant 0 : i32
    %c0_i32_1 = arith.constant 0 : i32
    return %c0_i32, %c0_i32_0 : i32, i32
  }
  func.func @transform_13(%arg0: i32) -> (i32, i32) {
    %c0_i32 = arith.constant 0 : i32
    %c0_i32_0 = arith.constant 0 : i32
    %c0_i32_1 = arith.constant 0 : i32
    return %c0_i32, %c0_i32_0 : i32, i32
  }
  func.func @transform_14(%arg0: i32) -> (i32, i32) {
    %c0_i32 = arith.constant 0 : i32
    %c0_i32_0 = arith.constant 0 : i32
    %c0_i32_1 = arith.constant 0 : i32
    return %c0_i32, %c0_i32_0 : i32, i32
  }
  func.func @transform_15(%arg0: i32) -> (i32, i32, i32) {
    %c0_i32 = arith.constant 0 : i32
    %c0_i32_0 = arith.constant 0 : i32
    %c0_i32_1 = arith.constant 0 : i32
    return %arg0, %c0_i32, %c0_i32_0 : i32, i32, i32
  }
}

</mosaic_0001>

<llo_original>
// kernel: pause_transformer_forward.1
$region0: #{pause_transformer_forward.1}
  #allocation0 [shape = 'u32[]', space=smem, size = 0x4, offset = 0x4, fixed_abs, tag = 'smem constant byte address 0x4 - core index']
  #allocation1 [shape = 'u32[144,128]{1,0:T(1,128)}', space=vmem, size = 0x12000, scoped, tag = 'internal scratch']
  %s0 = inlined_call_operand.vmem [shape: f32[2,8,32], index: 0, kind: input, shape index: {}]
  %s1 = inlined_call_operand.vmem [shape: f32[2,32], index: 1, kind: input, shape index: {}]
  %s2 = inlined_call_operand.vmem [shape: f32[2,1,32], index: 2, kind: input, shape index: {}]
  %s3 = inlined_call_operand.vmem [shape: f32[2,32,96], index: 3, kind: input, shape index: {}]
  %s4 = inlined_call_operand.vmem [shape: f32[2,32,32], index: 4, kind: input, shape index: {}]
  %s5 = inlined_call_operand.vmem [shape: f32[2,1,32], index: 5, kind: input, shape index: {}]
  %s6 = inlined_call_operand.vmem [shape: f32[2,32,128], index: 6, kind: input, shape index: {}]
  %s7 = inlined_call_operand.vmem [shape: f32[2,1,128], index: 7, kind: input, shape index: {}]
  %s8 = inlined_call_operand.vmem [shape: f32[2,128,32], index: 8, kind: input, shape index: {}]
  %s9 = inlined_call_operand.vmem [shape: f32[2,1,32], index: 9, kind: input, shape index: {}]
  %s10 = inlined_call_operand.vmem [shape: f32[1,32], index: 10, kind: input, shape index: {}]
  %s11 = inlined_call_operand.vmem [shape: f32[64,32], index: 11, kind: input, shape index: {}]
  %s12 = inlined_call_operand.vmem [shape: f32[1,32], index: 12, kind: input, shape index: {}]
  %s13 = inlined_call_operand.vmem [shape: f32[1,32], index: 13, kind: input, shape index: {}]
  %s14 = inlined_call_operand.vmem [shape: f32[32,128], index: 14, kind: input, shape index: {}]
  %s15 = inlined_call_operand.hbm [shape: f32[2,24,128], index: 15, kind: output, shape index: {}]
  %s16 = sld [smem:[#allocation0]]
  $region93: #{pause_transformer_forward.1} parent=0
    _
  %s18 = ssub.s32 1, %s16
  %s19 = scalar_select 0, %s18, %s16
  $region1: #{pause_transformer_forward.1} parent=0
    #allocation2 [shape = 'u8[24576]{0}', space=vmem, size = 0x6000, scoped, tag = 'output window, operand 0']
    #allocation3 [shape = 's32[2]{0}', space=sflag, size = 0x8, scoped, tag = 'scoped memory for pause_transformer_forward.1']
    %20 = vsyncpa [#allocation3], 0
    %s21 = scalar_lea.sflag [#allocation3], 1
    %22 = vsyncpa %s21, 0
    loop: start=0, step=1, limit=4
    $region2: #{pause_transformer_forward.1} parent=1 // loop_pre_header
      _
    $region3: #{pause_transformer_forward.1} parent=1 // loop_header
      %s24 = sphi 0, %s28
      %p25 = scmp.ge.s32.totalorder %s24, 4
      %s34 = sphi 0, %s36
      %s37 = sphi 0, %s34
      %s38 = sphi 0, %s37
      %s54 = sphi 0, %s38
      %s58 = sphi 0, %s58
      %s60 = sphi 0, %s58
      %s61 = sphi 0, %s60
      %s75 = sphi 0, %s61
      %s79 = sphi 0, %s79
      %s81 = sphi 0, %s79
      %s82 = sphi 0, %s81
      %s96 = sphi 0, %s82
      %s100 = sphi 0, %s100
      %s102 = sphi 0, %s100
      %s103 = sphi 0, %s102
      %s117 = sphi 0, %s103
      %s121 = sphi 0, %s121
      %s123 = sphi 0, %s121
      %s124 = sphi 0, %s123
      %s138 = sphi 0, %s124
      %s142 = sphi 0, %s142
      %s144 = sphi 0, %s142
      %s145 = sphi 0, %s144
      %s159 = sphi 0, %s145
      %s163 = sphi 0, %s163
      %s165 = sphi 0, %s163
      %s166 = sphi 0, %s165
      %s180 = sphi 0, %s166
      %s184 = sphi 0, %s184
      %s186 = sphi 0, %s184
      %s187 = sphi 0, %s186
      %s201 = sphi 0, %s187
      %s205 = sphi 0, %s205
      %s207 = sphi 0, %s205
      %s208 = sphi 0, %s207
      %s222 = sphi 0, %s208
      %s226 = sphi 0, %s226
      %s228 = sphi 0, %s226
      %s229 = sphi 0, %s228
      %s243 = sphi 0, %s229
      %s247 = sphi 0, %s247
      %s249 = sphi 0, %s247
      %s250 = sphi 0, %s249
      %s264 = sphi 0, %s250
      %s268 = sphi 0, %s268
      %s270 = sphi 0, %s268
      %s271 = sphi 0, %s270
      %s285 = sphi 0, %s271
      %s289 = sphi 0, %s289
      %s291 = sphi 0, %s289
      %s292 = sphi 0, %s291
      %s306 = sphi 0, %s292
      %s310 = sphi 0, %s310
      %s312 = sphi 0, %s310
      %s313 = sphi 0, %s312
      %s327 = sphi 0, %s313
      %s331 = sphi 0, %s331
      %s333 = sphi 0, %s331
      %s334 = sphi 0, %s333
      %s348 = sphi 0, %s334
      %s354 = sphi 0, %s356
      %s357 = sphi 0, %s354
      %s358 = sphi 0, %s357
      %s374 = sphi 0, %s358
    $region4: #{pause_transformer_forward.1} parent=1 // loop_header_branch
      %27 = sbr.rel (%p25) target = $region8
    $region5: #{pause_transformer_forward.1} parent=1 // loop_body
      %s29 = ssub.s32 %s24, 1
      %s30 = ssub.s32 %s24, 2
      %s31 = sadd.s32 %s24, 1
      %s32 = ssub.s32 %s24, %s31
      %p33 = scmp.eq.s32.totalorder %s32, 0
      %s35 = sadd.s32 %s34, 1
      %s36 = scalar_select %p33, %s34, %s35
      %p39 = pneg %p33
      %p40 = scmp.eq.s32.totalorder %s24, 1
      %p41 = por %p39, %p40
      %p42 = scmp.ne.s32.totalorder %s34, %s37
      %p43 = scmp.eq.s32.totalorder %s24, 0
      %p44 = por %p42, %p43
      %p45 = scmp.ne.s32.totalorder %s34, %s37
      %p46 = scmp.eq.s32.totalorder %s29, 1
      %p47 = por %p45, %p46
      %p48 = scmp.ne.s32.totalorder %s37, %s38
      %p49 = scmp.eq.s32.totalorder %s29, 0
      %p50 = por %p48, %p49
      %p51 = scmp.ne.s32.totalorder %s37, %s38
      %p52 = scmp.eq.s32.totalorder %s30, 1
      %p53 = por %p51, %p52
      %p55 = scmp.ne.s32.totalorder %s38, %s54
      %p56 = scmp.eq.s32.totalorder %s30, 0
      %p57 = por %p55, %p56
      %s59 = sadd.s32 %s58, 1
      %p62 = scmp.eq.s32.totalorder %s24, 1
      %p63 = scmp.ne.s32.totalorder %s58, %s60
      %p64 = scmp.eq.s32.totalorder %s24, 0
      %p65 = por %p63, %p64
      %p66 = scmp.ne.s32.totalorder %s58, %s60
      %p67 = scmp.eq.s32.totalorder %s29, 1
      %p68 = por %p66, %p67
      %p69 = scmp.ne.s32.totalorder %s60, %s61
      %p70 = scmp.eq.s32.totalorder %s29, 0
      %p71 = por %p69, %p70
      %p72 = scmp.ne.s32.totalorder %s60, %s61
      %p73 = scmp.eq.s32.totalorder %s30, 1
      %p74 = por %p72, %p73
      %p76 = scmp.ne.s32.totalorder %s61, %s75
      %p77 = scmp.eq.s32.totalorder %s30, 0
      %p78 = por %p76, %p77
      %s80 = sadd.s32 %s79, 1
      %p83 = scmp.eq.s32.totalorder %s24, 1
      %p84 = scmp.ne.s32.totalorder %s79, %s81
      %p85 = scmp.eq.s32.totalorder %s24, 0
      %p86 = por %p84, %p85
      %p87 = scmp.ne.s32.totalorder %s79, %s81
      %p88 = scmp.eq.s32.totalorder %s29, 1
      %p89 = por %p87, %p88
      %p90 = scmp.ne.s32.totalorder %s81, %s82
      %p91 = scmp.eq.s32.totalorder %s29, 0
      %p92 = por %p90, %p91
      %p93 = scmp.ne.s32.totalorder %s81, %s82
      %p94 = scmp.eq.s32.totalorder %s30, 1
      %p95 = por %p93, %p94
      %p97 = scmp.ne.s32.totalorder %s82, %s96
      %p98 = scmp.eq.s32.totalorder %s30, 0
      %p99 = por %p97, %p98
      %s101 = sadd.s32 %s100, 1
      %p104 = scmp.eq.s32.totalorder %s24, 1
      %p105 = scmp.ne.s32.totalorder %s100, %s102
      %p106 = scmp.eq.s32.totalorder %s24, 0
      %p107 = por %p105, %p106
      %p108 = scmp.ne.s32.totalorder %s100, %s102
      %p109 = scmp.eq.s32.totalorder %s29, 1
      %p110 = por %p108, %p109
      %p111 = scmp.ne.s32.totalorder %s102, %s103
      %p112 = scmp.eq.s32.totalorder %s29, 0
      %p113 = por %p111, %p112
      %p114 = scmp.ne.s32.totalorder %s102, %s103
      %p115 = scmp.eq.s32.totalorder %s30, 1
      %p116 = por %p114, %p115
      %p118 = scmp.ne.s32.totalorder %s103, %s117
      %p119 = scmp.eq.s32.totalorder %s30, 0
      %p120 = por %p118, %p119
      %s122 = sadd.s32 %s121, 1
      %p125 = scmp.eq.s32.totalorder %s24, 1
      %p126 = scmp.ne.s32.totalorder %s121, %s123
      %p127 = scmp.eq.s32.totalorder %s24, 0
      %p128 = por %p126, %p127
      %p129 = scmp.ne.s32.totalorder %s121, %s123
      %p130 = scmp.eq.s32.totalorder %s29, 1
      %p131 = por %p129, %p130
      %p132 = scmp.ne.s32.totalorder %s123, %s124
      %p133 = scmp.eq.s32.totalorder %s29, 0
      %p134 = por %p132, %p133
      %p135 = scmp.ne.s32.totalorder %s123, %s124
      %p136 = scmp.eq.s32.totalorder %s30, 1
      %p137 = por %p135, %p136
      %p139 = scmp.ne.s32.totalorder %s124, %s138
      %p140 = scmp.eq.s32.totalorder %s30, 0
      %p141 = por %p139, %p140
      %s143 = sadd.s32 %s142, 1
      %p146 = scmp.eq.s32.totalorder %s24, 1
      %p147 = scmp.ne.s32.totalorder %s142, %s144
      %p148 = scmp.eq.s32.totalorder %s24, 0
      %p149 = por %p147, %p148
      %p150 = scmp.ne.s32.totalorder %s142, %s144
      %p151 = scmp.eq.s32.totalorder %s29, 1
      %p152 = por %p150, %p151
      %p153 = scmp.ne.s32.totalorder %s144, %s145
      %p154 = scmp.eq.s32.totalorder %s29, 0
      %p155 = por %p153, %p154
      %p156 = scmp.ne.s32.totalorder %s144, %s145
      %p157 = scmp.eq.s32.totalorder %s30, 1
      %p158 = por %p156, %p157
      %p160 = scmp.ne.s32.totalorder %s145, %s159
      %p161 = scmp.eq.s32.totalorder %s30, 0
      %p162 = por %p160, %p161
      %s164 = sadd.s32 %s163, 1
      %p167 = scmp.eq.s32.totalorder %s24, 1
      %p168 = scmp.ne.s32.totalorder %s163, %s165
      %p169 = scmp.eq.s32.totalorder %s24, 0
      %p170 = por %p168, %p169
      %p171 = scmp.ne.s32.totalorder %s163, %s165
      %p172 = scmp.eq.s32.totalorder %s29, 1
      %p173 = por %p171, %p172
      %p174 = scmp.ne.s32.totalorder %s165, %s166
      %p175 = scmp.eq.s32.totalorder %s29, 0
      %p176 = por %p174, %p175
      %p177 = scmp.ne.s32.totalorder %s165, %s166
      %p178 = scmp.eq.s32.totalorder %s30, 1
      %p179 = por %p177, %p178
      %p181 = scmp.ne.s32.totalorder %s166, %s180
      %p182 = scmp.eq.s32.totalorder %s30, 0
      %p183 = por %p181, %p182
      %s185 = sadd.s32 %s184, 1
      %p188 = scmp.eq.s32.totalorder %s24, 1
      %p189 = scmp.ne.s32.totalorder %s184, %s186
      %p190 = scmp.eq.s32.totalorder %s24, 0
      %p191 = por %p189, %p190
      %p192 = scmp.ne.s32.totalorder %s184, %s186
      %p193 = scmp.eq.s32.totalorder %s29, 1
      %p194 = por %p192, %p193
      %p195 = scmp.ne.s32.totalorder %s186, %s187
      %p196 = scmp.eq.s32.totalorder %s29, 0
      %p197 = por %p195, %p196
      %p198 = scmp.ne.s32.totalorder %s186, %s187
      %p199 = scmp.eq.s32.totalorder %s30, 1
      %p200 = por %p198, %p199
      %p202 = scmp.ne.s32.totalorder %s187, %s201
      %p203 = scmp.eq.s32.totalorder %s30, 0
      %p204 = por %p202, %p203
      %s206 = sadd.s32 %s205, 1
      %p209 = scmp.eq.s32.totalorder %s24, 1
      %p210 = scmp.ne.s32.totalorder %s205, %s207
      %p211 = scmp.eq.s32.totalorder %s24, 0
      %p212 = por %p210, %p211
      %p213 = scmp.ne.s32.totalorder %s205, %s207
      %p214 = scmp.eq.s32.totalorder %s29, 1
      %p215 = por %p213, %p214
      %p216 = scmp.ne.s32.totalorder %s207, %s208
      %p217 = scmp.eq.s32.totalorder %s29, 0
      %p218 = por %p216, %p217
      %p219 = scmp.ne.s32.totalorder %s207, %s208
      %p220 = scmp.eq.s32.totalorder %s30, 1
      %p221 = por %p219, %p220
      %p223 = scmp.ne.s32.totalorder %s208, %s222
      %p224 = scmp.eq.s32.totalorder %s30, 0
      %p225 = por %p223, %p224
      %s227 = sadd.s32 %s226, 1
      %p230 = scmp.eq.s32.totalorder %s24, 1
      %p231 = scmp.ne.s32.totalorder %s226, %s228
      %p232 = scmp.eq.s32.totalorder %s24, 0
      %p233 = por %p231, %p232
      %p234 = scmp.ne.s32.totalorder %s226, %s228
      %p235 = scmp.eq.s32.totalorder %s29, 1
      %p236 = por %p234, %p235
      %p237 = scmp.ne.s32.totalorder %s228, %s229
      %p238 = scmp.eq.s32.totalorder %s29, 0
      %p239 = por %p237, %p238
      %p240 = scmp.ne.s32.totalorder %s228, %s229
      %p241 = scmp.eq.s32.totalorder %s30, 1
      %p242 = por %p240, %p241
      %p244 = scmp.ne.s32.totalorder %s229, %s243
      %p245 = scmp.eq.s32.totalorder %s30, 0
      %p246 = por %p244, %p245
      %s248 = sadd.s32 %s247, 1
      %p251 = scmp.eq.s32.totalorder %s24, 1
      %p252 = scmp.ne.s32.totalorder %s247, %s249
      %p253 = scmp.eq.s32.totalorder %s24, 0
      %p254 = por %p252, %p253
      %p255 = scmp.ne.s32.totalorder %s247, %s249
      %p256 = scmp.eq.s32.totalorder %s29, 1
      %p257 = por %p255, %p256
      %p258 = scmp.ne.s32.totalorder %s249, %s250
      %p259 = scmp.eq.s32.totalorder %s29, 0
      %p260 = por %p258, %p259
      %p261 = scmp.ne.s32.totalorder %s249, %s250
      %p262 = scmp.eq.s32.totalorder %s30, 1
      %p263 = por %p261, %p262
      %p265 = scmp.ne.s32.totalorder %s250, %s264
      %p266 = scmp.eq.s32.totalorder %s30, 0
      %p267 = por %p265, %p266
      %s269 = sadd.s32 %s268, 1
      %p272 = scmp.eq.s32.totalorder %s24, 1
      %p273 = scmp.ne.s32.totalorder %s268, %s270
      %p274 = scmp.eq.s32.totalorder %s24, 0
      %p275 = por %p273, %p274
      %p276 = scmp.ne.s32.totalorder %s268, %s270
      %p277 = scmp.eq.s32.totalorder %s29, 1
      %p278 = por %p276, %p277
      %p279 = scmp.ne.s32.totalorder %s270, %s271
      %p280 = scmp.eq.s32.totalorder %s29, 0
      %p281 = por %p279, %p280
      %p282 = scmp.ne.s32.totalorder %s270, %s271
      %p283 = scmp.eq.s32.totalorder %s30, 1
      %p284 = por %p282, %p283
      %p286 = scmp.ne.s32.totalorder %s271, %s285
      %p287 = scmp.eq.s32.totalorder %s30, 0
      %p288 = por %p286, %p287
      %s290 = sadd.s32 %s289, 1
      %p293 = scmp.eq.s32.totalorder %s24, 1
      %p294 = scmp.ne.s32.totalorder %s289, %s291
      %p295 = scmp.eq.s32.totalorder %s24, 0
      %p296 = por %p294, %p295
      %p297 = scmp.ne.s32.totalorder %s289, %s291
      %p298 = scmp.eq.s32.totalorder %s29, 1
      %p299 = por %p297, %p298
      %p300 = scmp.ne.s32.totalorder %s291, %s292
      %p301 = scmp.eq.s32.totalorder %s29, 0
      %p302 = por %p300, %p301
      %p303 = scmp.ne.s32.totalorder %s291, %s292
      %p304 = scmp.eq.s32.totalorder %s30, 1
      %p305 = por %p303, %p304
      %p307 = scmp.ne.s32.totalorder %s292, %s306
      %p308 = scmp.eq.s32.totalorder %s30, 0
      %p309 = por %p307, %p308
      %s311 = sadd.s32 %s310, 1
      %p314 = scmp.eq.s32.totalorder %s24, 1
      %p315 = scmp.ne.s32.totalorder %s310, %s312
      %p316 = scmp.eq.s32.totalorder %s24, 0
      %p317 = por %p315, %p316
      %p318 = scmp.ne.s32.totalorder %s310, %s312
      %p319 = scmp.eq.s32.totalorder %s29, 1
      %p320 = por %p318, %p319
      %p321 = scmp.ne.s32.totalorder %s312, %s313
      %p322 = scmp.eq.s32.totalorder %s29, 0
      %p323 = por %p321, %p322
      %p324 = scmp.ne.s32.totalorder %s312, %s313
      %p325 = scmp.eq.s32.totalorder %s30, 1
      %p326 = por %p324, %p325
      %p328 = scmp.ne.s32.totalorder %s313, %s327
      %p329 = scmp.eq.s32.totalorder %s30, 0
      %p330 = por %p328, %p329
      %s332 = sadd.s32 %s331, 1
      %p335 = scmp.eq.s32.totalorder %s24, 1
      %p336 = scmp.ne.s32.totalorder %s331, %s333
      %p337 = scmp.eq.s32.totalorder %s24, 0
      %p338 = por %p336, %p337
      %p339 = scmp.ne.s32.totalorder %s331, %s333
      %p340 = scmp.eq.s32.totalorder %s29, 1
      %p341 = por %p339, %p340
      %p342 = scmp.ne.s32.totalorder %s333, %s334
      %p343 = scmp.eq.s32.totalorder %s29, 0
      %p344 = por %p342, %p343
      %p345 = scmp.ne.s32.totalorder %s333, %s334
      %p346 = scmp.eq.s32.totalorder %s30, 1
      %p347 = por %p345, %p346
      %p349 = scmp.ne.s32.totalorder %s334, %s348
      %p350 = scmp.eq.s32.totalorder %s30, 0
      %p351 = por %p349, %p350
      %s352 = ssub.s32 %s24, %s31
      %p353 = scmp.eq.s32.totalorder %s352, 0
      %s355 = sadd.s32 %s354, 1
      %s356 = scalar_select %p353, %s354, %s355
      %p359 = pneg %p353
      %p360 = scmp.eq.s32.totalorder %s24, 1
      %p361 = por %p359, %p360
      %p362 = scmp.ne.s32.totalorder %s354, %s357
      %p363 = scmp.eq.s32.totalorder %s24, 0
      %p364 = por %p362, %p363
      %p365 = scmp.ne.s32.totalorder %s354, %s357
      %p366 = scmp.eq.s32.totalorder %s29, 1
      %p367 = por %p365, %p366
      %p368 = scmp.ne.s32.totalorder %s357, %s358
      %p369 = scmp.eq.s32.totalorder %s29, 0
      %p370 = por %p368, %p369
      %p371 = scmp.ne.s32.totalorder %s357, %s358
      %p372 = scmp.eq.s32.totalorder %s30, 1
      %p373 = por %p371, %p372
      %p375 = scmp.ne.s32.totalorder %s358, %s374
      %p376 = scmp.eq.s32.totalorder %s30, 0
      %p377 = por %p375, %p376
      %p378 = scmp.le.s32.totalorder 1, %s24
      %p379 = scmp.lt.s32.totalorder %s24, 3
      %p380 = pnand %p378, %p379
      %p381 = pneg %p380
      // Predicated region
      $region9: #{pause_transformer_forward.1} parent=5 // pred_check
        _
      $region10: #{pause_transformer_forward.1} parent=5 // pred_check_branch
        %383 = sbr.rel (%p380) target = $region12
      $region11: #{pause_transformer_forward.1} parent=5 // pred_region
        %s384 = ssub.s32 %s24, 1
        // Predicated region
        $region13: #{pause_transformer_forward.1} parent=11 // pred_check
          %p385 = pneg %p71
        $region14: #{pause_transformer_forward.1} parent=11 // pred_check_branch
          %387 = sbr.rel (%p385) target = $region16
        $region15: #{pause_transformer_forward.1} parent=11 // pred_region
          _
        $region16: #{pause_transformer_forward.1} parent=11 // pred_fallthru
          _
        // Predicated region
        $region17: #{pause_transformer_forward.1} parent=11 // pred_check
          %p388 = pneg %p92
        $region18: #{pause_transformer_forward.1} parent=11 // pred_check_branch
          %390 = sbr.rel (%p388) target = $region20
        $region19: #{pause_transformer_forward.1} parent=11 // pred_region
          _
        $region20: #{pause_transformer_forward.1} parent=11 // pred_fallthru
          _
        // Predicated region
        $region21: #{pause_transformer_forward.1} parent=11 // pred_check
          %p391 = pneg %p113
        $region22: #{pause_transformer_forward.1} parent=11 // pred_check_branch
          %393 = sbr.rel (%p391) target = $region24
        $region23: #{pause_transformer_forward.1} parent=11 // pred_region
          _
        $region24: #{pause_transformer_forward.1} parent=11 // pred_fallthru
          _
        // Predicated region
        $region25: #{pause_transformer_forward.1} parent=11 // pred_check
          %p394 = pneg %p134
        $region26: #{pause_transformer_forward.1} parent=11 // pred_check_branch
          %396 = sbr.rel (%p394) target = $region28
        $region27: #{pause_transformer_forward.1} parent=11 // pred_region
          _
        $region28: #{pause_transformer_forward.1} parent=11 // pred_fallthru
          _
        // Predicated region
        $region29: #{pause_transformer_forward.1} parent=11 // pred_check
          %p397 = pneg %p155
        $region30: #{pause_transformer_forward.1} parent=11 // pred_check_branch
          %399 = sbr.rel (%p397) target = $region32
        $region31: #{pause_transformer_forward.1} parent=11 // pred_region
          _
        $region32: #{pause_transformer_forward.1} parent=11 // pred_fallthru
          _
        // Predicated region
        $region33: #{pause_transformer_forward.1} parent=11 // pred_check
          %p400 = pneg %p176
        $region34: #{pause_transformer_forward.1} parent=11 // pred_check_branch
          %402 = sbr.rel (%p400) target = $region36
        $region35: #{pause_transformer_forward.1} parent=11 // pred_region
          _
        $region36: #{pause_transformer_forward.1} parent=11 // pred_fallthru
          _
        // Predicated region
        $region37: #{pause_transformer_forward.1} parent=11 // pred_check
          %p403 = pneg %p197
        $region38: #{pause_transformer_forward.1} parent=11 // pred_check_branch
          %405 = sbr.rel (%p403) target = $region40
        $region39: #{pause_transformer_forward.1} parent=11 // pred_region
          _
        $region40: #{pause_transformer_forward.1} parent=11 // pred_fallthru
          _
        // Predicated region
        $region41: #{pause_transformer_forward.1} parent=11 // pred_check
          %p406 = pneg %p218
        $region42: #{pause_transformer_forward.1} parent=11 // pred_check_branch
          %408 = sbr.rel (%p406) target = $region44
        $region43: #{pause_transformer_forward.1} parent=11 // pred_region
          _
        $region44: #{pause_transformer_forward.1} parent=11 // pred_fallthru
          _
        // Predicated region
        $region45: #{pause_transformer_forward.1} parent=11 // pred_check
          %p409 = pneg %p239
        $region46: #{pause_transformer_forward.1} parent=11 // pred_check_branch
          %411 = sbr.rel (%p409) target = $region48
        $region47: #{pause_transformer_forward.1} parent=11 // pred_region
          _
        $region48: #{pause_transformer_forward.1} parent=11 // pred_fallthru
          _
        // Predicated region
        $region49: #{pause_transformer_forward.1} parent=11 // pred_check
          %p412 = pneg %p260
        $region50: #{pause_transformer_forward.1} parent=11 // pred_check_branch
          %414 = sbr.rel (%p412) target = $region52
        $region51: #{pause_transformer_forward.1} parent=11 // pred_region
          _
        $region52: #{pause_transformer_forward.1} parent=11 // pred_fallthru
          _
        // Predicated region
        $region53: #{pause_transformer_forward.1} parent=11 // pred_check
          %p415 = pneg %p281
        $region54: #{pause_transformer_forward.1} parent=11 // pred_check_branch
          %417 = sbr.rel (%p415) target = $region56
        $region55: #{pause_transformer_forward.1} parent=11 // pred_region
          _
        $region56: #{pause_transformer_forward.1} parent=11 // pred_fallthru
          _
        // Predicated region
        $region57: #{pause_transformer_forward.1} parent=11 // pred_check
          %p418 = pneg %p302
        $region58: #{pause_transformer_forward.1} parent=11 // pred_check_branch
          %420 = sbr.rel (%p418) target = $region60
        $region59: #{pause_transformer_forward.1} parent=11 // pred_region
          _
        $region60: #{pause_transformer_forward.1} parent=11 // pred_fallthru
          _
        // Predicated region
        $region61: #{pause_transformer_forward.1} parent=11 // pred_check
          %p421 = pneg %p323
        $region62: #{pause_transformer_forward.1} parent=11 // pred_check_branch
          %423 = sbr.rel (%p421) target = $region64
        $region63: #{pause_transformer_forward.1} parent=11 // pred_region
          _
        $region64: #{pause_transformer_forward.1} parent=11 // pred_fallthru
          _
        // Predicated region
        $region65: #{pause_transformer_forward.1} parent=11 // pred_check
          %p424 = pneg %p344
        $region66: #{pause_transformer_forward.1} parent=11 // pred_check_branch
          %426 = sbr.rel (%p424) target = $region68
        $region67: #{pause_transformer_forward.1} parent=11 // pred_region
          _
        $region68: #{pause_transformer_forward.1} parent=11 // pred_fallthru
          _
      $region12: #{pause_transformer_forward.1} parent=5 // pred_fallthru
        _
      %p427 = scmp.lt.s32.totalorder %s24, 2
      // Predicated region
      $region69: #{pause_transformer_forward.1} parent=5 // pred_check
        %p428 = pneg %p427
      $region70: #{pause_transformer_forward.1} parent=5 // pred_check_branch
        %430 = sbr.rel (%p428) target = $region72
      $region71: #{pause_transformer_forward.1} parent=5 // pred_region
        // Predicated region
        $region73: #{pause_transformer_forward.1} parent=71 // pred_check
          %p431 = pneg %p44
        $region74: #{pause_transformer_forward.1} parent=71 // pred_check_branch
          %433 = sbr.rel (%p431) target = $region76
        $region75: #{pause_transformer_forward.1} parent=71 // pred_region
          %p434 = scmp.lt.s32.totalorder %s24, 1
          %s435 = scalar_select %p434, %s24, 1
          %s436 = smul.addr %s435, 8
          %s437 = scalar_lea.vmem %s0, %s436
        $region76: #{pause_transformer_forward.1} parent=71 // pred_fallthru
          _
      $region72: #{pause_transformer_forward.1} parent=5 // pred_fallthru
        _
      %p438 = scmp.le.s32.totalorder 1, %s24
      %p439 = scmp.lt.s32.totalorder %s24, 3
      %p440 = pnand %p438, %p439
      %p441 = pneg %p440
      // Predicated region
      $region77: #{pause_transformer_forward.1} parent=5 // pred_check
        _
      $region78: #{pause_transformer_forward.1} parent=5 // pred_check_branch
        %443 = sbr.rel (%p440) target = $region80
      $region79: #{pause_transformer_forward.1} parent=5 // pred_region
        %s444 = ssub.s32 %s24, 1
        %p445 = scmp.lt.s32.totalorder %s29, 1
        %s446 = scalar_select %p445, %s29, 1
        %s447 = smul.addr %s446, 8
        %s448 = scalar_lea.vmem %s0, %s447
        %p449 = pneg %p50
        %p450 = pneg %p47
        %p451 = pneg %p71
        %p452 = pneg %p68
        %p453 = pneg %p92
        %p454 = pneg %p89
        %p455 = pneg %p113
        %p456 = pneg %p110
        %p457 = pneg %p134
        %p458 = pneg %p131
        %p459 = pneg %p155
        %p460 = pneg %p152
        %p461 = pneg %p176
        %p462 = pneg %p173
        %p463 = pneg %p197
        %p464 = pneg %p194
        %p465 = pneg %p218
        %p466 = pneg %p215
        %p467 = pneg %p239
        %p468 = pneg %p236
        %p469 = pneg %p260
        %p470 = pneg %p257
        %p471 = pneg %p281
        %p472 = pneg %p278
        %p473 = pneg %p302
        %p474 = pneg %p299
        %p475 = pneg %p323
        %p476 = pneg %p320
        %p477 = pneg %p344
        %p478 = pneg %p341
        %p479 = pneg %p370
        %p480 = pneg %p367
        %s481 = sand.u32 %s357, 1
        %s482 = scalar_lea.sflag [#allocation3], %s481
        %s483 = sand.u32 %s357, 1
        %s484 = smul.addr %s483, 24
        %s485 = scalar_lea.vmem [#allocation2], %s484
        %p486 = scmp.lt.s32.totalorder %s29, 1
        %s487 = scalar_select %p486, %s29, 1
        %s488 = smul.addr %s487, 8
        %s489 = scalar_lea.vmem %s0, %s488
        %v490 = vld [vmem:[%s489] sm:$0xff]
        %v491 = vld [vmem:[%s1] sm:$0x3]
        %v492 = vlaneseq
        %v493 = vshrl.u32 %v492, 7
        %v494 = vsub.s32 0, %v493
        %v495 = vrot.slane %v491, %v494
        %v496 = vlaneseq
        %v497 = vshrl.u32 %v496, 7
        %v498 = vsub.s32 1, %v497
        %v499 = vrot.slane %v491, %v498
        %v500 = vlaneseq
        %v501 = vshrl.u32 %v500, 7
        %v502 = vlaneseq
        %v503 = vand.u32 %v502, 127
        %vm504 = vcmp.gt.s32.totalorder %v503, %v501
        %v505 = vadd.s32 %v501, 8
        %v506 = vadd.s32 %v501, 16
        %v507 = vsub.s32 %v501, %v503
        %v508 = vsub.s32 %v505, %v503
        %v509 = vsub.s32 %v506, %v503
        %vm510 = vcmp.eq.s32.totalorder %v507, 0
        %vm511 = vcmp.eq.s32.totalorder %v508, 0
        %vm512 = vcmp.eq.s32.totalorder %v509, 0
        %vm513 = vcmp.eq.s32.totalorder %v507, 8
        %vm514 = vcmp.eq.s32.totalorder %v508, 8
        %vm515 = vcmp.eq.s32.totalorder %v509, 8
        %vm516 = vmor %vm510, %vm513
        %vm517 = vmor %vm511, %vm514
        %vm518 = vmor %vm512, %vm515
        %vm519 = vcmp.eq.s32.totalorder %v507, 16
        %vm520 = vcmp.eq.s32.totalorder %v508, 16
        %vm521 = vcmp.eq.s32.totalorder %v509, 16
        %vm522 = vmor %vm516, %vm519
        %vm523 = vmor %vm517, %vm520
        %vm524 = vmor %vm518, %vm521
        %vm525 = vmxor %vm522, 1
        %vm526 = vmxor %vm523, 1
        %vm527 = vmxor %vm524, 1
        %v528 = vld [vmem:[%s2] sm:$0x1]
        %v529 = vld [vmem:[%s3] sm:$0xff]
        %v530 = vld [vmem:[%s3 + $0x8] sm:$0xff]
        %v531 = vld [vmem:[%s3 + $0x10] sm:$0xff]
        %v532 = vld [vmem:[%s3 + $0x18] sm:$0xff]
        %v533 = vld [vmem:[%s4] sm:$0xff]
        %v534 = vld [vmem:[%s4 + $0x8] sm:$0xff]
        %v535 = vld [vmem:[%s4 + $0x10] sm:$0xff]
        %v536 = vld [vmem:[%s4 + $0x18] sm:$0xff]
        %v537 = vld [vmem:[%s5] sm:$0x1]
        %v538 = vld [vmem:[%s6] sm:$0xff]
        %v539 = vld [vmem:[%s6 + $0x8] sm:$0xff]
        %v540 = vld [vmem:[%s6 + $0x10] sm:$0xff]
        %v541 = vld [vmem:[%s6 + $0x18] sm:$0xff]
        %v542 = vld [vmem:[%s7] sm:$0x1]
        %v543 = vld [vmem:[%s8] sm:$0xff]
        %v544 = vld [vmem:[%s8 + $0x8] sm:$0xff]
        %v545 = vld [vmem:[%s8 + $0x10] sm:$0xff]
        %v546 = vld [vmem:[%s8 + $0x18] sm:$0xff]
        %v547 = vld [vmem:[%s8 + $0x20] sm:$0xff]
        %v548 = vld [vmem:[%s8 + $0x28] sm:$0xff]
        %v549 = vld [vmem:[%s8 + $0x30] sm:$0xff]
        %v550 = vld [vmem:[%s8 + $0x38] sm:$0xff]
        %v551 = vld [vmem:[%s8 + $0x40] sm:$0xff]
        %v552 = vld [vmem:[%s8 + $0x48] sm:$0xff]
        %v553 = vld [vmem:[%s8 + $0x50] sm:$0xff]
        %v554 = vld [vmem:[%s8 + $0x58] sm:$0xff]
        %v555 = vld [vmem:[%s8 + $0x60] sm:$0xff]
        %v556 = vld [vmem:[%s8 + $0x68] sm:$0xff]
        %v557 = vld [vmem:[%s8 + $0x70] sm:$0xff]
        %v558 = vld [vmem:[%s8 + $0x78] sm:$0xff]
        %v559 = vld [vmem:[%s9] sm:$0x1]
        %v560 = vmul.f32 %v490, %v490
        %vm561 = vcmask 261120
        %v562 = vsel %vm561, %v560, 0.0
        %563 = vadd.xlane.f32.xlu0 %v562
        %v564 = vpop.xlane.xlu0 %563
        %v565 = vrsqrt.pop %v564
        %v566 = vmul.f32 %v564, %v565
        %vm567 = vcmp.eq.f32.partialorder %v564, inf
        %v568 = vsel %vm567, %v564, %v566
        %vm569 = vcmp.eq.f32.partialorder %v564, 0.0
        %v570 = vand.u32 %v564, 2147483648
        %v571 = vsel %vm569, %v570, %v568
        %v572 = vmax.f32 %v571, 1e-12
        %v573 = vrcp.pop %v572
        %v574 = vmul.f32 %v490, %v573
        %v575 = vmul.f32 %v574, 5.656854
        %v577 = vlaneseq
        %v578 = vshrl.u32 %v577, 7
        %v579 = vsub.s32 0, %v578
        %v580 = vrot.slane %v528, %v579
        %v582 = vmul.f32 %v575, %v580
        %v584 = vsel %vm561, %v582, 0
        %586 = vmatprep.subr.mxu0 0.0
        %587 = vmatpush1.msra.mxu0 0.0
        %588 = vmatprep.subr.mxu0 0.0
        %589 = vmatpush1.msra.mxu0 0.0
        %590 = vmatprep.subr.mxu0 0.0
        %591 = vmatpush1.msra.mxu0 0.0
        %592 = vmatprep.subr.mxu0 0.0
        %593 = vmatpush1.msra.mxu0 0.0
        %594 = vmatprep.subr.mxu0 0.0
        %595 = vmatpush1.msra.mxu0 0.0
        %596 = vmatprep.subr.mxu0 0.0
        %597 = vmatpush1.msra.mxu0 0.0
        %598 = vmatprep.subr.mxu0 0.0
        %599 = vmatpush1.msra.mxu0 0.0
        %600 = vmatprep.subr.mxu0 0.0
        %601 = vmatpush1.msra.mxu0 0.0
        %602 = vmatprep.subr.mxu0 0.0
        %603 = vmatpush1.msra.mxu0 0.0
        %604 = vmatprep.subr.mxu0 0.0
        %605 = vmatpush1.msra.mxu0 0.0
        %606 = vmatprep.subr.mxu0 0.0
        %607 = vmatpush1.msra.mxu0 0.0
        %608 = vmatprep.subr.mxu0 0.0
        %609 = vmatpush1.msra.mxu0 0.0
        %610 = vmatprep.subr.mxu0 0.0
        %611 = vmatpush1.msra.mxu0 %v532
        %612 = vmatprep.subr.mxu0 0.0
        %613 = vmatpush1.msra.mxu0 %v531
        %614 = vmatprep.subr.mxu0 0.0
        %615 = vmatpush1.msra.mxu0 %v530
        %616 = vmatprep.subr.mxu0 0.0
        %617 = vmatpush1.msra.mxu0 %v529
        %618 = vmatprep.subr.mxu0 0.0
        %619 = vmatpush2.msra.mxu0 0.0
        %620 = vmatprep.subr.mxu0 0.0
        %621 = vmatpush2.msra.mxu0 0.0
        %622 = vmatprep.subr.mxu0 0.0
        %623 = vmatpush2.msra.mxu0 0.0
        %624 = vmatprep.subr.mxu0 0.0
        %625 = vmatpush2.msra.mxu0 0.0
        %626 = vmatprep.subr.mxu0 0.0
        %627 = vmatpush2.msra.mxu0 0.0
        %628 = vmatprep.subr.mxu0 0.0
        %629 = vmatpush2.msra.mxu0 0.0
        %630 = vmatprep.subr.mxu0 0.0
        %631 = vmatpush2.msra.mxu0 0.0
        %632 = vmatprep.subr.mxu0 0.0
        %633 = vmatpush2.msra.mxu0 0.0
        %634 = vmatprep.subr.mxu0 0.0
        %635 = vmatpush2.msra.mxu0 0.0
        %636 = vmatprep.subr.mxu0 0.0
        %637 = vmatpush2.msra.mxu0 0.0
        %638 = vmatprep.subr.mxu0 0.0
        %639 = vmatpush2.msra.mxu0 0.0
        %640 = vmatprep.subr.mxu0 0.0
        %641 = vmatpush2.msra.mxu0 0.0
        %642 = vmatprep.subr.mxu0 0.0
        %643 = vmatpush2.msra.mxu0 0.0
        %644 = vmatprep.subr.mxu0 0.0
        %645 = vmatpush2.msra.mxu0 0.0
        %646 = vmatprep.subr.mxu0 0.0
        %647 = vmatpush2.msra.mxu0 0.0
        %648 = vmatprep.subr.mxu0 0.0
        %649 = vmatpush2.msra.mxu0 0.0
        %650 = vmatprep.mubr.f32.mxu0 0.0
        %651 = vmatmul.mubr.f32.gmra.mxu0 %v584
        %v652 = vpop.f32.mrf.mxu0
        %v653 = vadd.f32 0.0, %v652
        %v654 = vpop.f32.mrf.mxu0
        %655 = vdwg.mxu0
        %v656 = vmul.f32 %v653, 0.17677669
        %658 = vrot.lane.b32.xlu0 %v653, 96
        %v659 = vpop.permute.xlu0 %658
        %vm660 = vcmask 64512
        %v662 = vsel %vm660, %v656, 0
        %v664 = vsel %vm660, %v659, 0
        %666 = vmatprep.subr.mxu0 0.0
        %667 = vmatpush1.xpose.msra.mxu0 0.0
        %668 = vmatprep.subr.mxu0 0.0
        %669 = vmatpush1.xpose.msra.mxu0 0.0
        %670 = vmatprep.subr.mxu0 0.0
        %671 = vmatpush1.xpose.msra.mxu0 0.0
        %672 = vmatprep.subr.mxu0 0.0
        %673 = vmatpush1.xpose.msra.mxu0 0.0
        %674 = vmatprep.subr.mxu0 0.0
        %675 = vmatpush1.xpose.msra.mxu0 0.0
        %676 = vmatprep.subr.mxu0 0.0
        %677 = vmatpush1.xpose.msra.mxu0 0.0
        %678 = vmatprep.subr.mxu0 0.0
        %679 = vmatpush1.xpose.msra.mxu0 0.0
        %680 = vmatprep.subr.mxu0 0.0
        %681 = vmatpush1.xpose.msra.mxu0 0.0
        %682 = vmatprep.subr.mxu0 0.0
        %683 = vmatpush1.xpose.msra.mxu0 0.0
        %684 = vmatprep.subr.mxu0 0.0
        %685 = vmatpush1.xpose.msra.mxu0 0.0
        %686 = vmatprep.subr.mxu0 0.0
        %687 = vmatpush1.xpose.msra.mxu0 0.0
        %688 = vmatprep.subr.mxu0 0.0
        %689 = vmatpush1.xpose.msra.mxu0 0.0
        %690 = vmatprep.subr.mxu0 0.0
        %691 = vmatpush1.xpose.msra.mxu0 0.0
        %692 = vmatprep.subr.mxu0 0.0
        %693 = vmatpush1.xpose.msra.mxu0 0.0
        %694 = vmatprep.subr.mxu0 0.0
        %695 = vmatpush1.xpose.msra.mxu0 0.0
        %696 = vmatprep.subr.mxu0 0.0
        %697 = vmatpush1.xpose.msra.mxu0 %v664
        %698 = vmatprep.subr.mxu0 0.0
        %699 = vmatpush2.xpose.msra.mxu0 0.0
        %700 = vmatprep.subr.mxu0 0.0
        %701 = vmatpush2.xpose.msra.mxu0 0.0
        %702 = vmatprep.subr.mxu0 0.0
        %703 = vmatpush2.xpose.msra.mxu0 0.0
        %704 = vmatprep.subr.mxu0 0.0
        %705 = vmatpush2.xpose.msra.mxu0 0.0
        %706 = vmatprep.subr.mxu0 0.0
        %707 = vmatpush2.xpose.msra.mxu0 0.0
        %708 = vmatprep.subr.mxu0 0.0
        %709 = vmatpush2.xpose.msra.mxu0 0.0
        %710 = vmatprep.subr.mxu0 0.0
        %711 = vmatpush2.xpose.msra.mxu0 0.0
        %712 = vmatprep.subr.mxu0 0.0
        %713 = vmatpush2.xpose.msra.mxu0 0.0
        %714 = vmatprep.subr.mxu0 0.0
        %715 = vmatpush2.xpose.msra.mxu0 0.0
        %716 = vmatprep.subr.mxu0 0.0
        %717 = vmatpush2.xpose.msra.mxu0 0.0
        %718 = vmatprep.subr.mxu0 0.0
        %719 = vmatpush2.xpose.msra.mxu0 0.0
        %720 = vmatprep.subr.mxu0 0.0
        %721 = vmatpush2.xpose.msra.mxu0 0.0
        %722 = vmatprep.subr.mxu0 0.0
        %723 = vmatpush2.xpose.msra.mxu0 0.0
        %724 = vmatprep.subr.mxu0 0.0
        %725 = vmatpush2.xpose.msra.mxu0 0.0
        %726 = vmatprep.subr.mxu0 0.0
        %727 = vmatpush2.xpose.msra.mxu0 0.0
        %728 = vmatprep.subr.mxu0 0.0
        %729 = vmatpush2.xpose.msra.mxu0 0.0
        %730 = vmatprep.mubr.f32.mxu0 0.0
        %731 = vmatmul.mubr.f32.gmra.mxu0 %v662
        %v732 = vpop.f32.mrf.mxu0
        %v733 = vadd.f32 0.0, %v732
        %v734 = vpop.f32.mrf.mxu0
        %735 = vdwg.mxu0
        %v736 = vsel %vm504, -1e+30, %v733
        %v737 = vsel %vm660, %v736, -inf
        %738 = vmax.xlane.f32.xlu0 %v737
        %v739 = vpop.xlane.xlu0 %738
        %v740 = vsub.f32 %v736, %v739
        %v741 = vmul.f32 %v740, 1.442695
        %v742 = vpow.pop %v741
        %v743 = vsel %vm660, %v742, 0.0
        %744 = vadd.xlane.f32.xlu0 %v743
        %v745 = vpop.xlane.xlu0 %744
        %v746 = vrcp.pop %v745
        %v747 = vmul.f32 %v742, %v746
        %748 = vrot.lane.b32.xlu0 %v653, 64
        %v749 = vpop.permute.xlu0 %748
        %v752 = vsel %vm660, %v747, 0
        %754 = vmatprep.subr.mxu0 0.0
        %755 = vmatpush1.msra.mxu0 0.0
        %756 = vmatprep.subr.mxu0 0.0
        %757 = vmatpush1.msra.mxu0 0.0
        %758 = vmatprep.subr.mxu0 0.0
        %759 = vmatpush1.msra.mxu0 0.0
        %760 = vmatprep.subr.mxu0 0.0
        %761 = vmatpush1.msra.mxu0 0.0
        %762 = vmatprep.subr.mxu0 0.0
        %763 = vmatpush1.msra.mxu0 0.0
        %764 = vmatprep.subr.mxu0 0.0
        %765 = vmatpush1.msra.mxu0 0.0
        %766 = vmatprep.subr.mxu0 0.0
        %767 = vmatpush1.msra.mxu0 0.0
        %768 = vmatprep.subr.mxu0 0.0
        %769 = vmatpush1.msra.mxu0 0.0
        %770 = vmatprep.subr.mxu0 0.0
        %771 = vmatpush1.msra.mxu0 0.0
        %772 = vmatprep.subr.mxu0 0.0
        %773 = vmatpush1.msra.mxu0 0.0
        %774 = vmatprep.subr.mxu0 0.0
        %775 = vmatpush1.msra.mxu0 0.0
        %776 = vmatprep.subr.mxu0 0.0
        %777 = vmatpush1.msra.mxu0 0.0
        %778 = vmatprep.subr.mxu0 0.0
        %779 = vmatpush1.msra.mxu0 0.0
        %780 = vmatprep.subr.mxu0 0.0
        %781 = vmatpush1.msra.mxu0 0.0
        %782 = vmatprep.subr.mxu0 0.0
        %783 = vmatpush1.msra.mxu0 0.0
        %784 = vmatprep.subr.mxu0 0.0
        %785 = vmatpush1.msra.mxu0 %v749
        %786 = vmatprep.subr.mxu0 0.0
        %787 = vmatpush2.msra.mxu0 0.0
        %788 = vmatprep.subr.mxu0 0.0
        %789 = vmatpush2.msra.mxu0 0.0
        %790 = vmatprep.subr.mxu0 0.0
        %791 = vmatpush2.msra.mxu0 0.0
        %792 = vmatprep.subr.mxu0 0.0
        %793 = vmatpush2.msra.mxu0 0.0
        %794 = vmatprep.subr.mxu0 0.0
        %795 = vmatpush2.msra.mxu0 0.0
        %796 = vmatprep.subr.mxu0 0.0
        %797 = vmatpush2.msra.mxu0 0.0
        %798 = vmatprep.subr.mxu0 0.0
        %799 = vmatpush2.msra.mxu0 0.0
        %800 = vmatprep.subr.mxu0 0.0
        %801 = vmatpush2.msra.mxu0 0.0
        %802 = vmatprep.subr.mxu0 0.0
        %803 = vmatpush2.msra.mxu0 0.0
        %804 = vmatprep.subr.mxu0 0.0
        %805 = vmatpush2.msra.mxu0 0.0
        %806 = vmatprep.subr.mxu0 0.0
        %807 = vmatpush2.msra.mxu0 0.0
        %808 = vmatprep.subr.mxu0 0.0
        %809 = vmatpush2.msra.mxu0 0.0
        %810 = vmatprep.subr.mxu0 0.0
        %811 = vmatpush2.msra.mxu0 0.0
        %812 = vmatprep.subr.mxu0 0.0
        %813 = vmatpush2.msra.mxu0 0.0
        %814 = vmatprep.subr.mxu0 0.0
        %815 = vmatpush2.msra.mxu0 0.0
        %816 = vmatprep.subr.mxu0 0.0
        %817 = vmatpush2.msra.mxu0 0.0
        %818 = vmatprep.mubr.f32.mxu0 0.0
        %819 = vmatmul.mubr.f32.gmra.mxu0 %v752
        %v820 = vpop.f32.mrf.mxu0
        %v821 = vadd.f32 0.0, %v820
        %v822 = vpop.f32.mrf.mxu0
        %823 = vdwg.mxu0
        %824 = vrot.lane.b32.xlu0 %v656, 120
        %v825 = vpop.permute.xlu0 %824
        %826 = vrot.lane.b32.xlu0 %v653, 88
        %v827 = vpop.permute.xlu0 %826
        %v828 = vsel %vm660, %v825, 0
        %v830 = vsel %vm660, %v827, 0
        %832 = vmatprep.subr.mxu0 0.0
        %833 = vmatpush1.xpose.msra.mxu0 0.0
        %834 = vmatprep.subr.mxu0 0.0
        %835 = vmatpush1.xpose.msra.mxu0 0.0
        %836 = vmatprep.subr.mxu0 0.0
        %837 = vmatpush1.xpose.msra.mxu0 0.0
        %838 = vmatprep.subr.mxu0 0.0
        %839 = vmatpush1.xpose.msra.mxu0 0.0
        %840 = vmatprep.subr.mxu0 0.0
        %841 = vmatpush1.xpose.msra.mxu0 0.0
        %842 = vmatprep.subr.mxu0 0.0
        %843 = vmatpush1.xpose.msra.mxu0 0.0
        %844 = vmatprep.subr.mxu0 0.0
        %845 = vmatpush1.xpose.msra.mxu0 0.0
        %846 = vmatprep.subr.mxu0 0.0
        %847 = vmatpush1.xpose.msra.mxu0 0.0
        %848 = vmatprep.subr.mxu0 0.0
        %849 = vmatpush1.xpose.msra.mxu0 0.0
        %850 = vmatprep.subr.mxu0 0.0
        %851 = vmatpush1.xpose.msra.mxu0 0.0
        %852 = vmatprep.subr.mxu0 0.0
        %853 = vmatpush1.xpose.msra.mxu0 0.0
        %854 = vmatprep.subr.mxu0 0.0
        %855 = vmatpush1.xpose.msra.mxu0 0.0
        %856 = vmatprep.subr.mxu0 0.0
        %857 = vmatpush1.xpose.msra.mxu0 0.0
        %858 = vmatprep.subr.mxu0 0.0
        %859 = vmatpush1.xpose.msra.mxu0 0.0
        %860 = vmatprep.subr.mxu0 0.0
        %861 = vmatpush1.xpose.msra.mxu0 0.0
        %862 = vmatprep.subr.mxu0 0.0
        %863 = vmatpush1.xpose.msra.mxu0 %v830
        %864 = vmatprep.subr.mxu0 0.0
        %865 = vmatpush2.xpose.msra.mxu0 0.0
        %866 = vmatprep.subr.mxu0 0.0
        %867 = vmatpush2.xpose.msra.mxu0 0.0
        %868 = vmatprep.subr.mxu0 0.0
        %869 = vmatpush2.xpose.msra.mxu0 0.0
        %870 = vmatprep.subr.mxu0 0.0
        %871 = vmatpush2.xpose.msra.mxu0 0.0
        %872 = vmatprep.subr.mxu0 0.0
        %873 = vmatpush2.xpose.msra.mxu0 0.0
        %874 = vmatprep.subr.mxu0 0.0
        %875 = vmatpush2.xpose.msra.mxu0 0.0
        %876 = vmatprep.subr.mxu0 0.0
        %877 = vmatpush2.xpose.msra.mxu0 0.0
        %878 = vmatprep.subr.mxu0 0.0
        %879 = vmatpush2.xpose.msra.mxu0 0.0
        %880 = vmatprep.subr.mxu0 0.0
        %881 = vmatpush2.xpose.msra.mxu0 0.0
        %882 = vmatprep.subr.mxu0 0.0
        %883 = vmatpush2.xpose.msra.mxu0 0.0
        %884 = vmatprep.subr.mxu0 0.0
        %885 = vmatpush2.xpose.msra.mxu0 0.0
        %886 = vmatprep.subr.mxu0 0.0
        %887 = vmatpush2.xpose.msra.mxu0 0.0
        %888 = vmatprep.subr.mxu0 0.0
        %889 = vmatpush2.xpose.msra.mxu0 0.0
        %890 = vmatprep.subr.mxu0 0.0
        %891 = vmatpush2.xpose.msra.mxu0 0.0
        %892 = vmatprep.subr.mxu0 0.0
        %893 = vmatpush2.xpose.msra.mxu0 0.0
        %894 = vmatprep.subr.mxu0 0.0
        %895 = vmatpush2.xpose.msra.mxu0 0.0
        %896 = vmatprep.mubr.f32.mxu0 0.0
        %897 = vmatmul.mubr.f32.gmra.mxu0 %v828
        %v898 = vpop.f32.mrf.mxu0
        %v899 = vadd.f32 0.0, %v898
        %v900 = vpop.f32.mrf.mxu0
        %901 = vdwg.mxu0
        %v902 = vsel %vm504, -1e+30, %v899
        %v903 = vsel %vm660, %v902, -inf
        %904 = vmax.xlane.f32.xlu0 %v903
        %v905 = vpop.xlane.xlu0 %904
        %v906 = vsub.f32 %v902, %v905
        %v907 = vmul.f32 %v906, 1.442695
        %v908 = vpow.pop %v907
        %v909 = vsel %vm660, %v908, 0.0
        %910 = vadd.xlane.f32.xlu0 %v909
        %v911 = vpop.xlane.xlu0 %910
        %v912 = vrcp.pop %v911
        %v913 = vmul.f32 %v908, %v912
        %914 = vrot.lane.b32.xlu0 %v653, 56
        %v915 = vpop.permute.xlu0 %914
        %v918 = vsel %vm660, %v913, 0
        %920 = vmatprep.subr.mxu0 0.0
        %921 = vmatpush1.msra.mxu0 0.0
        %922 = vmatprep.subr.mxu0 0.0
        %923 = vmatpush1.msra.mxu0 0.0
        %924 = vmatprep.subr.mxu0 0.0
        %925 = vmatpush1.msra.mxu0 0.0
        %926 = vmatprep.subr.mxu0 0.0
        %927 = vmatpush1.msra.mxu0 0.0
        %928 = vmatprep.subr.mxu0 0.0
        %929 = vmatpush1.msra.mxu0 0.0
        %930 = vmatprep.subr.mxu0 0.0
        %931 = vmatpush1.msra.mxu0 0.0
        %932 = vmatprep.subr.mxu0 0.0
        %933 = vmatpush1.msra.mxu0 0.0
        %934 = vmatprep.subr.mxu0 0.0
        %935 = vmatpush1.msra.mxu0 0.0
        %936 = vmatprep.subr.mxu0 0.0
        %937 = vmatpush1.msra.mxu0 0.0
        %938 = vmatprep.subr.mxu0 0.0
        %939 = vmatpush1.msra.mxu0 0.0
        %940 = vmatprep.subr.mxu0 0.0
        %941 = vmatpush1.msra.mxu0 0.0
        %942 = vmatprep.subr.mxu0 0.0
        %943 = vmatpush1.msra.mxu0 0.0
        %944 = vmatprep.subr.mxu0 0.0
        %945 = vmatpush1.msra.mxu0 0.0
        %946 = vmatprep.subr.mxu0 0.0
        %947 = vmatpush1.msra.mxu0 0.0
        %948 = vmatprep.subr.mxu0 0.0
        %949 = vmatpush1.msra.mxu0 0.0
        %950 = vmatprep.subr.mxu0 0.0
        %951 = vmatpush1.msra.mxu0 %v915
        %952 = vmatprep.subr.mxu0 0.0
        %953 = vmatpush2.msra.mxu0 0.0
        %954 = vmatprep.subr.mxu0 0.0
        %955 = vmatpush2.msra.mxu0 0.0
        %956 = vmatprep.subr.mxu0 0.0
        %957 = vmatpush2.msra.mxu0 0.0
        %958 = vmatprep.subr.mxu0 0.0
        %959 = vmatpush2.msra.mxu0 0.0
        %960 = vmatprep.subr.mxu0 0.0
        %961 = vmatpush2.msra.mxu0 0.0
        %962 = vmatprep.subr.mxu0 0.0
        %963 = vmatpush2.msra.mxu0 0.0
        %964 = vmatprep.subr.mxu0 0.0
        %965 = vmatpush2.msra.mxu0 0.0
        %966 = vmatprep.subr.mxu0 0.0
        %967 = vmatpush2.msra.mxu0 0.0
        %968 = vmatprep.subr.mxu0 0.0
        %969 = vmatpush2.msra.mxu0 0.0
        %970 = vmatprep.subr.mxu0 0.0
        %971 = vmatpush2.msra.mxu0 0.0
        %972 = vmatprep.subr.mxu0 0.0
        %973 = vmatpush2.msra.mxu0 0.0
        %974 = vmatprep.subr.mxu0 0.0
        %975 = vmatpush2.msra.mxu0 0.0
        %976 = vmatprep.subr.mxu0 0.0
        %977 = vmatpush2.msra.mxu0 0.0
        %978 = vmatprep.subr.mxu0 0.0
        %979 = vmatpush2.msra.mxu0 0.0
        %980 = vmatprep.subr.mxu0 0.0
        %981 = vmatpush2.msra.mxu0 0.0
        %982 = vmatprep.subr.mxu0 0.0
        %983 = vmatpush2.msra.mxu0 0.0
        %984 = vmatprep.mubr.f32.mxu0 0.0
        %985 = vmatmul.mubr.f32.gmra.mxu0 %v918
        %v986 = vpop.f32.mrf.mxu0
        %v987 = vadd.f32 0.0, %v986
        %v988 = vpop.f32.mrf.mxu0
        %989 = vdwg.mxu0
        %v991 = vsel %vm660, %v987, 0
        %993 = vmatprep.subr.mxu0 0.0
        %994 = vmatpush1.msra.mxu0 0.0
        %995 = vmatprep.subr.mxu0 0.0
        %996 = vmatpush1.msra.mxu0 0.0
        %997 = vmatprep.subr.mxu0 0.0
        %998 = vmatpush1.msra.mxu0 0.0
        %999 = vmatprep.subr.mxu0 0.0
        %1000 = vmatpush1.msra.mxu0 0.0
        %1001 = vmatprep.subr.mxu0 0.0
        %1002 = vmatpush1.msra.mxu0 0.0
        %1003 = vmatprep.subr.mxu0 0.0
        %1004 = vmatpush1.msra.mxu0 0.0
        %1005 = vmatprep.subr.mxu0 0.0
        %1006 = vmatpush1.msra.mxu0 0.0
        %1007 = vmatprep.subr.mxu0 0.0
        %1008 = vmatpush1.msra.mxu0 0.0
        %1009 = vmatprep.subr.mxu0 0.0
        %1010 = vmatpush1.msra.mxu0 0.0
        %1011 = vmatprep.subr.mxu0 0.0
        %1012 = vmatpush1.msra.mxu0 0.0
        %1013 = vmatprep.subr.mxu0 0.0
        %1014 = vmatpush1.msra.mxu0 0.0
        %1015 = vmatprep.subr.mxu0 0.0
        %1016 = vmatpush1.msra.mxu0 0.0
        %1017 = vmatprep.subr.mxu0 0.0
        %1018 = vmatpush1.msra.mxu0 0.0
        %1019 = vmatprep.subr.mxu0 0.0
        %1020 = vmatpush1.msra.mxu0 0.0
        %1021 = vmatprep.subr.mxu0 0.0
        %1022 = vmatpush1.msra.mxu0 0.0
        %1023 = vmatprep.subr.mxu0 0.0
        %1024 = vmatpush1.msra.mxu0 %v534
        %1025 = vmatprep.subr.mxu0 0.0
        %1026 = vmatpush2.msra.mxu0 0.0
        %1027 = vmatprep.subr.mxu0 0.0
        %1028 = vmatpush2.msra.mxu0 0.0
        %1029 = vmatprep.subr.mxu0 0.0
        %1030 = vmatpush2.msra.mxu0 0.0
        %1031 = vmatprep.subr.mxu0 0.0
        %1032 = vmatpush2.msra.mxu0 0.0
        %1033 = vmatprep.subr.mxu0 0.0
        %1034 = vmatpush2.msra.mxu0 0.0
        %1035 = vmatprep.subr.mxu0 0.0
        %1036 = vmatpush2.msra.mxu0 0.0
        %1037 = vmatprep.subr.mxu0 0.0
        %1038 = vmatpush2.msra.mxu0 0.0
        %1039 = vmatprep.subr.mxu0 0.0
        %1040 = vmatpush2.msra.mxu0 0.0
        %1041 = vmatprep.subr.mxu0 0.0
        %1042 = vmatpush2.msra.mxu0 0.0
        %1043 = vmatprep.subr.mxu0 0.0
        %1044 = vmatpush2.msra.mxu0 0.0
        %1045 = vmatprep.subr.mxu0 0.0
        %1046 = vmatpush2.msra.mxu0 0.0
        %1047 = vmatprep.subr.mxu0 0.0
        %1048 = vmatpush2.msra.mxu0 0.0
        %1049 = vmatprep.subr.mxu0 0.0
        %1050 = vmatpush2.msra.mxu0 0.0
        %1051 = vmatprep.subr.mxu0 0.0
        %1052 = vmatpush2.msra.mxu0 0.0
        %1053 = vmatprep.subr.mxu0 0.0
        %1054 = vmatpush2.msra.mxu0 0.0
        %1055 = vmatprep.subr.mxu0 0.0
        %1056 = vmatpush2.msra.mxu0 0.0
        %1057 = vmatprep.mubr.f32.mxu0 0.0
        %1058 = vmatmul.mubr.f32.gmra.mxu0 %v991
        %v1059 = vpop.f32.mrf.mxu0
        %v1060 = vadd.f32 0.0, %v1059
        %v1061 = vpop.f32.mrf.mxu0
        %1062 = vdwg.mxu0
        %v1064 = vsel %vm660, %v821, 0
        %1066 = vmatprep.subr.mxu0 0.0
        %1067 = vmatpush1.msra.mxu0 0.0
        %1068 = vmatprep.subr.mxu0 0.0
        %1069 = vmatpush1.msra.mxu0 0.0
        %1070 = vmatprep.subr.mxu0 0.0
        %1071 = vmatpush1.msra.mxu0 0.0
        %1072 = vmatprep.subr.mxu0 0.0
        %1073 = vmatpush1.msra.mxu0 0.0
        %1074 = vmatprep.subr.mxu0 0.0
        %1075 = vmatpush1.msra.mxu0 0.0
        %1076 = vmatprep.subr.mxu0 0.0
        %1077 = vmatpush1.msra.mxu0 0.0
        %1078 = vmatprep.subr.mxu0 0.0
        %1079 = vmatpush1.msra.mxu0 0.0
        %1080 = vmatprep.subr.mxu0 0.0
        %1081 = vmatpush1.msra.mxu0 0.0
        %1082 = vmatprep.subr.mxu0 0.0
        %1083 = vmatpush1.msra.mxu0 0.0
        %1084 = vmatprep.subr.mxu0 0.0
        %1085 = vmatpush1.msra.mxu0 0.0
        %1086 = vmatprep.subr.mxu0 0.0
        %1087 = vmatpush1.msra.mxu0 0.0
        %1088 = vmatprep.subr.mxu0 0.0
        %1089 = vmatpush1.msra.mxu0 0.0
        %1090 = vmatprep.subr.mxu0 0.0
        %1091 = vmatpush1.msra.mxu0 0.0
        %1092 = vmatprep.subr.mxu0 0.0
        %1093 = vmatpush1.msra.mxu0 0.0
        %1094 = vmatprep.subr.mxu0 0.0
        %1095 = vmatpush1.msra.mxu0 0.0
        %1096 = vmatprep.subr.mxu0 0.0
        %1097 = vmatpush1.msra.mxu0 %v533
        %1098 = vmatprep.subr.mxu0 0.0
        %1099 = vmatpush2.msra.mxu0 0.0
        %1100 = vmatprep.subr.mxu0 0.0
        %1101 = vmatpush2.msra.mxu0 0.0
        %1102 = vmatprep.subr.mxu0 0.0
        %1103 = vmatpush2.msra.mxu0 0.0
        %1104 = vmatprep.subr.mxu0 0.0
        %1105 = vmatpush2.msra.mxu0 0.0
        %1106 = vmatprep.subr.mxu0 0.0
        %1107 = vmatpush2.msra.mxu0 0.0
        %1108 = vmatprep.subr.mxu0 0.0
        %1109 = vmatpush2.msra.mxu0 0.0
        %1110 = vmatprep.subr.mxu0 0.0
        %1111 = vmatpush2.msra.mxu0 0.0
        %1112 = vmatprep.subr.mxu0 0.0
        %1113 = vmatpush2.msra.mxu0 0.0
        %1114 = vmatprep.subr.mxu0 0.0
        %1115 = vmatpush2.msra.mxu0 0.0
        %1116 = vmatprep.subr.mxu0 0.0
        %1117 = vmatpush2.msra.mxu0 0.0
        %1118 = vmatprep.subr.mxu0 0.0
        %1119 = vmatpush2.msra.mxu0 0.0
        %1120 = vmatprep.subr.mxu0 0.0
        %1121 = vmatpush2.msra.mxu0 0.0
        %1122 = vmatprep.subr.mxu0 0.0
        %1123 = vmatpush2.msra.mxu0 0.0
        %1124 = vmatprep.subr.mxu0 0.0
        %1125 = vmatpush2.msra.mxu0 0.0
        %1126 = vmatprep.subr.mxu0 0.0
        %1127 = vmatpush2.msra.mxu0 0.0
        %1128 = vmatprep.subr.mxu0 0.0
        %1129 = vmatpush2.msra.mxu0 0.0
        %1130 = vmatprep.mubr.f32.mxu0 0.0
        %1131 = vmatmul.mubr.f32.gmra.mxu0 %v1064
        %v1132 = vpop.f32.mrf.mxu0
        %v1133 = vadd.f32 %v1060, %v1132
        %v1134 = vpop.f32.mrf.mxu0
        %1135 = vdwg.mxu0
        %1136 = vrot.lane.b32.xlu0 %v656, 112
        %v1137 = vpop.permute.xlu0 %1136
        %1138 = vrot.lane.b32.xlu0 %v653, 80
        %v1139 = vpop.permute.xlu0 %1138
        %v1140 = vsel %vm660, %v1137, 0
        %v1142 = vsel %vm660, %v1139, 0
        %1144 = vmatprep.subr.mxu0 0.0
        %1145 = vmatpush1.xpose.msra.mxu0 0.0
        %1146 = vmatprep.subr.mxu0 0.0
        %1147 = vmatpush1.xpose.msra.mxu0 0.0
        %1148 = vmatprep.subr.mxu0 0.0
        %1149 = vmatpush1.xpose.msra.mxu0 0.0
        %1150 = vmatprep.subr.mxu0 0.0
        %1151 = vmatpush1.xpose.msra.mxu0 0.0
        %1152 = vmatprep.subr.mxu0 0.0
        %1153 = vmatpush1.xpose.msra.mxu0 0.0
        %1154 = vmatprep.subr.mxu0 0.0
        %1155 = vmatpush1.xpose.msra.mxu0 0.0
        %1156 = vmatprep.subr.mxu0 0.0
        %1157 = vmatpush1.xpose.msra.mxu0 0.0
        %1158 = vmatprep.subr.mxu0 0.0
        %1159 = vmatpush1.xpose.msra.mxu0 0.0
        %1160 = vmatprep.subr.mxu0 0.0
        %1161 = vmatpush1.xpose.msra.mxu0 0.0
        %1162 = vmatprep.subr.mxu0 0.0
        %1163 = vmatpush1.xpose.msra.mxu0 0.0
        %1164 = vmatprep.subr.mxu0 0.0
        %1165 = vmatpush1.xpose.msra.mxu0 0.0
        %1166 = vmatprep.subr.mxu0 0.0
        %1167 = vmatpush1.xpose.msra.mxu0 0.0
        %1168 = vmatprep.subr.mxu0 0.0
        %1169 = vmatpush1.xpose.msra.mxu0 0.0
        %1170 = vmatprep.subr.mxu0 0.0
        %1171 = vmatpush1.xpose.msra.mxu0 0.0
        %1172 = vmatprep.subr.mxu0 0.0
        %1173 = vmatpush1.xpose.msra.mxu0 0.0
        %1174 = vmatprep.subr.mxu0 0.0
        %1175 = vmatpush1.xpose.msra.mxu0 %v1142
        %1176 = vmatprep.subr.mxu0 0.0
        %1177 = vmatpush2.xpose.msra.mxu0 0.0
        %1178 = vmatprep.subr.mxu0 0.0
        %1179 = vmatpush2.xpose.msra.mxu0 0.0
        %1180 = vmatprep.subr.mxu0 0.0
        %1181 = vmatpush2.xpose.msra.mxu0 0.0
        %1182 = vmatprep.subr.mxu0 0.0
        %1183 = vmatpush2.xpose.msra.mxu0 0.0
        %1184 = vmatprep.subr.mxu0 0.0
        %1185 = vmatpush2.xpose.msra.mxu0 0.0
        %1186 = vmatprep.subr.mxu0 0.0
        %1187 = vmatpush2.xpose.msra.mxu0 0.0
        %1188 = vmatprep.subr.mxu0 0.0
        %1189 = vmatpush2.xpose.msra.mxu0 0.0
        %1190 = vmatprep.subr.mxu0 0.0
        %1191 = vmatpush2.xpose.msra.mxu0 0.0
        %1192 = vmatprep.subr.mxu0 0.0
        %1193 = vmatpush2.xpose.msra.mxu0 0.0
        %1194 = vmatprep.subr.mxu0 0.0
        %1195 = vmatpush2.xpose.msra.mxu0 0.0
        %1196 = vmatprep.subr.mxu0 0.0
        %1197 = vmatpush2.xpose.msra.mxu0 0.0
        %1198 = vmatprep.subr.mxu0 0.0
        %1199 = vmatpush2.xpose.msra.mxu0 0.0
        %1200 = vmatprep.subr.mxu0 0.0
        %1201 = vmatpush2.xpose.msra.mxu0 0.0
        %1202 = vmatprep.subr.mxu0 0.0
        %1203 = vmatpush2.xpose.msra.mxu0 0.0
        %1204 = vmatprep.subr.mxu0 0.0
        %1205 = vmatpush2.xpose.msra.mxu0 0.0
        %1206 = vmatprep.subr.mxu0 0.0
        %1207 = vmatpush2.xpose.msra.mxu0 0.0
        %1208 = vmatprep.mubr.f32.mxu0 0.0
        %1209 = vmatmul.mubr.f32.gmra.mxu0 %v1140
        %v1210 = vpop.f32.mrf.mxu0
        %v1211 = vadd.f32 0.0, %v1210
        %v1212 = vpop.f32.mrf.mxu0
        %1213 = vdwg.mxu0
        %v1214 = vsel %vm504, -1e+30, %v1211
        %v1215 = vsel %vm660, %v1214, -inf
        %1216 = vmax.xlane.f32.xlu0 %v1215
        %v1217 = vpop.xlane.xlu0 %1216
        %v1218 = vsub.f32 %v1214, %v1217
        %v1219 = vmul.f32 %v1218, 1.442695
        %v1220 = vpow.pop %v1219
        %v1221 = vsel %vm660, %v1220, 0.0
        %1222 = vadd.xlane.f32.xlu0 %v1221
        %v1223 = vpop.xlane.xlu0 %1222
        %v1224 = vrcp.pop %v1223
        %v1225 = vmul.f32 %v1220, %v1224
        %1226 = vrot.lane.b32.xlu0 %v653, 48
        %v1227 = vpop.permute.xlu0 %1226
        %v1230 = vsel %vm660, %v1225, 0
        %1232 = vmatprep.subr.mxu0 0.0
        %1233 = vmatpush1.msra.mxu0 0.0
        %1234 = vmatprep.subr.mxu0 0.0
        %1235 = vmatpush1.msra.mxu0 0.0
        %1236 = vmatprep.subr.mxu0 0.0
        %1237 = vmatpush1.msra.mxu0 0.0
        %1238 = vmatprep.subr.mxu0 0.0
        %1239 = vmatpush1.msra.mxu0 0.0
        %1240 = vmatprep.subr.mxu0 0.0
        %1241 = vmatpush1.msra.mxu0 0.0
        %1242 = vmatprep.subr.mxu0 0.0
        %1243 = vmatpush1.msra.mxu0 0.0
        %1244 = vmatprep.subr.mxu0 0.0
        %1245 = vmatpush1.msra.mxu0 0.0
        %1246 = vmatprep.subr.mxu0 0.0
        %1247 = vmatpush1.msra.mxu0 0.0
        %1248 = vmatprep.subr.mxu0 0.0
        %1249 = vmatpush1.msra.mxu0 0.0
        %1250 = vmatprep.subr.mxu0 0.0
        %1251 = vmatpush1.msra.mxu0 0.0
        %1252 = vmatprep.subr.mxu0 0.0
        %1253 = vmatpush1.msra.mxu0 0.0
        %1254 = vmatprep.subr.mxu0 0.0
        %1255 = vmatpush1.msra.mxu0 0.0
        %1256 = vmatprep.subr.mxu0 0.0
        %1257 = vmatpush1.msra.mxu0 0.0
        %1258 = vmatprep.subr.mxu0 0.0
        %1259 = vmatpush1.msra.mxu0 0.0
        %1260 = vmatprep.subr.mxu0 0.0
        %1261 = vmatpush1.msra.mxu0 0.0
        %1262 = vmatprep.subr.mxu0 0.0
        %1263 = vmatpush1.msra.mxu0 %v1227
        %1264 = vmatprep.subr.mxu0 0.0
        %1265 = vmatpush2.msra.mxu0 0.0
        %1266 = vmatprep.subr.mxu0 0.0
        %1267 = vmatpush2.msra.mxu0 0.0
        %1268 = vmatprep.subr.mxu0 0.0
        %1269 = vmatpush2.msra.mxu0 0.0
        %1270 = vmatprep.subr.mxu0 0.0
        %1271 = vmatpush2.msra.mxu0 0.0
        %1272 = vmatprep.subr.mxu0 0.0
        %1273 = vmatpush2.msra.mxu0 0.0
        %1274 = vmatprep.subr.mxu0 0.0
        %1275 = vmatpush2.msra.mxu0 0.0
        %1276 = vmatprep.subr.mxu0 0.0
        %1277 = vmatpush2.msra.mxu0 0.0
        %1278 = vmatprep.subr.mxu0 0.0
        %1279 = vmatpush2.msra.mxu0 0.0
        %1280 = vmatprep.subr.mxu0 0.0
        %1281 = vmatpush2.msra.mxu0 0.0
        %1282 = vmatprep.subr.mxu0 0.0
        %1283 = vmatpush2.msra.mxu0 0.0
        %1284 = vmatprep.subr.mxu0 0.0
        %1285 = vmatpush2.msra.mxu0 0.0
        %1286 = vmatprep.subr.mxu0 0.0
        %1287 = vmatpush2.msra.mxu0 0.0
        %1288 = vmatprep.subr.mxu0 0.0
        %1289 = vmatpush2.msra.mxu0 0.0
        %1290 = vmatprep.subr.mxu0 0.0
        %1291 = vmatpush2.msra.mxu0 0.0
        %1292 = vmatprep.subr.mxu0 0.0
        %1293 = vmatpush2.msra.mxu0 0.0
        %1294 = vmatprep.subr.mxu0 0.0
        %1295 = vmatpush2.msra.mxu0 0.0
        %1296 = vmatprep.mubr.f32.mxu0 0.0
        %1297 = vmatmul.mubr.f32.gmra.mxu0 %v1230
        %v1298 = vpop.f32.mrf.mxu0
        %v1299 = vadd.f32 0.0, %v1298
        %v1300 = vpop.f32.mrf.mxu0
        %1301 = vdwg.mxu0
        %v1303 = vsel %vm660, %v1299, 0
        %1305 = vmatprep.subr.mxu0 0.0
        %1306 = vmatpush1.msra.mxu0 0.0
        %1307 = vmatprep.subr.mxu0 0.0
        %1308 = vmatpush1.msra.mxu0 0.0
        %1309 = vmatprep.subr.mxu0 0.0
        %1310 = vmatpush1.msra.mxu0 0.0
        %1311 = vmatprep.subr.mxu0 0.0
        %1312 = vmatpush1.msra.mxu0 0.0
        %1313 = vmatprep.subr.mxu0 0.0
        %1314 = vmatpush1.msra.mxu0 0.0
        %1315 = vmatprep.subr.mxu0 0.0
        %1316 = vmatpush1.msra.mxu0 0.0
        %1317 = vmatprep.subr.mxu0 0.0
        %1318 = vmatpush1.msra.mxu0 0.0
        %1319 = vmatprep.subr.mxu0 0.0
        %1320 = vmatpush1.msra.mxu0 0.0
        %1321 = vmatprep.subr.mxu0 0.0
        %1322 = vmatpush1.msra.mxu0 0.0
        %1323 = vmatprep.subr.mxu0 0.0
        %1324 = vmatpush1.msra.mxu0 0.0
        %1325 = vmatprep.subr.mxu0 0.0
        %1326 = vmatpush1.msra.mxu0 0.0
        %1327 = vmatprep.subr.mxu0 0.0
        %1328 = vmatpush1.msra.mxu0 0.0
        %1329 = vmatprep.subr.mxu0 0.0
        %1330 = vmatpush1.msra.mxu0 0.0
        %1331 = vmatprep.subr.mxu0 0.0
        %1332 = vmatpush1.msra.mxu0 0.0
        %1333 = vmatprep.subr.mxu0 0.0
        %1334 = vmatpush1.msra.mxu0 0.0
        %1335 = vmatprep.subr.mxu0 0.0
        %1336 = vmatpush1.msra.mxu0 %v535
        %1337 = vmatprep.subr.mxu0 0.0
        %1338 = vmatpush2.msra.mxu0 0.0
        %1339 = vmatprep.subr.mxu0 0.0
        %1340 = vmatpush2.msra.mxu0 0.0
        %1341 = vmatprep.subr.mxu0 0.0
        %1342 = vmatpush2.msra.mxu0 0.0
        %1343 = vmatprep.subr.mxu0 0.0
        %1344 = vmatpush2.msra.mxu0 0.0
        %1345 = vmatprep.subr.mxu0 0.0
        %1346 = vmatpush2.msra.mxu0 0.0
        %1347 = vmatprep.subr.mxu0 0.0
        %1348 = vmatpush2.msra.mxu0 0.0
        %1349 = vmatprep.subr.mxu0 0.0
        %1350 = vmatpush2.msra.mxu0 0.0
        %1351 = vmatprep.subr.mxu0 0.0
        %1352 = vmatpush2.msra.mxu0 0.0
        %1353 = vmatprep.subr.mxu0 0.0
        %1354 = vmatpush2.msra.mxu0 0.0
        %1355 = vmatprep.subr.mxu0 0.0
        %1356 = vmatpush2.msra.mxu0 0.0
        %1357 = vmatprep.subr.mxu0 0.0
        %1358 = vmatpush2.msra.mxu0 0.0
        %1359 = vmatprep.subr.mxu0 0.0
        %1360 = vmatpush2.msra.mxu0 0.0
        %1361 = vmatprep.subr.mxu0 0.0
        %1362 = vmatpush2.msra.mxu0 0.0
        %1363 = vmatprep.subr.mxu0 0.0
        %1364 = vmatpush2.msra.mxu0 0.0
        %1365 = vmatprep.subr.mxu0 0.0
        %1366 = vmatpush2.msra.mxu0 0.0
        %1367 = vmatprep.subr.mxu0 0.0
        %1368 = vmatpush2.msra.mxu0 0.0
        %1369 = vmatprep.mubr.f32.mxu0 0.0
        %1370 = vmatmul.mubr.f32.gmra.mxu0 %v1303
        %v1371 = vpop.f32.mrf.mxu0
        %v1372 = vadd.f32 0.0, %v1371
        %v1373 = vpop.f32.mrf.mxu0
        %1374 = vdwg.mxu0
        %v1375 = vadd.f32 %v1133, %v1372
        %1376 = vrot.lane.b32.xlu0 %v656, 104
        %v1377 = vpop.permute.xlu0 %1376
        %1378 = vrot.lane.b32.xlu0 %v653, 72
        %v1379 = vpop.permute.xlu0 %1378
        %v1380 = vsel %vm660, %v1377, 0
        %v1382 = vsel %vm660, %v1379, 0
        %1384 = vmatprep.subr.mxu0 0.0
        %1385 = vmatpush1.xpose.msra.mxu0 0.0
        %1386 = vmatprep.subr.mxu0 0.0
        %1387 = vmatpush1.xpose.msra.mxu0 0.0
        %1388 = vmatprep.subr.mxu0 0.0
        %1389 = vmatpush1.xpose.msra.mxu0 0.0
        %1390 = vmatprep.subr.mxu0 0.0
        %1391 = vmatpush1.xpose.msra.mxu0 0.0
        %1392 = vmatprep.subr.mxu0 0.0
        %1393 = vmatpush1.xpose.msra.mxu0 0.0
        %1394 = vmatprep.subr.mxu0 0.0
        %1395 = vmatpush1.xpose.msra.mxu0 0.0
        %1396 = vmatprep.subr.mxu0 0.0
        %1397 = vmatpush1.xpose.msra.mxu0 0.0
        %1398 = vmatprep.subr.mxu0 0.0
        %1399 = vmatpush1.xpose.msra.mxu0 0.0
        %1400 = vmatprep.subr.mxu0 0.0
        %1401 = vmatpush1.xpose.msra.mxu0 0.0
        %1402 = vmatprep.subr.mxu0 0.0
        %1403 = vmatpush1.xpose.msra.mxu0 0.0
        %1404 = vmatprep.subr.mxu0 0.0
        %1405 = vmatpush1.xpose.msra.mxu0 0.0
        %1406 = vmatprep.subr.mxu0 0.0
        %1407 = vmatpush1.xpose.msra.mxu0 0.0
        %1408 = vmatprep.subr.mxu0 0.0
        %1409 = vmatpush1.xpose.msra.mxu0 0.0
        %1410 = vmatprep.subr.mxu0 0.0
        %1411 = vmatpush1.xpose.msra.mxu0 0.0
        %1412 = vmatprep.subr.mxu0 0.0
        %1413 = vmatpush1.xpose.msra.mxu0 0.0
        %1414 = vmatprep.subr.mxu0 0.0
        %1415 = vmatpush1.xpose.msra.mxu0 %v1382
        %1416 = vmatprep.subr.mxu0 0.0
        %1417 = vmatpush2.xpose.msra.mxu0 0.0
        %1418 = vmatprep.subr.mxu0 0.0
        %1419 = vmatpush2.xpose.msra.mxu0 0.0
        %1420 = vmatprep.subr.mxu0 0.0
        %1421 = vmatpush2.xpose.msra.mxu0 0.0
        %1422 = vmatprep.subr.mxu0 0.0
        %1423 = vmatpush2.xpose.msra.mxu0 0.0
        %1424 = vmatprep.subr.mxu0 0.0
        %1425 = vmatpush2.xpose.msra.mxu0 0.0
        %1426 = vmatprep.subr.mxu0 0.0
        %1427 = vmatpush2.xpose.msra.mxu0 0.0
        %1428 = vmatprep.subr.mxu0 0.0
        %1429 = vmatpush2.xpose.msra.mxu0 0.0
        %1430 = vmatprep.subr.mxu0 0.0
        %1431 = vmatpush2.xpose.msra.mxu0 0.0
        %1432 = vmatprep.subr.mxu0 0.0
        %1433 = vmatpush2.xpose.msra.mxu0 0.0
        %1434 = vmatprep.subr.mxu0 0.0
        %1435 = vmatpush2.xpose.msra.mxu0 0.0
        %1436 = vmatprep.subr.mxu0 0.0
        %1437 = vmatpush2.xpose.msra.mxu0 0.0
        %1438 = vmatprep.subr.mxu0 0.0
        %1439 = vmatpush2.xpose.msra.mxu0 0.0
        %1440 = vmatprep.subr.mxu0 0.0
        %1441 = vmatpush2.xpose.msra.mxu0 0.0
        %1442 = vmatprep.subr.mxu0 0.0
        %1443 = vmatpush2.xpose.msra.mxu0 0.0
        %1444 = vmatprep.subr.mxu0 0.0
        %1445 = vmatpush2.xpose.msra.mxu0 0.0
        %1446 = vmatprep.subr.mxu0 0.0
        %1447 = vmatpush2.xpose.msra.mxu0 0.0
        %1448 = vmatprep.mubr.f32.mxu0 0.0
        %1449 = vmatmul.mubr.f32.gmra.mxu0 %v1380
        %v1450 = vpop.f32.mrf.mxu0
        %v1451 = vadd.f32 0.0, %v1450
        %v1452 = vpop.f32.mrf.mxu0
        %1453 = vdwg.mxu0
        %v1454 = vsel %vm504, -1e+30, %v1451
        %v1455 = vsel %vm660, %v1454, -inf
        %1456 = vmax.xlane.f32.xlu0 %v1455
        %v1457 = vpop.xlane.xlu0 %1456
        %v1458 = vsub.f32 %v1454, %v1457
        %v1459 = vmul.f32 %v1458, 1.442695
        %v1460 = vpow.pop %v1459
        %v1461 = vsel %vm660, %v1460, 0.0
        %1462 = vadd.xlane.f32.xlu0 %v1461
        %v1463 = vpop.xlane.xlu0 %1462
        %v1464 = vrcp.pop %v1463
        %v1465 = vmul.f32 %v1460, %v1464
        %1466 = vrot.lane.b32.xlu0 %v653, 40
        %v1467 = vpop.permute.xlu0 %1466
        %v1470 = vsel %vm660, %v1465, 0
        %1472 = vmatprep.subr.mxu0 0.0
        %1473 = vmatpush1.msra.mxu0 0.0
        %1474 = vmatprep.subr.mxu0 0.0
        %1475 = vmatpush1.msra.mxu0 0.0
        %1476 = vmatprep.subr.mxu0 0.0
        %1477 = vmatpush1.msra.mxu0 0.0
        %1478 = vmatprep.subr.mxu0 0.0
        %1479 = vmatpush1.msra.mxu0 0.0
        %1480 = vmatprep.subr.mxu0 0.0
        %1481 = vmatpush1.msra.mxu0 0.0
        %1482 = vmatprep.subr.mxu0 0.0
        %1483 = vmatpush1.msra.mxu0 0.0
        %1484 = vmatprep.subr.mxu0 0.0
        %1485 = vmatpush1.msra.mxu0 0.0
        %1486 = vmatprep.subr.mxu0 0.0
        %1487 = vmatpush1.msra.mxu0 0.0
        %1488 = vmatprep.subr.mxu0 0.0
        %1489 = vmatpush1.msra.mxu0 0.0
        %1490 = vmatprep.subr.mxu0 0.0
        %1491 = vmatpush1.msra.mxu0 0.0
        %1492 = vmatprep.subr.mxu0 0.0
        %1493 = vmatpush1.msra.mxu0 0.0
        %1494 = vmatprep.subr.mxu0 0.0
        %1495 = vmatpush1.msra.mxu0 0.0
        %1496 = vmatprep.subr.mxu0 0.0
        %1497 = vmatpush1.msra.mxu0 0.0
        %1498 = vmatprep.subr.mxu0 0.0
        %1499 = vmatpush1.msra.mxu0 0.0
        %1500 = vmatprep.subr.mxu0 0.0
        %1501 = vmatpush1.msra.mxu0 0.0
        %1502 = vmatprep.subr.mxu0 0.0
        %1503 = vmatpush1.msra.mxu0 %v1467
        %1504 = vmatprep.subr.mxu0 0.0
        %1505 = vmatpush2.msra.mxu0 0.0
        %1506 = vmatprep.subr.mxu0 0.0
        %1507 = vmatpush2.msra.mxu0 0.0
        %1508 = vmatprep.subr.mxu0 0.0
        %1509 = vmatpush2.msra.mxu0 0.0
        %1510 = vmatprep.subr.mxu0 0.0
        %1511 = vmatpush2.msra.mxu0 0.0
        %1512 = vmatprep.subr.mxu0 0.0
        %1513 = vmatpush2.msra.mxu0 0.0
        %1514 = vmatprep.subr.mxu0 0.0
        %1515 = vmatpush2.msra.mxu0 0.0
        %1516 = vmatprep.subr.mxu0 0.0
        %1517 = vmatpush2.msra.mxu0 0.0
        %1518 = vmatprep.subr.mxu0 0.0
        %1519 = vmatpush2.msra.mxu0 0.0
        %1520 = vmatprep.subr.mxu0 0.0
        %1521 = vmatpush2.msra.mxu0 0.0
        %1522 = vmatprep.subr.mxu0 0.0
        %1523 = vmatpush2.msra.mxu0 0.0
        %1524 = vmatprep.subr.mxu0 0.0
        %1525 = vmatpush2.msra.mxu0 0.0
        %1526 = vmatprep.subr.mxu0 0.0
        %1527 = vmatpush2.msra.mxu0 0.0
        %1528 = vmatprep.subr.mxu0 0.0
        %1529 = vmatpush2.msra.mxu0 0.0
        %1530 = vmatprep.subr.mxu0 0.0
        %1531 = vmatpush2.msra.mxu0 0.0
        %1532 = vmatprep.subr.mxu0 0.0
        %1533 = vmatpush2.msra.mxu0 0.0
        %1534 = vmatprep.subr.mxu0 0.0
        %1535 = vmatpush2.msra.mxu0 0.0
        %1536 = vmatprep.mubr.f32.mxu0 0.0
        %1537 = vmatmul.mubr.f32.gmra.mxu0 %v1470
        %v1538 = vpop.f32.mrf.mxu0
        %v1539 = vadd.f32 0.0, %v1538
        %v1540 = vpop.f32.mrf.mxu0
        %1541 = vdwg.mxu0
        %v1543 = vsel %vm660, %v1539, 0
        %1545 = vmatprep.subr.mxu0 0.0
        %1546 = vmatpush1.msra.mxu0 0.0
        %1547 = vmatprep.subr.mxu0 0.0
        %1548 = vmatpush1.msra.mxu0 0.0
        %1549 = vmatprep.subr.mxu0 0.0
        %1550 = vmatpush1.msra.mxu0 0.0
        %1551 = vmatprep.subr.mxu0 0.0
        %1552 = vmatpush1.msra.mxu0 0.0
        %1553 = vmatprep.subr.mxu0 0.0
        %1554 = vmatpush1.msra.mxu0 0.0
        %1555 = vmatprep.subr.mxu0 0.0
        %1556 = vmatpush1.msra.mxu0 0.0
        %1557 = vmatprep.subr.mxu0 0.0
        %1558 = vmatpush1.msra.mxu0 0.0
        %1559 = vmatprep.subr.mxu0 0.0
        %1560 = vmatpush1.msra.mxu0 0.0
        %1561 = vmatprep.subr.mxu0 0.0
        %1562 = vmatpush1.msra.mxu0 0.0
        %1563 = vmatprep.subr.mxu0 0.0
        %1564 = vmatpush1.msra.mxu0 0.0
        %1565 = vmatprep.subr.mxu0 0.0
        %1566 = vmatpush1.msra.mxu0 0.0
        %1567 = vmatprep.subr.mxu0 0.0
        %1568 = vmatpush1.msra.mxu0 0.0
        %1569 = vmatprep.subr.mxu0 0.0
        %1570 = vmatpush1.msra.mxu0 0.0
        %1571 = vmatprep.subr.mxu0 0.0
        %1572 = vmatpush1.msra.mxu0 0.0
        %1573 = vmatprep.subr.mxu0 0.0
        %1574 = vmatpush1.msra.mxu0 0.0
        %1575 = vmatprep.subr.mxu0 0.0
        %1576 = vmatpush1.msra.mxu0 %v536
        %1577 = vmatprep.subr.mxu0 0.0
        %1578 = vmatpush2.msra.mxu0 0.0
        %1579 = vmatprep.subr.mxu0 0.0
        %1580 = vmatpush2.msra.mxu0 0.0
        %1581 = vmatprep.subr.mxu0 0.0
        %1582 = vmatpush2.msra.mxu0 0.0
        %1583 = vmatprep.subr.mxu0 0.0
        %1584 = vmatpush2.msra.mxu0 0.0
        %1585 = vmatprep.subr.mxu0 0.0
        %1586 = vmatpush2.msra.mxu0 0.0
        %1587 = vmatprep.subr.mxu0 0.0
        %1588 = vmatpush2.msra.mxu0 0.0
        %1589 = vmatprep.subr.mxu0 0.0
        %1590 = vmatpush2.msra.mxu0 0.0
        %1591 = vmatprep.subr.mxu0 0.0
        %1592 = vmatpush2.msra.mxu0 0.0
        %1593 = vmatprep.subr.mxu0 0.0
        %1594 = vmatpush2.msra.mxu0 0.0
        %1595 = vmatprep.subr.mxu0 0.0
        %1596 = vmatpush2.msra.mxu0 0.0
        %1597 = vmatprep.subr.mxu0 0.0
        %1598 = vmatpush2.msra.mxu0 0.0
        %1599 = vmatprep.subr.mxu0 0.0
        %1600 = vmatpush2.msra.mxu0 0.0
        %1601 = vmatprep.subr.mxu0 0.0
        %1602 = vmatpush2.msra.mxu0 0.0
        %1603 = vmatprep.subr.mxu0 0.0
        %1604 = vmatpush2.msra.mxu0 0.0
        %1605 = vmatprep.subr.mxu0 0.0
        %1606 = vmatpush2.msra.mxu0 0.0
        %1607 = vmatprep.subr.mxu0 0.0
        %1608 = vmatpush2.msra.mxu0 0.0
        %1609 = vmatprep.mubr.f32.mxu0 0.0
        %1610 = vmatmul.mubr.f32.gmra.mxu0 %v1543
        %v1611 = vpop.f32.mrf.mxu0
        %v1612 = vadd.f32 0.0, %v1611
        %v1613 = vpop.f32.mrf.mxu0
        %1614 = vdwg.mxu0
        %v1615 = vadd.f32 %v1375, %v1612
        %v1616 = vadd.f32 %v490, %v1615
        %v1618 = vrot.slane %v1616, 7
        %1619 = vrot.lane.b32.xlu0 %v1618, 112
        %v1620 = vpop.permute.xlu0 %1619
        %vm1622 = vcmask 1040384
        %v1623 = vsel %vm1622, 0.0, %v1620
        %1625 = vrot.lane.b32.xlu0 %v1623, 16
        %v1626 = vpop.permute.xlu0 %1625
        %vm1628 = vcmask 130048
        %v1629 = vsel %vm1628, %v1616, %v1626
        %v1630 = vmul.f32 %v1629, %v1629
        %v1631 = vsel %vm561, %v1630, 0.0
        %1632 = vadd.xlane.f32.xlu0 %v1631
        %v1633 = vpop.xlane.xlu0 %1632
        %v1634 = vrsqrt.pop %v1633
        %v1635 = vmul.f32 %v1633, %v1634
        %vm1636 = vcmp.eq.f32.partialorder %v1633, inf
        %v1637 = vsel %vm1636, %v1633, %v1635
        %vm1638 = vcmp.eq.f32.partialorder %v1633, 0.0
        %v1639 = vand.u32 %v1633, 2147483648
        %v1640 = vsel %vm1638, %v1639, %v1637
        %v1641 = vmax.f32 %v1640, 1e-12
        %v1642 = vrcp.pop %v1641
        %v1643 = vmul.f32 %v1629, %v1642
        %v1644 = vmul.f32 %v1643, 5.656854
        %v1646 = vlaneseq
        %v1647 = vshrl.u32 %v1646, 7
        %v1648 = vsub.s32 0, %v1647
        %v1649 = vrot.slane %v537, %v1648
        %v1651 = vmul.f32 %v1644, %v1649
        %v1653 = vlaneseq
        %v1654 = vshrl.u32 %v1653, 7
        %v1655 = vsub.s32 0, %v1654
        %v1656 = vrot.slane %v542, %v1655
        %v1659 = vsel %vm561, %v1651, 0
        %1661 = vmatprep.subr.mxu0 0.0
        %1662 = vmatpush1.msra.mxu0 0.0
        %1663 = vmatprep.subr.mxu0 0.0
        %1664 = vmatpush1.msra.mxu0 0.0
        %1665 = vmatprep.subr.mxu0 0.0
        %1666 = vmatpush1.msra.mxu0 0.0
        %1667 = vmatprep.subr.mxu0 0.0
        %1668 = vmatpush1.msra.mxu0 0.0
        %1669 = vmatprep.subr.mxu0 0.0
        %1670 = vmatpush1.msra.mxu0 0.0
        %1671 = vmatprep.subr.mxu0 0.0
        %1672 = vmatpush1.msra.mxu0 0.0
        %1673 = vmatprep.subr.mxu0 0.0
        %1674 = vmatpush1.msra.mxu0 0.0
        %1675 = vmatprep.subr.mxu0 0.0
        %1676 = vmatpush1.msra.mxu0 0.0
        %1677 = vmatprep.subr.mxu0 0.0
        %1678 = vmatpush1.msra.mxu0 0.0
        %1679 = vmatprep.subr.mxu0 0.0
        %1680 = vmatpush1.msra.mxu0 0.0
        %1681 = vmatprep.subr.mxu0 0.0
        %1682 = vmatpush1.msra.mxu0 0.0
        %1683 = vmatprep.subr.mxu0 0.0
        %1684 = vmatpush1.msra.mxu0 0.0
        %1685 = vmatprep.subr.mxu0 0.0
        %1686 = vmatpush1.msra.mxu0 %v541
        %1687 = vmatprep.subr.mxu0 0.0
        %1688 = vmatpush1.msra.mxu0 %v540
        %1689 = vmatprep.subr.mxu0 0.0
        %1690 = vmatpush1.msra.mxu0 %v539
        %1691 = vmatprep.subr.mxu0 0.0
        %1692 = vmatpush1.msra.mxu0 %v538
        %1693 = vmatprep.subr.mxu0 0.0
        %1694 = vmatpush2.msra.mxu0 0.0
        %1695 = vmatprep.subr.mxu0 0.0
        %1696 = vmatpush2.msra.mxu0 0.0
        %1697 = vmatprep.subr.mxu0 0.0
        %1698 = vmatpush2.msra.mxu0 0.0
        %1699 = vmatprep.subr.mxu0 0.0
        %1700 = vmatpush2.msra.mxu0 0.0
        %1701 = vmatprep.subr.mxu0 0.0
        %1702 = vmatpush2.msra.mxu0 0.0
        %1703 = vmatprep.subr.mxu0 0.0
        %1704 = vmatpush2.msra.mxu0 0.0
        %1705 = vmatprep.subr.mxu0 0.0
        %1706 = vmatpush2.msra.mxu0 0.0
        %1707 = vmatprep.subr.mxu0 0.0
        %1708 = vmatpush2.msra.mxu0 0.0
        %1709 = vmatprep.subr.mxu0 0.0
        %1710 = vmatpush2.msra.mxu0 0.0
        %1711 = vmatprep.subr.mxu0 0.0
        %1712 = vmatpush2.msra.mxu0 0.0
        %1713 = vmatprep.subr.mxu0 0.0
        %1714 = vmatpush2.msra.mxu0 0.0
        %1715 = vmatprep.subr.mxu0 0.0
        %1716 = vmatpush2.msra.mxu0 0.0
        %1717 = vmatprep.subr.mxu0 0.0
        %1718 = vmatpush2.msra.mxu0 0.0
        %1719 = vmatprep.subr.mxu0 0.0
        %1720 = vmatpush2.msra.mxu0 0.0
        %1721 = vmatprep.subr.mxu0 0.0
        %1722 = vmatpush2.msra.mxu0 0.0
        %1723 = vmatprep.subr.mxu0 0.0
        %1724 = vmatpush2.msra.mxu0 0.0
        %1725 = vmatprep.mubr.f32.mxu0 0.0
        %1726 = vmatmul.mubr.f32.gmra.mxu0 %v1659
        %v1727 = vpop.f32.mrf.mxu0
        %v1728 = vadd.f32 %v1656, %v1727
        %v1729 = vpop.f32.mrf.mxu0
        %1730 = vdwg.mxu0
        %v1731 = vmul.f32 %v1728, 0.5
        %v1732 = vmul.f32 %v1728, 0.70710677
        %vm1733 = vcmp.ge.f32.partialorder %v1732, 0.0
        %v1734 = vsel %vm1733, 1.0, -1.0
        %v1735 = vand.u32 2147483647, %v1732
        %v1736 = vmul.f32 %v1735, 0.3275911
        %v1737 = vadd.f32 %v1736, 1.0
        %v1738 = vrcp.pop %v1737
        %v1739 = vmul.f32 1.0, %v1738
        %v1740 = vmul.f32 %v1739, 1.0614054
        %v1741 = vadd.f32 %v1740, -1.4531521
        %v1742 = vmul.f32 %v1741, %v1739
        %v1743 = vadd.f32 %v1742, 1.4214138
        %v1744 = vmul.f32 %v1743, %v1739
        %v1745 = vadd.f32 %v1744, -0.28449672
        %v1746 = vmul.f32 %v1745, %v1739
        %v1747 = vadd.f32 %v1746, 0.2548296
        %v1748 = vmul.f32 %v1747, %v1739
        %v1749 = vsub.f32 0.0, %v1735
        %v1750 = vmul.f32 %v1749, %v1735
        %v1751 = vmul.f32 %v1750, 1.442695
        %v1752 = vpow.pop %v1751
        %v1753 = vmul.f32 %v1748, %v1752
        %v1754 = vsub.f32 1.0, %v1753
        %v1755 = vmul.f32 %v1734, %v1754
        %v1756 = vadd.f32 %v1755, 1.0
        %v1757 = vmul.f32 %v1731, %v1756
        %v1759 = vlaneseq
        %v1760 = vshrl.u32 %v1759, 7
        %v1761 = vsub.s32 0, %v1760
        %v1762 = vrot.slane %v559, %v1761
        %1764 = vmatprep.subr.mxu0 0.0
        %1765 = vmatpush1.msra.mxu0 %v558
        %1766 = vmatprep.subr.mxu0 0.0
        %1767 = vmatpush1.msra.mxu0 %v557
        %1768 = vmatprep.subr.mxu0 0.0
        %1769 = vmatpush1.msra.mxu0 %v556
        %1770 = vmatprep.subr.mxu0 0.0
        %1771 = vmatpush1.msra.mxu0 %v555
        %1772 = vmatprep.subr.mxu0 0.0
        %1773 = vmatpush1.msra.mxu0 %v554
        %1774 = vmatprep.subr.mxu0 0.0
        %1775 = vmatpush1.msra.mxu0 %v553
        %1776 = vmatprep.subr.mxu0 0.0
        %1777 = vmatpush1.msra.mxu0 %v552
        %1778 = vmatprep.subr.mxu0 0.0
        %1779 = vmatpush1.msra.mxu0 %v551
        %1780 = vmatprep.subr.mxu0 0.0
        %1781 = vmatpush1.msra.mxu0 %v550
        %1782 = vmatprep.subr.mxu0 0.0
        %1783 = vmatpush1.msra.mxu0 %v549
        %1784 = vmatprep.subr.mxu0 0.0
        %1785 = vmatpush1.msra.mxu0 %v548
        %1786 = vmatprep.subr.mxu0 0.0
        %1787 = vmatpush1.msra.mxu0 %v547
        %1788 = vmatprep.subr.mxu0 0.0
        %1789 = vmatpush1.msra.mxu0 %v546
        %1790 = vmatprep.subr.mxu0 0.0
        %1791 = vmatpush1.msra.mxu0 %v545
        %1792 = vmatprep.subr.mxu0 0.0
        %1793 = vmatpush1.msra.mxu0 %v544
        %1794 = vmatprep.subr.mxu0 0.0
        %1795 = vmatpush1.msra.mxu0 %v543
        %1796 = vmatprep.subr.mxu0 0.0
        %1797 = vmatpush2.msra.mxu0 0.0
        %1798 = vmatprep.subr.mxu0 0.0
        %1799 = vmatpush2.msra.mxu0 0.0
        %1800 = vmatprep.subr.mxu0 0.0
        %1801 = vmatpush2.msra.mxu0 0.0
        %1802 = vmatprep.subr.mxu0 0.0
        %1803 = vmatpush2.msra.mxu0 0.0
        %1804 = vmatprep.subr.mxu0 0.0
        %1805 = vmatpush2.msra.mxu0 0.0
        %1806 = vmatprep.subr.mxu0 0.0
        %1807 = vmatpush2.msra.mxu0 0.0
        %1808 = vmatprep.subr.mxu0 0.0
        %1809 = vmatpush2.msra.mxu0 0.0
        %1810 = vmatprep.subr.mxu0 0.0
        %1811 = vmatpush2.msra.mxu0 0.0
        %1812 = vmatprep.subr.mxu0 0.0
        %1813 = vmatpush2.msra.mxu0 0.0
        %1814 = vmatprep.subr.mxu0 0.0
        %1815 = vmatpush2.msra.mxu0 0.0
        %1816 = vmatprep.subr.mxu0 0.0
        %1817 = vmatpush2.msra.mxu0 0.0
        %1818 = vmatprep.subr.mxu0 0.0
        %1819 = vmatpush2.msra.mxu0 0.0
        %1820 = vmatprep.subr.mxu0 0.0
        %1821 = vmatpush2.msra.mxu0 0.0
        %1822 = vmatprep.subr.mxu0 0.0
        %1823 = vmatpush2.msra.mxu0 0.0
        %1824 = vmatprep.subr.mxu0 0.0
        %1825 = vmatpush2.msra.mxu0 0.0
        %1826 = vmatprep.subr.mxu0 0.0
        %1827 = vmatpush2.msra.mxu0 0.0
        %1828 = vmatprep.mubr.f32.mxu0 0.0
        %1829 = vmatmul.mubr.f32.gmra.mxu0 %v1757
        %v1830 = vpop.f32.mrf.mxu0
        %v1831 = vadd.f32 %v1762, %v1830
        %v1832 = vpop.f32.mrf.mxu0
        %1833 = vdwg.mxu0
        %v1834 = vadd.f32 %v1831, %v1616
        %v1835 = vmul.f32 %v1834, %v1834
        %v1836 = vmul.f32 %v495, %v495
        %v1837 = vmul.f32 %v499, %v499
        %v1838 = vsel %vm561, %v1835, 0.0
        %1839 = vadd.xlane.f32.xlu0 %v1838
        %v1840 = vpop.xlane.xlu0 %1839
        %v1841 = vsel %vm561, %v1836, 0.0
        %1842 = vadd.xlane.f32.xlu0 %v1841
        %v1843 = vpop.xlane.xlu0 %1842
        %v1844 = vsel %vm561, %v1837, 0.0
        %1845 = vadd.xlane.f32.xlu0 %v1844
        %v1846 = vpop.xlane.xlu0 %1845
        %v1847 = vrsqrt.pop %v1840
        %v1848 = vmul.f32 %v1840, %v1847
        %vm1849 = vcmp.eq.f32.partialorder %v1840, inf
        %v1850 = vsel %vm1849, %v1840, %v1848
        %vm1851 = vcmp.eq.f32.partialorder %v1840, 0.0
        %v1852 = vand.u32 %v1840, 2147483648
        %v1853 = vsel %vm1851, %v1852, %v1850
        %v1854 = vrsqrt.pop %v1843
        %v1855 = vmul.f32 %v1843, %v1854
        %vm1856 = vcmp.eq.f32.partialorder %v1843, inf
        %v1857 = vsel %vm1856, %v1843, %v1855
        %vm1858 = vcmp.eq.f32.partialorder %v1843, 0.0
        %v1859 = vand.u32 %v1843, 2147483648
        %v1860 = vsel %vm1858, %v1859, %v1857
        %v1861 = vrsqrt.pop %v1846
        %v1862 = vmul.f32 %v1846, %v1861
        %vm1863 = vcmp.eq.f32.partialorder %v1846, inf
        %v1864 = vsel %vm1863, %v1846, %v1862
        %vm1865 = vcmp.eq.f32.partialorder %v1846, 0.0
        %v1866 = vand.u32 %v1846, 2147483648
        %v1867 = vsel %vm1865, %v1866, %v1864
        %v1868 = vmax.f32 %v1853, 1e-12
        %v1869 = vmax.f32 %v1860, 1e-12
        %v1870 = vmax.f32 %v1867, 1e-12
        %v1871 = vrcp.pop %v1868
        %v1872 = vmul.f32 %v1834, %v1871
        %v1873 = vrcp.pop %v1869
        %v1874 = vmul.f32 %v495, %v1873
        %v1875 = vrcp.pop %v1870
        %v1876 = vmul.f32 %v499, %v1875
        %v1877 = vmul.f32 %v1872, 5.656854
        %v1878 = vmul.f32 %v1874, 5.656854
        %v1879 = vmul.f32 %v1876, 5.656854
        %v1880 = vmul.f32 %v1877, %v580
        %v1881 = vmul.f32 %v1878, %v580
        %v1882 = vmul.f32 %v1879, %v580
        %v1884 = vsel %vm561, %v1880, 0
        %v1887 = vsel %vm561, %v1881, 0
        %v1890 = vsel %vm561, %v1882, 0
        %1892 = vmatprep.subr.mxu0 0.0
        %1893 = vmatpush1.msra.mxu0 0.0
        %1894 = vmatprep.subr.mxu0 0.0
        %1895 = vmatpush1.msra.mxu0 0.0
        %1896 = vmatprep.subr.mxu0 0.0
        %1897 = vmatpush1.msra.mxu0 0.0
        %1898 = vmatprep.subr.mxu0 0.0
        %1899 = vmatpush1.msra.mxu0 0.0
        %1900 = vmatprep.subr.mxu0 0.0
        %1901 = vmatpush1.msra.mxu0 0.0
        %1902 = vmatprep.subr.mxu0 0.0
        %1903 = vmatpush1.msra.mxu0 0.0
        %1904 = vmatprep.subr.mxu0 0.0
        %1905 = vmatpush1.msra.mxu0 0.0
        %1906 = vmatprep.subr.mxu0 0.0
        %1907 = vmatpush1.msra.mxu0 0.0
        %1908 = vmatprep.subr.mxu0 0.0
        %1909 = vmatpush1.msra.mxu0 0.0
        %1910 = vmatprep.subr.mxu0 0.0
        %1911 = vmatpush1.msra.mxu0 0.0
        %1912 = vmatprep.subr.mxu0 0.0
        %1913 = vmatpush1.msra.mxu0 0.0
        %1914 = vmatprep.subr.mxu0 0.0
        %1915 = vmatpush1.msra.mxu0 0.0
        %1916 = vmatprep.subr.mxu0 0.0
        %1917 = vmatpush1.msra.mxu0 %v532
        %1918 = vmatprep.subr.mxu0 0.0
        %1919 = vmatpush1.msra.mxu0 %v531
        %1920 = vmatprep.subr.mxu0 0.0
        %1921 = vmatpush1.msra.mxu0 %v530
        %1922 = vmatprep.subr.mxu0 0.0
        %1923 = vmatpush1.msra.mxu0 %v529
        %1924 = vmatprep.subr.mxu0 0.0
        %1925 = vmatpush2.msra.mxu0 0.0
        %1926 = vmatprep.subr.mxu0 0.0
        %1927 = vmatpush2.msra.mxu0 0.0
        %1928 = vmatprep.subr.mxu0 0.0
        %1929 = vmatpush2.msra.mxu0 0.0
        %1930 = vmatprep.subr.mxu0 0.0
        %1931 = vmatpush2.msra.mxu0 0.0
        %1932 = vmatprep.subr.mxu0 0.0
        %1933 = vmatpush2.msra.mxu0 0.0
        %1934 = vmatprep.subr.mxu0 0.0
        %1935 = vmatpush2.msra.mxu0 0.0
        %1936 = vmatprep.subr.mxu0 0.0
        %1937 = vmatpush2.msra.mxu0 0.0
        %1938 = vmatprep.subr.mxu0 0.0
        %1939 = vmatpush2.msra.mxu0 0.0
        %1940 = vmatprep.subr.mxu0 0.0
        %1941 = vmatpush2.msra.mxu0 0.0
        %1942 = vmatprep.subr.mxu0 0.0
        %1943 = vmatpush2.msra.mxu0 0.0
        %1944 = vmatprep.subr.mxu0 0.0
        %1945 = vmatpush2.msra.mxu0 0.0
        %1946 = vmatprep.subr.mxu0 0.0
        %1947 = vmatpush2.msra.mxu0 0.0
        %1948 = vmatprep.subr.mxu0 0.0
        %1949 = vmatpush2.msra.mxu0 0.0
        %1950 = vmatprep.subr.mxu0 0.0
        %1951 = vmatpush2.msra.mxu0 0.0
        %1952 = vmatprep.subr.mxu0 0.0
        %1953 = vmatpush2.msra.mxu0 0.0
        %1954 = vmatprep.subr.mxu0 0.0
        %1955 = vmatpush2.msra.mxu0 0.0
        %1956 = vmatprep.mubr.f32.mxu0 0.0
        %1957 = vmatmul.mubr.f32.gmra.mxu0 %v1884
        %v1958 = vpop.f32.mrf.mxu0
        %v1959 = vadd.f32 0.0, %v1958
        %v1960 = vpop.f32.mrf.mxu0
        %1961 = vmatprep.mubr.f32.mxu0 0.0
        %1962 = vmatmul.mubr.f32.gmra.mxu0 %v1887
        %v1963 = vpop.f32.mrf.mxu0
        %v1964 = vadd.f32 0.0, %v1963
        %v1965 = vpop.f32.mrf.mxu0
        %1966 = vmatprep.mubr.f32.mxu0 0.0
        %1967 = vmatmul.mubr.f32.gmra.mxu0 %v1890
        %v1968 = vpop.f32.mrf.mxu0
        %v1969 = vadd.f32 0.0, %v1968
        %v1970 = vpop.f32.mrf.mxu0
        %1971 = vdwg.mxu0
        %v1972 = vmul.f32 %v1959, 0.17677669
        %v1973 = vmul.f32 %v1964, 0.17677669
        %v1974 = vmul.f32 %v1969, 0.17677669
        %1978 = vrot.lane.b32.xlu0 %v1959, 96
        %v1979 = vpop.permute.xlu0 %1978
        %1980 = vrot.lane.b32.xlu0 %v1964, 96
        %v1981 = vpop.permute.xlu0 %1980
        %1982 = vrot.lane.b32.xlu0 %v1969, 96
        %v1983 = vpop.permute.xlu0 %1982
        %v1985 = vsel %vm660, %v1972, 0
        %v1988 = vsel %vm660, %v1973, 0
        %v1991 = vsel %vm660, %v1974, 0
        %v1993 = vsel %vm660, %v1979, 0
        %v1995 = vsel %vm660, %v1981, 0
        %v1997 = vsel %vm660, %v1983, 0
        %1999 = vmatprep.subr.mxu0 0.0
        %2000 = vmatpush1.xpose.msra.mxu0 0.0
        %2001 = vmatprep.subr.mxu0 0.0
        %2002 = vmatpush1.xpose.msra.mxu0 0.0
        %2003 = vmatprep.subr.mxu0 0.0
        %2004 = vmatpush1.xpose.msra.mxu0 0.0
        %2005 = vmatprep.subr.mxu0 0.0
        %2006 = vmatpush1.xpose.msra.mxu0 0.0
        %2007 = vmatprep.subr.mxu0 0.0
        %2008 = vmatpush1.xpose.msra.mxu0 0.0
        %2009 = vmatprep.subr.mxu0 0.0
        %2010 = vmatpush1.xpose.msra.mxu0 0.0
        %2011 = vmatprep.subr.mxu0 0.0
        %2012 = vmatpush1.xpose.msra.mxu0 0.0
        %2013 = vmatprep.subr.mxu0 0.0
        %2014 = vmatpush1.xpose.msra.mxu0 0.0
        %2015 = vmatprep.subr.mxu0 0.0
        %2016 = vmatpush1.xpose.msra.mxu0 0.0
        %2017 = vmatprep.subr.mxu0 0.0
        %2018 = vmatpush1.xpose.msra.mxu0 0.0
        %2019 = vmatprep.subr.mxu0 0.0
        %2020 = vmatpush1.xpose.msra.mxu0 0.0
        %2021 = vmatprep.subr.mxu0 0.0
        %2022 = vmatpush1.xpose.msra.mxu0 0.0
        %2023 = vmatprep.subr.mxu0 0.0
        %2024 = vmatpush1.xpose.msra.mxu0 0.0
        %2025 = vmatprep.subr.mxu0 0.0
        %2026 = vmatpush1.xpose.msra.mxu0 %v1997
        %2027 = vmatprep.subr.mxu0 0.0
        %2028 = vmatpush1.xpose.msra.mxu0 %v1995
        %2029 = vmatprep.subr.mxu0 0.0
        %2030 = vmatpush1.xpose.msra.mxu0 %v1993
        %2031 = vmatprep.subr.mxu0 0.0
        %2032 = vmatpush2.xpose.msra.mxu0 0.0
        %2033 = vmatprep.subr.mxu0 0.0
        %2034 = vmatpush2.xpose.msra.mxu0 0.0
        %2035 = vmatprep.subr.mxu0 0.0
        %2036 = vmatpush2.xpose.msra.mxu0 0.0
        %2037 = vmatprep.subr.mxu0 0.0
        %2038 = vmatpush2.xpose.msra.mxu0 0.0
        %2039 = vmatprep.subr.mxu0 0.0
        %2040 = vmatpush2.xpose.msra.mxu0 0.0
        %2041 = vmatprep.subr.mxu0 0.0
        %2042 = vmatpush2.xpose.msra.mxu0 0.0
        %2043 = vmatprep.subr.mxu0 0.0
        %2044 = vmatpush2.xpose.msra.mxu0 0.0
        %2045 = vmatprep.subr.mxu0 0.0
        %2046 = vmatpush2.xpose.msra.mxu0 0.0
        %2047 = vmatprep.subr.mxu0 0.0
        %2048 = vmatpush2.xpose.msra.mxu0 0.0
        %2049 = vmatprep.subr.mxu0 0.0
        %2050 = vmatpush2.xpose.msra.mxu0 0.0
        %2051 = vmatprep.subr.mxu0 0.0
        %2052 = vmatpush2.xpose.msra.mxu0 0.0
        %2053 = vmatprep.subr.mxu0 0.0
        %2054 = vmatpush2.xpose.msra.mxu0 0.0
        %2055 = vmatprep.subr.mxu0 0.0
        %2056 = vmatpush2.xpose.msra.mxu0 0.0
        %2057 = vmatprep.subr.mxu0 0.0
        %2058 = vmatpush2.xpose.msra.mxu0 0.0
        %2059 = vmatprep.subr.mxu0 0.0
        %2060 = vmatpush2.xpose.msra.mxu0 0.0
        %2061 = vmatprep.subr.mxu0 0.0
        %2062 = vmatpush2.xpose.msra.mxu0 0.0
        %2063 = vmatprep.mubr.f32.mxu0 0.0
        %2064 = vmatmul.mubr.f32.gmra.mxu0 %v1985
        %v2065 = vpop.f32.mrf.mxu0
        %v2066 = vadd.f32 0.0, %v2065
        %v2067 = vpop.f32.mrf.mxu0
        %2068 = vmatprep.mubr.f32.mxu0 0.0
        %2069 = vmatmul.mubr.f32.gmra.mxu0 %v1988
        %v2070 = vpop.f32.mrf.mxu0
        %v2071 = vadd.f32 0.0, %v2070
        %v2072 = vpop.f32.mrf.mxu0
        %2073 = vmatprep.mubr.f32.mxu0 0.0
        %2074 = vmatmul.mubr.f32.gmra.mxu0 %v1991
        %v2075 = vpop.f32.mrf.mxu0
        %v2076 = vadd.f32 0.0, %v2075
        %v2077 = vpop.f32.mrf.mxu0
        %2078 = vdwg.mxu0
        %v2079 = vsel %vm525, -1e+30, %v2066
        %v2080 = vsel %vm526, -1e+30, %v2071
        %v2081 = vsel %vm527, -1e+30, %v2076
        %vm2082 = vcmask 195584
        %v2083 = vsel %vm2082, %v2079, -inf
        %2084 = vmax.xlane.f32.xlu0 %v2083
        %v2085 = vpop.xlane.xlu0 %2084
        %v2086 = vsel %vm2082, %v2080, -inf
        %2087 = vmax.xlane.f32.xlu0 %v2086
        %v2088 = vpop.xlane.xlu0 %2087
        %v2089 = vsel %vm2082, %v2081, -inf
        %2090 = vmax.xlane.f32.xlu0 %v2089
        %v2091 = vpop.xlane.xlu0 %2090
        %v2092 = vsub.f32 %v2079, %v2085
        %v2093 = vsub.f32 %v2080, %v2088
        %v2094 = vsub.f32 %v2081, %v2091
        %v2095 = vmul.f32 %v2092, 1.442695
        %v2096 = vpow.pop %v2095
        %v2097 = vmul.f32 %v2093, 1.442695
        %v2098 = vpow.pop %v2097
        %v2099 = vmul.f32 %v2094, 1.442695
        %v2100 = vpow.pop %v2099
        %v2101 = vsel %vm2082, %v2096, 0.0
        %2102 = vadd.xlane.f32.xlu0 %v2101
        %v2103 = vpop.xlane.xlu0 %2102
        %v2104 = vsel %vm2082, %v2098, 0.0
        %2105 = vadd.xlane.f32.xlu0 %v2104
        %v2106 = vpop.xlane.xlu0 %2105
        %v2107 = vsel %vm2082, %v2100, 0.0
        %2108 = vadd.xlane.f32.xlu0 %v2107
        %v2109 = vpop.xlane.xlu0 %2108
        %v2110 = vrcp.pop %v2103
        %v2111 = vmul.f32 %v2096, %v2110
        %v2112 = vrcp.pop %v2106
        %v2113 = vmul.f32 %v2098, %v2112
        %v2114 = vrcp.pop %v2109
        %v2115 = vmul.f32 %v2100, %v2114
        %2116 = vrot.lane.b32.xlu0 %v1959, 64
        %v2117 = vpop.permute.xlu0 %2116
        %2118 = vrot.lane.b32.xlu0 %v1964, 64
        %v2119 = vpop.permute.xlu0 %2118
        %2120 = vrot.lane.b32.xlu0 %v1969, 64
        %v2121 = vpop.permute.xlu0 %2120
        %v2126 = vsel %vm2082, %v2111, 0
        %v2129 = vsel %vm2082, %v2113, 0
        %v2132 = vsel %vm2082, %v2115, 0
        %2134 = vmatprep.subr.mxu0 0.0
        %2135 = vmatpush1.msra.mxu0 0.0
        %2136 = vmatprep.subr.mxu0 0.0
        %2137 = vmatpush1.msra.mxu0 0.0
        %2138 = vmatprep.subr.mxu0 0.0
        %2139 = vmatpush1.msra.mxu0 0.0
        %2140 = vmatprep.subr.mxu0 0.0
        %2141 = vmatpush1.msra.mxu0 0.0
        %2142 = vmatprep.subr.mxu0 0.0
        %2143 = vmatpush1.msra.mxu0 0.0
        %2144 = vmatprep.subr.mxu0 0.0
        %2145 = vmatpush1.msra.mxu0 0.0
        %2146 = vmatprep.subr.mxu0 0.0
        %2147 = vmatpush1.msra.mxu0 0.0
        %2148 = vmatprep.subr.mxu0 0.0
        %2149 = vmatpush1.msra.mxu0 0.0
        %2150 = vmatprep.subr.mxu0 0.0
        %2151 = vmatpush1.msra.mxu0 0.0
        %2152 = vmatprep.subr.mxu0 0.0
        %2153 = vmatpush1.msra.mxu0 0.0
        %2154 = vmatprep.subr.mxu0 0.0
        %2155 = vmatpush1.msra.mxu0 0.0
        %2156 = vmatprep.subr.mxu0 0.0
        %2157 = vmatpush1.msra.mxu0 0.0
        %2158 = vmatprep.subr.mxu0 0.0
        %2159 = vmatpush1.msra.mxu0 0.0
        %2160 = vmatprep.subr.mxu0 0.0
        %2161 = vmatpush1.msra.mxu0 %v2121
        %2162 = vmatprep.subr.mxu0 0.0
        %2163 = vmatpush1.msra.mxu0 %v2119
        %2164 = vmatprep.subr.mxu0 0.0
        %2165 = vmatpush1.msra.mxu0 %v2117
        %2166 = vmatprep.subr.mxu0 0.0
        %2167 = vmatpush2.msra.mxu0 0.0
        %2168 = vmatprep.subr.mxu0 0.0
        %2169 = vmatpush2.msra.mxu0 0.0
        %2170 = vmatprep.subr.mxu0 0.0
        %2171 = vmatpush2.msra.mxu0 0.0
        %2172 = vmatprep.subr.mxu0 0.0
        %2173 = vmatpush2.msra.mxu0 0.0
        %2174 = vmatprep.subr.mxu0 0.0
        %2175 = vmatpush2.msra.mxu0 0.0
        %2176 = vmatprep.subr.mxu0 0.0
        %2177 = vmatpush2.msra.mxu0 0.0
        %2178 = vmatprep.subr.mxu0 0.0
        %2179 = vmatpush2.msra.mxu0 0.0
        %2180 = vmatprep.subr.mxu0 0.0
        %2181 = vmatpush2.msra.mxu0 0.0
        %2182 = vmatprep.subr.mxu0 0.0
        %2183 = vmatpush2.msra.mxu0 0.0
        %2184 = vmatprep.subr.mxu0 0.0
        %2185 = vmatpush2.msra.mxu0 0.0
        %2186 = vmatprep.subr.mxu0 0.0
        %2187 = vmatpush2.msra.mxu0 0.0
        %2188 = vmatprep.subr.mxu0 0.0
        %2189 = vmatpush2.msra.mxu0 0.0
        %2190 = vmatprep.subr.mxu0 0.0
        %2191 = vmatpush2.msra.mxu0 0.0
        %2192 = vmatprep.subr.mxu0 0.0
        %2193 = vmatpush2.msra.mxu0 0.0
        %2194 = vmatprep.subr.mxu0 0.0
        %2195 = vmatpush2.msra.mxu0 0.0
        %2196 = vmatprep.subr.mxu0 0.0
        %2197 = vmatpush2.msra.mxu0 0.0
        %2198 = vmatprep.mubr.f32.mxu0 0.0
        %2199 = vmatmul.mubr.f32.gmra.mxu0 %v2126
        %v2200 = vpop.f32.mrf.mxu0
        %v2201 = vadd.f32 0.0, %v2200
        %v2202 = vpop.f32.mrf.mxu0
        %2203 = vmatprep.mubr.f32.mxu0 0.0
        %2204 = vmatmul.mubr.f32.gmra.mxu0 %v2129
        %v2205 = vpop.f32.mrf.mxu0
        %v2206 = vadd.f32 0.0, %v2205
        %v2207 = vpop.f32.mrf.mxu0
        %2208 = vmatprep.mubr.f32.mxu0 0.0
        %2209 = vmatmul.mubr.f32.gmra.mxu0 %v2132
        %v2210 = vpop.f32.mrf.mxu0
        %v2211 = vadd.f32 0.0, %v2210
        %v2212 = vpop.f32.mrf.mxu0
        %2213 = vdwg.mxu0
        %2214 = vrot.lane.b32.xlu0 %v1972, 120
        %v2215 = vpop.permute.xlu0 %2214
        %2216 = vrot.lane.b32.xlu0 %v1973, 120
        %v2217 = vpop.permute.xlu0 %2216
        %2218 = vrot.lane.b32.xlu0 %v1974, 120
        %v2219 = vpop.permute.xlu0 %2218
        %2220 = vrot.lane.b32.xlu0 %v1959, 88
        %v2221 = vpop.permute.xlu0 %2220
        %2222 = vrot.lane.b32.xlu0 %v1964, 88
        %v2223 = vpop.permute.xlu0 %2222
        %2224 = vrot.lane.b32.xlu0 %v1969, 88
        %v2225 = vpop.permute.xlu0 %2224
        %v2226 = vsel %vm660, %v2215, 0
        %v2228 = vsel %vm660, %v2217, 0
        %v2230 = vsel %vm660, %v2219, 0
        %v2232 = vsel %vm660, %v2221, 0
        %v2234 = vsel %vm660, %v2223, 0
        %v2236 = vsel %vm660, %v2225, 0
        %2238 = vmatprep.subr.mxu0 0.0
        %2239 = vmatpush1.xpose.msra.mxu0 0.0
        %2240 = vmatprep.subr.mxu0 0.0
        %2241 = vmatpush1.xpose.msra.mxu0 0.0
        %2242 = vmatprep.subr.mxu0 0.0
        %2243 = vmatpush1.xpose.msra.mxu0 0.0
        %2244 = vmatprep.subr.mxu0 0.0
        %2245 = vmatpush1.xpose.msra.mxu0 0.0
        %2246 = vmatprep.subr.mxu0 0.0
        %2247 = vmatpush1.xpose.msra.mxu0 0.0
        %2248 = vmatprep.subr.mxu0 0.0
        %2249 = vmatpush1.xpose.msra.mxu0 0.0
        %2250 = vmatprep.subr.mxu0 0.0
        %2251 = vmatpush1.xpose.msra.mxu0 0.0
        %2252 = vmatprep.subr.mxu0 0.0
        %2253 = vmatpush1.xpose.msra.mxu0 0.0
        %2254 = vmatprep.subr.mxu0 0.0
        %2255 = vmatpush1.xpose.msra.mxu0 0.0
        %2256 = vmatprep.subr.mxu0 0.0
        %2257 = vmatpush1.xpose.msra.mxu0 0.0
        %2258 = vmatprep.subr.mxu0 0.0
        %2259 = vmatpush1.xpose.msra.mxu0 0.0
        %2260 = vmatprep.subr.mxu0 0.0
        %2261 = vmatpush1.xpose.msra.mxu0 0.0
        %2262 = vmatprep.subr.mxu0 0.0
        %2263 = vmatpush1.xpose.msra.mxu0 0.0
        %2264 = vmatprep.subr.mxu0 0.0
        %2265 = vmatpush1.xpose.msra.mxu0 %v2236
        %2266 = vmatprep.subr.mxu0 0.0
        %2267 = vmatpush1.xpose.msra.mxu0 %v2234
        %2268 = vmatprep.subr.mxu0 0.0
        %2269 = vmatpush1.xpose.msra.mxu0 %v2232
        %2270 = vmatprep.subr.mxu0 0.0
        %2271 = vmatpush2.xpose.msra.mxu0 0.0
        %2272 = vmatprep.subr.mxu0 0.0
        %2273 = vmatpush2.xpose.msra.mxu0 0.0
        %2274 = vmatprep.subr.mxu0 0.0
        %2275 = vmatpush2.xpose.msra.mxu0 0.0
        %2276 = vmatprep.subr.mxu0 0.0
        %2277 = vmatpush2.xpose.msra.mxu0 0.0
        %2278 = vmatprep.subr.mxu0 0.0
        %2279 = vmatpush2.xpose.msra.mxu0 0.0
        %2280 = vmatprep.subr.mxu0 0.0
        %2281 = vmatpush2.xpose.msra.mxu0 0.0
        %2282 = vmatprep.subr.mxu0 0.0
        %2283 = vmatpush2.xpose.msra.mxu0 0.0
        %2284 = vmatprep.subr.mxu0 0.0
        %2285 = vmatpush2.xpose.msra.mxu0 0.0
        %2286 = vmatprep.subr.mxu0 0.0
        %2287 = vmatpush2.xpose.msra.mxu0 0.0
        %2288 = vmatprep.subr.mxu0 0.0
        %2289 = vmatpush2.xpose.msra.mxu0 0.0
        %2290 = vmatprep.subr.mxu0 0.0
        %2291 = vmatpush2.xpose.msra.mxu0 0.0
        %2292 = vmatprep.subr.mxu0 0.0
        %2293 = vmatpush2.xpose.msra.mxu0 0.0
        %2294 = vmatprep.subr.mxu0 0.0
        %2295 = vmatpush2.xpose.msra.mxu0 0.0
        %2296 = vmatprep.subr.mxu0 0.0
        %2297 = vmatpush2.xpose.msra.mxu0 0.0
        %2298 = vmatprep.subr.mxu0 0.0
        %2299 = vmatpush2.xpose.msra.mxu0 0.0
        %2300 = vmatprep.subr.mxu0 0.0
        %2301 = vmatpush2.xpose.msra.mxu0 0.0
        %2302 = vmatprep.mubr.f32.mxu0 0.0
        %2303 = vmatmul.mubr.f32.gmra.mxu0 %v2226
        %v2304 = vpop.f32.mrf.mxu0
        %v2305 = vadd.f32 0.0, %v2304
        %v2306 = vpop.f32.mrf.mxu0
        %2307 = vmatprep.mubr.f32.mxu0 0.0
        %2308 = vmatmul.mubr.f32.gmra.mxu0 %v2228
        %v2309 = vpop.f32.mrf.mxu0
        %v2310 = vadd.f32 0.0, %v2309
        %v2311 = vpop.f32.mrf.mxu0
        %2312 = vmatprep.mubr.f32.mxu0 0.0
        %2313 = vmatmul.mubr.f32.gmra.mxu0 %v2230
        %v2314 = vpop.f32.mrf.mxu0
        %v2315 = vadd.f32 0.0, %v2314
        %v2316 = vpop.f32.mrf.mxu0
        %2317 = vdwg.mxu0
        %v2318 = vsel %vm525, -1e+30, %v2305
        %v2319 = vsel %vm526, -1e+30, %v2310
        %v2320 = vsel %vm527, -1e+30, %v2315
        %v2321 = vsel %vm2082, %v2318, -inf
        %2322 = vmax.xlane.f32.xlu0 %v2321
        %v2323 = vpop.xlane.xlu0 %2322
        %v2324 = vsel %vm2082, %v2319, -inf
        %2325 = vmax.xlane.f32.xlu0 %v2324
        %v2326 = vpop.xlane.xlu0 %2325
        %v2327 = vsel %vm2082, %v2320, -inf
        %2328 = vmax.xlane.f32.xlu0 %v2327
        %v2329 = vpop.xlane.xlu0 %2328
        %v2330 = vsub.f32 %v2318, %v2323
        %v2331 = vsub.f32 %v2319, %v2326
        %v2332 = vsub.f32 %v2320, %v2329
        %v2333 = vmul.f32 %v2330, 1.442695
        %v2334 = vpow.pop %v2333
        %v2335 = vmul.f32 %v2331, 1.442695
        %v2336 = vpow.pop %v2335
        %v2337 = vmul.f32 %v2332, 1.442695
        %v2338 = vpow.pop %v2337
        %v2339 = vsel %vm2082, %v2334, 0.0
        %2340 = vadd.xlane.f32.xlu0 %v2339
        %v2341 = vpop.xlane.xlu0 %2340
        %v2342 = vsel %vm2082, %v2336, 0.0
        %2343 = vadd.xlane.f32.xlu0 %v2342
        %v2344 = vpop.xlane.xlu0 %2343
        %v2345 = vsel %vm2082, %v2338, 0.0
        %2346 = vadd.xlane.f32.xlu0 %v2345
        %v2347 = vpop.xlane.xlu0 %2346
        %v2348 = vrcp.pop %v2341
        %v2349 = vmul.f32 %v2334, %v2348
        %v2350 = vrcp.pop %v2344
        %v2351 = vmul.f32 %v2336, %v2350
        %v2352 = vrcp.pop %v2347
        %v2353 = vmul.f32 %v2338, %v2352
        %2354 = vrot.lane.b32.xlu0 %v1959, 56
        %v2355 = vpop.permute.xlu0 %2354
        %2356 = vrot.lane.b32.xlu0 %v1964, 56
        %v2357 = vpop.permute.xlu0 %2356
        %2358 = vrot.lane.b32.xlu0 %v1969, 56
        %v2359 = vpop.permute.xlu0 %2358
        %v2364 = vsel %vm2082, %v2349, 0
        %v2367 = vsel %vm2082, %v2351, 0
        %v2370 = vsel %vm2082, %v2353, 0
        %2372 = vmatprep.subr.mxu0 0.0
        %2373 = vmatpush1.msra.mxu0 0.0
        %2374 = vmatprep.subr.mxu0 0.0
        %2375 = vmatpush1.msra.mxu0 0.0
        %2376 = vmatprep.subr.mxu0 0.0
        %2377 = vmatpush1.msra.mxu0 0.0
        %2378 = vmatprep.subr.mxu0 0.0
        %2379 = vmatpush1.msra.mxu0 0.0
        %2380 = vmatprep.subr.mxu0 0.0
        %2381 = vmatpush1.msra.mxu0 0.0
        %2382 = vmatprep.subr.mxu0 0.0
        %2383 = vmatpush1.msra.mxu0 0.0
        %2384 = vmatprep.subr.mxu0 0.0
        %2385 = vmatpush1.msra.mxu0 0.0
        %2386 = vmatprep.subr.mxu0 0.0
        %2387 = vmatpush1.msra.mxu0 0.0
        %2388 = vmatprep.subr.mxu0 0.0
        %2389 = vmatpush1.msra.mxu0 0.0
        %2390 = vmatprep.subr.mxu0 0.0
        %2391 = vmatpush1.msra.mxu0 0.0
        %2392 = vmatprep.subr.mxu0 0.0
        %2393 = vmatpush1.msra.mxu0 0.0
        %2394 = vmatprep.subr.mxu0 0.0
        %2395 = vmatpush1.msra.mxu0 0.0
        %2396 = vmatprep.subr.mxu0 0.0
        %2397 = vmatpush1.msra.mxu0 0.0
        %2398 = vmatprep.subr.mxu0 0.0
        %2399 = vmatpush1.msra.mxu0 %v2359
        %2400 = vmatprep.subr.mxu0 0.0
        %2401 = vmatpush1.msra.mxu0 %v2357
        %2402 = vmatprep.subr.mxu0 0.0
        %2403 = vmatpush1.msra.mxu0 %v2355
        %2404 = vmatprep.subr.mxu0 0.0
        %2405 = vmatpush2.msra.mxu0 0.0
        %2406 = vmatprep.subr.mxu0 0.0
        %2407 = vmatpush2.msra.mxu0 0.0
        %2408 = vmatprep.subr.mxu0 0.0
        %2409 = vmatpush2.msra.mxu0 0.0
        %2410 = vmatprep.subr.mxu0 0.0
        %2411 = vmatpush2.msra.mxu0 0.0
        %2412 = vmatprep.subr.mxu0 0.0
        %2413 = vmatpush2.msra.mxu0 0.0
        %2414 = vmatprep.subr.mxu0 0.0
        %2415 = vmatpush2.msra.mxu0 0.0
        %2416 = vmatprep.subr.mxu0 0.0
        %2417 = vmatpush2.msra.mxu0 0.0
        %2418 = vmatprep.subr.mxu0 0.0
        %2419 = vmatpush2.msra.mxu0 0.0
        %2420 = vmatprep.subr.mxu0 0.0
        %2421 = vmatpush2.msra.mxu0 0.0
        %2422 = vmatprep.subr.mxu0 0.0
        %2423 = vmatpush2.msra.mxu0 0.0
        %2424 = vmatprep.subr.mxu0 0.0
        %2425 = vmatpush2.msra.mxu0 0.0
        %2426 = vmatprep.subr.mxu0 0.0
        %2427 = vmatpush2.msra.mxu0 0.0
        %2428 = vmatprep.subr.mxu0 0.0
        %2429 = vmatpush2.msra.mxu0 0.0
        %2430 = vmatprep.subr.mxu0 0.0
        %2431 = vmatpush2.msra.mxu0 0.0
        %2432 = vmatprep.subr.mxu0 0.0
        %2433 = vmatpush2.msra.mxu0 0.0
        %2434 = vmatprep.subr.mxu0 0.0
        %2435 = vmatpush2.msra.mxu0 0.0
        %2436 = vmatprep.mubr.f32.mxu0 0.0
        %2437 = vmatmul.mubr.f32.gmra.mxu0 %v2364
        %v2438 = vpop.f32.mrf.mxu0
        %v2439 = vadd.f32 0.0, %v2438
        %v2440 = vpop.f32.mrf.mxu0
        %2441 = vmatprep.mubr.f32.mxu0 0.0
        %2442 = vmatmul.mubr.f32.gmra.mxu0 %v2367
        %v2443 = vpop.f32.mrf.mxu0
        %v2444 = vadd.f32 0.0, %v2443
        %v2445 = vpop.f32.mrf.mxu0
        %2446 = vmatprep.mubr.f32.mxu0 0.0
        %2447 = vmatmul.mubr.f32.gmra.mxu0 %v2370
        %v2448 = vpop.f32.mrf.mxu0
        %v2449 = vadd.f32 0.0, %v2448
        %v2450 = vpop.f32.mrf.mxu0
        %2451 = vdwg.mxu0
        %v2453 = vsel %vm660, %v2439, 0
        %v2456 = vsel %vm660, %v2444, 0
        %v2459 = vsel %vm660, %v2449, 0
        %2461 = vmatprep.subr.mxu0 0.0
        %2462 = vmatpush1.msra.mxu0 0.0
        %2463 = vmatprep.subr.mxu0 0.0
        %2464 = vmatpush1.msra.mxu0 0.0
        %2465 = vmatprep.subr.mxu0 0.0
        %2466 = vmatpush1.msra.mxu0 0.0
        %2467 = vmatprep.subr.mxu0 0.0
        %2468 = vmatpush1.msra.mxu0 0.0
        %2469 = vmatprep.subr.mxu0 0.0
        %2470 = vmatpush1.msra.mxu0 0.0
        %2471 = vmatprep.subr.mxu0 0.0
        %2472 = vmatpush1.msra.mxu0 0.0
        %2473 = vmatprep.subr.mxu0 0.0
        %2474 = vmatpush1.msra.mxu0 0.0
        %2475 = vmatprep.subr.mxu0 0.0
        %2476 = vmatpush1.msra.mxu0 0.0
        %2477 = vmatprep.subr.mxu0 0.0
        %2478 = vmatpush1.msra.mxu0 0.0
        %2479 = vmatprep.subr.mxu0 0.0
        %2480 = vmatpush1.msra.mxu0 0.0
        %2481 = vmatprep.subr.mxu0 0.0
        %2482 = vmatpush1.msra.mxu0 0.0
        %2483 = vmatprep.subr.mxu0 0.0
        %2484 = vmatpush1.msra.mxu0 0.0
        %2485 = vmatprep.subr.mxu0 0.0
        %2486 = vmatpush1.msra.mxu0 0.0
        %2487 = vmatprep.subr.mxu0 0.0
        %2488 = vmatpush1.msra.mxu0 0.0
        %2489 = vmatprep.subr.mxu0 0.0
        %2490 = vmatpush1.msra.mxu0 0.0
        %2491 = vmatprep.subr.mxu0 0.0
        %2492 = vmatpush1.msra.mxu0 %v534
        %2493 = vmatprep.subr.mxu0 0.0
        %2494 = vmatpush2.msra.mxu0 0.0
        %2495 = vmatprep.subr.mxu0 0.0
        %2496 = vmatpush2.msra.mxu0 0.0
        %2497 = vmatprep.subr.mxu0 0.0
        %2498 = vmatpush2.msra.mxu0 0.0
        %2499 = vmatprep.subr.mxu0 0.0
        %2500 = vmatpush2.msra.mxu0 0.0
        %2501 = vmatprep.subr.mxu0 0.0
        %2502 = vmatpush2.msra.mxu0 0.0
        %2503 = vmatprep.subr.mxu0 0.0
        %2504 = vmatpush2.msra.mxu0 0.0
        %2505 = vmatprep.subr.mxu0 0.0
        %2506 = vmatpush2.msra.mxu0 0.0
        %2507 = vmatprep.subr.mxu0 0.0
        %2508 = vmatpush2.msra.mxu0 0.0
        %2509 = vmatprep.subr.mxu0 0.0
        %2510 = vmatpush2.msra.mxu0 0.0
        %2511 = vmatprep.subr.mxu0 0.0
        %2512 = vmatpush2.msra.mxu0 0.0
        %2513 = vmatprep.subr.mxu0 0.0
        %2514 = vmatpush2.msra.mxu0 0.0
        %2515 = vmatprep.subr.mxu0 0.0
        %2516 = vmatpush2.msra.mxu0 0.0
        %2517 = vmatprep.subr.mxu0 0.0
        %2518 = vmatpush2.msra.mxu0 0.0
        %2519 = vmatprep.subr.mxu0 0.0
        %2520 = vmatpush2.msra.mxu0 0.0
        %2521 = vmatprep.subr.mxu0 0.0
        %2522 = vmatpush2.msra.mxu0 0.0
        %2523 = vmatprep.subr.mxu0 0.0
        %2524 = vmatpush2.msra.mxu0 0.0
        %2525 = vmatprep.mubr.f32.mxu0 0.0
        %2526 = vmatmul.mubr.f32.gmra.mxu0 %v2453
        %v2527 = vpop.f32.mrf.mxu0
        %v2528 = vadd.f32 0.0, %v2527
        %v2529 = vpop.f32.mrf.mxu0
        %2530 = vmatprep.mubr.f32.mxu0 0.0
        %2531 = vmatmul.mubr.f32.gmra.mxu0 %v2456
        %v2532 = vpop.f32.mrf.mxu0
        %v2533 = vadd.f32 0.0, %v2532
        %v2534 = vpop.f32.mrf.mxu0
        %2535 = vmatprep.mubr.f32.mxu0 0.0
        %2536 = vmatmul.mubr.f32.gmra.mxu0 %v2459
        %v2537 = vpop.f32.mrf.mxu0
        %v2538 = vadd.f32 0.0, %v2537
        %v2539 = vpop.f32.mrf.mxu0
        %2540 = vdwg.mxu0
        %v2542 = vsel %vm660, %v2201, 0
        %v2545 = vsel %vm660, %v2206, 0
        %v2548 = vsel %vm660, %v2211, 0
        %2550 = vmatprep.subr.mxu0 0.0
        %2551 = vmatpush1.msra.mxu0 0.0
        %2552 = vmatprep.subr.mxu0 0.0
        %2553 = vmatpush1.msra.mxu0 0.0
        %2554 = vmatprep.subr.mxu0 0.0
        %2555 = vmatpush1.msra.mxu0 0.0
        %2556 = vmatprep.subr.mxu0 0.0
        %2557 = vmatpush1.msra.mxu0 0.0
        %2558 = vmatprep.subr.mxu0 0.0
        %2559 = vmatpush1.msra.mxu0 0.0
        %2560 = vmatprep.subr.mxu0 0.0
        %2561 = vmatpush1.msra.mxu0 0.0
        %2562 = vmatprep.subr.mxu0 0.0
        %2563 = vmatpush1.msra.mxu0 0.0
        %2564 = vmatprep.subr.mxu0 0.0
        %2565 = vmatpush1.msra.mxu0 0.0
        %2566 = vmatprep.subr.mxu0 0.0
        %2567 = vmatpush1.msra.mxu0 0.0
        %2568 = vmatprep.subr.mxu0 0.0
        %2569 = vmatpush1.msra.mxu0 0.0
        %2570 = vmatprep.subr.mxu0 0.0
        %2571 = vmatpush1.msra.mxu0 0.0
        %2572 = vmatprep.subr.mxu0 0.0
        %2573 = vmatpush1.msra.mxu0 0.0
        %2574 = vmatprep.subr.mxu0 0.0
        %2575 = vmatpush1.msra.mxu0 0.0
        %2576 = vmatprep.subr.mxu0 0.0
        %2577 = vmatpush1.msra.mxu0 0.0
        %2578 = vmatprep.subr.mxu0 0.0
        %2579 = vmatpush1.msra.mxu0 0.0
        %2580 = vmatprep.subr.mxu0 0.0
        %2581 = vmatpush1.msra.mxu0 %v533
        %2582 = vmatprep.subr.mxu0 0.0
        %2583 = vmatpush2.msra.mxu0 0.0
        %2584 = vmatprep.subr.mxu0 0.0
        %2585 = vmatpush2.msra.mxu0 0.0
        %2586 = vmatprep.subr.mxu0 0.0
        %2587 = vmatpush2.msra.mxu0 0.0
        %2588 = vmatprep.subr.mxu0 0.0
        %2589 = vmatpush2.msra.mxu0 0.0
        %2590 = vmatprep.subr.mxu0 0.0
        %2591 = vmatpush2.msra.mxu0 0.0
        %2592 = vmatprep.subr.mxu0 0.0
        %2593 = vmatpush2.msra.mxu0 0.0
        %2594 = vmatprep.subr.mxu0 0.0
        %2595 = vmatpush2.msra.mxu0 0.0
        %2596 = vmatprep.subr.mxu0 0.0
        %2597 = vmatpush2.msra.mxu0 0.0
        %2598 = vmatprep.subr.mxu0 0.0
        %2599 = vmatpush2.msra.mxu0 0.0
        %2600 = vmatprep.subr.mxu0 0.0
        %2601 = vmatpush2.msra.mxu0 0.0
        %2602 = vmatprep.subr.mxu0 0.0
        %2603 = vmatpush2.msra.mxu0 0.0
        %2604 = vmatprep.subr.mxu0 0.0
        %2605 = vmatpush2.msra.mxu0 0.0
        %2606 = vmatprep.subr.mxu0 0.0
        %2607 = vmatpush2.msra.mxu0 0.0
        %2608 = vmatprep.subr.mxu0 0.0
        %2609 = vmatpush2.msra.mxu0 0.0
        %2610 = vmatprep.subr.mxu0 0.0
        %2611 = vmatpush2.msra.mxu0 0.0
        %2612 = vmatprep.subr.mxu0 0.0
        %2613 = vmatpush2.msra.mxu0 0.0
        %2614 = vmatprep.mubr.f32.mxu0 0.0
        %2615 = vmatmul.mubr.f32.gmra.mxu0 %v2542
        %v2616 = vpop.f32.mrf.mxu0
        %v2617 = vadd.f32 %v2528, %v2616
        %v2618 = vpop.f32.mrf.mxu0
        %2619 = vmatprep.mubr.f32.mxu0 0.0
        %2620 = vmatmul.mubr.f32.gmra.mxu0 %v2545
        %v2621 = vpop.f32.mrf.mxu0
        %v2622 = vadd.f32 %v2533, %v2621
        %v2623 = vpop.f32.mrf.mxu0
        %2624 = vmatprep.mubr.f32.mxu0 0.0
        %2625 = vmatmul.mubr.f32.gmra.mxu0 %v2548
        %v2626 = vpop.f32.mrf.mxu0
        %v2627 = vadd.f32 %v2538, %v2626
        %v2628 = vpop.f32.mrf.mxu0
        %2629 = vdwg.mxu0
        %2630 = vrot.lane.b32.xlu0 %v1972, 112
        %v2631 = vpop.permute.xlu0 %2630
        %2632 = vrot.lane.b32.xlu0 %v1973, 112
        %v2633 = vpop.permute.xlu0 %2632
        %2634 = vrot.lane.b32.xlu0 %v1974, 112
        %v2635 = vpop.permute.xlu0 %2634
        %2636 = vrot.lane.b32.xlu0 %v1959, 80
        %v2637 = vpop.permute.xlu0 %2636
        %2638 = vrot.lane.b32.xlu0 %v1964, 80
        %v2639 = vpop.permute.xlu0 %2638
        %2640 = vrot.lane.b32.xlu0 %v1969, 80
        %v2641 = vpop.permute.xlu0 %2640
        %v2642 = vsel %vm660, %v2631, 0
        %v2644 = vsel %vm660, %v2633, 0
        %v2646 = vsel %vm660, %v2635, 0
        %v2648 = vsel %vm660, %v2637, 0
        %v2650 = vsel %vm660, %v2639, 0
        %v2652 = vsel %vm660, %v2641, 0
        %2654 = vmatprep.subr.mxu0 0.0
        %2655 = vmatpush1.xpose.msra.mxu0 0.0
        %2656 = vmatprep.subr.mxu0 0.0
        %2657 = vmatpush1.xpose.msra.mxu0 0.0
        %2658 = vmatprep.subr.mxu0 0.0
        %2659 = vmatpush1.xpose.msra.mxu0 0.0
        %2660 = vmatprep.subr.mxu0 0.0
        %2661 = vmatpush1.xpose.msra.mxu0 0.0
        %2662 = vmatprep.subr.mxu0 0.0
        %2663 = vmatpush1.xpose.msra.mxu0 0.0
        %2664 = vmatprep.subr.mxu0 0.0
        %2665 = vmatpush1.xpose.msra.mxu0 0.0
        %2666 = vmatprep.subr.mxu0 0.0
        %2667 = vmatpush1.xpose.msra.mxu0 0.0
        %2668 = vmatprep.subr.mxu0 0.0
        %2669 = vmatpush1.xpose.msra.mxu0 0.0
        %2670 = vmatprep.subr.mxu0 0.0
        %2671 = vmatpush1.xpose.msra.mxu0 0.0
        %2672 = vmatprep.subr.mxu0 0.0
        %2673 = vmatpush1.xpose.msra.mxu0 0.0
        %2674 = vmatprep.subr.mxu0 0.0
        %2675 = vmatpush1.xpose.msra.mxu0 0.0
        %2676 = vmatprep.subr.mxu0 0.0
        %2677 = vmatpush1.xpose.msra.mxu0 0.0
        %2678 = vmatprep.subr.mxu0 0.0
        %2679 = vmatpush1.xpose.msra.mxu0 0.0
        %2680 = vmatprep.subr.mxu0 0.0
        %2681 = vmatpush1.xpose.msra.mxu0 %v2652
        %2682 = vmatprep.subr.mxu0 0.0
        %2683 = vmatpush1.xpose.msra.mxu0 %v2650
        %2684 = vmatprep.subr.mxu0 0.0
        %2685 = vmatpush1.xpose.msra.mxu0 %v2648
        %2686 = vmatprep.subr.mxu0 0.0
        %2687 = vmatpush2.xpose.msra.mxu0 0.0
        %2688 = vmatprep.subr.mxu0 0.0
        %2689 = vmatpush2.xpose.msra.mxu0 0.0
        %2690 = vmatprep.subr.mxu0 0.0
        %2691 = vmatpush2.xpose.msra.mxu0 0.0
        %2692 = vmatprep.subr.mxu0 0.0
        %2693 = vmatpush2.xpose.msra.mxu0 0.0
        %2694 = vmatprep.subr.mxu0 0.0
        %2695 = vmatpush2.xpose.msra.mxu0 0.0
        %2696 = vmatprep.subr.mxu0 0.0
        %2697 = vmatpush2.xpose.msra.mxu0 0.0
        %2698 = vmatprep.subr.mxu0 0.0
        %2699 = vmatpush2.xpose.msra.mxu0 0.0
        %2700 = vmatprep.subr.mxu0 0.0
        %2701 = vmatpush2.xpose.msra.mxu0 0.0
        %2702 = vmatprep.subr.mxu0 0.0
        %2703 = vmatpush2.xpose.msra.mxu0 0.0
        %2704 = vmatprep.subr.mxu0 0.0
        %2705 = vmatpush2.xpose.msra.mxu0 0.0
        %2706 = vmatprep.subr.mxu0 0.0
        %2707 = vmatpush2.xpose.msra.mxu0 0.0
        %2708 = vmatprep.subr.mxu0 0.0
        %2709 = vmatpush2.xpose.msra.mxu0 0.0
        %2710 = vmatprep.subr.mxu0 0.0
        %2711 = vmatpush2.xpose.msra.mxu0 0.0
        %2712 = vmatprep.subr.mxu0 0.0
        %2713 = vmatpush2.xpose.msra.mxu0 0.0
        %2714 = vmatprep.subr.mxu0 0.0
        %2715 = vmatpush2.xpose.msra.mxu0 0.0
        %2716 = vmatprep.subr.mxu0 0.0
        %2717 = vmatpush2.xpose.msra.mxu0 0.0
        %2718 = vmatprep.mubr.f32.mxu0 0.0
        %2719 = vmatmul.mubr.f32.gmra.mxu0 %v2642
        %v2720 = vpop.f32.mrf.mxu0
        %v2721 = vadd.f32 0.0, %v2720
        %v2722 = vpop.f32.mrf.mxu0
        %2723 = vmatprep.mubr.f32.mxu0 0.0
        %2724 = vmatmul.mubr.f32.gmra.mxu0 %v2644
        %v2725 = vpop.f32.mrf.mxu0
        %v2726 = vadd.f32 0.0, %v2725
        %v2727 = vpop.f32.mrf.mxu0
        %2728 = vmatprep.mubr.f32.mxu0 0.0
        %2729 = vmatmul.mubr.f32.gmra.mxu0 %v2646
        %v2730 = vpop.f32.mrf.mxu0
        %v2731 = vadd.f32 0.0, %v2730
        %v2732 = vpop.f32.mrf.mxu0
        %2733 = vdwg.mxu0
        %v2734 = vsel %vm525, -1e+30, %v2721
        %v2735 = vsel %vm526, -1e+30, %v2726
        %v2736 = vsel %vm527, -1e+30, %v2731
        %v2737 = vsel %vm2082, %v2734, -inf
        %2738 = vmax.xlane.f32.xlu0 %v2737
        %v2739 = vpop.xlane.xlu0 %2738
        %v2740 = vsel %vm2082, %v2735, -inf
        %2741 = vmax.xlane.f32.xlu0 %v2740
        %v2742 = vpop.xlane.xlu0 %2741
        %v2743 = vsel %vm2082, %v2736, -inf
        %2744 = vmax.xlane.f32.xlu0 %v2743
        %v2745 = vpop.xlane.xlu0 %2744
        %v2746 = vsub.f32 %v2734, %v2739
        %v2747 = vsub.f32 %v2735, %v2742
        %v2748 = vsub.f32 %v2736, %v2745
        %v2749 = vmul.f32 %v2746, 1.442695
        %v2750 = vpow.pop %v2749
        %v2751 = vmul.f32 %v2747, 1.442695
        %v2752 = vpow.pop %v2751
        %v2753 = vmul.f32 %v2748, 1.442695
        %v2754 = vpow.pop %v2753
        %v2755 = vsel %vm2082, %v2750, 0.0
        %2756 = vadd.xlane.f32.xlu0 %v2755
        %v2757 = vpop.xlane.xlu0 %2756
        %v2758 = vsel %vm2082, %v2752, 0.0
        %2759 = vadd.xlane.f32.xlu0 %v2758
        %v2760 = vpop.xlane.xlu0 %2759
        %v2761 = vsel %vm2082, %v2754, 0.0
        %2762 = vadd.xlane.f32.xlu0 %v2761
        %v2763 = vpop.xlane.xlu0 %2762
        %v2764 = vrcp.pop %v2757
        %v2765 = vmul.f32 %v2750, %v2764
        %v2766 = vrcp.pop %v2760
        %v2767 = vmul.f32 %v2752, %v2766
        %v2768 = vrcp.pop %v2763
        %v2769 = vmul.f32 %v2754, %v2768
        %2770 = vrot.lane.b32.xlu0 %v1959, 48
        %v2771 = vpop.permute.xlu0 %2770
        %2772 = vrot.lane.b32.xlu0 %v1964, 48
        %v2773 = vpop.permute.xlu0 %2772
        %2774 = vrot.lane.b32.xlu0 %v1969, 48
        %v2775 = vpop.permute.xlu0 %2774
        %v2780 = vsel %vm2082, %v2765, 0
        %v2783 = vsel %vm2082, %v2767, 0
        %v2786 = vsel %vm2082, %v2769, 0
        %2788 = vmatprep.subr.mxu0 0.0
        %2789 = vmatpush1.msra.mxu0 0.0
        %2790 = vmatprep.subr.mxu0 0.0
        %2791 = vmatpush1.msra.mxu0 0.0
        %2792 = vmatprep.subr.mxu0 0.0
        %2793 = vmatpush1.msra.mxu0 0.0
        %2794 = vmatprep.subr.mxu0 0.0
        %2795 = vmatpush1.msra.mxu0 0.0
        %2796 = vmatprep.subr.mxu0 0.0
        %2797 = vmatpush1.msra.mxu0 0.0
        %2798 = vmatprep.subr.mxu0 0.0
        %2799 = vmatpush1.msra.mxu0 0.0
        %2800 = vmatprep.subr.mxu0 0.0
        %2801 = vmatpush1.msra.mxu0 0.0
        %2802 = vmatprep.subr.mxu0 0.0
        %2803 = vmatpush1.msra.mxu0 0.0
        %2804 = vmatprep.subr.mxu0 0.0
        %2805 = vmatpush1.msra.mxu0 0.0
        %2806 = vmatprep.subr.mxu0 0.0
        %2807 = vmatpush1.msra.mxu0 0.0
        %2808 = vmatprep.subr.mxu0 0.0
        %2809 = vmatpush1.msra.mxu0 0.0
        %2810 = vmatprep.subr.mxu0 0.0
        %2811 = vmatpush1.msra.mxu0 0.0
        %2812 = vmatprep.subr.mxu0 0.0
        %2813 = vmatpush1.msra.mxu0 0.0
        %2814 = vmatprep.subr.mxu0 0.0
        %2815 = vmatpush1.msra.mxu0 %v2775
        %2816 = vmatprep.subr.mxu0 0.0
        %2817 = vmatpush1.msra.mxu0 %v2773
        %2818 = vmatprep.subr.mxu0 0.0
        %2819 = vmatpush1.msra.mxu0 %v2771
        %2820 = vmatprep.subr.mxu0 0.0
        %2821 = vmatpush2.msra.mxu0 0.0
        %2822 = vmatprep.subr.mxu0 0.0
        %2823 = vmatpush2.msra.mxu0 0.0
        %2824 = vmatprep.subr.mxu0 0.0
        %2825 = vmatpush2.msra.mxu0 0.0
        %2826 = vmatprep.subr.mxu0 0.0
        %2827 = vmatpush2.msra.mxu0 0.0
        %2828 = vmatprep.subr.mxu0 0.0
        %2829 = vmatpush2.msra.mxu0 0.0
        %2830 = vmatprep.subr.mxu0 0.0
        %2831 = vmatpush2.msra.mxu0 0.0
        %2832 = vmatprep.subr.mxu0 0.0
        %2833 = vmatpush2.msra.mxu0 0.0
        %2834 = vmatprep.subr.mxu0 0.0
        %2835 = vmatpush2.msra.mxu0 0.0
        %2836 = vmatprep.subr.mxu0 0.0
        %2837 = vmatpush2.msra.mxu0 0.0
        %2838 = vmatprep.subr.mxu0 0.0
        %2839 = vmatpush2.msra.mxu0 0.0
        %2840 = vmatprep.subr.mxu0 0.0
        %2841 = vmatpush2.msra.mxu0 0.0
        %2842 = vmatprep.subr.mxu0 0.0
        %2843 = vmatpush2.msra.mxu0 0.0
        %2844 = vmatprep.subr.mxu0 0.0
        %2845 = vmatpush2.msra.mxu0 0.0
        %2846 = vmatprep.subr.mxu0 0.0
        %2847 = vmatpush2.msra.mxu0 0.0
        %2848 = vmatprep.subr.mxu0 0.0
        %2849 = vmatpush2.msra.mxu0 0.0
        %2850 = vmatprep.subr.mxu0 0.0
        %2851 = vmatpush2.msra.mxu0 0.0
        %2852 = vmatprep.mubr.f32.mxu0 0.0
        %2853 = vmatmul.mubr.f32.gmra.mxu0 %v2780
        %v2854 = vpop.f32.mrf.mxu0
        %v2855 = vadd.f32 0.0, %v2854
        %v2856 = vpop.f32.mrf.mxu0
        %2857 = vmatprep.mubr.f32.mxu0 0.0
        %2858 = vmatmul.mubr.f32.gmra.mxu0 %v2783
        %v2859 = vpop.f32.mrf.mxu0
        %v2860 = vadd.f32 0.0, %v2859
        %v2861 = vpop.f32.mrf.mxu0
        %2862 = vmatprep.mubr.f32.mxu0 0.0
        %2863 = vmatmul.mubr.f32.gmra.mxu0 %v2786
        %v2864 = vpop.f32.mrf.mxu0
        %v2865 = vadd.f32 0.0, %v2864
        %v2866 = vpop.f32.mrf.mxu0
        %2867 = vdwg.mxu0
        %v2869 = vsel %vm660, %v2855, 0
        %v2872 = vsel %vm660, %v2860, 0
        %v2875 = vsel %vm660, %v2865, 0
        %2877 = vmatprep.subr.mxu0 0.0
        %2878 = vmatpush1.msra.mxu0 0.0
        %2879 = vmatprep.subr.mxu0 0.0
        %2880 = vmatpush1.msra.mxu0 0.0
        %2881 = vmatprep.subr.mxu0 0.0
        %2882 = vmatpush1.msra.mxu0 0.0
        %2883 = vmatprep.subr.mxu0 0.0
        %2884 = vmatpush1.msra.mxu0 0.0
        %2885 = vmatprep.subr.mxu0 0.0
        %2886 = vmatpush1.msra.mxu0 0.0
        %2887 = vmatprep.subr.mxu0 0.0
        %2888 = vmatpush1.msra.mxu0 0.0
        %2889 = vmatprep.subr.mxu0 0.0
        %2890 = vmatpush1.msra.mxu0 0.0
        %2891 = vmatprep.subr.mxu0 0.0
        %2892 = vmatpush1.msra.mxu0 0.0
        %2893 = vmatprep.subr.mxu0 0.0
        %2894 = vmatpush1.msra.mxu0 0.0
        %2895 = vmatprep.subr.mxu0 0.0
        %2896 = vmatpush1.msra.mxu0 0.0
        %2897 = vmatprep.subr.mxu0 0.0
        %2898 = vmatpush1.msra.mxu0 0.0
        %2899 = vmatprep.subr.mxu0 0.0
        %2900 = vmatpush1.msra.mxu0 0.0
        %2901 = vmatprep.subr.mxu0 0.0
        %2902 = vmatpush1.msra.mxu0 0.0
        %2903 = vmatprep.subr.mxu0 0.0
        %2904 = vmatpush1.msra.mxu0 0.0
        %2905 = vmatprep.subr.mxu0 0.0
        %2906 = vmatpush1.msra.mxu0 0.0
        %2907 = vmatprep.subr.mxu0 0.0
        %2908 = vmatpush1.msra.mxu0 %v535
        %2909 = vmatprep.subr.mxu0 0.0
        %2910 = vmatpush2.msra.mxu0 0.0
        %2911 = vmatprep.subr.mxu0 0.0
        %2912 = vmatpush2.msra.mxu0 0.0
        %2913 = vmatprep.subr.mxu0 0.0
        %2914 = vmatpush2.msra.mxu0 0.0
        %2915 = vmatprep.subr.mxu0 0.0
        %2916 = vmatpush2.msra.mxu0 0.0
        %2917 = vmatprep.subr.mxu0 0.0
        %2918 = vmatpush2.msra.mxu0 0.0
        %2919 = vmatprep.subr.mxu0 0.0
        %2920 = vmatpush2.msra.mxu0 0.0
        %2921 = vmatprep.subr.mxu0 0.0
        %2922 = vmatpush2.msra.mxu0 0.0
        %2923 = vmatprep.subr.mxu0 0.0
        %2924 = vmatpush2.msra.mxu0 0.0
        %2925 = vmatprep.subr.mxu0 0.0
        %2926 = vmatpush2.msra.mxu0 0.0
        %2927 = vmatprep.subr.mxu0 0.0
        %2928 = vmatpush2.msra.mxu0 0.0
        %2929 = vmatprep.subr.mxu0 0.0
        %2930 = vmatpush2.msra.mxu0 0.0
        %2931 = vmatprep.subr.mxu0 0.0
        %2932 = vmatpush2.msra.mxu0 0.0
        %2933 = vmatprep.subr.mxu0 0.0
        %2934 = vmatpush2.msra.mxu0 0.0
        %2935 = vmatprep.subr.mxu0 0.0
        %2936 = vmatpush2.msra.mxu0 0.0
        %2937 = vmatprep.subr.mxu0 0.0
        %2938 = vmatpush2.msra.mxu0 0.0
        %2939 = vmatprep.subr.mxu0 0.0
        %2940 = vmatpush2.msra.mxu0 0.0
        %2941 = vmatprep.mubr.f32.mxu0 0.0
        %2942 = vmatmul.mubr.f32.gmra.mxu0 %v2869
        %v2943 = vpop.f32.mrf.mxu0
        %v2944 = vadd.f32 0.0, %v2943
        %v2945 = vpop.f32.mrf.mxu0
        %2946 = vmatprep.mubr.f32.mxu0 0.0
        %2947 = vmatmul.mubr.f32.gmra.mxu0 %v2872
        %v2948 = vpop.f32.mrf.mxu0
        %v2949 = vadd.f32 0.0, %v2948
        %v2950 = vpop.f32.mrf.mxu0
        %2951 = vmatprep.mubr.f32.mxu0 0.0
        %2952 = vmatmul.mubr.f32.gmra.mxu0 %v2875
        %v2953 = vpop.f32.mrf.mxu0
        %v2954 = vadd.f32 0.0, %v2953
        %v2955 = vpop.f32.mrf.mxu0
        %2956 = vdwg.mxu0
        %v2957 = vadd.f32 %v2617, %v2944
        %v2958 = vadd.f32 %v2622, %v2949
        %v2959 = vadd.f32 %v2627, %v2954
        %2960 = vrot.lane.b32.xlu0 %v1972, 104
        %v2961 = vpop.permute.xlu0 %2960
        %2962 = vrot.lane.b32.xlu0 %v1973, 104
        %v2963 = vpop.permute.xlu0 %2962
        %2964 = vrot.lane.b32.xlu0 %v1974, 104
        %v2965 = vpop.permute.xlu0 %2964
        %2966 = vrot.lane.b32.xlu0 %v1959, 72
        %v2967 = vpop.permute.xlu0 %2966
        %2968 = vrot.lane.b32.xlu0 %v1964, 72
        %v2969 = vpop.permute.xlu0 %2968
        %2970 = vrot.lane.b32.xlu0 %v1969, 72
        %v2971 = vpop.permute.xlu0 %2970
        %v2972 = vsel %vm660, %v2961, 0
        %v2974 = vsel %vm660, %v2963, 0
        %v2976 = vsel %vm660, %v2965, 0
        %v2978 = vsel %vm660, %v2967, 0
        %v2980 = vsel %vm660, %v2969, 0
        %v2982 = vsel %vm660, %v2971, 0
        %2984 = vmatprep.subr.mxu0 0.0
        %2985 = vmatpush1.xpose.msra.mxu0 0.0
        %2986 = vmatprep.subr.mxu0 0.0
        %2987 = vmatpush1.xpose.msra.mxu0 0.0
        %2988 = vmatprep.subr.mxu0 0.0
        %2989 = vmatpush1.xpose.msra.mxu0 0.0
        %2990 = vmatprep.subr.mxu0 0.0
        %2991 = vmatpush1.xpose.msra.mxu0 0.0
        %2992 = vmatprep.subr.mxu0 0.0
        %2993 = vmatpush1.xpose.msra.mxu0 0.0
        %2994 = vmatprep.subr.mxu0 0.0
        %2995 = vmatpush1.xpose.msra.mxu0 0.0
        %2996 = vmatprep.subr.mxu0 0.0
        %2997 = vmatpush1.xpose.msra.mxu0 0.0
        %2998 = vmatprep.subr.mxu0 0.0
        %2999 = vmatpush1.xpose.msra.mxu0 0.0
        %3000 = vmatprep.subr.mxu0 0.0
        %3001 = vmatpush1.xpose.msra.mxu0 0.0
        %3002 = vmatprep.subr.mxu0 0.0
        %3003 = vmatpush1.xpose.msra.mxu0 0.0
        %3004 = vmatprep.subr.mxu0 0.0
        %3005 = vmatpush1.xpose.msra.mxu0 0.0
        %3006 = vmatprep.subr.mxu0 0.0
        %3007 = vmatpush1.xpose.msra.mxu0 0.0
        %3008 = vmatprep.subr.mxu0 0.0
        %3009 = vmatpush1.xpose.msra.mxu0 0.0
        %3010 = vmatprep.subr.mxu0 0.0
        %3011 = vmatpush1.xpose.msra.mxu0 %v2982
        %3012 = vmatprep.subr.mxu0 0.0
        %3013 = vmatpush1.xpose.msra.mxu0 %v2980
        %3014 = vmatprep.subr.mxu0 0.0
        %3015 = vmatpush1.xpose.msra.mxu0 %v2978
        %3016 = vmatprep.subr.mxu0 0.0
        %3017 = vmatpush2.xpose.msra.mxu0 0.0
        %3018 = vmatprep.subr.mxu0 0.0
        %3019 = vmatpush2.xpose.msra.mxu0 0.0
        %3020 = vmatprep.subr.mxu0 0.0
        %3021 = vmatpush2.xpose.msra.mxu0 0.0
        %3022 = vmatprep.subr.mxu0 0.0
        %3023 = vmatpush2.xpose.msra.mxu0 0.0
        %3024 = vmatprep.subr.mxu0 0.0
        %3025 = vmatpush2.xpose.msra.mxu0 0.0
        %3026 = vmatprep.subr.mxu0 0.0
        %3027 = vmatpush2.xpose.msra.mxu0 0.0
        %3028 = vmatprep.subr.mxu0 0.0
        %3029 = vmatpush2.xpose.msra.mxu0 0.0
        %3030 = vmatprep.subr.mxu0 0.0
        %3031 = vmatpush2.xpose.msra.mxu0 0.0
        %3032 = vmatprep.subr.mxu0 0.0
        %3033 = vmatpush2.xpose.msra.mxu0 0.0
        %3034 = vmatprep.subr.mxu0 0.0
        %3035 = vmatpush2.xpose.msra.mxu0 0.0
        %3036 = vmatprep.subr.mxu0 0.0
        %3037 = vmatpush2.xpose.msra.mxu0 0.0
        %3038 = vmatprep.subr.mxu0 0.0
        %3039 = vmatpush2.xpose.msra.mxu0 0.0
        %3040 = vmatprep.subr.mxu0 0.0
        %3041 = vmatpush2.xpose.msra.mxu0 0.0
        %3042 = vmatprep.subr.mxu0 0.0
        %3043 = vmatpush2.xpose.msra.mxu0 0.0
        %3044 = vmatprep.subr.mxu0 0.0
        %3045 = vmatpush2.xpose.msra.mxu0 0.0
        %3046 = vmatprep.subr.mxu0 0.0
        %3047 = vmatpush2.xpose.msra.mxu0 0.0
        %3048 = vmatprep.mubr.f32.mxu0 0.0
        %3049 = vmatmul.mubr.f32.gmra.mxu0 %v2972
        %v3050 = vpop.f32.mrf.mxu0
        %v3051 = vadd.f32 0.0, %v3050
        %v3052 = vpop.f32.mrf.mxu0
        %3053 = vmatprep.mubr.f32.mxu0 0.0
        %3054 = vmatmul.mubr.f32.gmra.mxu0 %v2974
        %v3055 = vpop.f32.mrf.mxu0
        %v3056 = vadd.f32 0.0, %v3055
        %v3057 = vpop.f32.mrf.mxu0
        %3058 = vmatprep.mubr.f32.mxu0 0.0
        %3059 = vmatmul.mubr.f32.gmra.mxu0 %v2976
        %v3060 = vpop.f32.mrf.mxu0
        %v3061 = vadd.f32 0.0, %v3060
        %v3062 = vpop.f32.mrf.mxu0
        %3063 = vdwg.mxu0
        %v3064 = vsel %vm525, -1e+30, %v3051
        %v3065 = vsel %vm526, -1e+30, %v3056
        %v3066 = vsel %vm527, -1e+30, %v3061
        %v3067 = vsel %vm2082, %v3064, -inf
        %3068 = vmax.xlane.f32.xlu0 %v3067
        %v3069 = vpop.xlane.xlu0 %3068
        %v3070 = vsel %vm2082, %v3065, -inf
        %3071 = vmax.xlane.f32.xlu0 %v3070
        %v3072 = vpop.xlane.xlu0 %3071
        %v3073 = vsel %vm2082, %v3066, -inf
        %3074 = vmax.xlane.f32.xlu0 %v3073
        %v3075 = vpop.xlane.xlu0 %3074
        %v3076 = vsub.f32 %v3064, %v3069
        %v3077 = vsub.f32 %v3065, %v3072
        %v3078 = vsub.f32 %v3066, %v3075
        %v3079 = vmul.f32 %v3076, 1.442695
        %v3080 = vpow.pop %v3079
        %v3081 = vmul.f32 %v3077, 1.442695
        %v3082 = vpow.pop %v3081
        %v3083 = vmul.f32 %v3078, 1.442695
        %v3084 = vpow.pop %v3083
        %v3085 = vsel %vm2082, %v3080, 0.0
        %3086 = vadd.xlane.f32.xlu0 %v3085
        %v3087 = vpop.xlane.xlu0 %3086
        %v3088 = vsel %vm2082, %v3082, 0.0
        %3089 = vadd.xlane.f32.xlu0 %v3088
        %v3090 = vpop.xlane.xlu0 %3089
        %v3091 = vsel %vm2082, %v3084, 0.0
        %3092 = vadd.xlane.f32.xlu0 %v3091
        %v3093 = vpop.xlane.xlu0 %3092
        %v3094 = vrcp.pop %v3087
        %v3095 = vmul.f32 %v3080, %v3094
        %v3096 = vrcp.pop %v3090
        %v3097 = vmul.f32 %v3082, %v3096
        %v3098 = vrcp.pop %v3093
        %v3099 = vmul.f32 %v3084, %v3098
        %3100 = vrot.lane.b32.xlu0 %v1959, 40
        %v3101 = vpop.permute.xlu0 %3100
        %3102 = vrot.lane.b32.xlu0 %v1964, 40
        %v3103 = vpop.permute.xlu0 %3102
        %3104 = vrot.lane.b32.xlu0 %v1969, 40
        %v3105 = vpop.permute.xlu0 %3104
        %v3110 = vsel %vm2082, %v3095, 0
        %v3113 = vsel %vm2082, %v3097, 0
        %v3116 = vsel %vm2082, %v3099, 0
        %3118 = vmatprep.subr.mxu0 0.0
        %3119 = vmatpush1.msra.mxu0 0.0
        %3120 = vmatprep.subr.mxu0 0.0
        %3121 = vmatpush1.msra.mxu0 0.0
        %3122 = vmatprep.subr.mxu0 0.0
        %3123 = vmatpush1.msra.mxu0 0.0
        %3124 = vmatprep.subr.mxu0 0.0
        %3125 = vmatpush1.msra.mxu0 0.0
        %3126 = vmatprep.subr.mxu0 0.0
        %3127 = vmatpush1.msra.mxu0 0.0
        %3128 = vmatprep.subr.mxu0 0.0
        %3129 = vmatpush1.msra.mxu0 0.0
        %3130 = vmatprep.subr.mxu0 0.0
        %3131 = vmatpush1.msra.mxu0 0.0
        %3132 = vmatprep.subr.mxu0 0.0
        %3133 = vmatpush1.msra.mxu0 0.0
        %3134 = vmatprep.subr.mxu0 0.0
        %3135 = vmatpush1.msra.mxu0 0.0
        %3136 = vmatprep.subr.mxu0 0.0
        %3137 = vmatpush1.msra.mxu0 0.0
        %3138 = vmatprep.subr.mxu0 0.0
        %3139 = vmatpush1.msra.mxu0 0.0
        %3140 = vmatprep.subr.mxu0 0.0
        %3141 = vmatpush1.msra.mxu0 0.0
        %3142 = vmatprep.subr.mxu0 0.0
        %3143 = vmatpush1.msra.mxu0 0.0
        %3144 = vmatprep.subr.mxu0 0.0
        %3145 = vmatpush1.msra.mxu0 %v3105
        %3146 = vmatprep.subr.mxu0 0.0
        %3147 = vmatpush1.msra.mxu0 %v3103
        %3148 = vmatprep.subr.mxu0 0.0
        %3149 = vmatpush1.msra.mxu0 %v3101
        %3150 = vmatprep.subr.mxu0 0.0
        %3151 = vmatpush2.msra.mxu0 0.0
        %3152 = vmatprep.subr.mxu0 0.0
        %3153 = vmatpush2.msra.mxu0 0.0
        %3154 = vmatprep.subr.mxu0 0.0
        %3155 = vmatpush2.msra.mxu0 0.0
        %3156 = vmatprep.subr.mxu0 0.0
        %3157 = vmatpush2.msra.mxu0 0.0
        %3158 = vmatprep.subr.mxu0 0.0
        %3159 = vmatpush2.msra.mxu0 0.0
        %3160 = vmatprep.subr.mxu0 0.0
        %3161 = vmatpush2.msra.mxu0 0.0
        %3162 = vmatprep.subr.mxu0 0.0
        %3163 = vmatpush2.msra.mxu0 0.0
        %3164 = vmatprep.subr.mxu0 0.0
        %3165 = vmatpush2.msra.mxu0 0.0
        %3166 = vmatprep.subr.mxu0 0.0
        %3167 = vmatpush2.msra.mxu0 0.0
        %3168 = vmatprep.subr.mxu0 0.0
        %3169 = vmatpush2.msra.mxu0 0.0
        %3170 = vmatprep.subr.mxu0 0.0
        %3171 = vmatpush2.msra.mxu0 0.0
        %3172 = vmatprep.subr.mxu0 0.0
        %3173 = vmatpush2.msra.mxu0 0.0
        %3174 = vmatprep.subr.mxu0 0.0
        %3175 = vmatpush2.msra.mxu0 0.0
        %3176 = vmatprep.subr.mxu0 0.0
        %3177 = vmatpush2.msra.mxu0 0.0
        %3178 = vmatprep.subr.mxu0 0.0
        %3179 = vmatpush2.msra.mxu0 0.0
        %3180 = vmatprep.subr.mxu0 0.0
        %3181 = vmatpush2.msra.mxu0 0.0
        %3182 = vmatprep.mubr.f32.mxu0 0.0
        %3183 = vmatmul.mubr.f32.gmra.mxu0 %v3110
        %v3184 = vpop.f32.mrf.mxu0
        %v3185 = vadd.f32 0.0, %v3184
        %v3186 = vpop.f32.mrf.mxu0
        %3187 = vmatprep.mubr.f32.mxu0 0.0
        %3188 = vmatmul.mubr.f32.gmra.mxu0 %v3113
        %v3189 = vpop.f32.mrf.mxu0
        %v3190 = vadd.f32 0.0, %v3189
        %v3191 = vpop.f32.mrf.mxu0
        %3192 = vmatprep.mubr.f32.mxu0 0.0
        %3193 = vmatmul.mubr.f32.gmra.mxu0 %v3116
        %v3194 = vpop.f32.mrf.mxu0
        %v3195 = vadd.f32 0.0, %v3194
        %v3196 = vpop.f32.mrf.mxu0
        %3197 = vdwg.mxu0
        %v3199 = vsel %vm660, %v3185, 0
        %v3202 = vsel %vm660, %v3190, 0
        %v3205 = vsel %vm660, %v3195, 0
        %3207 = vmatprep.subr.mxu0 0.0
        %3208 = vmatpush1.msra.mxu0 0.0
        %3209 = vmatprep.subr.mxu0 0.0
        %3210 = vmatpush1.msra.mxu0 0.0
        %3211 = vmatprep.subr.mxu0 0.0
        %3212 = vmatpush1.msra.mxu0 0.0
        %3213 = vmatprep.subr.mxu0 0.0
        %3214 = vmatpush1.msra.mxu0 0.0
        %3215 = vmatprep.subr.mxu0 0.0
        %3216 = vmatpush1.msra.mxu0 0.0
        %3217 = vmatprep.subr.mxu0 0.0
        %3218 = vmatpush1.msra.mxu0 0.0
        %3219 = vmatprep.subr.mxu0 0.0
        %3220 = vmatpush1.msra.mxu0 0.0
        %3221 = vmatprep.subr.mxu0 0.0
        %3222 = vmatpush1.msra.mxu0 0.0
        %3223 = vmatprep.subr.mxu0 0.0
        %3224 = vmatpush1.msra.mxu0 0.0
        %3225 = vmatprep.subr.mxu0 0.0
        %3226 = vmatpush1.msra.mxu0 0.0
        %3227 = vmatprep.subr.mxu0 0.0
        %3228 = vmatpush1.msra.mxu0 0.0
        %3229 = vmatprep.subr.mxu0 0.0
        %3230 = vmatpush1.msra.mxu0 0.0
        %3231 = vmatprep.subr.mxu0 0.0
        %3232 = vmatpush1.msra.mxu0 0.0
        %3233 = vmatprep.subr.mxu0 0.0
        %3234 = vmatpush1.msra.mxu0 0.0
        %3235 = vmatprep.subr.mxu0 0.0
        %3236 = vmatpush1.msra.mxu0 0.0
        %3237 = vmatprep.subr.mxu0 0.0
        %3238 = vmatpush1.msra.mxu0 %v536
        %3239 = vmatprep.subr.mxu0 0.0
        %3240 = vmatpush2.msra.mxu0 0.0
        %3241 = vmatprep.subr.mxu0 0.0
        %3242 = vmatpush2.msra.mxu0 0.0
        %3243 = vmatprep.subr.mxu0 0.0
        %3244 = vmatpush2.msra.mxu0 0.0
        %3245 = vmatprep.subr.mxu0 0.0
        %3246 = vmatpush2.msra.mxu0 0.0
        %3247 = vmatprep.subr.mxu0 0.0
        %3248 = vmatpush2.msra.mxu0 0.0
        %3249 = vmatprep.subr.mxu0 0.0
        %3250 = vmatpush2.msra.mxu0 0.0
        %3251 = vmatprep.subr.mxu0 0.0
        %3252 = vmatpush2.msra.mxu0 0.0
        %3253 = vmatprep.subr.mxu0 0.0
        %3254 = vmatpush2.msra.mxu0 0.0
        %3255 = vmatprep.subr.mxu0 0.0
        %3256 = vmatpush2.msra.mxu0 0.0
        %3257 = vmatprep.subr.mxu0 0.0
        %3258 = vmatpush2.msra.mxu0 0.0
        %3259 = vmatprep.subr.mxu0 0.0
        %3260 = vmatpush2.msra.mxu0 0.0
        %3261 = vmatprep.subr.mxu0 0.0
        %3262 = vmatpush2.msra.mxu0 0.0
        %3263 = vmatprep.subr.mxu0 0.0
        %3264 = vmatpush2.msra.mxu0 0.0
        %3265 = vmatprep.subr.mxu0 0.0
        %3266 = vmatpush2.msra.mxu0 0.0
        %3267 = vmatprep.subr.mxu0 0.0
        %3268 = vmatpush2.msra.mxu0 0.0
        %3269 = vmatprep.subr.mxu0 0.0
        %3270 = vmatpush2.msra.mxu0 0.0
        %3271 = vmatprep.mubr.f32.mxu0 0.0
        %3272 = vmatmul.mubr.f32.gmra.mxu0 %v3199
        %v3273 = vpop.f32.mrf.mxu0
        %v3274 = vadd.f32 0.0, %v3273
        %v3275 = vpop.f32.mrf.mxu0
        %3276 = vmatprep.mubr.f32.mxu0 0.0
        %3277 = vmatmul.mubr.f32.gmra.mxu0 %v3202
        %v3278 = vpop.f32.mrf.mxu0
        %v3279 = vadd.f32 0.0, %v3278
        %v3280 = vpop.f32.mrf.mxu0
        %3281 = vmatprep.mubr.f32.mxu0 0.0
        %3282 = vmatmul.mubr.f32.gmra.mxu0 %v3205
        %v3283 = vpop.f32.mrf.mxu0
        %v3284 = vadd.f32 0.0, %v3283
        %v3285 = vpop.f32.mrf.mxu0
        %3286 = vdwg.mxu0
        %v3287 = vadd.f32 %v2957, %v3274
        %v3288 = vadd.f32 %v2958, %v3279
        %v3289 = vadd.f32 %v2959, %v3284
        %v3290 = vadd.f32 %v1834, %v3287
        %v3291 = vadd.f32 %v495, %v3288
        %v3292 = vadd.f32 %v499, %v3289
        %3295 = vrot.lane.b32.xlu0 %v3290, 112
        %v3296 = vpop.permute.xlu0 %3295
        %3297 = vrot.lane.b32.xlu0 %v3291, 112
        %v3298 = vpop.permute.xlu0 %3297
        %3300 = vrot.lane.b32.xlu0 0.0, 16
        %v3301 = vpop.permute.xlu0 %3300
        %3302 = vrot.lane.b32.xlu0 %v3296, 16
        %v3303 = vpop.permute.xlu0 %3302
        %3304 = vrot.lane.b32.xlu0 %v3298, 16
        %v3305 = vpop.permute.xlu0 %3304
        %v3309 = vsel %vm1628, %v3290, %v3301
        %v3310 = vsel %vm1628, %v3291, %v3303
        %v3311 = vsel %vm1628, %v3292, %v3305
        %v3312 = vmul.f32 %v3309, %v3309
        %v3313 = vmul.f32 %v3310, %v3310
        %v3314 = vmul.f32 %v3311, %v3311
        %v3315 = vsel %vm561, %v3312, 0.0
        %3316 = vadd.xlane.f32.xlu0 %v3315
        %v3317 = vpop.xlane.xlu0 %3316
        %v3318 = vsel %vm561, %v3313, 0.0
        %3319 = vadd.xlane.f32.xlu0 %v3318
        %v3320 = vpop.xlane.xlu0 %3319
        %v3321 = vsel %vm561, %v3314, 0.0
        %3322 = vadd.xlane.f32.xlu0 %v3321
        %v3323 = vpop.xlane.xlu0 %3322
        %v3324 = vrsqrt.pop %v3317
        %v3325 = vmul.f32 %v3317, %v3324
        %vm3326 = vcmp.eq.f32.partialorder %v3317, inf
        %v3327 = vsel %vm3326, %v3317, %v3325
        %vm3328 = vcmp.eq.f32.partialorder %v3317, 0.0
        %v3329 = vand.u32 %v3317, 2147483648
        %v3330 = vsel %vm3328, %v3329, %v3327
        %v3331 = vrsqrt.pop %v3320
        %v3332 = vmul.f32 %v3320, %v3331
        %vm3333 = vcmp.eq.f32.partialorder %v3320, inf
        %v3334 = vsel %vm3333, %v3320, %v3332
        %vm3335 = vcmp.eq.f32.partialorder %v3320, 0.0
        %v3336 = vand.u32 %v3320, 2147483648
        %v3337 = vsel %vm3335, %v3336, %v3334
        %v3338 = vrsqrt.pop %v3323
        %v3339 = vmul.f32 %v3323, %v3338
        %vm3340 = vcmp.eq.f32.partialorder %v3323, inf
        %v3341 = vsel %vm3340, %v3323, %v3339
        %vm3342 = vcmp.eq.f32.partialorder %v3323, 0.0
        %v3343 = vand.u32 %v3323, 2147483648
        %v3344 = vsel %vm3342, %v3343, %v3341
        %v3345 = vmax.f32 %v3330, 1e-12
        %v3346 = vmax.f32 %v3337, 1e-12
        %v3347 = vmax.f32 %v3344, 1e-12
        %v3348 = vrcp.pop %v3345
        %v3349 = vmul.f32 %v3309, %v3348
        %v3350 = vrcp.pop %v3346
        %v3351 = vmul.f32 %v3310, %v3350
        %v3352 = vrcp.pop %v3347
        %v3353 = vmul.f32 %v3311, %v3352
        %v3354 = vmul.f32 %v3349, 5.656854
        %v3355 = vmul.f32 %v3351, 5.656854
        %v3356 = vmul.f32 %v3353, 5.656854
        %v3357 = vmul.f32 %v3354, %v1649
        %v3358 = vmul.f32 %v3355, %v1649
        %v3359 = vmul.f32 %v3356, %v1649
        %v3361 = vsel %vm561, %v3357, 0
        %v3364 = vsel %vm561, %v3358, 0
        %v3367 = vsel %vm561, %v3359, 0
        %3369 = vmatprep.subr.mxu0 0.0
        %3370 = vmatpush1.msra.mxu0 0.0
        %3371 = vmatprep.subr.mxu0 0.0
        %3372 = vmatpush1.msra.mxu0 0.0
        %3373 = vmatprep.subr.mxu0 0.0
        %3374 = vmatpush1.msra.mxu0 0.0
        %3375 = vmatprep.subr.mxu0 0.0
        %3376 = vmatpush1.msra.mxu0 0.0
        %3377 = vmatprep.subr.mxu0 0.0
        %3378 = vmatpush1.msra.mxu0 0.0
        %3379 = vmatprep.subr.mxu0 0.0
        %3380 = vmatpush1.msra.mxu0 0.0
        %3381 = vmatprep.subr.mxu0 0.0
        %3382 = vmatpush1.msra.mxu0 0.0
        %3383 = vmatprep.subr.mxu0 0.0
        %3384 = vmatpush1.msra.mxu0 0.0
        %3385 = vmatprep.subr.mxu0 0.0
        %3386 = vmatpush1.msra.mxu0 0.0
        %3387 = vmatprep.subr.mxu0 0.0
        %3388 = vmatpush1.msra.mxu0 0.0
        %3389 = vmatprep.subr.mxu0 0.0
        %3390 = vmatpush1.msra.mxu0 0.0
        %3391 = vmatprep.subr.mxu0 0.0
        %3392 = vmatpush1.msra.mxu0 0.0
        %3393 = vmatprep.subr.mxu0 0.0
        %3394 = vmatpush1.msra.mxu0 %v541
        %3395 = vmatprep.subr.mxu0 0.0
        %3396 = vmatpush1.msra.mxu0 %v540
        %3397 = vmatprep.subr.mxu0 0.0
        %3398 = vmatpush1.msra.mxu0 %v539
        %3399 = vmatprep.subr.mxu0 0.0
        %3400 = vmatpush1.msra.mxu0 %v538
        %3401 = vmatprep.subr.mxu0 0.0
        %3402 = vmatpush2.msra.mxu0 0.0
        %3403 = vmatprep.subr.mxu0 0.0
        %3404 = vmatpush2.msra.mxu0 0.0
        %3405 = vmatprep.subr.mxu0 0.0
        %3406 = vmatpush2.msra.mxu0 0.0
        %3407 = vmatprep.subr.mxu0 0.0
        %3408 = vmatpush2.msra.mxu0 0.0
        %3409 = vmatprep.subr.mxu0 0.0
        %3410 = vmatpush2.msra.mxu0 0.0
        %3411 = vmatprep.subr.mxu0 0.0
        %3412 = vmatpush2.msra.mxu0 0.0
        %3413 = vmatprep.subr.mxu0 0.0
        %3414 = vmatpush2.msra.mxu0 0.0
        %3415 = vmatprep.subr.mxu0 0.0
        %3416 = vmatpush2.msra.mxu0 0.0
        %3417 = vmatprep.subr.mxu0 0.0
        %3418 = vmatpush2.msra.mxu0 0.0
        %3419 = vmatprep.subr.mxu0 0.0
        %3420 = vmatpush2.msra.mxu0 0.0
        %3421 = vmatprep.subr.mxu0 0.0
        %3422 = vmatpush2.msra.mxu0 0.0
        %3423 = vmatprep.subr.mxu0 0.0
        %3424 = vmatpush2.msra.mxu0 0.0
        %3425 = vmatprep.subr.mxu0 0.0
        %3426 = vmatpush2.msra.mxu0 0.0
        %3427 = vmatprep.subr.mxu0 0.0
        %3428 = vmatpush2.msra.mxu0 0.0
        %3429 = vmatprep.subr.mxu0 0.0
        %3430 = vmatpush2.msra.mxu0 0.0
        %3431 = vmatprep.subr.mxu0 0.0
        %3432 = vmatpush2.msra.mxu0 0.0
        %3433 = vmatprep.mubr.f32.mxu0 0.0
        %3434 = vmatmul.mubr.f32.gmra.mxu0 %v3361
        %v3435 = vpop.f32.mrf.mxu0
        %v3436 = vadd.f32 %v1656, %v3435
        %v3437 = vpop.f32.mrf.mxu0
        %3438 = vmatprep.mubr.f32.mxu0 0.0
        %3439 = vmatmul.mubr.f32.gmra.mxu0 %v3364
        %v3440 = vpop.f32.mrf.mxu0
        %v3441 = vadd.f32 %v1656, %v3440
        %v3442 = vpop.f32.mrf.mxu0
        %3443 = vmatprep.mubr.f32.mxu0 0.0
        %3444 = vmatmul.mubr.f32.gmra.mxu0 %v3367
        %v3445 = vpop.f32.mrf.mxu0
        %v3446 = vadd.f32 %v1656, %v3445
        %v3447 = vpop.f32.mrf.mxu0
        %3448 = vdwg.mxu0
        %v3449 = vmul.f32 %v3436, 0.5
        %v3450 = vmul.f32 %v3441, 0.5
        %v3451 = vmul.f32 %v3446, 0.5
        %v3452 = vmul.f32 %v3436, 0.70710677
        %v3453 = vmul.f32 %v3441, 0.70710677
        %v3454 = vmul.f32 %v3446, 0.70710677
        %vm3455 = vcmp.ge.f32.partialorder %v3452, 0.0
        %vm3456 = vcmp.ge.f32.partialorder %v3453, 0.0
        %vm3457 = vcmp.ge.f32.partialorder %v3454, 0.0
        %v3458 = vsel %vm3455, 1.0, -1.0
        %v3459 = vsel %vm3456, 1.0, -1.0
        %v3460 = vsel %vm3457, 1.0, -1.0
        %v3461 = vand.u32 2147483647, %v3452
        %v3462 = vand.u32 2147483647, %v3453
        %v3463 = vand.u32 2147483647, %v3454
        %v3464 = vmul.f32 %v3461, 0.3275911
        %v3465 = vmul.f32 %v3462, 0.3275911
        %v3466 = vmul.f32 %v3463, 0.3275911
        %v3467 = vadd.f32 %v3464, 1.0
        %v3468 = vadd.f32 %v3465, 1.0
        %v3469 = vadd.f32 %v3466, 1.0
        %v3470 = vrcp.pop %v3467
        %v3471 = vmul.f32 1.0, %v3470
        %v3472 = vrcp.pop %v3468
        %v3473 = vmul.f32 1.0, %v3472
        %v3474 = vrcp.pop %v3469
        %v3475 = vmul.f32 1.0, %v3474
        %v3476 = vmul.f32 %v3471, 1.0614054
        %v3477 = vmul.f32 %v3473, 1.0614054
        %v3478 = vmul.f32 %v3475, 1.0614054
        %v3479 = vadd.f32 %v3476, -1.4531521
        %v3480 = vadd.f32 %v3477, -1.4531521
        %v3481 = vadd.f32 %v3478, -1.4531521
        %v3482 = vmul.f32 %v3479, %v3471
        %v3483 = vmul.f32 %v3480, %v3473
        %v3484 = vmul.f32 %v3481, %v3475
        %v3485 = vadd.f32 %v3482, 1.4214138
        %v3486 = vadd.f32 %v3483, 1.4214138
        %v3487 = vadd.f32 %v3484, 1.4214138
        %v3488 = vmul.f32 %v3485, %v3471
        %v3489 = vmul.f32 %v3486, %v3473
        %v3490 = vmul.f32 %v3487, %v3475
        %v3491 = vadd.f32 %v3488, -0.28449672
        %v3492 = vadd.f32 %v3489, -0.28449672
        %v3493 = vadd.f32 %v3490, -0.28449672
        %v3494 = vmul.f32 %v3491, %v3471
        %v3495 = vmul.f32 %v3492, %v3473
        %v3496 = vmul.f32 %v3493, %v3475
        %v3497 = vadd.f32 %v3494, 0.2548296
        %v3498 = vadd.f32 %v3495, 0.2548296
        %v3499 = vadd.f32 %v3496, 0.2548296
        %v3500 = vmul.f32 %v3497, %v3471
        %v3501 = vmul.f32 %v3498, %v3473
        %v3502 = vmul.f32 %v3499, %v3475
        %v3503 = vsub.f32 0.0, %v3461
        %v3504 = vsub.f32 0.0, %v3462
        %v3505 = vsub.f32 0.0, %v3463
        %v3506 = vmul.f32 %v3503, %v3461
        %v3507 = vmul.f32 %v3504, %v3462
        %v3508 = vmul.f32 %v3505, %v3463
        %v3509 = vmul.f32 %v3506, 1.442695
        %v3510 = vpow.pop %v3509
        %v3511 = vmul.f32 %v3507, 1.442695
        %v3512 = vpow.pop %v3511
        %v3513 = vmul.f32 %v3508, 1.442695
        %v3514 = vpow.pop %v3513
        %v3515 = vmul.f32 %v3500, %v3510
        %v3516 = vmul.f32 %v3501, %v3512
        %v3517 = vmul.f32 %v3502, %v3514
        %v3518 = vsub.f32 1.0, %v3515
        %v3519 = vsub.f32 1.0, %v3516
        %v3520 = vsub.f32 1.0, %v3517
        %v3521 = vmul.f32 %v3458, %v3518
        %v3522 = vmul.f32 %v3459, %v3519
        %v3523 = vmul.f32 %v3460, %v3520
        %v3524 = vadd.f32 %v3521, 1.0
        %v3525 = vadd.f32 %v3522, 1.0
        %v3526 = vadd.f32 %v3523, 1.0
        %v3527 = vmul.f32 %v3449, %v3524
        %v3528 = vmul.f32 %v3450, %v3525
        %v3529 = vmul.f32 %v3451, %v3526
        %3530 = vmatprep.subr.mxu0 0.0
        %3531 = vmatpush1.msra.mxu0 %v558
        %3532 = vmatprep.subr.mxu0 0.0
        %3533 = vmatpush1.msra.mxu0 %v557
        %3534 = vmatprep.subr.mxu0 0.0
        %3535 = vmatpush1.msra.mxu0 %v556
        %3536 = vmatprep.subr.mxu0 0.0
        %3537 = vmatpush1.msra.mxu0 %v555
        %3538 = vmatprep.subr.mxu0 0.0
        %3539 = vmatpush1.msra.mxu0 %v554
        %3540 = vmatprep.subr.mxu0 0.0
        %3541 = vmatpush1.msra.mxu0 %v553
        %3542 = vmatprep.subr.mxu0 0.0
        %3543 = vmatpush1.msra.mxu0 %v552
        %3544 = vmatprep.subr.mxu0 0.0
        %3545 = vmatpush1.msra.mxu0 %v551
        %3546 = vmatprep.subr.mxu0 0.0
        %3547 = vmatpush1.msra.mxu0 %v550
        %3548 = vmatprep.subr.mxu0 0.0
        %3549 = vmatpush1.msra.mxu0 %v549
        %3550 = vmatprep.subr.mxu0 0.0
        %3551 = vmatpush1.msra.mxu0 %v548
        %3552 = vmatprep.subr.mxu0 0.0
        %3553 = vmatpush1.msra.mxu0 %v547
        %3554 = vmatprep.subr.mxu0 0.0
        %3555 = vmatpush1.msra.mxu0 %v546
        %3556 = vmatprep.subr.mxu0 0.0
        %3557 = vmatpush1.msra.mxu0 %v545
        %3558 = vmatprep.subr.mxu0 0.0
        %3559 = vmatpush1.msra.mxu0 %v544
        %3560 = vmatprep.subr.mxu0 0.0
        %3561 = vmatpush1.msra.mxu0 %v543
        %3562 = vmatprep.subr.mxu0 0.0
        %3563 = vmatpush2.msra.mxu0 0.0
        %3564 = vmatprep.subr.mxu0 0.0
        %3565 = vmatpush2.msra.mxu0 0.0
        %3566 = vmatprep.subr.mxu0 0.0
        %3567 = vmatpush2.msra.mxu0 0.0
        %3568 = vmatprep.subr.mxu0 0.0
        %3569 = vmatpush2.msra.mxu0 0.0
        %3570 = vmatprep.subr.mxu0 0.0
        %3571 = vmatpush2.msra.mxu0 0.0
        %3572 = vmatprep.subr.mxu0 0.0
        %3573 = vmatpush2.msra.mxu0 0.0
        %3574 = vmatprep.subr.mxu0 0.0
        %3575 = vmatpush2.msra.mxu0 0.0
        %3576 = vmatprep.subr.mxu0 0.0
        %3577 = vmatpush2.msra.mxu0 0.0
        %3578 = vmatprep.subr.mxu0 0.0
        %3579 = vmatpush2.msra.mxu0 0.0
        %3580 = vmatprep.subr.mxu0 0.0
        %3581 = vmatpush2.msra.mxu0 0.0
        %3582 = vmatprep.subr.mxu0 0.0
        %3583 = vmatpush2.msra.mxu0 0.0
        %3584 = vmatprep.subr.mxu0 0.0
        %3585 = vmatpush2.msra.mxu0 0.0
        %3586 = vmatprep.subr.mxu0 0.0
        %3587 = vmatpush2.msra.mxu0 0.0
        %3588 = vmatprep.subr.mxu0 0.0
        %3589 = vmatpush2.msra.mxu0 0.0
        %3590 = vmatprep.subr.mxu0 0.0
        %3591 = vmatpush2.msra.mxu0 0.0
        %3592 = vmatprep.subr.mxu0 0.0
        %3593 = vmatpush2.msra.mxu0 0.0
        %3594 = vmatprep.mubr.f32.mxu0 0.0
        %3595 = vmatmul.mubr.f32.gmra.mxu0 %v3527
        %v3596 = vpop.f32.mrf.mxu0
        %v3597 = vadd.f32 %v1762, %v3596
        %v3598 = vpop.f32.mrf.mxu0
        %3599 = vmatprep.mubr.f32.mxu0 0.0
        %3600 = vmatmul.mubr.f32.gmra.mxu0 %v3528
        %v3601 = vpop.f32.mrf.mxu0
        %v3602 = vadd.f32 %v1762, %v3601
        %v3603 = vpop.f32.mrf.mxu0
        %3604 = vmatprep.mubr.f32.mxu0 0.0
        %3605 = vmatmul.mubr.f32.gmra.mxu0 %v3529
        %v3606 = vpop.f32.mrf.mxu0
        %v3607 = vadd.f32 %v1762, %v3606
        %v3608 = vpop.f32.mrf.mxu0
        %3609 = vdwg.mxu0
        %v3610 = vadd.f32 %v3597, %v3290
        %v3611 = vadd.f32 %v3602, %v3291
        %v3612 = vadd.f32 %v3607, %v3292
        %v3614 = vrot.slane %v3612, 7
        %v3616 = vsel %vm1622, 0.0, %v3614
        %v3617 = vld [vmem:[%s10] sm:$0x1]
        %v3618 = vmul.f32 %v3610, %v3610
        %v3619 = vsel %vm561, %v3618, 0.0
        %3620 = vadd.xlane.f32.xlu0 %v3619
        %v3621 = vpop.xlane.xlu0 %3620
        %v3622 = vrsqrt.pop %v3621
        %v3623 = vmul.f32 %v3621, %v3622
        %vm3624 = vcmp.eq.f32.partialorder %v3621, inf
        %v3625 = vsel %vm3624, %v3621, %v3623
        %vm3626 = vcmp.eq.f32.partialorder %v3621, 0.0
        %v3627 = vand.u32 %v3621, 2147483648
        %v3628 = vsel %vm3626, %v3627, %v3625
        %v3629 = vmax.f32 %v3628, 1e-12
        %v3630 = vrcp.pop %v3629
        %v3631 = vmul.f32 %v3610, %v3630
        %v3632 = vmul.f32 %v3631, 5.656854
        %v3634 = vlaneseq
        %v3635 = vshrl.u32 %v3634, 7
        %v3636 = vsub.s32 0, %v3635
        %v3637 = vrot.slane %v3617, %v3636
        %v3639 = vmul.f32 %v3632, %v3637
        %v3640 = vmul.f32 %v3616, %v3616
        %v3641 = vsel %vm561, %v3640, 0.0
        %3642 = vadd.xlane.f32.xlu0 %v3641
        %v3643 = vpop.xlane.xlu0 %3642
        %v3644 = vrsqrt.pop %v3643
        %v3645 = vmul.f32 %v3643, %v3644
        %vm3646 = vcmp.eq.f32.partialorder %v3643, inf
        %v3647 = vsel %vm3646, %v3643, %v3645
        %vm3648 = vcmp.eq.f32.partialorder %v3643, 0.0
        %v3649 = vand.u32 %v3643, 2147483648
        %v3650 = vsel %vm3648, %v3649, %v3647
        %v3651 = vmax.f32 %v3650, 1e-12
        %v3652 = vrcp.pop %v3651
        %v3653 = vmul.f32 %v3616, %v3652
        %v3654 = vmul.f32 %v3653, 5.656854
        %v3655 = vmul.f32 %v3654, %v3637
        %3657 = vrot.lane.b32.xlu0 %v3655, 32
        %v3658 = vpop.permute.xlu0 %3657
        %v3660 = vsel %vm561, %v3639, %v3658
        %v3661 = vld [vmem:[%s11] sm:$0xff]
        %v3662 = vld [vmem:[%s11 + $0x8] sm:$0xff]
        %v3663 = vld [vmem:[%s11 + $0x10] sm:$0xff]
        %v3664 = vld [vmem:[%s11 + $0x18] sm:$0xff]
        %v3665 = vld [vmem:[%s11 + $0x20] sm:$0xff]
        %v3666 = vld [vmem:[%s11 + $0x28] sm:$0xff]
        %v3667 = vld [vmem:[%s11 + $0x30] sm:$0xff]
        %v3668 = vld [vmem:[%s11 + $0x38] sm:$0xff]
        %v3669 = vld [vmem:[%s12] sm:$0x1]
        %v3671 = vlaneseq
        %v3672 = vshrl.u32 %v3671, 7
        %v3673 = vsub.s32 0, %v3672
        %v3674 = vrot.slane %v3669, %v3673
        %vm3676 = vcmask 523264
        %v3678 = vsel %vm3676, %v3660, 0
        %3680 = vmatprep.subr.mxu0 0.0
        %3681 = vmatpush1.msra.mxu0 0.0
        %3682 = vmatprep.subr.mxu0 0.0
        %3683 = vmatpush1.msra.mxu0 0.0
        %3684 = vmatprep.subr.mxu0 0.0
        %3685 = vmatpush1.msra.mxu0 0.0
        %3686 = vmatprep.subr.mxu0 0.0
        %3687 = vmatpush1.msra.mxu0 0.0
        %3688 = vmatprep.subr.mxu0 0.0
        %3689 = vmatpush1.msra.mxu0 0.0
        %3690 = vmatprep.subr.mxu0 0.0
        %3691 = vmatpush1.msra.mxu0 0.0
        %3692 = vmatprep.subr.mxu0 0.0
        %3693 = vmatpush1.msra.mxu0 0.0
        %3694 = vmatprep.subr.mxu0 0.0
        %3695 = vmatpush1.msra.mxu0 0.0
        %3696 = vmatprep.subr.mxu0 0.0
        %3697 = vmatpush1.msra.mxu0 %v3668
        %3698 = vmatprep.subr.mxu0 0.0
        %3699 = vmatpush1.msra.mxu0 %v3667
        %3700 = vmatprep.subr.mxu0 0.0
        %3701 = vmatpush1.msra.mxu0 %v3666
        %3702 = vmatprep.subr.mxu0 0.0
        %3703 = vmatpush1.msra.mxu0 %v3665
        %3704 = vmatprep.subr.mxu0 0.0
        %3705 = vmatpush1.msra.mxu0 %v3664
        %3706 = vmatprep.subr.mxu0 0.0
        %3707 = vmatpush1.msra.mxu0 %v3663
        %3708 = vmatprep.subr.mxu0 0.0
        %3709 = vmatpush1.msra.mxu0 %v3662
        %3710 = vmatprep.subr.mxu0 0.0
        %3711 = vmatpush1.msra.mxu0 %v3661
        %3712 = vmatprep.subr.mxu0 0.0
        %3713 = vmatpush2.msra.mxu0 0.0
        %3714 = vmatprep.subr.mxu0 0.0
        %3715 = vmatpush2.msra.mxu0 0.0
        %3716 = vmatprep.subr.mxu0 0.0
        %3717 = vmatpush2.msra.mxu0 0.0
        %3718 = vmatprep.subr.mxu0 0.0
        %3719 = vmatpush2.msra.mxu0 0.0
        %3720 = vmatprep.subr.mxu0 0.0
        %3721 = vmatpush2.msra.mxu0 0.0
        %3722 = vmatprep.subr.mxu0 0.0
        %3723 = vmatpush2.msra.mxu0 0.0
        %3724 = vmatprep.subr.mxu0 0.0
        %3725 = vmatpush2.msra.mxu0 0.0
        %3726 = vmatprep.subr.mxu0 0.0
        %3727 = vmatpush2.msra.mxu0 0.0
        %3728 = vmatprep.subr.mxu0 0.0
        %3729 = vmatpush2.msra.mxu0 0.0
        %3730 = vmatprep.subr.mxu0 0.0
        %3731 = vmatpush2.msra.mxu0 0.0
        %3732 = vmatprep.subr.mxu0 0.0
        %3733 = vmatpush2.msra.mxu0 0.0
        %3734 = vmatprep.subr.mxu0 0.0
        %3735 = vmatpush2.msra.mxu0 0.0
        %3736 = vmatprep.subr.mxu0 0.0
        %3737 = vmatpush2.msra.mxu0 0.0
        %3738 = vmatprep.subr.mxu0 0.0
        %3739 = vmatpush2.msra.mxu0 0.0
        %3740 = vmatprep.subr.mxu0 0.0
        %3741 = vmatpush2.msra.mxu0 0.0
        %3742 = vmatprep.subr.mxu0 0.0
        %3743 = vmatpush2.msra.mxu0 0.0
        %3744 = vmatprep.mubr.f32.mxu0 0.0
        %3745 = vmatmul.mubr.f32.gmra.mxu0 %v3678
        %v3746 = vpop.f32.mrf.mxu0
        %v3747 = vadd.f32 %v3674, %v3746
        %v3748 = vpop.f32.mrf.mxu0
        %3749 = vdwg.mxu0
        %v3750 = vadd.f32 %v3610, %v3747
        %s3751 = scalar_lea.vmem %s2, 1
        %v3752 = vld [vmem:[%s3751] sm:$0x1]
        %s3753 = scalar_lea.vmem %s3, 32
        %v3754 = vld [vmem:[%s3753] sm:$0xff]
        %v3755 = vld [vmem:[%s3753 + $0x8] sm:$0xff]
        %v3756 = vld [vmem:[%s3753 + $0x10] sm:$0xff]
        %v3757 = vld [vmem:[%s3753 + $0x18] sm:$0xff]
        %s3758 = scalar_lea.vmem %s4, 32
        %v3759 = vld [vmem:[%s3758] sm:$0xff]
        %v3760 = vld [vmem:[%s3758 + $0x8] sm:$0xff]
        %v3761 = vld [vmem:[%s3758 + $0x10] sm:$0xff]
        %v3762 = vld [vmem:[%s3758 + $0x18] sm:$0xff]
        %s3763 = scalar_lea.vmem %s5, 1
        %v3764 = vld [vmem:[%s3763] sm:$0x1]
        %s3765 = scalar_lea.vmem %s6, 32
        %v3766 = vld [vmem:[%s3765] sm:$0xff]
        %v3767 = vld [vmem:[%s3765 + $0x8] sm:$0xff]
        %v3768 = vld [vmem:[%s3765 + $0x10] sm:$0xff]
        %v3769 = vld [vmem:[%s3765 + $0x18] sm:$0xff]
        %s3770 = scalar_lea.vmem %s7, 1
        %v3771 = vld [vmem:[%s3770] sm:$0x1]
        %s3772 = scalar_lea.vmem %s8, 128
        %v3773 = vld [vmem:[%s3772] sm:$0xff]
        %v3774 = vld [vmem:[%s3772 + $0x8] sm:$0xff]
        %v3775 = vld [vmem:[%s3772 + $0x10] sm:$0xff]
        %v3776 = vld [vmem:[%s3772 + $0x18] sm:$0xff]
        %v3777 = vld [vmem:[%s3772 + $0x20] sm:$0xff]
        %v3778 = vld [vmem:[%s3772 + $0x28] sm:$0xff]
        %v3779 = vld [vmem:[%s3772 + $0x30] sm:$0xff]
        %v3780 = vld [vmem:[%s3772 + $0x38] sm:$0xff]
        %v3781 = vld [vmem:[%s3772 + $0x40] sm:$0xff]
        %v3782 = vld [vmem:[%s3772 + $0x48] sm:$0xff]
        %v3783 = vld [vmem:[%s3772 + $0x50] sm:$0xff]
        %v3784 = vld [vmem:[%s3772 + $0x58] sm:$0xff]
        %v3785 = vld [vmem:[%s3772 + $0x60] sm:$0xff]
        %v3786 = vld [vmem:[%s3772 + $0x68] sm:$0xff]
        %v3787 = vld [vmem:[%s3772 + $0x70] sm:$0xff]
        %v3788 = vld [vmem:[%s3772 + $0x78] sm:$0xff]
        %s3789 = scalar_lea.vmem %s9, 1
        %v3790 = vld [vmem:[%s3789] sm:$0x1]
        %v3791 = vmul.f32 %v3750, %v3750
        %v3792 = vsel %vm561, %v3791, 0.0
        %3793 = vadd.xlane.f32.xlu0 %v3792
        %v3794 = vpop.xlane.xlu0 %3793
        %v3795 = vrsqrt.pop %v3794
        %v3796 = vmul.f32 %v3794, %v3795
        %vm3797 = vcmp.eq.f32.partialorder %v3794, inf
        %v3798 = vsel %vm3797, %v3794, %v3796
        %vm3799 = vcmp.eq.f32.partialorder %v3794, 0.0
        %v3800 = vand.u32 %v3794, 2147483648
        %v3801 = vsel %vm3799, %v3800, %v3798
        %v3802 = vmax.f32 %v3801, 1e-12
        %v3803 = vrcp.pop %v3802
        %v3804 = vmul.f32 %v3750, %v3803
        %v3805 = vmul.f32 %v3804, 5.656854
        %v3807 = vlaneseq
        %v3808 = vshrl.u32 %v3807, 7
        %v3809 = vsub.s32 0, %v3808
        %v3810 = vrot.slane %v3752, %v3809
        %v3812 = vmul.f32 %v3805, %v3810
        %v3814 = vsel %vm561, %v3812, 0
        %3816 = vmatprep.subr.mxu0 0.0
        %3817 = vmatpush1.msra.mxu0 0.0
        %3818 = vmatprep.subr.mxu0 0.0
        %3819 = vmatpush1.msra.mxu0 0.0
        %3820 = vmatprep.subr.mxu0 0.0
        %3821 = vmatpush1.msra.mxu0 0.0
        %3822 = vmatprep.subr.mxu0 0.0
        %3823 = vmatpush1.msra.mxu0 0.0
        %3824 = vmatprep.subr.mxu0 0.0
        %3825 = vmatpush1.msra.mxu0 0.0
        %3826 = vmatprep.subr.mxu0 0.0
        %3827 = vmatpush1.msra.mxu0 0.0
        %3828 = vmatprep.subr.mxu0 0.0
        %3829 = vmatpush1.msra.mxu0 0.0
        %3830 = vmatprep.subr.mxu0 0.0
        %3831 = vmatpush1.msra.mxu0 0.0
        %3832 = vmatprep.subr.mxu0 0.0
        %3833 = vmatpush1.msra.mxu0 0.0
        %3834 = vmatprep.subr.mxu0 0.0
        %3835 = vmatpush1.msra.mxu0 0.0
        %3836 = vmatprep.subr.mxu0 0.0
        %3837 = vmatpush1.msra.mxu0 0.0
        %3838 = vmatprep.subr.mxu0 0.0
        %3839 = vmatpush1.msra.mxu0 0.0
        %3840 = vmatprep.subr.mxu0 0.0
        %3841 = vmatpush1.msra.mxu0 %v3757
        %3842 = vmatprep.subr.mxu0 0.0
        %3843 = vmatpush1.msra.mxu0 %v3756
        %3844 = vmatprep.subr.mxu0 0.0
        %3845 = vmatpush1.msra.mxu0 %v3755
        %3846 = vmatprep.subr.mxu0 0.0
        %3847 = vmatpush1.msra.mxu0 %v3754
        %3848 = vmatprep.subr.mxu0 0.0
        %3849 = vmatpush2.msra.mxu0 0.0
        %3850 = vmatprep.subr.mxu0 0.0
        %3851 = vmatpush2.msra.mxu0 0.0
        %3852 = vmatprep.subr.mxu0 0.0
        %3853 = vmatpush2.msra.mxu0 0.0
        %3854 = vmatprep.subr.mxu0 0.0
        %3855 = vmatpush2.msra.mxu0 0.0
        %3856 = vmatprep.subr.mxu0 0.0
        %3857 = vmatpush2.msra.mxu0 0.0
        %3858 = vmatprep.subr.mxu0 0.0
        %3859 = vmatpush2.msra.mxu0 0.0
        %3860 = vmatprep.subr.mxu0 0.0
        %3861 = vmatpush2.msra.mxu0 0.0
        %3862 = vmatprep.subr.mxu0 0.0
        %3863 = vmatpush2.msra.mxu0 0.0
        %3864 = vmatprep.subr.mxu0 0.0
        %3865 = vmatpush2.msra.mxu0 0.0
        %3866 = vmatprep.subr.mxu0 0.0
        %3867 = vmatpush2.msra.mxu0 0.0
        %3868 = vmatprep.subr.mxu0 0.0
        %3869 = vmatpush2.msra.mxu0 0.0
        %3870 = vmatprep.subr.mxu0 0.0
        %3871 = vmatpush2.msra.mxu0 0.0
        %3872 = vmatprep.subr.mxu0 0.0
        %3873 = vmatpush2.msra.mxu0 0.0
        %3874 = vmatprep.subr.mxu0 0.0
        %3875 = vmatpush2.msra.mxu0 0.0
        %3876 = vmatprep.subr.mxu0 0.0
        %3877 = vmatpush2.msra.mxu0 0.0
        %3878 = vmatprep.subr.mxu0 0.0
        %3879 = vmatpush2.msra.mxu0 0.0
        %3880 = vmatprep.mubr.f32.mxu0 0.0
        %3881 = vmatmul.mubr.f32.gmra.mxu0 %v3814
        %v3882 = vpop.f32.mrf.mxu0
        %v3883 = vadd.f32 0.0, %v3882
        %v3884 = vpop.f32.mrf.mxu0
        %3885 = vdwg.mxu0
        %v3886 = vmul.f32 %v3883, 0.17677669
        %3888 = vrot.lane.b32.xlu0 %v3883, 96
        %v3889 = vpop.permute.xlu0 %3888
        %v3891 = vsel %vm660, %v3886, 0
        %v3893 = vsel %vm660, %v3889, 0
        %3895 = vmatprep.subr.mxu0 0.0
        %3896 = vmatpush1.xpose.msra.mxu0 0.0
        %3897 = vmatprep.subr.mxu0 0.0
        %3898 = vmatpush1.xpose.msra.mxu0 0.0
        %3899 = vmatprep.subr.mxu0 0.0
        %3900 = vmatpush1.xpose.msra.mxu0 0.0
        %3901 = vmatprep.subr.mxu0 0.0
        %3902 = vmatpush1.xpose.msra.mxu0 0.0
        %3903 = vmatprep.subr.mxu0 0.0
        %3904 = vmatpush1.xpose.msra.mxu0 0.0
        %3905 = vmatprep.subr.mxu0 0.0
        %3906 = vmatpush1.xpose.msra.mxu0 0.0
        %3907 = vmatprep.subr.mxu0 0.0
        %3908 = vmatpush1.xpose.msra.mxu0 0.0
        %3909 = vmatprep.subr.mxu0 0.0
        %3910 = vmatpush1.xpose.msra.mxu0 0.0
        %3911 = vmatprep.subr.mxu0 0.0
        %3912 = vmatpush1.xpose.msra.mxu0 0.0
        %3913 = vmatprep.subr.mxu0 0.0
        %3914 = vmatpush1.xpose.msra.mxu0 0.0
        %3915 = vmatprep.subr.mxu0 0.0
        %3916 = vmatpush1.xpose.msra.mxu0 0.0
        %3917 = vmatprep.subr.mxu0 0.0
        %3918 = vmatpush1.xpose.msra.mxu0 0.0
        %3919 = vmatprep.subr.mxu0 0.0
        %3920 = vmatpush1.xpose.msra.mxu0 0.0
        %3921 = vmatprep.subr.mxu0 0.0
        %3922 = vmatpush1.xpose.msra.mxu0 0.0
        %3923 = vmatprep.subr.mxu0 0.0
        %3924 = vmatpush1.xpose.msra.mxu0 0.0
        %3925 = vmatprep.subr.mxu0 0.0
        %3926 = vmatpush1.xpose.msra.mxu0 %v3893
        %3927 = vmatprep.subr.mxu0 0.0
        %3928 = vmatpush2.xpose.msra.mxu0 0.0
        %3929 = vmatprep.subr.mxu0 0.0
        %3930 = vmatpush2.xpose.msra.mxu0 0.0
        %3931 = vmatprep.subr.mxu0 0.0
        %3932 = vmatpush2.xpose.msra.mxu0 0.0
        %3933 = vmatprep.subr.mxu0 0.0
        %3934 = vmatpush2.xpose.msra.mxu0 0.0
        %3935 = vmatprep.subr.mxu0 0.0
        %3936 = vmatpush2.xpose.msra.mxu0 0.0
        %3937 = vmatprep.subr.mxu0 0.0
        %3938 = vmatpush2.xpose.msra.mxu0 0.0
        %3939 = vmatprep.subr.mxu0 0.0
        %3940 = vmatpush2.xpose.msra.mxu0 0.0
        %3941 = vmatprep.subr.mxu0 0.0
        %3942 = vmatpush2.xpose.msra.mxu0 0.0
        %3943 = vmatprep.subr.mxu0 0.0
        %3944 = vmatpush2.xpose.msra.mxu0 0.0
        %3945 = vmatprep.subr.mxu0 0.0
        %3946 = vmatpush2.xpose.msra.mxu0 0.0
        %3947 = vmatprep.subr.mxu0 0.0
        %3948 = vmatpush2.xpose.msra.mxu0 0.0
        %3949 = vmatprep.subr.mxu0 0.0
        %3950 = vmatpush2.xpose.msra.mxu0 0.0
        %3951 = vmatprep.subr.mxu0 0.0
        %3952 = vmatpush2.xpose.msra.mxu0 0.0
        %3953 = vmatprep.subr.mxu0 0.0
        %3954 = vmatpush2.xpose.msra.mxu0 0.0
        %3955 = vmatprep.subr.mxu0 0.0
        %3956 = vmatpush2.xpose.msra.mxu0 0.0
        %3957 = vmatprep.subr.mxu0 0.0
        %3958 = vmatpush2.xpose.msra.mxu0 0.0
        %3959 = vmatprep.mubr.f32.mxu0 0.0
        %3960 = vmatmul.mubr.f32.gmra.mxu0 %v3891
        %v3961 = vpop.f32.mrf.mxu0
        %v3962 = vadd.f32 0.0, %v3961
        %v3963 = vpop.f32.mrf.mxu0
        %3964 = vdwg.mxu0
        %v3965 = vsel %vm504, -1e+30, %v3962
        %v3966 = vsel %vm660, %v3965, -inf
        %3967 = vmax.xlane.f32.xlu0 %v3966
        %v3968 = vpop.xlane.xlu0 %3967
        %v3969 = vsub.f32 %v3965, %v3968
        %v3970 = vmul.f32 %v3969, 1.442695
        %v3971 = vpow.pop %v3970
        %v3972 = vsel %vm660, %v3971, 0.0
        %3973 = vadd.xlane.f32.xlu0 %v3972
        %v3974 = vpop.xlane.xlu0 %3973
        %v3975 = vrcp.pop %v3974
        %v3976 = vmul.f32 %v3971, %v3975
        %3977 = vrot.lane.b32.xlu0 %v3883, 64
        %v3978 = vpop.permute.xlu0 %3977
        %v3981 = vsel %vm660, %v3976, 0
        %3983 = vmatprep.subr.mxu0 0.0
        %3984 = vmatpush1.msra.mxu0 0.0
        %3985 = vmatprep.subr.mxu0 0.0
        %3986 = vmatpush1.msra.mxu0 0.0
        %3987 = vmatprep.subr.mxu0 0.0
        %3988 = vmatpush1.msra.mxu0 0.0
        %3989 = vmatprep.subr.mxu0 0.0
        %3990 = vmatpush1.msra.mxu0 0.0
        %3991 = vmatprep.subr.mxu0 0.0
        %3992 = vmatpush1.msra.mxu0 0.0
        %3993 = vmatprep.subr.mxu0 0.0
        %3994 = vmatpush1.msra.mxu0 0.0
        %3995 = vmatprep.subr.mxu0 0.0
        %3996 = vmatpush1.msra.mxu0 0.0
        %3997 = vmatprep.subr.mxu0 0.0
        %3998 = vmatpush1.msra.mxu0 0.0
        %3999 = vmatprep.subr.mxu0 0.0
        %4000 = vmatpush1.msra.mxu0 0.0
        %4001 = vmatprep.subr.mxu0 0.0
        %4002 = vmatpush1.msra.mxu0 0.0
        %4003 = vmatprep.subr.mxu0 0.0
        %4004 = vmatpush1.msra.mxu0 0.0
        %4005 = vmatprep.subr.mxu0 0.0
        %4006 = vmatpush1.msra.mxu0 0.0
        %4007 = vmatprep.subr.mxu0 0.0
        %4008 = vmatpush1.msra.mxu0 0.0
        %4009 = vmatprep.subr.mxu0 0.0
        %4010 = vmatpush1.msra.mxu0 0.0
        %4011 = vmatprep.subr.mxu0 0.0
        %4012 = vmatpush1.msra.mxu0 0.0
        %4013 = vmatprep.subr.mxu0 0.0
        %4014 = vmatpush1.msra.mxu0 %v3978
        %4015 = vmatprep.subr.mxu0 0.0
        %4016 = vmatpush2.msra.mxu0 0.0
        %4017 = vmatprep.subr.mxu0 0.0
        %4018 = vmatpush2.msra.mxu0 0.0
        %4019 = vmatprep.subr.mxu0 0.0
        %4020 = vmatpush2.msra.mxu0 0.0
        %4021 = vmatprep.subr.mxu0 0.0
        %4022 = vmatpush2.msra.mxu0 0.0
        %4023 = vmatprep.subr.mxu0 0.0
        %4024 = vmatpush2.msra.mxu0 0.0
        %4025 = vmatprep.subr.mxu0 0.0
        %4026 = vmatpush2.msra.mxu0 0.0
        %4027 = vmatprep.subr.mxu0 0.0
        %4028 = vmatpush2.msra.mxu0 0.0
        %4029 = vmatprep.subr.mxu0 0.0
        %4030 = vmatpush2.msra.mxu0 0.0
        %4031 = vmatprep.subr.mxu0 0.0
        %4032 = vmatpush2.msra.mxu0 0.0
        %4033 = vmatprep.subr.mxu0 0.0
        %4034 = vmatpush2.msra.mxu0 0.0
        %4035 = vmatprep.subr.mxu0 0.0
        %4036 = vmatpush2.msra.mxu0 0.0
        %4037 = vmatprep.subr.mxu0 0.0
        %4038 = vmatpush2.msra.mxu0 0.0
        %4039 = vmatprep.subr.mxu0 0.0
        %4040 = vmatpush2.msra.mxu0 0.0
        %4041 = vmatprep.subr.mxu0 0.0
        %4042 = vmatpush2.msra.mxu0 0.0
        %4043 = vmatprep.subr.mxu0 0.0
        %4044 = vmatpush2.msra.mxu0 0.0
        %4045 = vmatprep.subr.mxu0 0.0
        %4046 = vmatpush2.msra.mxu0 0.0
        %4047 = vmatprep.mubr.f32.mxu0 0.0
        %4048 = vmatmul.mubr.f32.gmra.mxu0 %v3981
        %v4049 = vpop.f32.mrf.mxu0
        %v4050 = vadd.f32 0.0, %v4049
        %v4051 = vpop.f32.mrf.mxu0
        %4052 = vdwg.mxu0
        %4053 = vrot.lane.b32.xlu0 %v3886, 120
        %v4054 = vpop.permute.xlu0 %4053
        %4055 = vrot.lane.b32.xlu0 %v3883, 88
        %v4056 = vpop.permute.xlu0 %4055
        %v4057 = vsel %vm660, %v4054, 0
        %v4059 = vsel %vm660, %v4056, 0
        %4061 = vmatprep.subr.mxu0 0.0
        %4062 = vmatpush1.xpose.msra.mxu0 0.0
        %4063 = vmatprep.subr.mxu0 0.0
        %4064 = vmatpush1.xpose.msra.mxu0 0.0
        %4065 = vmatprep.subr.mxu0 0.0
        %4066 = vmatpush1.xpose.msra.mxu0 0.0
        %4067 = vmatprep.subr.mxu0 0.0
        %4068 = vmatpush1.xpose.msra.mxu0 0.0
        %4069 = vmatprep.subr.mxu0 0.0
        %4070 = vmatpush1.xpose.msra.mxu0 0.0
        %4071 = vmatprep.subr.mxu0 0.0
        %4072 = vmatpush1.xpose.msra.mxu0 0.0
        %4073 = vmatprep.subr.mxu0 0.0
        %4074 = vmatpush1.xpose.msra.mxu0 0.0
        %4075 = vmatprep.subr.mxu0 0.0
        %4076 = vmatpush1.xpose.msra.mxu0 0.0
        %4077 = vmatprep.subr.mxu0 0.0
        %4078 = vmatpush1.xpose.msra.mxu0 0.0
        %4079 = vmatprep.subr.mxu0 0.0
        %4080 = vmatpush1.xpose.msra.mxu0 0.0
        %4081 = vmatprep.subr.mxu0 0.0
        %4082 = vmatpush1.xpose.msra.mxu0 0.0
        %4083 = vmatprep.subr.mxu0 0.0
        %4084 = vmatpush1.xpose.msra.mxu0 0.0
        %4085 = vmatprep.subr.mxu0 0.0
        %4086 = vmatpush1.xpose.msra.mxu0 0.0
        %4087 = vmatprep.subr.mxu0 0.0
        %4088 = vmatpush1.xpose.msra.mxu0 0.0
        %4089 = vmatprep.subr.mxu0 0.0
        %4090 = vmatpush1.xpose.msra.mxu0 0.0
        %4091 = vmatprep.subr.mxu0 0.0
        %4092 = vmatpush1.xpose.msra.mxu0 %v4059
        %4093 = vmatprep.subr.mxu0 0.0
        %4094 = vmatpush2.xpose.msra.mxu0 0.0
        %4095 = vmatprep.subr.mxu0 0.0
        %4096 = vmatpush2.xpose.msra.mxu0 0.0
        %4097 = vmatprep.subr.mxu0 0.0
        %4098 = vmatpush2.xpose.msra.mxu0 0.0
        %4099 = vmatprep.subr.mxu0 0.0
        %4100 = vmatpush2.xpose.msra.mxu0 0.0
        %4101 = vmatprep.subr.mxu0 0.0
        %4102 = vmatpush2.xpose.msra.mxu0 0.0
        %4103 = vmatprep.subr.mxu0 0.0
        %4104 = vmatpush2.xpose.msra.mxu0 0.0
        %4105 = vmatprep.subr.mxu0 0.0
        %4106 = vmatpush2.xpose.msra.mxu0 0.0
        %4107 = vmatprep.subr.mxu0 0.0
        %4108 = vmatpush2.xpose.msra.mxu0 0.0
        %4109 = vmatprep.subr.mxu0 0.0
        %4110 = vmatpush2.xpose.msra.mxu0 0.0
        %4111 = vmatprep.subr.mxu0 0.0
        %4112 = vmatpush2.xpose.msra.mxu0 0.0
        %4113 = vmatprep.subr.mxu0 0.0
        %4114 = vmatpush2.xpose.msra.mxu0 0.0
        %4115 = vmatprep.subr.mxu0 0.0
        %4116 = vmatpush2.xpose.msra.mxu0 0.0
        %4117 = vmatprep.subr.mxu0 0.0
        %4118 = vmatpush2.xpose.msra.mxu0 0.0
        %4119 = vmatprep.subr.mxu0 0.0
        %4120 = vmatpush2.xpose.msra.mxu0 0.0
        %4121 = vmatprep.subr.mxu0 0.0
        %4122 = vmatpush2.xpose.msra.mxu0 0.0
        %4123 = vmatprep.subr.mxu0 0.0
        %4124 = vmatpush2.xpose.msra.mxu0 0.0
        %4125 = vmatprep.mubr.f32.mxu0 0.0
        %4126 = vmatmul.mubr.f32.gmra.mxu0 %v4057
        %v4127 = vpop.f32.mrf.mxu0
        %v4128 = vadd.f32 0.0, %v4127
        %v4129 = vpop.f32.mrf.mxu0
        %4130 = vdwg.mxu0
        %v4131 = vsel %vm504, -1e+30, %v4128
        %v4132 = vsel %vm660, %v4131, -inf
        %4133 = vmax.xlane.f32.xlu0 %v4132
        %v4134 = vpop.xlane.xlu0 %4133
        %v4135 = vsub.f32 %v4131, %v4134
        %v4136 = vmul.f32 %v4135, 1.442695
        %v4137 = vpow.pop %v4136
        %v4138 = vsel %vm660, %v4137, 0.0
        %4139 = vadd.xlane.f32.xlu0 %v4138
        %v4140 = vpop.xlane.xlu0 %4139
        %v4141 = vrcp.pop %v4140
        %v4142 = vmul.f32 %v4137, %v4141
        %4143 = vrot.lane.b32.xlu0 %v3883, 56
        %v4144 = vpop.permute.xlu0 %4143
        %v4147 = vsel %vm660, %v4142, 0
        %4149 = vmatprep.subr.mxu0 0.0
        %4150 = vmatpush1.msra.mxu0 0.0
        %4151 = vmatprep.subr.mxu0 0.0
        %4152 = vmatpush1.msra.mxu0 0.0
        %4153 = vmatprep.subr.mxu0 0.0
        %4154 = vmatpush1.msra.mxu0 0.0
        %4155 = vmatprep.subr.mxu0 0.0
        %4156 = vmatpush1.msra.mxu0 0.0
        %4157 = vmatprep.subr.mxu0 0.0
        %4158 = vmatpush1.msra.mxu0 0.0
        %4159 = vmatprep.subr.mxu0 0.0
        %4160 = vmatpush1.msra.mxu0 0.0
        %4161 = vmatprep.subr.mxu0 0.0
        %4162 = vmatpush1.msra.mxu0 0.0
        %4163 = vmatprep.subr.mxu0 0.0
        %4164 = vmatpush1.msra.mxu0 0.0
        %4165 = vmatprep.subr.mxu0 0.0
        %4166 = vmatpush1.msra.mxu0 0.0
        %4167 = vmatprep.subr.mxu0 0.0
        %4168 = vmatpush1.msra.mxu0 0.0
        %4169 = vmatprep.subr.mxu0 0.0
        %4170 = vmatpush1.msra.mxu0 0.0
        %4171 = vmatprep.subr.mxu0 0.0
        %4172 = vmatpush1.msra.mxu0 0.0
        %4173 = vmatprep.subr.mxu0 0.0
        %4174 = vmatpush1.msra.mxu0 0.0
        %4175 = vmatprep.subr.mxu0 0.0
        %4176 = vmatpush1.msra.mxu0 0.0
        %4177 = vmatprep.subr.mxu0 0.0
        %4178 = vmatpush1.msra.mxu0 0.0
        %4179 = vmatprep.subr.mxu0 0.0
        %4180 = vmatpush1.msra.mxu0 %v4144
        %4181 = vmatprep.subr.mxu0 0.0
        %4182 = vmatpush2.msra.mxu0 0.0
        %4183 = vmatprep.subr.mxu0 0.0
        %4184 = vmatpush2.msra.mxu0 0.0
        %4185 = vmatprep.subr.mxu0 0.0
        %4186 = vmatpush2.msra.mxu0 0.0
        %4187 = vmatprep.subr.mxu0 0.0
        %4188 = vmatpush2.msra.mxu0 0.0
        %4189 = vmatprep.subr.mxu0 0.0
        %4190 = vmatpush2.msra.mxu0 0.0
        %4191 = vmatprep.subr.mxu0 0.0
        %4192 = vmatpush2.msra.mxu0 0.0
        %4193 = vmatprep.subr.mxu0 0.0
        %4194 = vmatpush2.msra.mxu0 0.0
        %4195 = vmatprep.subr.mxu0 0.0
        %4196 = vmatpush2.msra.mxu0 0.0
        %4197 = vmatprep.subr.mxu0 0.0
        %4198 = vmatpush2.msra.mxu0 0.0
        %4199 = vmatprep.subr.mxu0 0.0
        %4200 = vmatpush2.msra.mxu0 0.0
        %4201 = vmatprep.subr.mxu0 0.0
        %4202 = vmatpush2.msra.mxu0 0.0
        %4203 = vmatprep.subr.mxu0 0.0
        %4204 = vmatpush2.msra.mxu0 0.0
        %4205 = vmatprep.subr.mxu0 0.0
        %4206 = vmatpush2.msra.mxu0 0.0
        %4207 = vmatprep.subr.mxu0 0.0
        %4208 = vmatpush2.msra.mxu0 0.0
        %4209 = vmatprep.subr.mxu0 0.0
        %4210 = vmatpush2.msra.mxu0 0.0
        %4211 = vmatprep.subr.mxu0 0.0
        %4212 = vmatpush2.msra.mxu0 0.0
        %4213 = vmatprep.mubr.f32.mxu0 0.0
        %4214 = vmatmul.mubr.f32.gmra.mxu0 %v4147
        %v4215 = vpop.f32.mrf.mxu0
        %v4216 = vadd.f32 0.0, %v4215
        %v4217 = vpop.f32.mrf.mxu0
        %4218 = vdwg.mxu0
        %v4220 = vsel %vm660, %v4216, 0
        %4222 = vmatprep.subr.mxu0 0.0
        %4223 = vmatpush1.msra.mxu0 0.0
        %4224 = vmatprep.subr.mxu0 0.0
        %4225 = vmatpush1.msra.mxu0 0.0
        %4226 = vmatprep.subr.mxu0 0.0
        %4227 = vmatpush1.msra.mxu0 0.0
        %4228 = vmatprep.subr.mxu0 0.0
        %4229 = vmatpush1.msra.mxu0 0.0
        %4230 = vmatprep.subr.mxu0 0.0
        %4231 = vmatpush1.msra.mxu0 0.0
        %4232 = vmatprep.subr.mxu0 0.0
        %4233 = vmatpush1.msra.mxu0 0.0
        %4234 = vmatprep.subr.mxu0 0.0
        %4235 = vmatpush1.msra.mxu0 0.0
        %4236 = vmatprep.subr.mxu0 0.0
        %4237 = vmatpush1.msra.mxu0 0.0
        %4238 = vmatprep.subr.mxu0 0.0
        %4239 = vmatpush1.msra.mxu0 0.0
        %4240 = vmatprep.subr.mxu0 0.0
        %4241 = vmatpush1.msra.mxu0 0.0
        %4242 = vmatprep.subr.mxu0 0.0
        %4243 = vmatpush1.msra.mxu0 0.0
        %4244 = vmatprep.subr.mxu0 0.0
        %4245 = vmatpush1.msra.mxu0 0.0
        %4246 = vmatprep.subr.mxu0 0.0
        %4247 = vmatpush1.msra.mxu0 0.0
        %4248 = vmatprep.subr.mxu0 0.0
        %4249 = vmatpush1.msra.mxu0 0.0
        %4250 = vmatprep.subr.mxu0 0.0
        %4251 = vmatpush1.msra.mxu0 0.0
        %4252 = vmatprep.subr.mxu0 0.0
        %4253 = vmatpush1.msra.mxu0 %v3760
        %4254 = vmatprep.subr.mxu0 0.0
        %4255 = vmatpush2.msra.mxu0 0.0
        %4256 = vmatprep.subr.mxu0 0.0
        %4257 = vmatpush2.msra.mxu0 0.0
        %4258 = vmatprep.subr.mxu0 0.0
        %4259 = vmatpush2.msra.mxu0 0.0
        %4260 = vmatprep.subr.mxu0 0.0
        %4261 = vmatpush2.msra.mxu0 0.0
        %4262 = vmatprep.subr.mxu0 0.0
        %4263 = vmatpush2.msra.mxu0 0.0
        %4264 = vmatprep.subr.mxu0 0.0
        %4265 = vmatpush2.msra.mxu0 0.0
        %4266 = vmatprep.subr.mxu0 0.0
        %4267 = vmatpush2.msra.mxu0 0.0
        %4268 = vmatprep.subr.mxu0 0.0
        %4269 = vmatpush2.msra.mxu0 0.0
        %4270 = vmatprep.subr.mxu0 0.0
        %4271 = vmatpush2.msra.mxu0 0.0
        %4272 = vmatprep.subr.mxu0 0.0
        %4273 = vmatpush2.msra.mxu0 0.0
        %4274 = vmatprep.subr.mxu0 0.0
        %4275 = vmatpush2.msra.mxu0 0.0
        %4276 = vmatprep.subr.mxu0 0.0
        %4277 = vmatpush2.msra.mxu0 0.0
        %4278 = vmatprep.subr.mxu0 0.0
        %4279 = vmatpush2.msra.mxu0 0.0
        %4280 = vmatprep.subr.mxu0 0.0
        %4281 = vmatpush2.msra.mxu0 0.0
        %4282 = vmatprep.subr.mxu0 0.0
        %4283 = vmatpush2.msra.mxu0 0.0
        %4284 = vmatprep.subr.mxu0 0.0
        %4285 = vmatpush2.msra.mxu0 0.0
        %4286 = vmatprep.mubr.f32.mxu0 0.0
        %4287 = vmatmul.mubr.f32.gmra.mxu0 %v4220
        %v4288 = vpop.f32.mrf.mxu0
        %v4289 = vadd.f32 0.0, %v4288
        %v4290 = vpop.f32.mrf.mxu0
        %4291 = vdwg.mxu0
        %v4293 = vsel %vm660, %v4050, 0
        %4295 = vmatprep.subr.mxu0 0.0
        %4296 = vmatpush1.msra.mxu0 0.0
        %4297 = vmatprep.subr.mxu0 0.0
        %4298 = vmatpush1.msra.mxu0 0.0
        %4299 = vmatprep.subr.mxu0 0.0
        %4300 = vmatpush1.msra.mxu0 0.0
        %4301 = vmatprep.subr.mxu0 0.0
        %4302 = vmatpush1.msra.mxu0 0.0
        %4303 = vmatprep.subr.mxu0 0.0
        %4304 = vmatpush1.msra.mxu0 0.0
        %4305 = vmatprep.subr.mxu0 0.0
        %4306 = vmatpush1.msra.mxu0 0.0
        %4307 = vmatprep.subr.mxu0 0.0
        %4308 = vmatpush1.msra.mxu0 0.0
        %4309 = vmatprep.subr.mxu0 0.0
        %4310 = vmatpush1.msra.mxu0 0.0
        %4311 = vmatprep.subr.mxu0 0.0
        %4312 = vmatpush1.msra.mxu0 0.0
        %4313 = vmatprep.subr.mxu0 0.0
        %4314 = vmatpush1.msra.mxu0 0.0
        %4315 = vmatprep.subr.mxu0 0.0
        %4316 = vmatpush1.msra.mxu0 0.0
        %4317 = vmatprep.subr.mxu0 0.0
        %4318 = vmatpush1.msra.mxu0 0.0
        %4319 = vmatprep.subr.mxu0 0.0
        %4320 = vmatpush1.msra.mxu0 0.0
        %4321 = vmatprep.subr.mxu0 0.0
        %4322 = vmatpush1.msra.mxu0 0.0
        %4323 = vmatprep.subr.mxu0 0.0
        %4324 = vmatpush1.msra.mxu0 0.0
        %4325 = vmatprep.subr.mxu0 0.0
        %4326 = vmatpush1.msra.mxu0 %v3759
        %4327 = vmatprep.subr.mxu0 0.0
        %4328 = vmatpush2.msra.mxu0 0.0
        %4329 = vmatprep.subr.mxu0 0.0
        %4330 = vmatpush2.msra.mxu0 0.0
        %4331 = vmatprep.subr.mxu0 0.0
        %4332 = vmatpush2.msra.mxu0 0.0
        %4333 = vmatprep.subr.mxu0 0.0
        %4334 = vmatpush2.msra.mxu0 0.0
        %4335 = vmatprep.subr.mxu0 0.0
        %4336 = vmatpush2.msra.mxu0 0.0
        %4337 = vmatprep.subr.mxu0 0.0
        %4338 = vmatpush2.msra.mxu0 0.0
        %4339 = vmatprep.subr.mxu0 0.0
        %4340 = vmatpush2.msra.mxu0 0.0
        %4341 = vmatprep.subr.mxu0 0.0
        %4342 = vmatpush2.msra.mxu0 0.0
        %4343 = vmatprep.subr.mxu0 0.0
        %4344 = vmatpush2.msra.mxu0 0.0
        %4345 = vmatprep.subr.mxu0 0.0
        %4346 = vmatpush2.msra.mxu0 0.0
        %4347 = vmatprep.subr.mxu0 0.0
        %4348 = vmatpush2.msra.mxu0 0.0
        %4349 = vmatprep.subr.mxu0 0.0
        %4350 = vmatpush2.msra.mxu0 0.0
        %4351 = vmatprep.subr.mxu0 0.0
        %4352 = vmatpush2.msra.mxu0 0.0
        %4353 = vmatprep.subr.mxu0 0.0
        %4354 = vmatpush2.msra.mxu0 0.0
        %4355 = vmatprep.subr.mxu0 0.0
        %4356 = vmatpush2.msra.mxu0 0.0
        %4357 = vmatprep.subr.mxu0 0.0
        %4358 = vmatpush2.msra.mxu0 0.0
        %4359 = vmatprep.mubr.f32.mxu0 0.0
        %4360 = vmatmul.mubr.f32.gmra.mxu0 %v4293
        %v4361 = vpop.f32.mrf.mxu0
        %v4362 = vadd.f32 %v4289, %v4361
        %v4363 = vpop.f32.mrf.mxu0
        %4364 = vdwg.mxu0
        %4365 = vrot.lane.b32.xlu0 %v3886, 112
        %v4366 = vpop.permute.xlu0 %4365
        %4367 = vrot.lane.b32.xlu0 %v3883, 80
        %v4368 = vpop.permute.xlu0 %4367
        %v4369 = vsel %vm660, %v4366, 0
        %v4371 = vsel %vm660, %v4368, 0
        %4373 = vmatprep.subr.mxu0 0.0
        %4374 = vmatpush1.xpose.msra.mxu0 0.0
        %4375 = vmatprep.subr.mxu0 0.0
        %4376 = vmatpush1.xpose.msra.mxu0 0.0
        %4377 = vmatprep.subr.mxu0 0.0
        %4378 = vmatpush1.xpose.msra.mxu0 0.0
        %4379 = vmatprep.subr.mxu0 0.0
        %4380 = vmatpush1.xpose.msra.mxu0 0.0
        %4381 = vmatprep.subr.mxu0 0.0
        %4382 = vmatpush1.xpose.msra.mxu0 0.0
        %4383 = vmatprep.subr.mxu0 0.0
        %4384 = vmatpush1.xpose.msra.mxu0 0.0
        %4385 = vmatprep.subr.mxu0 0.0
        %4386 = vmatpush1.xpose.msra.mxu0 0.0
        %4387 = vmatprep.subr.mxu0 0.0
        %4388 = vmatpush1.xpose.msra.mxu0 0.0
        %4389 = vmatprep.subr.mxu0 0.0
        %4390 = vmatpush1.xpose.msra.mxu0 0.0
        %4391 = vmatprep.subr.mxu0 0.0
        %4392 = vmatpush1.xpose.msra.mxu0 0.0
        %4393 = vmatprep.subr.mxu0 0.0
        %4394 = vmatpush1.xpose.msra.mxu0 0.0
        %4395 = vmatprep.subr.mxu0 0.0
        %4396 = vmatpush1.xpose.msra.mxu0 0.0
        %4397 = vmatprep.subr.mxu0 0.0
        %4398 = vmatpush1.xpose.msra.mxu0 0.0
        %4399 = vmatprep.subr.mxu0 0.0
        %4400 = vmatpush1.xpose.msra.mxu0 0.0
        %4401 = vmatprep.subr.mxu0 0.0
        %4402 = vmatpush1.xpose.msra.mxu0 0.0
        %4403 = vmatprep.subr.mxu0 0.0
        %4404 = vmatpush1.xpose.msra.mxu0 %v4371
        %4405 = vmatprep.subr.mxu0 0.0
        %4406 = vmatpush2.xpose.msra.mxu0 0.0
        %4407 = vmatprep.subr.mxu0 0.0
        %4408 = vmatpush2.xpose.msra.mxu0 0.0
        %4409 = vmatprep.subr.mxu0 0.0
        %4410 = vmatpush2.xpose.msra.mxu0 0.0
        %4411 = vmatprep.subr.mxu0 0.0
        %4412 = vmatpush2.xpose.msra.mxu0 0.0
        %4413 = vmatprep.subr.mxu0 0.0
        %4414 = vmatpush2.xpose.msra.mxu0 0.0
        %4415 = vmatprep.subr.mxu0 0.0
        %4416 = vmatpush2.xpose.msra.mxu0 0.0
        %4417 = vmatprep.subr.mxu0 0.0
        %4418 = vmatpush2.xpose.msra.mxu0 0.0
        %4419 = vmatprep.subr.mxu0 0.0
        %4420 = vmatpush2.xpose.msra.mxu0 0.0
        %4421 = vmatprep.subr.mxu0 0.0
        %4422 = vmatpush2.xpose.msra.mxu0 0.0
        %4423 = vmatprep.subr.mxu0 0.0
        %4424 = vmatpush2.xpose.msra.mxu0 0.0
        %4425 = vmatprep.subr.mxu0 0.0
        %4426 = vmatpush2.xpose.msra.mxu0 0.0
        %4427 = vmatprep.subr.mxu0 0.0
        %4428 = vmatpush2.xpose.msra.mxu0 0.0
        %4429 = vmatprep.subr.mxu0 0.0
        %4430 = vmatpush2.xpose.msra.mxu0 0.0
        %4431 = vmatprep.subr.mxu0 0.0
        %4432 = vmatpush2.xpose.msra.mxu0 0.0
        %4433 = vmatprep.subr.mxu0 0.0
        %4434 = vmatpush2.xpose.msra.mxu0 0.0
        %4435 = vmatprep.subr.mxu0 0.0
        %4436 = vmatpush2.xpose.msra.mxu0 0.0
        %4437 = vmatprep.mubr.f32.mxu0 0.0
        %4438 = vmatmul.mubr.f32.gmra.mxu0 %v4369
        %v4439 = vpop.f32.mrf.mxu0
        %v4440 = vadd.f32 0.0, %v4439
        %v4441 = vpop.f32.mrf.mxu0
        %4442 = vdwg.mxu0
        %v4443 = vsel %vm504, -1e+30, %v4440
        %v4444 = vsel %vm660, %v4443, -inf
        %4445 = vmax.xlane.f32.xlu0 %v4444
        %v4446 = vpop.xlane.xlu0 %4445
        %v4447 = vsub.f32 %v4443, %v4446
        %v4448 = vmul.f32 %v4447, 1.442695
        %v4449 = vpow.pop %v4448
        %v4450 = vsel %vm660, %v4449, 0.0
        %4451 = vadd.xlane.f32.xlu0 %v4450
        %v4452 = vpop.xlane.xlu0 %4451
        %v4453 = vrcp.pop %v4452
        %v4454 = vmul.f32 %v4449, %v4453
        %4455 = vrot.lane.b32.xlu0 %v3883, 48
        %v4456 = vpop.permute.xlu0 %4455
        %v4459 = vsel %vm660, %v4454, 0
        %4461 = vmatprep.subr.mxu0 0.0
        %4462 = vmatpush1.msra.mxu0 0.0
        %4463 = vmatprep.subr.mxu0 0.0
        %4464 = vmatpush1.msra.mxu0 0.0
        %4465 = vmatprep.subr.mxu0 0.0
        %4466 = vmatpush1.msra.mxu0 0.0
        %4467 = vmatprep.subr.mxu0 0.0
        %4468 = vmatpush1.msra.mxu0 0.0
        %4469 = vmatprep.subr.mxu0 0.0
        %4470 = vmatpush1.msra.mxu0 0.0
        %4471 = vmatprep.subr.mxu0 0.0
        %4472 = vmatpush1.msra.mxu0 0.0
        %4473 = vmatprep.subr.mxu0 0.0
        %4474 = vmatpush1.msra.mxu0 0.0
        %4475 = vmatprep.subr.mxu0 0.0
        %4476 = vmatpush1.msra.mxu0 0.0
        %4477 = vmatprep.subr.mxu0 0.0
        %4478 = vmatpush1.msra.mxu0 0.0
        %4479 = vmatprep.subr.mxu0 0.0
        %4480 = vmatpush1.msra.mxu0 0.0
        %4481 = vmatprep.subr.mxu0 0.0
        %4482 = vmatpush1.msra.mxu0 0.0
        %4483 = vmatprep.subr.mxu0 0.0
        %4484 = vmatpush1.msra.mxu0 0.0
        %4485 = vmatprep.subr.mxu0 0.0
        %4486 = vmatpush1.msra.mxu0 0.0
        %4487 = vmatprep.subr.mxu0 0.0
        %4488 = vmatpush1.msra.mxu0 0.0
        %4489 = vmatprep.subr.mxu0 0.0
        %4490 = vmatpush1.msra.mxu0 0.0
        %4491 = vmatprep.subr.mxu0 0.0
        %4492 = vmatpush1.msra.mxu0 %v4456
        %4493 = vmatprep.subr.mxu0 0.0
        %4494 = vmatpush2.msra.mxu0 0.0
        %4495 = vmatprep.subr.mxu0 0.0
        %4496 = vmatpush2.msra.mxu0 0.0
        %4497 = vmatprep.subr.mxu0 0.0
        %4498 = vmatpush2.msra.mxu0 0.0
        %4499 = vmatprep.subr.mxu0 0.0
        %4500 = vmatpush2.msra.mxu0 0.0
        %4501 = vmatprep.subr.mxu0 0.0
        %4502 = vmatpush2.msra.mxu0 0.0
        %4503 = vmatprep.subr.mxu0 0.0
        %4504 = vmatpush2.msra.mxu0 0.0
        %4505 = vmatprep.subr.mxu0 0.0
        %4506 = vmatpush2.msra.mxu0 0.0
        %4507 = vmatprep.subr.mxu0 0.0
        %4508 = vmatpush2.msra.mxu0 0.0
        %4509 = vmatprep.subr.mxu0 0.0
        %4510 = vmatpush2.msra.mxu0 0.0
        %4511 = vmatprep.subr.mxu0 0.0
        %4512 = vmatpush2.msra.mxu0 0.0
        %4513 = vmatprep.subr.mxu0 0.0
        %4514 = vmatpush2.msra.mxu0 0.0
        %4515 = vmatprep.subr.mxu0 0.0
        %4516 = vmatpush2.msra.mxu0 0.0
        %4517 = vmatprep.subr.mxu0 0.0
        %4518 = vmatpush2.msra.mxu0 0.0
        %4519 = vmatprep.subr.mxu0 0.0
        %4520 = vmatpush2.msra.mxu0 0.0
        %4521 = vmatprep.subr.mxu0 0.0
        %4522 = vmatpush2.msra.mxu0 0.0
        %4523 = vmatprep.subr.mxu0 0.0
        %4524 = vmatpush2.msra.mxu0 0.0
        %4525 = vmatprep.mubr.f32.mxu0 0.0
        %4526 = vmatmul.mubr.f32.gmra.mxu0 %v4459
        %v4527 = vpop.f32.mrf.mxu0
        %v4528 = vadd.f32 0.0, %v4527
        %v4529 = vpop.f32.mrf.mxu0
        %4530 = vdwg.mxu0
        %v4532 = vsel %vm660, %v4528, 0
        %4534 = vmatprep.subr.mxu0 0.0
        %4535 = vmatpush1.msra.mxu0 0.0
        %4536 = vmatprep.subr.mxu0 0.0
        %4537 = vmatpush1.msra.mxu0 0.0
        %4538 = vmatprep.subr.mxu0 0.0
        %4539 = vmatpush1.msra.mxu0 0.0
        %4540 = vmatprep.subr.mxu0 0.0
        %4541 = vmatpush1.msra.mxu0 0.0
        %4542 = vmatprep.subr.mxu0 0.0
        %4543 = vmatpush1.msra.mxu0 0.0
        %4544 = vmatprep.subr.mxu0 0.0
        %4545 = vmatpush1.msra.mxu0 0.0
        %4546 = vmatprep.subr.mxu0 0.0
        %4547 = vmatpush1.msra.mxu0 0.0
        %4548 = vmatprep.subr.mxu0 0.0
        %4549 = vmatpush1.msra.mxu0 0.0
        %4550 = vmatprep.subr.mxu0 0.0
        %4551 = vmatpush1.msra.mxu0 0.0
        %4552 = vmatprep.subr.mxu0 0.0
        %4553 = vmatpush1.msra.mxu0 0.0
        %4554 = vmatprep.subr.mxu0 0.0
        %4555 = vmatpush1.msra.mxu0 0.0
        %4556 = vmatprep.subr.mxu0 0.0
        %4557 = vmatpush1.msra.mxu0 0.0
        %4558 = vmatprep.subr.mxu0 0.0
        %4559 = vmatpush1.msra.mxu0 0.0
        %4560 = vmatprep.subr.mxu0 0.0
        %4561 = vmatpush1.msra.mxu0 0.0
        %4562 = vmatprep.subr.mxu0 0.0
        %4563 = vmatpush1.msra.mxu0 0.0
        %4564 = vmatprep.subr.mxu0 0.0
        %4565 = vmatpush1.msra.mxu0 %v3761
        %4566 = vmatprep.subr.mxu0 0.0
        %4567 = vmatpush2.msra.mxu0 0.0
        %4568 = vmatprep.subr.mxu0 0.0
        %4569 = vmatpush2.msra.mxu0 0.0
        %4570 = vmatprep.subr.mxu0 0.0
        %4571 = vmatpush2.msra.mxu0 0.0
        %4572 = vmatprep.subr.mxu0 0.0
        %4573 = vmatpush2.msra.mxu0 0.0
        %4574 = vmatprep.subr.mxu0 0.0
        %4575 = vmatpush2.msra.mxu0 0.0
        %4576 = vmatprep.subr.mxu0 0.0
        %4577 = vmatpush2.msra.mxu0 0.0
        %4578 = vmatprep.subr.mxu0 0.0
        %4579 = vmatpush2.msra.mxu0 0.0
        %4580 = vmatprep.subr.mxu0 0.0
        %4581 = vmatpush2.msra.mxu0 0.0
        %4582 = vmatprep.subr.mxu0 0.0
        %4583 = vmatpush2.msra.mxu0 0.0
        %4584 = vmatprep.subr.mxu0 0.0
        %4585 = vmatpush2.msra.mxu0 0.0
        %4586 = vmatprep.subr.mxu0 0.0
        %4587 = vmatpush2.msra.mxu0 0.0
        %4588 = vmatprep.subr.mxu0 0.0
        %4589 = vmatpush2.msra.mxu0 0.0
        %4590 = vmatprep.subr.mxu0 0.0
        %4591 = vmatpush2.msra.mxu0 0.0
        %4592 = vmatprep.subr.mxu0 0.0
        %4593 = vmatpush2.msra.mxu0 0.0
        %4594 = vmatprep.subr.mxu0 0.0
        %4595 = vmatpush2.msra.mxu0 0.0
        %4596 = vmatprep.subr.mxu0 0.0
        %4597 = vmatpush2.msra.mxu0 0.0
        %4598 = vmatprep.mubr.f32.mxu0 0.0
        %4599 = vmatmul.mubr.f32.gmra.mxu0 %v4532
        %v4600 = vpop.f32.mrf.mxu0
        %v4601 = vadd.f32 0.0, %v4600
        %v4602 = vpop.f32.mrf.mxu0
        %4603 = vdwg.mxu0
        %v4604 = vadd.f32 %v4362, %v4601
        %4605 = vrot.lane.b32.xlu0 %v3886, 104
        %v4606 = vpop.permute.xlu0 %4605
        %4607 = vrot.lane.b32.xlu0 %v3883, 72
        %v4608 = vpop.permute.xlu0 %4607
        %v4609 = vsel %vm660, %v4606, 0
        %v4611 = vsel %vm660, %v4608, 0
        %4613 = vmatprep.subr.mxu0 0.0
        %4614 = vmatpush1.xpose.msra.mxu0 0.0
        %4615 = vmatprep.subr.mxu0 0.0
        %4616 = vmatpush1.xpose.msra.mxu0 0.0
        %4617 = vmatprep.subr.mxu0 0.0
        %4618 = vmatpush1.xpose.msra.mxu0 0.0
        %4619 = vmatprep.subr.mxu0 0.0
        %4620 = vmatpush1.xpose.msra.mxu0 0.0
        %4621 = vmatprep.subr.mxu0 0.0
        %4622 = vmatpush1.xpose.msra.mxu0 0.0
        %4623 = vmatprep.subr.mxu0 0.0
        %4624 = vmatpush1.xpose.msra.mxu0 0.0
        %4625 = vmatprep.subr.mxu0 0.0
        %4626 = vmatpush1.xpose.msra.mxu0 0.0
        %4627 = vmatprep.subr.mxu0 0.0
        %4628 = vmatpush1.xpose.msra.mxu0 0.0
        %4629 = vmatprep.subr.mxu0 0.0
        %4630 = vmatpush1.xpose.msra.mxu0 0.0
        %4631 = vmatprep.subr.mxu0 0.0
        %4632 = vmatpush1.xpose.msra.mxu0 0.0
        %4633 = vmatprep.subr.mxu0 0.0
        %4634 = vmatpush1.xpose.msra.mxu0 0.0
        %4635 = vmatprep.subr.mxu0 0.0
        %4636 = vmatpush1.xpose.msra.mxu0 0.0
        %4637 = vmatprep.subr.mxu0 0.0
        %4638 = vmatpush1.xpose.msra.mxu0 0.0
        %4639 = vmatprep.subr.mxu0 0.0
        %4640 = vmatpush1.xpose.msra.mxu0 0.0
        %4641 = vmatprep.subr.mxu0 0.0
        %4642 = vmatpush1.xpose.msra.mxu0 0.0
        %4643 = vmatprep.subr.mxu0 0.0
        %4644 = vmatpush1.xpose.msra.mxu0 %v4611
        %4645 = vmatprep.subr.mxu0 0.0
        %4646 = vmatpush2.xpose.msra.mxu0 0.0
        %4647 = vmatprep.subr.mxu0 0.0
        %4648 = vmatpush2.xpose.msra.mxu0 0.0
        %4649 = vmatprep.subr.mxu0 0.0
        %4650 = vmatpush2.xpose.msra.mxu0 0.0
        %4651 = vmatprep.subr.mxu0 0.0
        %4652 = vmatpush2.xpose.msra.mxu0 0.0
        %4653 = vmatprep.subr.mxu0 0.0
        %4654 = vmatpush2.xpose.msra.mxu0 0.0
        %4655 = vmatprep.subr.mxu0 0.0
        %4656 = vmatpush2.xpose.msra.mxu0 0.0
        %4657 = vmatprep.subr.mxu0 0.0
        %4658 = vmatpush2.xpose.msra.mxu0 0.0
        %4659 = vmatprep.subr.mxu0 0.0
        %4660 = vmatpush2.xpose.msra.mxu0 0.0
        %4661 = vmatprep.subr.mxu0 0.0
        %4662 = vmatpush2.xpose.msra.mxu0 0.0
        %4663 = vmatprep.subr.mxu0 0.0
        %4664 = vmatpush2.xpose.msra.mxu0 0.0
        %4665 = vmatprep.subr.mxu0 0.0
        %4666 = vmatpush2.xpose.msra.mxu0 0.0
        %4667 = vmatprep.subr.mxu0 0.0
        %4668 = vmatpush2.xpose.msra.mxu0 0.0
        %4669 = vmatprep.subr.mxu0 0.0
        %4670 = vmatpush2.xpose.msra.mxu0 0.0
        %4671 = vmatprep.subr.mxu0 0.0
        %4672 = vmatpush2.xpose.msra.mxu0 0.0
        %4673 = vmatprep.subr.mxu0 0.0
        %4674 = vmatpush2.xpose.msra.mxu0 0.0
        %4675 = vmatprep.subr.mxu0 0.0
        %4676 = vmatpush2.xpose.msra.mxu0 0.0
        %4677 = vmatprep.mubr.f32.mxu0 0.0
        %4678 = vmatmul.mubr.f32.gmra.mxu0 %v4609
        %v4679 = vpop.f32.mrf.mxu0
        %v4680 = vadd.f32 0.0, %v4679
        %v4681 = vpop.f32.mrf.mxu0
        %4682 = vdwg.mxu0
        %v4683 = vsel %vm504, -1e+30, %v4680
        %v4684 = vsel %vm660, %v4683, -inf
        %4685 = vmax.xlane.f32.xlu0 %v4684
        %v4686 = vpop.xlane.xlu0 %4685
        %v4687 = vsub.f32 %v4683, %v4686
        %v4688 = vmul.f32 %v4687, 1.442695
        %v4689 = vpow.pop %v4688
        %v4690 = vsel %vm660, %v4689, 0.0
        %4691 = vadd.xlane.f32.xlu0 %v4690
        %v4692 = vpop.xlane.xlu0 %4691
        %v4693 = vrcp.pop %v4692
        %v4694 = vmul.f32 %v4689, %v4693
        %4695 = vrot.lane.b32.xlu0 %v3883, 40
        %v4696 = vpop.permute.xlu0 %4695
        %v4699 = vsel %vm660, %v4694, 0
        %4701 = vmatprep.subr.mxu0 0.0
        %4702 = vmatpush1.msra.mxu0 0.0
        %4703 = vmatprep.subr.mxu0 0.0
        %4704 = vmatpush1.msra.mxu0 0.0
        %4705 = vmatprep.subr.mxu0 0.0
        %4706 = vmatpush1.msra.mxu0 0.0
        %4707 = vmatprep.subr.mxu0 0.0
        %4708 = vmatpush1.msra.mxu0 0.0
        %4709 = vmatprep.subr.mxu0 0.0
        %4710 = vmatpush1.msra.mxu0 0.0
        %4711 = vmatprep.subr.mxu0 0.0
        %4712 = vmatpush1.msra.mxu0 0.0
        %4713 = vmatprep.subr.mxu0 0.0
        %4714 = vmatpush1.msra.mxu0 0.0
        %4715 = vmatprep.subr.mxu0 0.0
        %4716 = vmatpush1.msra.mxu0 0.0
        %4717 = vmatprep.subr.mxu0 0.0
        %4718 = vmatpush1.msra.mxu0 0.0
        %4719 = vmatprep.subr.mxu0 0.0
        %4720 = vmatpush1.msra.mxu0 0.0
        %4721 = vmatprep.subr.mxu0 0.0
        %4722 = vmatpush1.msra.mxu0 0.0
        %4723 = vmatprep.subr.mxu0 0.0
        %4724 = vmatpush1.msra.mxu0 0.0
        %4725 = vmatprep.subr.mxu0 0.0
        %4726 = vmatpush1.msra.mxu0 0.0
        %4727 = vmatprep.subr.mxu0 0.0
        %4728 = vmatpush1.msra.mxu0 0.0
        %4729 = vmatprep.subr.mxu0 0.0
        %4730 = vmatpush1.msra.mxu0 0.0
        %4731 = vmatprep.subr.mxu0 0.0
        %4732 = vmatpush1.msra.mxu0 %v4696
        %4733 = vmatprep.subr.mxu0 0.0
        %4734 = vmatpush2.msra.mxu0 0.0
        %4735 = vmatprep.subr.mxu0 0.0
        %4736 = vmatpush2.msra.mxu0 0.0
        %4737 = vmatprep.subr.mxu0 0.0
        %4738 = vmatpush2.msra.mxu0 0.0
        %4739 = vmatprep.subr.mxu0 0.0
        %4740 = vmatpush2.msra.mxu0 0.0
        %4741 = vmatprep.subr.mxu0 0.0
        %4742 = vmatpush2.msra.mxu0 0.0
        %4743 = vmatprep.subr.mxu0 0.0
        %4744 = vmatpush2.msra.mxu0 0.0
        %4745 = vmatprep.subr.mxu0 0.0
        %4746 = vmatpush2.msra.mxu0 0.0
        %4747 = vmatprep.subr.mxu0 0.0
        %4748 = vmatpush2.msra.mxu0 0.0
        %4749 = vmatprep.subr.mxu0 0.0
        %4750 = vmatpush2.msra.mxu0 0.0
        %4751 = vmatprep.subr.mxu0 0.0
        %4752 = vmatpush2.msra.mxu0 0.0
        %4753 = vmatprep.subr.mxu0 0.0
        %4754 = vmatpush2.msra.mxu0 0.0
        %4755 = vmatprep.subr.mxu0 0.0
        %4756 = vmatpush2.msra.mxu0 0.0
        %4757 = vmatprep.subr.mxu0 0.0
        %4758 = vmatpush2.msra.mxu0 0.0
        %4759 = vmatprep.subr.mxu0 0.0
        %4760 = vmatpush2.msra.mxu0 0.0
        %4761 = vmatprep.subr.mxu0 0.0
        %4762 = vmatpush2.msra.mxu0 0.0
        %4763 = vmatprep.subr.mxu0 0.0
        %4764 = vmatpush2.msra.mxu0 0.0
        %4765 = vmatprep.mubr.f32.mxu0 0.0
        %4766 = vmatmul.mubr.f32.gmra.mxu0 %v4699
        %v4767 = vpop.f32.mrf.mxu0
        %v4768 = vadd.f32 0.0, %v4767
        %v4769 = vpop.f32.mrf.mxu0
        %4770 = vdwg.mxu0
        %v4772 = vsel %vm660, %v4768, 0
        %4774 = vmatprep.subr.mxu0 0.0
        %4775 = vmatpush1.msra.mxu0 0.0
        %4776 = vmatprep.subr.mxu0 0.0
        %4777 = vmatpush1.msra.mxu0 0.0
        %4778 = vmatprep.subr.mxu0 0.0
        %4779 = vmatpush1.msra.mxu0 0.0
        %4780 = vmatprep.subr.mxu0 0.0
        %4781 = vmatpush1.msra.mxu0 0.0
        %4782 = vmatprep.subr.mxu0 0.0
        %4783 = vmatpush1.msra.mxu0 0.0
        %4784 = vmatprep.subr.mxu0 0.0
        %4785 = vmatpush1.msra.mxu0 0.0
        %4786 = vmatprep.subr.mxu0 0.0
        %4787 = vmatpush1.msra.mxu0 0.0
        %4788 = vmatprep.subr.mxu0 0.0
        %4789 = vmatpush1.msra.mxu0 0.0
        %4790 = vmatprep.subr.mxu0 0.0
        %4791 = vmatpush1.msra.mxu0 0.0
        %4792 = vmatprep.subr.mxu0 0.0
        %4793 = vmatpush1.msra.mxu0 0.0
        %4794 = vmatprep.subr.mxu0 0.0
        %4795 = vmatpush1.msra.mxu0 0.0
        %4796 = vmatprep.subr.mxu0 0.0
        %4797 = vmatpush1.msra.mxu0 0.0
        %4798 = vmatprep.subr.mxu0 0.0
        %4799 = vmatpush1.msra.mxu0 0.0
        %4800 = vmatprep.subr.mxu0 0.0
        %4801 = vmatpush1.msra.mxu0 0.0
        %4802 = vmatprep.subr.mxu0 0.0
        %4803 = vmatpush1.msra.mxu0 0.0
        %4804 = vmatprep.subr.mxu0 0.0
        %4805 = vmatpush1.msra.mxu0 %v3762
        %4806 = vmatprep.subr.mxu0 0.0
        %4807 = vmatpush2.msra.mxu0 0.0
        %4808 = vmatprep.subr.mxu0 0.0
        %4809 = vmatpush2.msra.mxu0 0.0
        %4810 = vmatprep.subr.mxu0 0.0
        %4811 = vmatpush2.msra.mxu0 0.0
        %4812 = vmatprep.subr.mxu0 0.0
        %4813 = vmatpush2.msra.mxu0 0.0
        %4814 = vmatprep.subr.mxu0 0.0
        %4815 = vmatpush2.msra.mxu0 0.0
        %4816 = vmatprep.subr.mxu0 0.0
        %4817 = vmatpush2.msra.mxu0 0.0
        %4818 = vmatprep.subr.mxu0 0.0
        %4819 = vmatpush2.msra.mxu0 0.0
        %4820 = vmatprep.subr.mxu0 0.0
        %4821 = vmatpush2.msra.mxu0 0.0
        %4822 = vmatprep.subr.mxu0 0.0
        %4823 = vmatpush2.msra.mxu0 0.0
        %4824 = vmatprep.subr.mxu0 0.0
        %4825 = vmatpush2.msra.mxu0 0.0
        %4826 = vmatprep.subr.mxu0 0.0
        %4827 = vmatpush2.msra.mxu0 0.0
        %4828 = vmatprep.subr.mxu0 0.0
        %4829 = vmatpush2.msra.mxu0 0.0
        %4830 = vmatprep.subr.mxu0 0.0
        %4831 = vmatpush2.msra.mxu0 0.0
        %4832 = vmatprep.subr.mxu0 0.0
        %4833 = vmatpush2.msra.mxu0 0.0
        %4834 = vmatprep.subr.mxu0 0.0
        %4835 = vmatpush2.msra.mxu0 0.0
        %4836 = vmatprep.subr.mxu0 0.0
        %4837 = vmatpush2.msra.mxu0 0.0
        %4838 = vmatprep.mubr.f32.mxu0 0.0
        %4839 = vmatmul.mubr.f32.gmra.mxu0 %v4772
        %v4840 = vpop.f32.mrf.mxu0
        %v4841 = vadd.f32 0.0, %v4840
        %v4842 = vpop.f32.mrf.mxu0
        %4843 = vdwg.mxu0
        %v4844 = vadd.f32 %v4604, %v4841
        %v4845 = vadd.f32 %v3750, %v4844
        %v4847 = vrot.slane %v4845, 7
        %4848 = vrot.lane.b32.xlu0 %v4847, 112
        %v4849 = vpop.permute.xlu0 %4848
        %v4851 = vsel %vm1622, 0.0, %v4849
        %4853 = vrot.lane.b32.xlu0 %v4851, 16
        %v4854 = vpop.permute.xlu0 %4853
        %v4856 = vsel %vm1628, %v4845, %v4854
        %v4857 = vmul.f32 %v4856, %v4856
        %v4858 = vsel %vm561, %v4857, 0.0
        %4859 = vadd.xlane.f32.xlu0 %v4858
        %v4860 = vpop.xlane.xlu0 %4859
        %v4861 = vrsqrt.pop %v4860
        %v4862 = vmul.f32 %v4860, %v4861
        %vm4863 = vcmp.eq.f32.partialorder %v4860, inf
        %v4864 = vsel %vm4863, %v4860, %v4862
        %vm4865 = vcmp.eq.f32.partialorder %v4860, 0.0
        %v4866 = vand.u32 %v4860, 2147483648
        %v4867 = vsel %vm4865, %v4866, %v4864
        %v4868 = vmax.f32 %v4867, 1e-12
        %v4869 = vrcp.pop %v4868
        %v4870 = vmul.f32 %v4856, %v4869
        %v4871 = vmul.f32 %v4870, 5.656854
        %v4873 = vlaneseq
        %v4874 = vshrl.u32 %v4873, 7
        %v4875 = vsub.s32 0, %v4874
        %v4876 = vrot.slane %v3764, %v4875
        %v4878 = vmul.f32 %v4871, %v4876
        %v4880 = vlaneseq
        %v4881 = vshrl.u32 %v4880, 7
        %v4882 = vsub.s32 0, %v4881
        %v4883 = vrot.slane %v3771, %v4882
        %v4886 = vsel %vm561, %v4878, 0
        %4888 = vmatprep.subr.mxu0 0.0
        %4889 = vmatpush1.msra.mxu0 0.0
        %4890 = vmatprep.subr.mxu0 0.0
        %4891 = vmatpush1.msra.mxu0 0.0
        %4892 = vmatprep.subr.mxu0 0.0
        %4893 = vmatpush1.msra.mxu0 0.0
        %4894 = vmatprep.subr.mxu0 0.0
        %4895 = vmatpush1.msra.mxu0 0.0
        %4896 = vmatprep.subr.mxu0 0.0
        %4897 = vmatpush1.msra.mxu0 0.0
        %4898 = vmatprep.subr.mxu0 0.0
        %4899 = vmatpush1.msra.mxu0 0.0
        %4900 = vmatprep.subr.mxu0 0.0
        %4901 = vmatpush1.msra.mxu0 0.0
        %4902 = vmatprep.subr.mxu0 0.0
        %4903 = vmatpush1.msra.mxu0 0.0
        %4904 = vmatprep.subr.mxu0 0.0
        %4905 = vmatpush1.msra.mxu0 0.0
        %4906 = vmatprep.subr.mxu0 0.0
        %4907 = vmatpush1.msra.mxu0 0.0
        %4908 = vmatprep.subr.mxu0 0.0
        %4909 = vmatpush1.msra.mxu0 0.0
        %4910 = vmatprep.subr.mxu0 0.0
        %4911 = vmatpush1.msra.mxu0 0.0
        %4912 = vmatprep.subr.mxu0 0.0
        %4913 = vmatpush1.msra.mxu0 %v3769
        %4914 = vmatprep.subr.mxu0 0.0
        %4915 = vmatpush1.msra.mxu0 %v3768
        %4916 = vmatprep.subr.mxu0 0.0
        %4917 = vmatpush1.msra.mxu0 %v3767
        %4918 = vmatprep.subr.mxu0 0.0
        %4919 = vmatpush1.msra.mxu0 %v3766
        %4920 = vmatprep.subr.mxu0 0.0
        %4921 = vmatpush2.msra.mxu0 0.0
        %4922 = vmatprep.subr.mxu0 0.0
        %4923 = vmatpush2.msra.mxu0 0.0
        %4924 = vmatprep.subr.mxu0 0.0
        %4925 = vmatpush2.msra.mxu0 0.0
        %4926 = vmatprep.subr.mxu0 0.0
        %4927 = vmatpush2.msra.mxu0 0.0
        %4928 = vmatprep.subr.mxu0 0.0
        %4929 = vmatpush2.msra.mxu0 0.0
        %4930 = vmatprep.subr.mxu0 0.0
        %4931 = vmatpush2.msra.mxu0 0.0
        %4932 = vmatprep.subr.mxu0 0.0
        %4933 = vmatpush2.msra.mxu0 0.0
        %4934 = vmatprep.subr.mxu0 0.0
        %4935 = vmatpush2.msra.mxu0 0.0
        %4936 = vmatprep.subr.mxu0 0.0
        %4937 = vmatpush2.msra.mxu0 0.0
        %4938 = vmatprep.subr.mxu0 0.0
        %4939 = vmatpush2.msra.mxu0 0.0
        %4940 = vmatprep.subr.mxu0 0.0
        %4941 = vmatpush2.msra.mxu0 0.0
        %4942 = vmatprep.subr.mxu0 0.0
        %4943 = vmatpush2.msra.mxu0 0.0
        %4944 = vmatprep.subr.mxu0 0.0
        %4945 = vmatpush2.msra.mxu0 0.0
        %4946 = vmatprep.subr.mxu0 0.0
        %4947 = vmatpush2.msra.mxu0 0.0
        %4948 = vmatprep.subr.mxu0 0.0
        %4949 = vmatpush2.msra.mxu0 0.0
        %4950 = vmatprep.subr.mxu0 0.0
        %4951 = vmatpush2.msra.mxu0 0.0
        %4952 = vmatprep.mubr.f32.mxu0 0.0
        %4953 = vmatmul.mubr.f32.gmra.mxu0 %v4886
        %v4954 = vpop.f32.mrf.mxu0
        %v4955 = vadd.f32 %v4883, %v4954
        %v4956 = vpop.f32.mrf.mxu0
        %4957 = vdwg.mxu0
        %v4958 = vmul.f32 %v4955, 0.5
        %v4959 = vmul.f32 %v4955, 0.70710677
        %vm4960 = vcmp.ge.f32.partialorder %v4959, 0.0
        %v4961 = vsel %vm4960, 1.0, -1.0
        %v4962 = vand.u32 2147483647, %v4959
        %v4963 = vmul.f32 %v4962, 0.3275911
        %v4964 = vadd.f32 %v4963, 1.0
        %v4965 = vrcp.pop %v4964
        %v4966 = vmul.f32 1.0, %v4965
        %v4967 = vmul.f32 %v4966, 1.0614054
        %v4968 = vadd.f32 %v4967, -1.4531521
        %v4969 = vmul.f32 %v4968, %v4966
        %v4970 = vadd.f32 %v4969, 1.4214138
        %v4971 = vmul.f32 %v4970, %v4966
        %v4972 = vadd.f32 %v4971, -0.28449672
        %v4973 = vmul.f32 %v4972, %v4966
        %v4974 = vadd.f32 %v4973, 0.2548296
        %v4975 = vmul.f32 %v4974, %v4966
        %v4976 = vsub.f32 0.0, %v4962
        %v4977 = vmul.f32 %v4976, %v4962
        %v4978 = vmul.f32 %v4977, 1.442695
        %v4979 = vpow.pop %v4978
        %v4980 = vmul.f32 %v4975, %v4979
        %v4981 = vsub.f32 1.0, %v4980
        %v4982 = vmul.f32 %v4961, %v4981
        %v4983 = vadd.f32 %v4982, 1.0
        %v4984 = vmul.f32 %v4958, %v4983
        %v4986 = vlaneseq
        %v4987 = vshrl.u32 %v4986, 7
        %v4988 = vsub.s32 0, %v4987
        %v4989 = vrot.slane %v3790, %v4988
        %4991 = vmatprep.subr.mxu0 0.0
        %4992 = vmatpush1.msra.mxu0 %v3788
        %4993 = vmatprep.subr.mxu0 0.0
        %4994 = vmatpush1.msra.mxu0 %v3787
        %4995 = vmatprep.subr.mxu0 0.0
        %4996 = vmatpush1.msra.mxu0 %v3786
        %4997 = vmatprep.subr.mxu0 0.0
        %4998 = vmatpush1.msra.mxu0 %v3785
        %4999 = vmatprep.subr.mxu0 0.0
        %5000 = vmatpush1.msra.mxu0 %v3784
        %5001 = vmatprep.subr.mxu0 0.0
        %5002 = vmatpush1.msra.mxu0 %v3783
        %5003 = vmatprep.subr.mxu0 0.0
        %5004 = vmatpush1.msra.mxu0 %v3782
        %5005 = vmatprep.subr.mxu0 0.0
        %5006 = vmatpush1.msra.mxu0 %v3781
        %5007 = vmatprep.subr.mxu0 0.0
        %5008 = vmatpush1.msra.mxu0 %v3780
        %5009 = vmatprep.subr.mxu0 0.0
        %5010 = vmatpush1.msra.mxu0 %v3779
        %5011 = vmatprep.subr.mxu0 0.0
        %5012 = vmatpush1.msra.mxu0 %v3778
        %5013 = vmatprep.subr.mxu0 0.0
        %5014 = vmatpush1.msra.mxu0 %v3777
        %5015 = vmatprep.subr.mxu0 0.0
        %5016 = vmatpush1.msra.mxu0 %v3776
        %5017 = vmatprep.subr.mxu0 0.0
        %5018 = vmatpush1.msra.mxu0 %v3775
        %5019 = vmatprep.subr.mxu0 0.0
        %5020 = vmatpush1.msra.mxu0 %v3774
        %5021 = vmatprep.subr.mxu0 0.0
        %5022 = vmatpush1.msra.mxu0 %v3773
        %5023 = vmatprep.subr.mxu0 0.0
        %5024 = vmatpush2.msra.mxu0 0.0
        %5025 = vmatprep.subr.mxu0 0.0
        %5026 = vmatpush2.msra.mxu0 0.0
        %5027 = vmatprep.subr.mxu0 0.0
        %5028 = vmatpush2.msra.mxu0 0.0
        %5029 = vmatprep.subr.mxu0 0.0
        %5030 = vmatpush2.msra.mxu0 0.0
        %5031 = vmatprep.subr.mxu0 0.0
        %5032 = vmatpush2.msra.mxu0 0.0
        %5033 = vmatprep.subr.mxu0 0.0
        %5034 = vmatpush2.msra.mxu0 0.0
        %5035 = vmatprep.subr.mxu0 0.0
        %5036 = vmatpush2.msra.mxu0 0.0
        %5037 = vmatprep.subr.mxu0 0.0
        %5038 = vmatpush2.msra.mxu0 0.0
        %5039 = vmatprep.subr.mxu0 0.0
        %5040 = vmatpush2.msra.mxu0 0.0
        %5041 = vmatprep.subr.mxu0 0.0
        %5042 = vmatpush2.msra.mxu0 0.0
        %5043 = vmatprep.subr.mxu0 0.0
        %5044 = vmatpush2.msra.mxu0 0.0
        %5045 = vmatprep.subr.mxu0 0.0
        %5046 = vmatpush2.msra.mxu0 0.0
        %5047 = vmatprep.subr.mxu0 0.0
        %5048 = vmatpush2.msra.mxu0 0.0
        %5049 = vmatprep.subr.mxu0 0.0
        %5050 = vmatpush2.msra.mxu0 0.0
        %5051 = vmatprep.subr.mxu0 0.0
        %5052 = vmatpush2.msra.mxu0 0.0
        %5053 = vmatprep.subr.mxu0 0.0
        %5054 = vmatpush2.msra.mxu0 0.0
        %5055 = vmatprep.mubr.f32.mxu0 0.0
        %5056 = vmatmul.mubr.f32.gmra.mxu0 %v4984
        %v5057 = vpop.f32.mrf.mxu0
        %v5058 = vadd.f32 %v4989, %v5057
        %v5059 = vpop.f32.mrf.mxu0
        %5060 = vdwg.mxu0
        %v5061 = vadd.f32 %v5058, %v4845
        %v5062 = vmul.f32 %v5061, %v5061
        %v5063 = vmul.f32 %v3611, %v3611
        %v5064 = vmul.f32 %v3612, %v3612
        %v5065 = vsel %vm561, %v5062, 0.0
        %5066 = vadd.xlane.f32.xlu0 %v5065
        %v5067 = vpop.xlane.xlu0 %5066
        %v5068 = vsel %vm561, %v5063, 0.0
        %5069 = vadd.xlane.f32.xlu0 %v5068
        %v5070 = vpop.xlane.xlu0 %5069
        %v5071 = vsel %vm561, %v5064, 0.0
        %5072 = vadd.xlane.f32.xlu0 %v5071
        %v5073 = vpop.xlane.xlu0 %5072
        %v5074 = vrsqrt.pop %v5067
        %v5075 = vmul.f32 %v5067, %v5074
        %vm5076 = vcmp.eq.f32.partialorder %v5067, inf
        %v5077 = vsel %vm5076, %v5067, %v5075
        %vm5078 = vcmp.eq.f32.partialorder %v5067, 0.0
        %v5079 = vand.u32 %v5067, 2147483648
        %v5080 = vsel %vm5078, %v5079, %v5077
        %v5081 = vrsqrt.pop %v5070
        %v5082 = vmul.f32 %v5070, %v5081
        %vm5083 = vcmp.eq.f32.partialorder %v5070, inf
        %v5084 = vsel %vm5083, %v5070, %v5082
        %vm5085 = vcmp.eq.f32.partialorder %v5070, 0.0
        %v5086 = vand.u32 %v5070, 2147483648
        %v5087 = vsel %vm5085, %v5086, %v5084
        %v5088 = vrsqrt.pop %v5073
        %v5089 = vmul.f32 %v5073, %v5088
        %vm5090 = vcmp.eq.f32.partialorder %v5073, inf
        %v5091 = vsel %vm5090, %v5073, %v5089
        %vm5092 = vcmp.eq.f32.partialorder %v5073, 0.0
        %v5093 = vand.u32 %v5073, 2147483648
        %v5094 = vsel %vm5092, %v5093, %v5091
        %v5095 = vmax.f32 %v5080, 1e-12
        %v5096 = vmax.f32 %v5087, 1e-12
        %v5097 = vmax.f32 %v5094, 1e-12
        %v5098 = vrcp.pop %v5095
        %v5099 = vmul.f32 %v5061, %v5098
        %v5100 = vrcp.pop %v5096
        %v5101 = vmul.f32 %v3611, %v5100
        %v5102 = vrcp.pop %v5097
        %v5103 = vmul.f32 %v3612, %v5102
        %v5104 = vmul.f32 %v5099, 5.656854
        %v5105 = vmul.f32 %v5101, 5.656854
        %v5106 = vmul.f32 %v5103, 5.656854
        %v5107 = vmul.f32 %v5104, %v3810
        %v5108 = vmul.f32 %v5105, %v3810
        %v5109 = vmul.f32 %v5106, %v3810
        %v5111 = vsel %vm561, %v5107, 0
        %v5114 = vsel %vm561, %v5108, 0
        %v5117 = vsel %vm561, %v5109, 0
        %5119 = vmatprep.subr.mxu0 0.0
        %5120 = vmatpush1.msra.mxu0 0.0
        %5121 = vmatprep.subr.mxu0 0.0
        %5122 = vmatpush1.msra.mxu0 0.0
        %5123 = vmatprep.subr.mxu0 0.0
        %5124 = vmatpush1.msra.mxu0 0.0
        %5125 = vmatprep.subr.mxu0 0.0
        %5126 = vmatpush1.msra.mxu0 0.0
        %5127 = vmatprep.subr.mxu0 0.0
        %5128 = vmatpush1.msra.mxu0 0.0
        %5129 = vmatprep.subr.mxu0 0.0
        %5130 = vmatpush1.msra.mxu0 0.0
        %5131 = vmatprep.subr.mxu0 0.0
        %5132 = vmatpush1.msra.mxu0 0.0
        %5133 = vmatprep.subr.mxu0 0.0
        %5134 = vmatpush1.msra.mxu0 0.0
        %5135 = vmatprep.subr.mxu0 0.0
        %5136 = vmatpush1.msra.mxu0 0.0
        %5137 = vmatprep.subr.mxu0 0.0
        %5138 = vmatpush1.msra.mxu0 0.0
        %5139 = vmatprep.subr.mxu0 0.0
        %5140 = vmatpush1.msra.mxu0 0.0
        %5141 = vmatprep.subr.mxu0 0.0
        %5142 = vmatpush1.msra.mxu0 0.0
        %5143 = vmatprep.subr.mxu0 0.0
        %5144 = vmatpush1.msra.mxu0 %v3757
        %5145 = vmatprep.subr.mxu0 0.0
        %5146 = vmatpush1.msra.mxu0 %v3756
        %5147 = vmatprep.subr.mxu0 0.0
        %5148 = vmatpush1.msra.mxu0 %v3755
        %5149 = vmatprep.subr.mxu0 0.0
        %5150 = vmatpush1.msra.mxu0 %v3754
        %5151 = vmatprep.subr.mxu0 0.0
        %5152 = vmatpush2.msra.mxu0 0.0
        %5153 = vmatprep.subr.mxu0 0.0
        %5154 = vmatpush2.msra.mxu0 0.0
        %5155 = vmatprep.subr.mxu0 0.0
        %5156 = vmatpush2.msra.mxu0 0.0
        %5157 = vmatprep.subr.mxu0 0.0
        %5158 = vmatpush2.msra.mxu0 0.0
        %5159 = vmatprep.subr.mxu0 0.0
        %5160 = vmatpush2.msra.mxu0 0.0
        %5161 = vmatprep.subr.mxu0 0.0
        %5162 = vmatpush2.msra.mxu0 0.0
        %5163 = vmatprep.subr.mxu0 0.0
        %5164 = vmatpush2.msra.mxu0 0.0
        %5165 = vmatprep.subr.mxu0 0.0
        %5166 = vmatpush2.msra.mxu0 0.0
        %5167 = vmatprep.subr.mxu0 0.0
        %5168 = vmatpush2.msra.mxu0 0.0
        %5169 = vmatprep.subr.mxu0 0.0
        %5170 = vmatpush2.msra.mxu0 0.0
        %5171 = vmatprep.subr.mxu0 0.0
        %5172 = vmatpush2.msra.mxu0 0.0
        %5173 = vmatprep.subr.mxu0 0.0
        %5174 = vmatpush2.msra.mxu0 0.0
        %5175 = vmatprep.subr.mxu0 0.0
        %5176 = vmatpush2.msra.mxu0 0.0
        %5177 = vmatprep.subr.mxu0 0.0
        %5178 = vmatpush2.msra.mxu0 0.0
        %5179 = vmatprep.subr.mxu0 0.0
        %5180 = vmatpush2.msra.mxu0 0.0
        %5181 = vmatprep.subr.mxu0 0.0
        %5182 = vmatpush2.msra.mxu0 0.0
        %5183 = vmatprep.mubr.f32.mxu0 0.0
        %5184 = vmatmul.mubr.f32.gmra.mxu0 %v5111
        %v5185 = vpop.f32.mrf.mxu0
        %v5186 = vadd.f32 0.0, %v5185
        %v5187 = vpop.f32.mrf.mxu0
        %5188 = vmatprep.mubr.f32.mxu0 0.0
        %5189 = vmatmul.mubr.f32.gmra.mxu0 %v5114
        %v5190 = vpop.f32.mrf.mxu0
        %v5191 = vadd.f32 0.0, %v5190
        %v5192 = vpop.f32.mrf.mxu0
        %5193 = vmatprep.mubr.f32.mxu0 0.0
        %5194 = vmatmul.mubr.f32.gmra.mxu0 %v5117
        %v5195 = vpop.f32.mrf.mxu0
        %v5196 = vadd.f32 0.0, %v5195
        %v5197 = vpop.f32.mrf.mxu0
        %5198 = vdwg.mxu0
        %v5199 = vmul.f32 %v5186, 0.17677669
        %v5200 = vmul.f32 %v5191, 0.17677669
        %v5201 = vmul.f32 %v5196, 0.17677669
        %5205 = vrot.lane.b32.xlu0 %v5186, 96
        %v5206 = vpop.permute.xlu0 %5205
        %5207 = vrot.lane.b32.xlu0 %v5191, 96
        %v5208 = vpop.permute.xlu0 %5207
        %5209 = vrot.lane.b32.xlu0 %v5196, 96
        %v5210 = vpop.permute.xlu0 %5209
        %v5212 = vsel %vm660, %v5199, 0
        %v5215 = vsel %vm660, %v5200, 0
        %v5218 = vsel %vm660, %v5201, 0
        %v5220 = vsel %vm660, %v5206, 0
        %v5222 = vsel %vm660, %v5208, 0
        %v5224 = vsel %vm660, %v5210, 0
        %5226 = vmatprep.subr.mxu0 0.0
        %5227 = vmatpush1.xpose.msra.mxu0 0.0
        %5228 = vmatprep.subr.mxu0 0.0
        %5229 = vmatpush1.xpose.msra.mxu0 0.0
        %5230 = vmatprep.subr.mxu0 0.0
        %5231 = vmatpush1.xpose.msra.mxu0 0.0
        %5232 = vmatprep.subr.mxu0 0.0
        %5233 = vmatpush1.xpose.msra.mxu0 0.0
        %5234 = vmatprep.subr.mxu0 0.0
        %5235 = vmatpush1.xpose.msra.mxu0 0.0
        %5236 = vmatprep.subr.mxu0 0.0
        %5237 = vmatpush1.xpose.msra.mxu0 0.0
        %5238 = vmatprep.subr.mxu0 0.0
        %5239 = vmatpush1.xpose.msra.mxu0 0.0
        %5240 = vmatprep.subr.mxu0 0.0
        %5241 = vmatpush1.xpose.msra.mxu0 0.0
        %5242 = vmatprep.subr.mxu0 0.0
        %5243 = vmatpush1.xpose.msra.mxu0 0.0
        %5244 = vmatprep.subr.mxu0 0.0
        %5245 = vmatpush1.xpose.msra.mxu0 0.0
        %5246 = vmatprep.subr.mxu0 0.0
        %5247 = vmatpush1.xpose.msra.mxu0 0.0
        %5248 = vmatprep.subr.mxu0 0.0
        %5249 = vmatpush1.xpose.msra.mxu0 0.0
        %5250 = vmatprep.subr.mxu0 0.0
        %5251 = vmatpush1.xpose.msra.mxu0 0.0
        %5252 = vmatprep.subr.mxu0 0.0
        %5253 = vmatpush1.xpose.msra.mxu0 %v5224
        %5254 = vmatprep.subr.mxu0 0.0
        %5255 = vmatpush1.xpose.msra.mxu0 %v5222
        %5256 = vmatprep.subr.mxu0 0.0
        %5257 = vmatpush1.xpose.msra.mxu0 %v5220
        %5258 = vmatprep.subr.mxu0 0.0
        %5259 = vmatpush2.xpose.msra.mxu0 0.0
        %5260 = vmatprep.subr.mxu0 0.0
        %5261 = vmatpush2.xpose.msra.mxu0 0.0
        %5262 = vmatprep.subr.mxu0 0.0
        %5263 = vmatpush2.xpose.msra.mxu0 0.0
        %5264 = vmatprep.subr.mxu0 0.0
        %5265 = vmatpush2.xpose.msra.mxu0 0.0
        %5266 = vmatprep.subr.mxu0 0.0
        %5267 = vmatpush2.xpose.msra.mxu0 0.0
        %5268 = vmatprep.subr.mxu0 0.0
        %5269 = vmatpush2.xpose.msra.mxu0 0.0
        %5270 = vmatprep.subr.mxu0 0.0
        %5271 = vmatpush2.xpose.msra.mxu0 0.0
        %5272 = vmatprep.subr.mxu0 0.0
        %5273 = vmatpush2.xpose.msra.mxu0 0.0
        %5274 = vmatprep.subr.mxu0 0.0
        %5275 = vmatpush2.xpose.msra.mxu0 0.0
        %5276 = vmatprep.subr.mxu0 0.0
        %5277 = vmatpush2.xpose.msra.mxu0 0.0
        %5278 = vmatprep.subr.mxu0 0.0
        %5279 = vmatpush2.xpose.msra.mxu0 0.0
        %5280 = vmatprep.subr.mxu0 0.0
        %5281 = vmatpush2.xpose.msra.mxu0 0.0
        %5282 = vmatprep.subr.mxu0 0.0
        %5283 = vmatpush2.xpose.msra.mxu0 0.0
        %5284 = vmatprep.subr.mxu0 0.0
        %5285 = vmatpush2.xpose.msra.mxu0 0.0
        %5286 = vmatprep.subr.mxu0 0.0
        %5287 = vmatpush2.xpose.msra.mxu0 0.0
        %5288 = vmatprep.subr.mxu0 0.0
        %5289 = vmatpush2.xpose.msra.mxu0 0.0
        %5290 = vmatprep.mubr.f32.mxu0 0.0
        %5291 = vmatmul.mubr.f32.gmra.mxu0 %v5212
        %v5292 = vpop.f32.mrf.mxu0
        %v5293 = vadd.f32 0.0, %v5292
        %v5294 = vpop.f32.mrf.mxu0
        %5295 = vmatprep.mubr.f32.mxu0 0.0
        %5296 = vmatmul.mubr.f32.gmra.mxu0 %v5215
        %v5297 = vpop.f32.mrf.mxu0
        %v5298 = vadd.f32 0.0, %v5297
        %v5299 = vpop.f32.mrf.mxu0
        %5300 = vmatprep.mubr.f32.mxu0 0.0
        %5301 = vmatmul.mubr.f32.gmra.mxu0 %v5218
        %v5302 = vpop.f32.mrf.mxu0
        %v5303 = vadd.f32 0.0, %v5302
        %v5304 = vpop.f32.mrf.mxu0
        %5305 = vdwg.mxu0
        %v5306 = vsel %vm525, -1e+30, %v5293
        %v5307 = vsel %vm526, -1e+30, %v5298
        %v5308 = vsel %vm527, -1e+30, %v5303
        %v5309 = vsel %vm2082, %v5306, -inf
        %5310 = vmax.xlane.f32.xlu0 %v5309
        %v5311 = vpop.xlane.xlu0 %5310
        %v5312 = vsel %vm2082, %v5307, -inf
        %5313 = vmax.xlane.f32.xlu0 %v5312
        %v5314 = vpop.xlane.xlu0 %5313
        %v5315 = vsel %vm2082, %v5308, -inf
        %5316 = vmax.xlane.f32.xlu0 %v5315
        %v5317 = vpop.xlane.xlu0 %5316
        %v5318 = vsub.f32 %v5306, %v5311
        %v5319 = vsub.f32 %v5307, %v5314
        %v5320 = vsub.f32 %v5308, %v5317
        %v5321 = vmul.f32 %v5318, 1.442695
        %v5322 = vpow.pop %v5321
        %v5323 = vmul.f32 %v5319, 1.442695
        %v5324 = vpow.pop %v5323
        %v5325 = vmul.f32 %v5320, 1.442695
        %v5326 = vpow.pop %v5325
        %v5327 = vsel %vm2082, %v5322, 0.0
        %5328 = vadd.xlane.f32.xlu0 %v5327
        %v5329 = vpop.xlane.xlu0 %5328
        %v5330 = vsel %vm2082, %v5324, 0.0
        %5331 = vadd.xlane.f32.xlu0 %v5330
        %v5332 = vpop.xlane.xlu0 %5331
        %v5333 = vsel %vm2082, %v5326, 0.0
        %5334 = vadd.xlane.f32.xlu0 %v5333
        %v5335 = vpop.xlane.xlu0 %5334
        %v5336 = vrcp.pop %v5329
        %v5337 = vmul.f32 %v5322, %v5336
        %v5338 = vrcp.pop %v5332
        %v5339 = vmul.f32 %v5324, %v5338
        %v5340 = vrcp.pop %v5335
        %v5341 = vmul.f32 %v5326, %v5340
        %5342 = vrot.lane.b32.xlu0 %v5186, 64
        %v5343 = vpop.permute.xlu0 %5342
        %5344 = vrot.lane.b32.xlu0 %v5191, 64
        %v5345 = vpop.permute.xlu0 %5344
        %5346 = vrot.lane.b32.xlu0 %v5196, 64
        %v5347 = vpop.permute.xlu0 %5346
        %v5352 = vsel %vm2082, %v5337, 0
        %v5355 = vsel %vm2082, %v5339, 0
        %v5358 = vsel %vm2082, %v5341, 0
        %5360 = vmatprep.subr.mxu0 0.0
        %5361 = vmatpush1.msra.mxu0 0.0
        %5362 = vmatprep.subr.mxu0 0.0
        %5363 = vmatpush1.msra.mxu0 0.0
        %5364 = vmatprep.subr.mxu0 0.0
        %5365 = vmatpush1.msra.mxu0 0.0
        %5366 = vmatprep.subr.mxu0 0.0
        %5367 = vmatpush1.msra.mxu0 0.0
        %5368 = vmatprep.subr.mxu0 0.0
        %5369 = vmatpush1.msra.mxu0 0.0
        %5370 = vmatprep.subr.mxu0 0.0
        %5371 = vmatpush1.msra.mxu0 0.0
        %5372 = vmatprep.subr.mxu0 0.0
        %5373 = vmatpush1.msra.mxu0 0.0
        %5374 = vmatprep.subr.mxu0 0.0
        %5375 = vmatpush1.msra.mxu0 0.0
        %5376 = vmatprep.subr.mxu0 0.0
        %5377 = vmatpush1.msra.mxu0 0.0
        %5378 = vmatprep.subr.mxu0 0.0
        %5379 = vmatpush1.msra.mxu0 0.0
        %5380 = vmatprep.subr.mxu0 0.0
        %5381 = vmatpush1.msra.mxu0 0.0
        %5382 = vmatprep.subr.mxu0 0.0
        %5383 = vmatpush1.msra.mxu0 0.0
        %5384 = vmatprep.subr.mxu0 0.0
        %5385 = vmatpush1.msra.mxu0 0.0
        %5386 = vmatprep.subr.mxu0 0.0
        %5387 = vmatpush1.msra.mxu0 %v5347
        %5388 = vmatprep.subr.mxu0 0.0
        %5389 = vmatpush1.msra.mxu0 %v5345
        %5390 = vmatprep.subr.mxu0 0.0
        %5391 = vmatpush1.msra.mxu0 %v5343
        %5392 = vmatprep.subr.mxu0 0.0
        %5393 = vmatpush2.msra.mxu0 0.0
        %5394 = vmatprep.subr.mxu0 0.0
        %5395 = vmatpush2.msra.mxu0 0.0
        %5396 = vmatprep.subr.mxu0 0.0
        %5397 = vmatpush2.msra.mxu0 0.0
        %5398 = vmatprep.subr.mxu0 0.0
        %5399 = vmatpush2.msra.mxu0 0.0
        %5400 = vmatprep.subr.mxu0 0.0
        %5401 = vmatpush2.msra.mxu0 0.0
        %5402 = vmatprep.subr.mxu0 0.0
        %5403 = vmatpush2.msra.mxu0 0.0
        %5404 = vmatprep.subr.mxu0 0.0
        %5405 = vmatpush2.msra.mxu0 0.0
        %5406 = vmatprep.subr.mxu0 0.0
        %5407 = vmatpush2.msra.mxu0 0.0
        %5408 = vmatprep.subr.mxu0 0.0
        %5409 = vmatpush2.msra.mxu0 0.0
        %5410 = vmatprep.subr.mxu0 0.0
        %5411 = vmatpush2.msra.mxu0 0.0
        %5412 = vmatprep.subr.mxu0 0.0
        %5413 = vmatpush2.msra.mxu0 0.0
        %5414 = vmatprep.subr.mxu0 0.0
        %5415 = vmatpush2.msra.mxu0 0.0
        %5416 = vmatprep.subr.mxu0 0.0
        %5417 = vmatpush2.msra.mxu0 0.0
        %5418 = vmatprep.subr.mxu0 0.0
        %5419 = vmatpush2.msra.mxu0 0.0
        %5420 = vmatprep.subr.mxu0 0.0
        %5421 = vmatpush2.msra.mxu0 0.0
        %5422 = vmatprep.subr.mxu0 0.0
        %5423 = vmatpush2.msra.mxu0 0.0
        %5424 = vmatprep.mubr.f32.mxu0 0.0
        %5425 = vmatmul.mubr.f32.gmra.mxu0 %v5352
        %v5426 = vpop.f32.mrf.mxu0
        %v5427 = vadd.f32 0.0, %v5426
        %v5428 = vpop.f32.mrf.mxu0
        %5429 = vmatprep.mubr.f32.mxu0 0.0
        %5430 = vmatmul.mubr.f32.gmra.mxu0 %v5355
        %v5431 = vpop.f32.mrf.mxu0
        %v5432 = vadd.f32 0.0, %v5431
        %v5433 = vpop.f32.mrf.mxu0
        %5434 = vmatprep.mubr.f32.mxu0 0.0
        %5435 = vmatmul.mubr.f32.gmra.mxu0 %v5358
        %v5436 = vpop.f32.mrf.mxu0
        %v5437 = vadd.f32 0.0, %v5436
        %v5438 = vpop.f32.mrf.mxu0
        %5439 = vdwg.mxu0
        %5440 = vrot.lane.b32.xlu0 %v5199, 120
        %v5441 = vpop.permute.xlu0 %5440
        %5442 = vrot.lane.b32.xlu0 %v5200, 120
        %v5443 = vpop.permute.xlu0 %5442
        %5444 = vrot.lane.b32.xlu0 %v5201, 120
        %v5445 = vpop.permute.xlu0 %5444
        %5446 = vrot.lane.b32.xlu0 %v5186, 88
        %v5447 = vpop.permute.xlu0 %5446
        %5448 = vrot.lane.b32.xlu0 %v5191, 88
        %v5449 = vpop.permute.xlu0 %5448
        %5450 = vrot.lane.b32.xlu0 %v5196, 88
        %v5451 = vpop.permute.xlu0 %5450
        %v5452 = vsel %vm660, %v5441, 0
        %v5454 = vsel %vm660, %v5443, 0
        %v5456 = vsel %vm660, %v5445, 0
        %v5458 = vsel %vm660, %v5447, 0
        %v5460 = vsel %vm660, %v5449, 0
        %v5462 = vsel %vm660, %v5451, 0
        %5464 = vmatprep.subr.mxu0 0.0
        %5465 = vmatpush1.xpose.msra.mxu0 0.0
        %5466 = vmatprep.subr.mxu0 0.0
        %5467 = vmatpush1.xpose.msra.mxu0 0.0
        %5468 = vmatprep.subr.mxu0 0.0
        %5469 = vmatpush1.xpose.msra.mxu0 0.0
        %5470 = vmatprep.subr.mxu0 0.0
        %5471 = vmatpush1.xpose.msra.mxu0 0.0
        %5472 = vmatprep.subr.mxu0 0.0
        %5473 = vmatpush1.xpose.msra.mxu0 0.0
        %5474 = vmatprep.subr.mxu0 0.0
        %5475 = vmatpush1.xpose.msra.mxu0 0.0
        %5476 = vmatprep.subr.mxu0 0.0
        %5477 = vmatpush1.xpose.msra.mxu0 0.0
        %5478 = vmatprep.subr.mxu0 0.0
        %5479 = vmatpush1.xpose.msra.mxu0 0.0
        %5480 = vmatprep.subr.mxu0 0.0
        %5481 = vmatpush1.xpose.msra.mxu0 0.0
        %5482 = vmatprep.subr.mxu0 0.0
        %5483 = vmatpush1.xpose.msra.mxu0 0.0
        %5484 = vmatprep.subr.mxu0 0.0
        %5485 = vmatpush1.xpose.msra.mxu0 0.0
        %5486 = vmatprep.subr.mxu0 0.0
        %5487 = vmatpush1.xpose.msra.mxu0 0.0
        %5488 = vmatprep.subr.mxu0 0.0
        %5489 = vmatpush1.xpose.msra.mxu0 0.0
        %5490 = vmatprep.subr.mxu0 0.0
        %5491 = vmatpush1.xpose.msra.mxu0 %v5462
        %5492 = vmatprep.subr.mxu0 0.0
        %5493 = vmatpush1.xpose.msra.mxu0 %v5460
        %5494 = vmatprep.subr.mxu0 0.0
        %5495 = vmatpush1.xpose.msra.mxu0 %v5458
        %5496 = vmatprep.subr.mxu0 0.0
        %5497 = vmatpush2.xpose.msra.mxu0 0.0
        %5498 = vmatprep.subr.mxu0 0.0
        %5499 = vmatpush2.xpose.msra.mxu0 0.0
        %5500 = vmatprep.subr.mxu0 0.0
        %5501 = vmatpush2.xpose.msra.mxu0 0.0
        %5502 = vmatprep.subr.mxu0 0.0
        %5503 = vmatpush2.xpose.msra.mxu0 0.0
        %5504 = vmatprep.subr.mxu0 0.0
        %5505 = vmatpush2.xpose.msra.mxu0 0.0
        %5506 = vmatprep.subr.mxu0 0.0
        %5507 = vmatpush2.xpose.msra.mxu0 0.0
        %5508 = vmatprep.subr.mxu0 0.0
        %5509 = vmatpush2.xpose.msra.mxu0 0.0
        %5510 = vmatprep.subr.mxu0 0.0
        %5511 = vmatpush2.xpose.msra.mxu0 0.0
        %5512 = vmatprep.subr.mxu0 0.0
        %5513 = vmatpush2.xpose.msra.mxu0 0.0
        %5514 = vmatprep.subr.mxu0 0.0
        %5515 = vmatpush2.xpose.msra.mxu0 0.0
        %5516 = vmatprep.subr.mxu0 0.0
        %5517 = vmatpush2.xpose.msra.mxu0 0.0
        %5518 = vmatprep.subr.mxu0 0.0
        %5519 = vmatpush2.xpose.msra.mxu0 0.0
        %5520 = vmatprep.subr.mxu0 0.0
        %5521 = vmatpush2.xpose.msra.mxu0 0.0
        %5522 = vmatprep.subr.mxu0 0.0
        %5523 = vmatpush2.xpose.msra.mxu0 0.0
        %5524 = vmatprep.subr.mxu0 0.0
        %5525 = vmatpush2.xpose.msra.mxu0 0.0
        %5526 = vmatprep.subr.mxu0 0.0
        %5527 = vmatpush2.xpose.msra.mxu0 0.0
        %5528 = vmatprep.mubr.f32.mxu0 0.0
        %5529 = vmatmul.mubr.f32.gmra.mxu0 %v5452
        %v5530 = vpop.f32.mrf.mxu0
        %v5531 = vadd.f32 0.0, %v5530
        %v5532 = vpop.f32.mrf.mxu0
        %5533 = vmatprep.mubr.f32.mxu0 0.0
        %5534 = vmatmul.mubr.f32.gmra.mxu0 %v5454
        %v5535 = vpop.f32.mrf.mxu0
        %v5536 = vadd.f32 0.0, %v5535
        %v5537 = vpop.f32.mrf.mxu0
        %5538 = vmatprep.mubr.f32.mxu0 0.0
        %5539 = vmatmul.mubr.f32.gmra.mxu0 %v5456
        %v5540 = vpop.f32.mrf.mxu0
        %v5541 = vadd.f32 0.0, %v5540
        %v5542 = vpop.f32.mrf.mxu0
        %5543 = vdwg.mxu0
        %v5544 = vsel %vm525, -1e+30, %v5531
        %v5545 = vsel %vm526, -1e+30, %v5536
        %v5546 = vsel %vm527, -1e+30, %v5541
        %v5547 = vsel %vm2082, %v5544, -inf
        %5548 = vmax.xlane.f32.xlu0 %v5547
        %v5549 = vpop.xlane.xlu0 %5548
        %v5550 = vsel %vm2082, %v5545, -inf
        %5551 = vmax.xlane.f32.xlu0 %v5550
        %v5552 = vpop.xlane.xlu0 %5551
        %v5553 = vsel %vm2082, %v5546, -inf
        %5554 = vmax.xlane.f32.xlu0 %v5553
        %v5555 = vpop.xlane.xlu0 %5554
        %v5556 = vsub.f32 %v5544, %v5549
        %v5557 = vsub.f32 %v5545, %v5552
        %v5558 = vsub.f32 %v5546, %v5555
        %v5559 = vmul.f32 %v5556, 1.442695
        %v5560 = vpow.pop %v5559
        %v5561 = vmul.f32 %v5557, 1.442695
        %v5562 = vpow.pop %v5561
        %v5563 = vmul.f32 %v5558, 1.442695
        %v5564 = vpow.pop %v5563
        %v5565 = vsel %vm2082, %v5560, 0.0
        %5566 = vadd.xlane.f32.xlu0 %v5565
        %v5567 = vpop.xlane.xlu0 %5566
        %v5568 = vsel %vm2082, %v5562, 0.0
        %5569 = vadd.xlane.f32.xlu0 %v5568
        %v5570 = vpop.xlane.xlu0 %5569
        %v5571 = vsel %vm2082, %v5564, 0.0
        %5572 = vadd.xlane.f32.xlu0 %v5571
        %v5573 = vpop.xlane.xlu0 %5572
        %v5574 = vrcp.pop %v5567
        %v5575 = vmul.f32 %v5560, %v5574
        %v5576 = vrcp.pop %v5570
        %v5577 = vmul.f32 %v5562, %v5576
        %v5578 = vrcp.pop %v5573
        %v5579 = vmul.f32 %v5564, %v5578
        %5580 = vrot.lane.b32.xlu0 %v5186, 56
        %v5581 = vpop.permute.xlu0 %5580
        %5582 = vrot.lane.b32.xlu0 %v5191, 56
        %v5583 = vpop.permute.xlu0 %5582
        %5584 = vrot.lane.b32.xlu0 %v5196, 56
        %v5585 = vpop.permute.xlu0 %5584
        %v5590 = vsel %vm2082, %v5575, 0
        %v5593 = vsel %vm2082, %v5577, 0
        %v5596 = vsel %vm2082, %v5579, 0
        %5598 = vmatprep.subr.mxu0 0.0
        %5599 = vmatpush1.msra.mxu0 0.0
        %5600 = vmatprep.subr.mxu0 0.0
        %5601 = vmatpush1.msra.mxu0 0.0
        %5602 = vmatprep.subr.mxu0 0.0
        %5603 = vmatpush1.msra.mxu0 0.0
        %5604 = vmatprep.subr.mxu0 0.0
        %5605 = vmatpush1.msra.mxu0 0.0
        %5606 = vmatprep.subr.mxu0 0.0
        %5607 = vmatpush1.msra.mxu0 0.0
        %5608 = vmatprep.subr.mxu0 0.0
        %5609 = vmatpush1.msra.mxu0 0.0
        %5610 = vmatprep.subr.mxu0 0.0
        %5611 = vmatpush1.msra.mxu0 0.0
        %5612 = vmatprep.subr.mxu0 0.0
        %5613 = vmatpush1.msra.mxu0 0.0
        %5614 = vmatprep.subr.mxu0 0.0
        %5615 = vmatpush1.msra.mxu0 0.0
        %5616 = vmatprep.subr.mxu0 0.0
        %5617 = vmatpush1.msra.mxu0 0.0
        %5618 = vmatprep.subr.mxu0 0.0
        %5619 = vmatpush1.msra.mxu0 0.0
        %5620 = vmatprep.subr.mxu0 0.0
        %5621 = vmatpush1.msra.mxu0 0.0
        %5622 = vmatprep.subr.mxu0 0.0
        %5623 = vmatpush1.msra.mxu0 0.0
        %5624 = vmatprep.subr.mxu0 0.0
        %5625 = vmatpush1.msra.mxu0 %v5585
        %5626 = vmatprep.subr.mxu0 0.0
        %5627 = vmatpush1.msra.mxu0 %v5583
        %5628 = vmatprep.subr.mxu0 0.0
        %5629 = vmatpush1.msra.mxu0 %v5581
        %5630 = vmatprep.subr.mxu0 0.0
        %5631 = vmatpush2.msra.mxu0 0.0
        %5632 = vmatprep.subr.mxu0 0.0
        %5633 = vmatpush2.msra.mxu0 0.0
        %5634 = vmatprep.subr.mxu0 0.0
        %5635 = vmatpush2.msra.mxu0 0.0
        %5636 = vmatprep.subr.mxu0 0.0
        %5637 = vmatpush2.msra.mxu0 0.0
        %5638 = vmatprep.subr.mxu0 0.0
        %5639 = vmatpush2.msra.mxu0 0.0
        %5640 = vmatprep.subr.mxu0 0.0
        %5641 = vmatpush2.msra.mxu0 0.0
        %5642 = vmatprep.subr.mxu0 0.0
        %5643 = vmatpush2.msra.mxu0 0.0
        %5644 = vmatprep.subr.mxu0 0.0
        %5645 = vmatpush2.msra.mxu0 0.0
        %5646 = vmatprep.subr.mxu0 0.0
        %5647 = vmatpush2.msra.mxu0 0.0
        %5648 = vmatprep.subr.mxu0 0.0
        %5649 = vmatpush2.msra.mxu0 0.0
        %5650 = vmatprep.subr.mxu0 0.0
        %5651 = vmatpush2.msra.mxu0 0.0
        %5652 = vmatprep.subr.mxu0 0.0
        %5653 = vmatpush2.msra.mxu0 0.0
        %5654 = vmatprep.subr.mxu0 0.0
        %5655 = vmatpush2.msra.mxu0 0.0
        %5656 = vmatprep.subr.mxu0 0.0
        %5657 = vmatpush2.msra.mxu0 0.0
        %5658 = vmatprep.subr.mxu0 0.0
        %5659 = vmatpush2.msra.mxu0 0.0
        %5660 = vmatprep.subr.mxu0 0.0
        %5661 = vmatpush2.msra.mxu0 0.0
        %5662 = vmatprep.mubr.f32.mxu0 0.0
        %5663 = vmatmul.mubr.f32.gmra.mxu0 %v5590
        %v5664 = vpop.f32.mrf.mxu0
        %v5665 = vadd.f32 0.0, %v5664
        %v5666 = vpop.f32.mrf.mxu0
        %5667 = vmatprep.mubr.f32.mxu0 0.0
        %5668 = vmatmul.mubr.f32.gmra.mxu0 %v5593
        %v5669 = vpop.f32.mrf.mxu0
        %v5670 = vadd.f32 0.0, %v5669
        %v5671 = vpop.f32.mrf.mxu0
        %5672 = vmatprep.mubr.f32.mxu0 0.0
        %5673 = vmatmul.mubr.f32.gmra.mxu0 %v5596
        %v5674 = vpop.f32.mrf.mxu0
        %v5675 = vadd.f32 0.0, %v5674
        %v5676 = vpop.f32.mrf.mxu0
        %5677 = vdwg.mxu0
        %v5679 = vsel %vm660, %v5665, 0
        %v5682 = vsel %vm660, %v5670, 0
        %v5685 = vsel %vm660, %v5675, 0
        %5687 = vmatprep.subr.mxu0 0.0
        %5688 = vmatpush1.msra.mxu0 0.0
        %5689 = vmatprep.subr.mxu0 0.0
        %5690 = vmatpush1.msra.mxu0 0.0
        %5691 = vmatprep.subr.mxu0 0.0
        %5692 = vmatpush1.msra.mxu0 0.0
        %5693 = vmatprep.subr.mxu0 0.0
        %5694 = vmatpush1.msra.mxu0 0.0
        %5695 = vmatprep.subr.mxu0 0.0
        %5696 = vmatpush1.msra.mxu0 0.0
        %5697 = vmatprep.subr.mxu0 0.0
        %5698 = vmatpush1.msra.mxu0 0.0
        %5699 = vmatprep.subr.mxu0 0.0
        %5700 = vmatpush1.msra.mxu0 0.0
        %5701 = vmatprep.subr.mxu0 0.0
        %5702 = vmatpush1.msra.mxu0 0.0
        %5703 = vmatprep.subr.mxu0 0.0
        %5704 = vmatpush1.msra.mxu0 0.0
        %5705 = vmatprep.subr.mxu0 0.0
        %5706 = vmatpush1.msra.mxu0 0.0
        %5707 = vmatprep.subr.mxu0 0.0
        %5708 = vmatpush1.msra.mxu0 0.0
        %5709 = vmatprep.subr.mxu0 0.0
        %5710 = vmatpush1.msra.mxu0 0.0
        %5711 = vmatprep.subr.mxu0 0.0
        %5712 = vmatpush1.msra.mxu0 0.0
        %5713 = vmatprep.subr.mxu0 0.0
        %5714 = vmatpush1.msra.mxu0 0.0
        %5715 = vmatprep.subr.mxu0 0.0
        %5716 = vmatpush1.msra.mxu0 0.0
        %5717 = vmatprep.subr.mxu0 0.0
        %5718 = vmatpush1.msra.mxu0 %v3760
        %5719 = vmatprep.subr.mxu0 0.0
        %5720 = vmatpush2.msra.mxu0 0.0
        %5721 = vmatprep.subr.mxu0 0.0
        %5722 = vmatpush2.msra.mxu0 0.0
        %5723 = vmatprep.subr.mxu0 0.0
        %5724 = vmatpush2.msra.mxu0 0.0
        %5725 = vmatprep.subr.mxu0 0.0
        %5726 = vmatpush2.msra.mxu0 0.0
        %5727 = vmatprep.subr.mxu0 0.0
        %5728 = vmatpush2.msra.mxu0 0.0
        %5729 = vmatprep.subr.mxu0 0.0
        %5730 = vmatpush2.msra.mxu0 0.0
        %5731 = vmatprep.subr.mxu0 0.0
        %5732 = vmatpush2.msra.mxu0 0.0
        %5733 = vmatprep.subr.mxu0 0.0
        %5734 = vmatpush2.msra.mxu0 0.0
        %5735 = vmatprep.subr.mxu0 0.0
        %5736 = vmatpush2.msra.mxu0 0.0
        %5737 = vmatprep.subr.mxu0 0.0
        %5738 = vmatpush2.msra.mxu0 0.0
        %5739 = vmatprep.subr.mxu0 0.0
        %5740 = vmatpush2.msra.mxu0 0.0
        %5741 = vmatprep.subr.mxu0 0.0
        %5742 = vmatpush2.msra.mxu0 0.0
        %5743 = vmatprep.subr.mxu0 0.0
        %5744 = vmatpush2.msra.mxu0 0.0
        %5745 = vmatprep.subr.mxu0 0.0
        %5746 = vmatpush2.msra.mxu0 0.0
        %5747 = vmatprep.subr.mxu0 0.0
        %5748 = vmatpush2.msra.mxu0 0.0
        %5749 = vmatprep.subr.mxu0 0.0
        %5750 = vmatpush2.msra.mxu0 0.0
        %5751 = vmatprep.mubr.f32.mxu0 0.0
        %5752 = vmatmul.mubr.f32.gmra.mxu0 %v5679
        %v5753 = vpop.f32.mrf.mxu0
        %v5754 = vadd.f32 0.0, %v5753
        %v5755 = vpop.f32.mrf.mxu0
        %5756 = vmatprep.mubr.f32.mxu0 0.0
        %5757 = vmatmul.mubr.f32.gmra.mxu0 %v5682
        %v5758 = vpop.f32.mrf.mxu0
        %v5759 = vadd.f32 0.0, %v5758
        %v5760 = vpop.f32.mrf.mxu0
        %5761 = vmatprep.mubr.f32.mxu0 0.0
        %5762 = vmatmul.mubr.f32.gmra.mxu0 %v5685
        %v5763 = vpop.f32.mrf.mxu0
        %v5764 = vadd.f32 0.0, %v5763
        %v5765 = vpop.f32.mrf.mxu0
        %5766 = vdwg.mxu0
        %v5768 = vsel %vm660, %v5427, 0
        %v5771 = vsel %vm660, %v5432, 0
        %v5774 = vsel %vm660, %v5437, 0
        %5776 = vmatprep.subr.mxu0 0.0
        %5777 = vmatpush1.msra.mxu0 0.0
        %5778 = vmatprep.subr.mxu0 0.0
        %5779 = vmatpush1.msra.mxu0 0.0
        %5780 = vmatprep.subr.mxu0 0.0
        %5781 = vmatpush1.msra.mxu0 0.0
        %5782 = vmatprep.subr.mxu0 0.0
        %5783 = vmatpush1.msra.mxu0 0.0
        %5784 = vmatprep.subr.mxu0 0.0
        %5785 = vmatpush1.msra.mxu0 0.0
        %5786 = vmatprep.subr.mxu0 0.0
        %5787 = vmatpush1.msra.mxu0 0.0
        %5788 = vmatprep.subr.mxu0 0.0
        %5789 = vmatpush1.msra.mxu0 0.0
        %5790 = vmatprep.subr.mxu0 0.0
        %5791 = vmatpush1.msra.mxu0 0.0
        %5792 = vmatprep.subr.mxu0 0.0
        %5793 = vmatpush1.msra.mxu0 0.0
        %5794 = vmatprep.subr.mxu0 0.0
        %5795 = vmatpush1.msra.mxu0 0.0
        %5796 = vmatprep.subr.mxu0 0.0
        %5797 = vmatpush1.msra.mxu0 0.0
        %5798 = vmatprep.subr.mxu0 0.0
        %5799 = vmatpush1.msra.mxu0 0.0
        %5800 = vmatprep.subr.mxu0 0.0
        %5801 = vmatpush1.msra.mxu0 0.0
        %5802 = vmatprep.subr.mxu0 0.0
        %5803 = vmatpush1.msra.mxu0 0.0
        %5804 = vmatprep.subr.mxu0 0.0
        %5805 = vmatpush1.msra.mxu0 0.0
        %5806 = vmatprep.subr.mxu0 0.0
        %5807 = vmatpush1.msra.mxu0 %v3759
        %5808 = vmatprep.subr.mxu0 0.0
        %5809 = vmatpush2.msra.mxu0 0.0
        %5810 = vmatprep.subr.mxu0 0.0
        %5811 = vmatpush2.msra.mxu0 0.0
        %5812 = vmatprep.subr.mxu0 0.0
        %5813 = vmatpush2.msra.mxu0 0.0
        %5814 = vmatprep.subr.mxu0 0.0
        %5815 = vmatpush2.msra.mxu0 0.0
        %5816 = vmatprep.subr.mxu0 0.0
        %5817 = vmatpush2.msra.mxu0 0.0
        %5818 = vmatprep.subr.mxu0 0.0
        %5819 = vmatpush2.msra.mxu0 0.0
        %5820 = vmatprep.subr.mxu0 0.0
        %5821 = vmatpush2.msra.mxu0 0.0
        %5822 = vmatprep.subr.mxu0 0.0
        %5823 = vmatpush2.msra.mxu0 0.0
        %5824 = vmatprep.subr.mxu0 0.0
        %5825 = vmatpush2.msra.mxu0 0.0
        %5826 = vmatprep.subr.mxu0 0.0
        %5827 = vmatpush2.msra.mxu0 0.0
        %5828 = vmatprep.subr.mxu0 0.0
        %5829 = vmatpush2.msra.mxu0 0.0
        %5830 = vmatprep.subr.mxu0 0.0
        %5831 = vmatpush2.msra.mxu0 0.0
        %5832 = vmatprep.subr.mxu0 0.0
        %5833 = vmatpush2.msra.mxu0 0.0
        %5834 = vmatprep.subr.mxu0 0.0
        %5835 = vmatpush2.msra.mxu0 0.0
        %5836 = vmatprep.subr.mxu0 0.0
        %5837 = vmatpush2.msra.mxu0 0.0
        %5838 = vmatprep.subr.mxu0 0.0
        %5839 = vmatpush2.msra.mxu0 0.0
        %5840 = vmatprep.mubr.f32.mxu0 0.0
        %5841 = vmatmul.mubr.f32.gmra.mxu0 %v5768
        %v5842 = vpop.f32.mrf.mxu0
        %v5843 = vadd.f32 %v5754, %v5842
        %v5844 = vpop.f32.mrf.mxu0
        %5845 = vmatprep.mubr.f32.mxu0 0.0
        %5846 = vmatmul.mubr.f32.gmra.mxu0 %v5771
        %v5847 = vpop.f32.mrf.mxu0
        %v5848 = vadd.f32 %v5759, %v5847
        %v5849 = vpop.f32.mrf.mxu0
        %5850 = vmatprep.mubr.f32.mxu0 0.0
        %5851 = vmatmul.mubr.f32.gmra.mxu0 %v5774
        %v5852 = vpop.f32.mrf.mxu0
        %v5853 = vadd.f32 %v5764, %v5852
        %v5854 = vpop.f32.mrf.mxu0
        %5855 = vdwg.mxu0
        %5856 = vrot.lane.b32.xlu0 %v5199, 112
        %v5857 = vpop.permute.xlu0 %5856
        %5858 = vrot.lane.b32.xlu0 %v5200, 112
        %v5859 = vpop.permute.xlu0 %5858
        %5860 = vrot.lane.b32.xlu0 %v5201, 112
        %v5861 = vpop.permute.xlu0 %5860
        %5862 = vrot.lane.b32.xlu0 %v5186, 80
        %v5863 = vpop.permute.xlu0 %5862
        %5864 = vrot.lane.b32.xlu0 %v5191, 80
        %v5865 = vpop.permute.xlu0 %5864
        %5866 = vrot.lane.b32.xlu0 %v5196, 80
        %v5867 = vpop.permute.xlu0 %5866
        %v5868 = vsel %vm660, %v5857, 0
        %v5870 = vsel %vm660, %v5859, 0
        %v5872 = vsel %vm660, %v5861, 0
        %v5874 = vsel %vm660, %v5863, 0
        %v5876 = vsel %vm660, %v5865, 0
        %v5878 = vsel %vm660, %v5867, 0
        %5880 = vmatprep.subr.mxu0 0.0
        %5881 = vmatpush1.xpose.msra.mxu0 0.0
        %5882 = vmatprep.subr.mxu0 0.0
        %5883 = vmatpush1.xpose.msra.mxu0 0.0
        %5884 = vmatprep.subr.mxu0 0.0
        %5885 = vmatpush1.xpose.msra.mxu0 0.0
        %5886 = vmatprep.subr.mxu0 0.0
        %5887 = vmatpush1.xpose.msra.mxu0 0.0
        %5888 = vmatprep.subr.mxu0 0.0
        %5889 = vmatpush1.xpose.msra.mxu0 0.0
        %5890 = vmatprep.subr.mxu0 0.0
        %5891 = vmatpush1.xpose.msra.mxu0 0.0
        %5892 = vmatprep.subr.mxu0 0.0
        %5893 = vmatpush1.xpose.msra.mxu0 0.0
        %5894 = vmatprep.subr.mxu0 0.0
        %5895 = vmatpush1.xpose.msra.mxu0 0.0
        %5896 = vmatprep.subr.mxu0 0.0
        %5897 = vmatpush1.xpose.msra.mxu0 0.0
        %5898 = vmatprep.subr.mxu0 0.0
        %5899 = vmatpush1.xpose.msra.mxu0 0.0
        %5900 = vmatprep.subr.mxu0 0.0
        %5901 = vmatpush1.xpose.msra.mxu0 0.0
        %5902 = vmatprep.subr.mxu0 0.0
        %5903 = vmatpush1.xpose.msra.mxu0 0.0
        %5904 = vmatprep.subr.mxu0 0.0
        %5905 = vmatpush1.xpose.msra.mxu0 0.0
        %5906 = vmatprep.subr.mxu0 0.0
        %5907 = vmatpush1.xpose.msra.mxu0 %v5878
        %5908 = vmatprep.subr.mxu0 0.0
        %5909 = vmatpush1.xpose.msra.mxu0 %v5876
        %5910 = vmatprep.subr.mxu0 0.0
        %5911 = vmatpush1.xpose.msra.mxu0 %v5874
        %5912 = vmatprep.subr.mxu0 0.0
        %5913 = vmatpush2.xpose.msra.mxu0 0.0
        %5914 = vmatprep.subr.mxu0 0.0
        %5915 = vmatpush2.xpose.msra.mxu0 0.0
        %5916 = vmatprep.subr.mxu0 0.0
        %5917 = vmatpush2.xpose.msra.mxu0 0.0
        %5918 = vmatprep.subr.mxu0 0.0
        %5919 = vmatpush2.xpose.msra.mxu0 0.0
        %5920 = vmatprep.subr.mxu0 0.0
        %5921 = vmatpush2.xpose.msra.mxu0 0.0
        %5922 = vmatprep.subr.mxu0 0.0
        %5923 = vmatpush2.xpose.msra.mxu0 0.0
        %5924 = vmatprep.subr.mxu0 0.0
        %5925 = vmatpush2.xpose.msra.mxu0 0.0
        %5926 = vmatprep.subr.mxu0 0.0
        %5927 = vmatpush2.xpose.msra.mxu0 0.0
        %5928 = vmatprep.subr.mxu0 0.0
        %5929 = vmatpush2.xpose.msra.mxu0 0.0
        %5930 = vmatprep.subr.mxu0 0.0
        %5931 = vmatpush2.xpose.msra.mxu0 0.0
        %5932 = vmatprep.subr.mxu0 0.0
        %5933 = vmatpush2.xpose.msra.mxu0 0.0
        %5934 = vmatprep.subr.mxu0 0.0
        %5935 = vmatpush2.xpose.msra.mxu0 0.0
        %5936 = vmatprep.subr.mxu0 0.0
        %5937 = vmatpush2.xpose.msra.mxu0 0.0
        %5938 = vmatprep.subr.mxu0 0.0
        %5939 = vmatpush2.xpose.msra.mxu0 0.0
        %5940 = vmatprep.subr.mxu0 0.0
        %5941 = vmatpush2.xpose.msra.mxu0 0.0
        %5942 = vmatprep.subr.mxu0 0.0
        %5943 = vmatpush2.xpose.msra.mxu0 0.0
        %5944 = vmatprep.mubr.f32.mxu0 0.0
        %5945 = vmatmul.mubr.f32.gmra.mxu0 %v5868
        %v5946 = vpop.f32.mrf.mxu0
        %v5947 = vadd.f32 0.0, %v5946
        %v5948 = vpop.f32.mrf.mxu0
        %5949 = vmatprep.mubr.f32.mxu0 0.0
        %5950 = vmatmul.mubr.f32.gmra.mxu0 %v5870
        %v5951 = vpop.f32.mrf.mxu0
        %v5952 = vadd.f32 0.0, %v5951
        %v5953 = vpop.f32.mrf.mxu0
        %5954 = vmatprep.mubr.f32.mxu0 0.0
        %5955 = vmatmul.mubr.f32.gmra.mxu0 %v5872
        %v5956 = vpop.f32.mrf.mxu0
        %v5957 = vadd.f32 0.0, %v5956
        %v5958 = vpop.f32.mrf.mxu0
        %5959 = vdwg.mxu0
        %v5960 = vsel %vm525, -1e+30, %v5947
        %v5961 = vsel %vm526, -1e+30, %v5952
        %v5962 = vsel %vm527, -1e+30, %v5957
        %v5963 = vsel %vm2082, %v5960, -inf
        %5964 = vmax.xlane.f32.xlu0 %v5963
        %v5965 = vpop.xlane.xlu0 %5964
        %v5966 = vsel %vm2082, %v5961, -inf
        %5967 = vmax.xlane.f32.xlu0 %v5966
        %v5968 = vpop.xlane.xlu0 %5967
        %v5969 = vsel %vm2082, %v5962, -inf
        %5970 = vmax.xlane.f32.xlu0 %v5969
        %v5971 = vpop.xlane.xlu0 %5970
        %v5972 = vsub.f32 %v5960, %v5965
        %v5973 = vsub.f32 %v5961, %v5968
        %v5974 = vsub.f32 %v5962, %v5971
        %v5975 = vmul.f32 %v5972, 1.442695
        %v5976 = vpow.pop %v5975
        %v5977 = vmul.f32 %v5973, 1.442695
        %v5978 = vpow.pop %v5977
        %v5979 = vmul.f32 %v5974, 1.442695
        %v5980 = vpow.pop %v5979
        %v5981 = vsel %vm2082, %v5976, 0.0
        %5982 = vadd.xlane.f32.xlu0 %v5981
        %v5983 = vpop.xlane.xlu0 %5982
        %v5984 = vsel %vm2082, %v5978, 0.0
        %5985 = vadd.xlane.f32.xlu0 %v5984
        %v5986 = vpop.xlane.xlu0 %5985
        %v5987 = vsel %vm2082, %v5980, 0.0
        %5988 = vadd.xlane.f32.xlu0 %v5987
        %v5989 = vpop.xlane.xlu0 %5988
        %v5990 = vrcp.pop %v5983
        %v5991 = vmul.f32 %v5976, %v5990
        %v5992 = vrcp.pop %v5986
        %v5993 = vmul.f32 %v5978, %v5992
        %v5994 = vrcp.pop %v5989
        %v5995 = vmul.f32 %v5980, %v5994
        %5996 = vrot.lane.b32.xlu0 %v5186, 48
        %v5997 = vpop.permute.xlu0 %5996
        %5998 = vrot.lane.b32.xlu0 %v5191, 48
        %v5999 = vpop.permute.xlu0 %5998
        %6000 = vrot.lane.b32.xlu0 %v5196, 48
        %v6001 = vpop.permute.xlu0 %6000
        %v6006 = vsel %vm2082, %v5991, 0
        %v6009 = vsel %vm2082, %v5993, 0
        %v6012 = vsel %vm2082, %v5995, 0
        %6014 = vmatprep.subr.mxu0 0.0
        %6015 = vmatpush1.msra.mxu0 0.0
        %6016 = vmatprep.subr.mxu0 0.0
        %6017 = vmatpush1.msra.mxu0 0.0
        %6018 = vmatprep.subr.mxu0 0.0
        %6019 = vmatpush1.msra.mxu0 0.0
        %6020 = vmatprep.subr.mxu0 0.0
        %6021 = vmatpush1.msra.mxu0 0.0
        %6022 = vmatprep.subr.mxu0 0.0
        %6023 = vmatpush1.msra.mxu0 0.0
        %6024 = vmatprep.subr.mxu0 0.0
        %6025 = vmatpush1.msra.mxu0 0.0
        %6026 = vmatprep.subr.mxu0 0.0
        %6027 = vmatpush1.msra.mxu0 0.0
        %6028 = vmatprep.subr.mxu0 0.0
        %6029 = vmatpush1.msra.mxu0 0.0
        %6030 = vmatprep.subr.mxu0 0.0
        %6031 = vmatpush1.msra.mxu0 0.0
        %6032 = vmatprep.subr.mxu0 0.0
        %6033 = vmatpush1.msra.mxu0 0.0
        %6034 = vmatprep.subr.mxu0 0.0
        %6035 = vmatpush1.msra.mxu0 0.0
        %6036 = vmatprep.subr.mxu0 0.0
        %6037 = vmatpush1.msra.mxu0 0.0
        %6038 = vmatprep.subr.mxu0 0.0
        %6039 = vmatpush1.msra.mxu0 0.0
        %6040 = vmatprep.subr.mxu0 0.0
        %6041 = vmatpush1.msra.mxu0 %v6001
        %6042 = vmatprep.subr.mxu0 0.0
        %6043 = vmatpush1.msra.mxu0 %v5999
        %6044 = vmatprep.subr.mxu0 0.0
        %6045 = vmatpush1.msra.mxu0 %v5997
        %6046 = vmatprep.subr.mxu0 0.0
        %6047 = vmatpush2.msra.mxu0 0.0
        %6048 = vmatprep.subr.mxu0 0.0
        %6049 = vmatpush2.msra.mxu0 0.0
        %6050 = vmatprep.subr.mxu0 0.0
        %6051 = vmatpush2.msra.mxu0 0.0
        %6052 = vmatprep.subr.mxu0 0.0
        %6053 = vmatpush2.msra.mxu0 0.0
        %6054 = vmatprep.subr.mxu0 0.0
        %6055 = vmatpush2.msra.mxu0 0.0
        %6056 = vmatprep.subr.mxu0 0.0
        %6057 = vmatpush2.msra.mxu0 0.0
        %6058 = vmatprep.subr.mxu0 0.0
        %6059 = vmatpush2.msra.mxu0 0.0
        %6060 = vmatprep.subr.mxu0 0.0
        %6061 = vmatpush2.msra.mxu0 0.0
        %6062 = vmatprep.subr.mxu0 0.0
        %6063 = vmatpush2.msra.mxu0 0.0
        %6064 = vmatprep.subr.mxu0 0.0
        %6065 = vmatpush2.msra.mxu0 0.0
        %6066 = vmatprep.subr.mxu0 0.0
        %6067 = vmatpush2.msra.mxu0 0.0
        %6068 = vmatprep.subr.mxu0 0.0
        %6069 = vmatpush2.msra.mxu0 0.0
        %6070 = vmatprep.subr.mxu0 0.0
        %6071 = vmatpush2.msra.mxu0 0.0
        %6072 = vmatprep.subr.mxu0 0.0
        %6073 = vmatpush2.msra.mxu0 0.0
        %6074 = vmatprep.subr.mxu0 0.0
        %6075 = vmatpush2.msra.mxu0 0.0
        %6076 = vmatprep.subr.mxu0 0.0
        %6077 = vmatpush2.msra.mxu0 0.0
        %6078 = vmatprep.mubr.f32.mxu0 0.0
        %6079 = vmatmul.mubr.f32.gmra.mxu0 %v6006
        %v6080 = vpop.f32.mrf.mxu0
        %v6081 = vadd.f32 0.0, %v6080
        %v6082 = vpop.f32.mrf.mxu0
        %6083 = vmatprep.mubr.f32.mxu0 0.0
        %6084 = vmatmul.mubr.f32.gmra.mxu0 %v6009
        %v6085 = vpop.f32.mrf.mxu0
        %v6086 = vadd.f32 0.0, %v6085
        %v6087 = vpop.f32.mrf.mxu0
        %6088 = vmatprep.mubr.f32.mxu0 0.0
        %6089 = vmatmul.mubr.f32.gmra.mxu0 %v6012
        %v6090 = vpop.f32.mrf.mxu0
        %v6091 = vadd.f32 0.0, %v6090
        %v6092 = vpop.f32.mrf.mxu0
        %6093 = vdwg.mxu0
        %v6095 = vsel %vm660, %v6081, 0
        %v6098 = vsel %vm660, %v6086, 0
        %v6101 = vsel %vm660, %v6091, 0
        %6103 = vmatprep.subr.mxu0 0.0
        %6104 = vmatpush1.msra.mxu0 0.0
        %6105 = vmatprep.subr.mxu0 0.0
        %6106 = vmatpush1.msra.mxu0 0.0
        %6107 = vmatprep.subr.mxu0 0.0
        %6108 = vmatpush1.msra.mxu0 0.0
        %6109 = vmatprep.subr.mxu0 0.0
        %6110 = vmatpush1.msra.mxu0 0.0
        %6111 = vmatprep.subr.mxu0 0.0
        %6112 = vmatpush1.msra.mxu0 0.0
        %6113 = vmatprep.subr.mxu0 0.0
        %6114 = vmatpush1.msra.mxu0 0.0
        %6115 = vmatprep.subr.mxu0 0.0
        %6116 = vmatpush1.msra.mxu0 0.0
        %6117 = vmatprep.subr.mxu0 0.0
        %6118 = vmatpush1.msra.mxu0 0.0
        %6119 = vmatprep.subr.mxu0 0.0
        %6120 = vmatpush1.msra.mxu0 0.0
        %6121 = vmatprep.subr.mxu0 0.0
        %6122 = vmatpush1.msra.mxu0 0.0
        %6123 = vmatprep.subr.mxu0 0.0
        %6124 = vmatpush1.msra.mxu0 0.0
        %6125 = vmatprep.subr.mxu0 0.0
        %6126 = vmatpush1.msra.mxu0 0.0
        %6127 = vmatprep.subr.mxu0 0.0
        %6128 = vmatpush1.msra.mxu0 0.0
        %6129 = vmatprep.subr.mxu0 0.0
        %6130 = vmatpush1.msra.mxu0 0.0
        %6131 = vmatprep.subr.mxu0 0.0
        %6132 = vmatpush1.msra.mxu0 0.0
        %6133 = vmatprep.subr.mxu0 0.0
        %6134 = vmatpush1.msra.mxu0 %v3761
        %6135 = vmatprep.subr.mxu0 0.0
        %6136 = vmatpush2.msra.mxu0 0.0
        %6137 = vmatprep.subr.mxu0 0.0
        %6138 = vmatpush2.msra.mxu0 0.0
        %6139 = vmatprep.subr.mxu0 0.0
        %6140 = vmatpush2.msra.mxu0 0.0
        %6141 = vmatprep.subr.mxu0 0.0
        %6142 = vmatpush2.msra.mxu0 0.0
        %6143 = vmatprep.subr.mxu0 0.0
        %6144 = vmatpush2.msra.mxu0 0.0
        %6145 = vmatprep.subr.mxu0 0.0
        %6146 = vmatpush2.msra.mxu0 0.0
        %6147 = vmatprep.subr.mxu0 0.0
        %6148 = vmatpush2.msra.mxu0 0.0
        %6149 = vmatprep.subr.mxu0 0.0
        %6150 = vmatpush2.msra.mxu0 0.0
        %6151 = vmatprep.subr.mxu0 0.0
        %6152 = vmatpush2.msra.mxu0 0.0
        %6153 = vmatprep.subr.mxu0 0.0
        %6154 = vmatpush2.msra.mxu0 0.0
        %6155 = vmatprep.subr.mxu0 0.0
        %6156 = vmatpush2.msra.mxu0 0.0
        %6157 = vmatprep.subr.mxu0 0.0
        %6158 = vmatpush2.msra.mxu0 0.0
        %6159 = vmatprep.subr.mxu0 0.0
        %6160 = vmatpush2.msra.mxu0 0.0
        %6161 = vmatprep.subr.mxu0 0.0
        %6162 = vmatpush2.msra.mxu0 0.0
        %6163 = vmatprep.subr.mxu0 0.0
        %6164 = vmatpush2.msra.mxu0 0.0
        %6165 = vmatprep.subr.mxu0 0.0
        %6166 = vmatpush2.msra.mxu0 0.0
        %6167 = vmatprep.mubr.f32.mxu0 0.0
        %6168 = vmatmul.mubr.f32.gmra.mxu0 %v6095
        %v6169 = vpop.f32.mrf.mxu0
        %v6170 = vadd.f32 0.0, %v6169
        %v6171 = vpop.f32.mrf.mxu0
        %6172 = vmatprep.mubr.f32.mxu0 0.0
        %6173 = vmatmul.mubr.f32.gmra.mxu0 %v6098
        %v6174 = vpop.f32.mrf.mxu0
        %v6175 = vadd.f32 0.0, %v6174
        %v6176 = vpop.f32.mrf.mxu0
        %6177 = vmatprep.mubr.f32.mxu0 0.0
        %6178 = vmatmul.mubr.f32.gmra.mxu0 %v6101
        %v6179 = vpop.f32.mrf.mxu0
        %v6180 = vadd.f32 0.0, %v6179
        %v6181 = vpop.f32.mrf.mxu0
        %6182 = vdwg.mxu0
        %v6183 = vadd.f32 %v5843, %v6170
        %v6184 = vadd.f32 %v5848, %v6175
        %v6185 = vadd.f32 %v5853, %v6180
        %6186 = vrot.lane.b32.xlu0 %v5199, 104
        %v6187 = vpop.permute.xlu0 %6186
        %6188 = vrot.lane.b32.xlu0 %v5200, 104
        %v6189 = vpop.permute.xlu0 %6188
        %6190 = vrot.lane.b32.xlu0 %v5201, 104
        %v6191 = vpop.permute.xlu0 %6190
        %6192 = vrot.lane.b32.xlu0 %v5186, 72
        %v6193 = vpop.permute.xlu0 %6192
        %6194 = vrot.lane.b32.xlu0 %v5191, 72
        %v6195 = vpop.permute.xlu0 %6194
        %6196 = vrot.lane.b32.xlu0 %v5196, 72
        %v6197 = vpop.permute.xlu0 %6196
        %v6198 = vsel %vm660, %v6187, 0
        %v6200 = vsel %vm660, %v6189, 0
        %v6202 = vsel %vm660, %v6191, 0
        %v6204 = vsel %vm660, %v6193, 0
        %v6206 = vsel %vm660, %v6195, 0
        %v6208 = vsel %vm660, %v6197, 0
        %6210 = vmatprep.subr.mxu0 0.0
        %6211 = vmatpush1.xpose.msra.mxu0 0.0
        %6212 = vmatprep.subr.mxu0 0.0
        %6213 = vmatpush1.xpose.msra.mxu0 0.0
        %6214 = vmatprep.subr.mxu0 0.0
        %6215 = vmatpush1.xpose.msra.mxu0 0.0
        %6216 = vmatprep.subr.mxu0 0.0
        %6217 = vmatpush1.xpose.msra.mxu0 0.0
        %6218 = vmatprep.subr.mxu0 0.0
        %6219 = vmatpush1.xpose.msra.mxu0 0.0
        %6220 = vmatprep.subr.mxu0 0.0
        %6221 = vmatpush1.xpose.msra.mxu0 0.0
        %6222 = vmatprep.subr.mxu0 0.0
        %6223 = vmatpush1.xpose.msra.mxu0 0.0
        %6224 = vmatprep.subr.mxu0 0.0
        %6225 = vmatpush1.xpose.msra.mxu0 0.0
        %6226 = vmatprep.subr.mxu0 0.0
        %6227 = vmatpush1.xpose.msra.mxu0 0.0
        %6228 = vmatprep.subr.mxu0 0.0
        %6229 = vmatpush1.xpose.msra.mxu0 0.0
        %6230 = vmatprep.subr.mxu0 0.0
        %6231 = vmatpush1.xpose.msra.mxu0 0.0
        %6232 = vmatprep.subr.mxu0 0.0
        %6233 = vmatpush1.xpose.msra.mxu0 0.0
        %6234 = vmatprep.subr.mxu0 0.0
        %6235 = vmatpush1.xpose.msra.mxu0 0.0
        %6236 = vmatprep.subr.mxu0 0.0
        %6237 = vmatpush1.xpose.msra.mxu0 %v6208
        %6238 = vmatprep.subr.mxu0 0.0
        %6239 = vmatpush1.xpose.msra.mxu0 %v6206
        %6240 = vmatprep.subr.mxu0 0.0
        %6241 = vmatpush1.xpose.msra.mxu0 %v6204
        %6242 = vmatprep.subr.mxu0 0.0
        %6243 = vmatpush2.xpose.msra.mxu0 0.0
        %6244 = vmatprep.subr.mxu0 0.0
        %6245 = vmatpush2.xpose.msra.mxu0 0.0
        %6246 = vmatprep.subr.mxu0 0.0
        %6247 = vmatpush2.xpose.msra.mxu0 0.0
        %6248 = vmatprep.subr.mxu0 0.0
        %6249 = vmatpush2.xpose.msra.mxu0 0.0
        %6250 = vmatprep.subr.mxu0 0.0
        %6251 = vmatpush2.xpose.msra.mxu0 0.0
        %6252 = vmatprep.subr.mxu0 0.0
        %6253 = vmatpush2.xpose.msra.mxu0 0.0
        %6254 = vmatprep.subr.mxu0 0.0
        %6255 = vmatpush2.xpose.msra.mxu0 0.0
        %6256 = vmatprep.subr.mxu0 0.0
        %6257 = vmatpush2.xpose.msra.mxu0 0.0
        %6258 = vmatprep.subr.mxu0 0.0
        %6259 = vmatpush2.xpose.msra.mxu0 0.0
        %6260 = vmatprep.subr.mxu0 0.0
        %6261 = vmatpush2.xpose.msra.mxu0 0.0
        %6262 = vmatprep.subr.mxu0 0.0
        %6263 = vmatpush2.xpose.msra.mxu0 0.0
        %6264 = vmatprep.subr.mxu0 0.0
        %6265 = vmatpush2.xpose.msra.mxu0 0.0
        %6266 = vmatprep.subr.mxu0 0.0
        %6267 = vmatpush2.xpose.msra.mxu0 0.0
        %6268 = vmatprep.subr.mxu0 0.0
        %6269 = vmatpush2.xpose.msra.mxu0 0.0
        %6270 = vmatprep.subr.mxu0 0.0
        %6271 = vmatpush2.xpose.msra.mxu0 0.0
        %6272 = vmatprep.subr.mxu0 0.0
        %6273 = vmatpush2.xpose.msra.mxu0 0.0
        %6274 = vmatprep.mubr.f32.mxu0 0.0
        %6275 = vmatmul.mubr.f32.gmra.mxu0 %v6198
        %v6276 = vpop.f32.mrf.mxu0
        %v6277 = vadd.f32 0.0, %v6276
        %v6278 = vpop.f32.mrf.mxu0
        %6279 = vmatprep.mubr.f32.mxu0 0.0
        %6280 = vmatmul.mubr.f32.gmra.mxu0 %v6200
        %v6281 = vpop.f32.mrf.mxu0
        %v6282 = vadd.f32 0.0, %v6281
        %v6283 = vpop.f32.mrf.mxu0
        %6284 = vmatprep.mubr.f32.mxu0 0.0
        %6285 = vmatmul.mubr.f32.gmra.mxu0 %v6202
        %v6286 = vpop.f32.mrf.mxu0
        %v6287 = vadd.f32 0.0, %v6286
        %v6288 = vpop.f32.mrf.mxu0
        %6289 = vdwg.mxu0
        %v6290 = vsel %vm525, -1e+30, %v6277
        %v6291 = vsel %vm526, -1e+30, %v6282
        %v6292 = vsel %vm527, -1e+30, %v6287
        %v6293 = vsel %vm2082, %v6290, -inf
        %6294 = vmax.xlane.f32.xlu0 %v6293
        %v6295 = vpop.xlane.xlu0 %6294
        %v6296 = vsel %vm2082, %v6291, -inf
        %6297 = vmax.xlane.f32.xlu0 %v6296
        %v6298 = vpop.xlane.xlu0 %6297
        %v6299 = vsel %vm2082, %v6292, -inf
        %6300 = vmax.xlane.f32.xlu0 %v6299
        %v6301 = vpop.xlane.xlu0 %6300
        %v6302 = vsub.f32 %v6290, %v6295
        %v6303 = vsub.f32 %v6291, %v6298
        %v6304 = vsub.f32 %v6292, %v6301
        %v6305 = vmul.f32 %v6302, 1.442695
        %v6306 = vpow.pop %v6305
        %v6307 = vmul.f32 %v6303, 1.442695
        %v6308 = vpow.pop %v6307
        %v6309 = vmul.f32 %v6304, 1.442695
        %v6310 = vpow.pop %v6309
        %v6311 = vsel %vm2082, %v6306, 0.0
        %6312 = vadd.xlane.f32.xlu0 %v6311
        %v6313 = vpop.xlane.xlu0 %6312
        %v6314 = vsel %vm2082, %v6308, 0.0
        %6315 = vadd.xlane.f32.xlu0 %v6314
        %v6316 = vpop.xlane.xlu0 %6315
        %v6317 = vsel %vm2082, %v6310, 0.0
        %6318 = vadd.xlane.f32.xlu0 %v6317
        %v6319 = vpop.xlane.xlu0 %6318
        %v6320 = vrcp.pop %v6313
        %v6321 = vmul.f32 %v6306, %v6320
        %v6322 = vrcp.pop %v6316
        %v6323 = vmul.f32 %v6308, %v6322
        %v6324 = vrcp.pop %v6319
        %v6325 = vmul.f32 %v6310, %v6324
        %6326 = vrot.lane.b32.xlu0 %v5186, 40
        %v6327 = vpop.permute.xlu0 %6326
        %6328 = vrot.lane.b32.xlu0 %v5191, 40
        %v6329 = vpop.permute.xlu0 %6328
        %6330 = vrot.lane.b32.xlu0 %v5196, 40
        %v6331 = vpop.permute.xlu0 %6330
        %v6336 = vsel %vm2082, %v6321, 0
        %v6339 = vsel %vm2082, %v6323, 0
        %v6342 = vsel %vm2082, %v6325, 0
        %6344 = vmatprep.subr.mxu0 0.0
        %6345 = vmatpush1.msra.mxu0 0.0
        %6346 = vmatprep.subr.mxu0 0.0
        %6347 = vmatpush1.msra.mxu0 0.0
        %6348 = vmatprep.subr.mxu0 0.0
        %6349 = vmatpush1.msra.mxu0 0.0
        %6350 = vmatprep.subr.mxu0 0.0
        %6351 = vmatpush1.msra.mxu0 0.0
        %6352 = vmatprep.subr.mxu0 0.0
        %6353 = vmatpush1.msra.mxu0 0.0
        %6354 = vmatprep.subr.mxu0 0.0
        %6355 = vmatpush1.msra.mxu0 0.0
        %6356 = vmatprep.subr.mxu0 0.0
        %6357 = vmatpush1.msra.mxu0 0.0
        %6358 = vmatprep.subr.mxu0 0.0
        %6359 = vmatpush1.msra.mxu0 0.0
        %6360 = vmatprep.subr.mxu0 0.0
        %6361 = vmatpush1.msra.mxu0 0.0
        %6362 = vmatprep.subr.mxu0 0.0
        %6363 = vmatpush1.msra.mxu0 0.0
        %6364 = vmatprep.subr.mxu0 0.0
        %6365 = vmatpush1.msra.mxu0 0.0
        %6366 = vmatprep.subr.mxu0 0.0
        %6367 = vmatpush1.msra.mxu0 0.0
        %6368 = vmatprep.subr.mxu0 0.0
        %6369 = vmatpush1.msra.mxu0 0.0
        %6370 = vmatprep.subr.mxu0 0.0
        %6371 = vmatpush1.msra.mxu0 %v6331
        %6372 = vmatprep.subr.mxu0 0.0
        %6373 = vmatpush1.msra.mxu0 %v6329
        %6374 = vmatprep.subr.mxu0 0.0
        %6375 = vmatpush1.msra.mxu0 %v6327
        %6376 = vmatprep.subr.mxu0 0.0
        %6377 = vmatpush2.msra.mxu0 0.0
        %6378 = vmatprep.subr.mxu0 0.0
        %6379 = vmatpush2.msra.mxu0 0.0
        %6380 = vmatprep.subr.mxu0 0.0
        %6381 = vmatpush2.msra.mxu0 0.0
        %6382 = vmatprep.subr.mxu0 0.0
        %6383 = vmatpush2.msra.mxu0 0.0
        %6384 = vmatprep.subr.mxu0 0.0
        %6385 = vmatpush2.msra.mxu0 0.0
        %6386 = vmatprep.subr.mxu0 0.0
        %6387 = vmatpush2.msra.mxu0 0.0
        %6388 = vmatprep.subr.mxu0 0.0
        %6389 = vmatpush2.msra.mxu0 0.0
        %6390 = vmatprep.subr.mxu0 0.0
        %6391 = vmatpush2.msra.mxu0 0.0
        %6392 = vmatprep.subr.mxu0 0.0
        %6393 = vmatpush2.msra.mxu0 0.0
        %6394 = vmatprep.subr.mxu0 0.0
        %6395 = vmatpush2.msra.mxu0 0.0
        %6396 = vmatprep.subr.mxu0 0.0
        %6397 = vmatpush2.msra.mxu0 0.0
        %6398 = vmatprep.subr.mxu0 0.0
        %6399 = vmatpush2.msra.mxu0 0.0
        %6400 = vmatprep.subr.mxu0 0.0
        %6401 = vmatpush2.msra.mxu0 0.0
        %6402 = vmatprep.subr.mxu0 0.0
        %6403 = vmatpush2.msra.mxu0 0.0
        %6404 = vmatprep.subr.mxu0 0.0
        %6405 = vmatpush2.msra.mxu0 0.0
        %6406 = vmatprep.subr.mxu0 0.0
        %6407 = vmatpush2.msra.mxu0 0.0
        %6408 = vmatprep.mubr.f32.mxu0 0.0
        %6409 = vmatmul.mubr.f32.gmra.mxu0 %v6336
        %v6410 = vpop.f32.mrf.mxu0
        %v6411 = vadd.f32 0.0, %v6410
        %v6412 = vpop.f32.mrf.mxu0
        %6413 = vmatprep.mubr.f32.mxu0 0.0
        %6414 = vmatmul.mubr.f32.gmra.mxu0 %v6339
        %v6415 = vpop.f32.mrf.mxu0
        %v6416 = vadd.f32 0.0, %v6415
        %v6417 = vpop.f32.mrf.mxu0
        %6418 = vmatprep.mubr.f32.mxu0 0.0
        %6419 = vmatmul.mubr.f32.gmra.mxu0 %v6342
        %v6420 = vpop.f32.mrf.mxu0
        %v6421 = vadd.f32 0.0, %v6420
        %v6422 = vpop.f32.mrf.mxu0
        %6423 = vdwg.mxu0
        %v6425 = vsel %vm660, %v6411, 0
        %v6428 = vsel %vm660, %v6416, 0
        %v6431 = vsel %vm660, %v6421, 0
        %6433 = vmatprep.subr.mxu0 0.0
        %6434 = vmatpush1.msra.mxu0 0.0
        %6435 = vmatprep.subr.mxu0 0.0
        %6436 = vmatpush1.msra.mxu0 0.0
        %6437 = vmatprep.subr.mxu0 0.0
        %6438 = vmatpush1.msra.mxu0 0.0
        %6439 = vmatprep.subr.mxu0 0.0
        %6440 = vmatpush1.msra.mxu0 0.0
        %6441 = vmatprep.subr.mxu0 0.0
        %6442 = vmatpush1.msra.mxu0 0.0
        %6443 = vmatprep.subr.mxu0 0.0
        %6444 = vmatpush1.msra.mxu0 0.0
        %6445 = vmatprep.subr.mxu0 0.0
        %6446 = vmatpush1.msra.mxu0 0.0
        %6447 = vmatprep.subr.mxu0 0.0
        %6448 = vmatpush1.msra.mxu0 0.0
        %6449 = vmatprep.subr.mxu0 0.0
        %6450 = vmatpush1.msra.mxu0 0.0
        %6451 = vmatprep.subr.mxu0 0.0
        %6452 = vmatpush1.msra.mxu0 0.0
        %6453 = vmatprep.subr.mxu0 0.0
        %6454 = vmatpush1.msra.mxu0 0.0
        %6455 = vmatprep.subr.mxu0 0.0
        %6456 = vmatpush1.msra.mxu0 0.0
        %6457 = vmatprep.subr.mxu0 0.0
        %6458 = vmatpush1.msra.mxu0 0.0
        %6459 = vmatprep.subr.mxu0 0.0
        %6460 = vmatpush1.msra.mxu0 0.0
        %6461 = vmatprep.subr.mxu0 0.0
        %6462 = vmatpush1.msra.mxu0 0.0
        %6463 = vmatprep.subr.mxu0 0.0
        %6464 = vmatpush1.msra.mxu0 %v3762
        %6465 = vmatprep.subr.mxu0 0.0
        %6466 = vmatpush2.msra.mxu0 0.0
        %6467 = vmatprep.subr.mxu0 0.0
        %6468 = vmatpush2.msra.mxu0 0.0
        %6469 = vmatprep.subr.mxu0 0.0
        %6470 = vmatpush2.msra.mxu0 0.0
        %6471 = vmatprep.subr.mxu0 0.0
        %6472 = vmatpush2.msra.mxu0 0.0
        %6473 = vmatprep.subr.mxu0 0.0
        %6474 = vmatpush2.msra.mxu0 0.0
        %6475 = vmatprep.subr.mxu0 0.0
        %6476 = vmatpush2.msra.mxu0 0.0
        %6477 = vmatprep.subr.mxu0 0.0
        %6478 = vmatpush2.msra.mxu0 0.0
        %6479 = vmatprep.subr.mxu0 0.0
        %6480 = vmatpush2.msra.mxu0 0.0
        %6481 = vmatprep.subr.mxu0 0.0
        %6482 = vmatpush2.msra.mxu0 0.0
        %6483 = vmatprep.subr.mxu0 0.0
        %6484 = vmatpush2.msra.mxu0 0.0
        %6485 = vmatprep.subr.mxu0 0.0
        %6486 = vmatpush2.msra.mxu0 0.0
        %6487 = vmatprep.subr.mxu0 0.0
        %6488 = vmatpush2.msra.mxu0 0.0
        %6489 = vmatprep.subr.mxu0 0.0
        %6490 = vmatpush2.msra.mxu0 0.0
        %6491 = vmatprep.subr.mxu0 0.0
        %6492 = vmatpush2.msra.mxu0 0.0
        %6493 = vmatprep.subr.mxu0 0.0
        %6494 = vmatpush2.msra.mxu0 0.0
        %6495 = vmatprep.subr.mxu0 0.0
        %6496 = vmatpush2.msra.mxu0 0.0
        %6497 = vmatprep.mubr.f32.mxu0 0.0
        %6498 = vmatmul.mubr.f32.gmra.mxu0 %v6425
        %v6499 = vpop.f32.mrf.mxu0
        %v6500 = vadd.f32 0.0, %v6499
        %v6501 = vpop.f32.mrf.mxu0
        %6502 = vmatprep.mubr.f32.mxu0 0.0
        %6503 = vmatmul.mubr.f32.gmra.mxu0 %v6428
        %v6504 = vpop.f32.mrf.mxu0
        %v6505 = vadd.f32 0.0, %v6504
        %v6506 = vpop.f32.mrf.mxu0
        %6507 = vmatprep.mubr.f32.mxu0 0.0
        %6508 = vmatmul.mubr.f32.gmra.mxu0 %v6431
        %v6509 = vpop.f32.mrf.mxu0
        %v6510 = vadd.f32 0.0, %v6509
        %v6511 = vpop.f32.mrf.mxu0
        %6512 = vdwg.mxu0
        %v6513 = vadd.f32 %v6183, %v6500
        %v6514 = vadd.f32 %v6184, %v6505
        %v6515 = vadd.f32 %v6185, %v6510
        %v6516 = vadd.f32 %v5061, %v6513
        %v6517 = vadd.f32 %v3611, %v6514
        %v6518 = vadd.f32 %v3612, %v6515
        %6521 = vrot.lane.b32.xlu0 %v6516, 112
        %v6522 = vpop.permute.xlu0 %6521
        %6523 = vrot.lane.b32.xlu0 %v6517, 112
        %v6524 = vpop.permute.xlu0 %6523
        %6525 = vrot.lane.b32.xlu0 %v6522, 16
        %v6526 = vpop.permute.xlu0 %6525
        %6527 = vrot.lane.b32.xlu0 %v6524, 16
        %v6528 = vpop.permute.xlu0 %6527
        %v6531 = vsel %vm1628, %v6516, %v3301
        %v6532 = vsel %vm1628, %v6517, %v6526
        %v6533 = vsel %vm1628, %v6518, %v6528
        %v6534 = vmul.f32 %v6531, %v6531
        %v6535 = vmul.f32 %v6532, %v6532
        %v6536 = vmul.f32 %v6533, %v6533
        %v6537 = vsel %vm561, %v6534, 0.0
        %6538 = vadd.xlane.f32.xlu0 %v6537
        %v6539 = vpop.xlane.xlu0 %6538
        %v6540 = vsel %vm561, %v6535, 0.0
        %6541 = vadd.xlane.f32.xlu0 %v6540
        %v6542 = vpop.xlane.xlu0 %6541
        %v6543 = vsel %vm561, %v6536, 0.0
        %6544 = vadd.xlane.f32.xlu0 %v6543
        %v6545 = vpop.xlane.xlu0 %6544
        %v6546 = vrsqrt.pop %v6539
        %v6547 = vmul.f32 %v6539, %v6546
        %vm6548 = vcmp.eq.f32.partialorder %v6539, inf
        %v6549 = vsel %vm6548, %v6539, %v6547
        %vm6550 = vcmp.eq.f32.partialorder %v6539, 0.0
        %v6551 = vand.u32 %v6539, 2147483648
        %v6552 = vsel %vm6550, %v6551, %v6549
        %v6553 = vrsqrt.pop %v6542
        %v6554 = vmul.f32 %v6542, %v6553
        %vm6555 = vcmp.eq.f32.partialorder %v6542, inf
        %v6556 = vsel %vm6555, %v6542, %v6554
        %vm6557 = vcmp.eq.f32.partialorder %v6542, 0.0
        %v6558 = vand.u32 %v6542, 2147483648
        %v6559 = vsel %vm6557, %v6558, %v6556
        %v6560 = vrsqrt.pop %v6545
        %v6561 = vmul.f32 %v6545, %v6560
        %vm6562 = vcmp.eq.f32.partialorder %v6545, inf
        %v6563 = vsel %vm6562, %v6545, %v6561
        %vm6564 = vcmp.eq.f32.partialorder %v6545, 0.0
        %v6565 = vand.u32 %v6545, 2147483648
        %v6566 = vsel %vm6564, %v6565, %v6563
        %v6567 = vmax.f32 %v6552, 1e-12
        %v6568 = vmax.f32 %v6559, 1e-12
        %v6569 = vmax.f32 %v6566, 1e-12
        %v6570 = vrcp.pop %v6567
        %v6571 = vmul.f32 %v6531, %v6570
        %v6572 = vrcp.pop %v6568
        %v6573 = vmul.f32 %v6532, %v6572
        %v6574 = vrcp.pop %v6569
        %v6575 = vmul.f32 %v6533, %v6574
        %v6576 = vmul.f32 %v6571, 5.656854
        %v6577 = vmul.f32 %v6573, 5.656854
        %v6578 = vmul.f32 %v6575, 5.656854
        %v6579 = vmul.f32 %v6576, %v4876
        %v6580 = vmul.f32 %v6577, %v4876
        %v6581 = vmul.f32 %v6578, %v4876
        %v6583 = vsel %vm561, %v6579, 0
        %v6586 = vsel %vm561, %v6580, 0
        %v6589 = vsel %vm561, %v6581, 0
        %6591 = vmatprep.subr.mxu0 0.0
        %6592 = vmatpush1.msra.mxu0 0.0
        %6593 = vmatprep.subr.mxu0 0.0
        %6594 = vmatpush1.msra.mxu0 0.0
        %6595 = vmatprep.subr.mxu0 0.0
        %6596 = vmatpush1.msra.mxu0 0.0
        %6597 = vmatprep.subr.mxu0 0.0
        %6598 = vmatpush1.msra.mxu0 0.0
        %6599 = vmatprep.subr.mxu0 0.0
        %6600 = vmatpush1.msra.mxu0 0.0
        %6601 = vmatprep.subr.mxu0 0.0
        %6602 = vmatpush1.msra.mxu0 0.0
        %6603 = vmatprep.subr.mxu0 0.0
        %6604 = vmatpush1.msra.mxu0 0.0
        %6605 = vmatprep.subr.mxu0 0.0
        %6606 = vmatpush1.msra.mxu0 0.0
        %6607 = vmatprep.subr.mxu0 0.0
        %6608 = vmatpush1.msra.mxu0 0.0
        %6609 = vmatprep.subr.mxu0 0.0
        %6610 = vmatpush1.msra.mxu0 0.0
        %6611 = vmatprep.subr.mxu0 0.0
        %6612 = vmatpush1.msra.mxu0 0.0
        %6613 = vmatprep.subr.mxu0 0.0
        %6614 = vmatpush1.msra.mxu0 0.0
        %6615 = vmatprep.subr.mxu0 0.0
        %6616 = vmatpush1.msra.mxu0 %v3769
        %6617 = vmatprep.subr.mxu0 0.0
        %6618 = vmatpush1.msra.mxu0 %v3768
        %6619 = vmatprep.subr.mxu0 0.0
        %6620 = vmatpush1.msra.mxu0 %v3767
        %6621 = vmatprep.subr.mxu0 0.0
        %6622 = vmatpush1.msra.mxu0 %v3766
        %6623 = vmatprep.subr.mxu0 0.0
        %6624 = vmatpush2.msra.mxu0 0.0
        %6625 = vmatprep.subr.mxu0 0.0
        %6626 = vmatpush2.msra.mxu0 0.0
        %6627 = vmatprep.subr.mxu0 0.0
        %6628 = vmatpush2.msra.mxu0 0.0
        %6629 = vmatprep.subr.mxu0 0.0
        %6630 = vmatpush2.msra.mxu0 0.0
        %6631 = vmatprep.subr.mxu0 0.0
        %6632 = vmatpush2.msra.mxu0 0.0
        %6633 = vmatprep.subr.mxu0 0.0
        %6634 = vmatpush2.msra.mxu0 0.0
        %6635 = vmatprep.subr.mxu0 0.0
        %6636 = vmatpush2.msra.mxu0 0.0
        %6637 = vmatprep.subr.mxu0 0.0
        %6638 = vmatpush2.msra.mxu0 0.0
        %6639 = vmatprep.subr.mxu0 0.0
        %6640 = vmatpush2.msra.mxu0 0.0
        %6641 = vmatprep.subr.mxu0 0.0
        %6642 = vmatpush2.msra.mxu0 0.0
        %6643 = vmatprep.subr.mxu0 0.0
        %6644 = vmatpush2.msra.mxu0 0.0
        %6645 = vmatprep.subr.mxu0 0.0
        %6646 = vmatpush2.msra.mxu0 0.0
        %6647 = vmatprep.subr.mxu0 0.0
        %6648 = vmatpush2.msra.mxu0 0.0
        %6649 = vmatprep.subr.mxu0 0.0
        %6650 = vmatpush2.msra.mxu0 0.0
        %6651 = vmatprep.subr.mxu0 0.0
        %6652 = vmatpush2.msra.mxu0 0.0
        %6653 = vmatprep.subr.mxu0 0.0
        %6654 = vmatpush2.msra.mxu0 0.0
        %6655 = vmatprep.mubr.f32.mxu0 0.0
        %6656 = vmatmul.mubr.f32.gmra.mxu0 %v6583
        %v6657 = vpop.f32.mrf.mxu0
        %v6658 = vadd.f32 %v4883, %v6657
        %v6659 = vpop.f32.mrf.mxu0
        %6660 = vmatprep.mubr.f32.mxu0 0.0
        %6661 = vmatmul.mubr.f32.gmra.mxu0 %v6586
        %v6662 = vpop.f32.mrf.mxu0
        %v6663 = vadd.f32 %v4883, %v6662
        %v6664 = vpop.f32.mrf.mxu0
        %6665 = vmatprep.mubr.f32.mxu0 0.0
        %6666 = vmatmul.mubr.f32.gmra.mxu0 %v6589
        %v6667 = vpop.f32.mrf.mxu0
        %v6668 = vadd.f32 %v4883, %v6667
        %v6669 = vpop.f32.mrf.mxu0
        %6670 = vdwg.mxu0
        %v6671 = vmul.f32 %v6658, 0.5
        %v6672 = vmul.f32 %v6663, 0.5
        %v6673 = vmul.f32 %v6668, 0.5
        %v6674 = vmul.f32 %v6658, 0.70710677
        %v6675 = vmul.f32 %v6663, 0.70710677
        %v6676 = vmul.f32 %v6668, 0.70710677
        %vm6677 = vcmp.ge.f32.partialorder %v6674, 0.0
        %vm6678 = vcmp.ge.f32.partialorder %v6675, 0.0
        %vm6679 = vcmp.ge.f32.partialorder %v6676, 0.0
        %v6680 = vsel %vm6677, 1.0, -1.0
        %v6681 = vsel %vm6678, 1.0, -1.0
        %v6682 = vsel %vm6679, 1.0, -1.0
        %v6683 = vand.u32 2147483647, %v6674
        %v6684 = vand.u32 2147483647, %v6675
        %v6685 = vand.u32 2147483647, %v6676
        %v6686 = vmul.f32 %v6683, 0.3275911
        %v6687 = vmul.f32 %v6684, 0.3275911
        %v6688 = vmul.f32 %v6685, 0.3275911
        %v6689 = vadd.f32 %v6686, 1.0
        %v6690 = vadd.f32 %v6687, 1.0
        %v6691 = vadd.f32 %v6688, 1.0
        %v6692 = vrcp.pop %v6689
        %v6693 = vmul.f32 1.0, %v6692
        %v6694 = vrcp.pop %v6690
        %v6695 = vmul.f32 1.0, %v6694
        %v6696 = vrcp.pop %v6691
        %v6697 = vmul.f32 1.0, %v6696
        %v6698 = vmul.f32 %v6693, 1.0614054
        %v6699 = vmul.f32 %v6695, 1.0614054
        %v6700 = vmul.f32 %v6697, 1.0614054
        %v6701 = vadd.f32 %v6698, -1.4531521
        %v6702 = vadd.f32 %v6699, -1.4531521
        %v6703 = vadd.f32 %v6700, -1.4531521
        %v6704 = vmul.f32 %v6701, %v6693
        %v6705 = vmul.f32 %v6702, %v6695
        %v6706 = vmul.f32 %v6703, %v6697
        %v6707 = vadd.f32 %v6704, 1.4214138
        %v6708 = vadd.f32 %v6705, 1.4214138
        %v6709 = vadd.f32 %v6706, 1.4214138
        %v6710 = vmul.f32 %v6707, %v6693
        %v6711 = vmul.f32 %v6708, %v6695
        %v6712 = vmul.f32 %v6709, %v6697
        %v6713 = vadd.f32 %v6710, -0.28449672
        %v6714 = vadd.f32 %v6711, -0.28449672
        %v6715 = vadd.f32 %v6712, -0.28449672
        %v6716 = vmul.f32 %v6713, %v6693
        %v6717 = vmul.f32 %v6714, %v6695
        %v6718 = vmul.f32 %v6715, %v6697
        %v6719 = vadd.f32 %v6716, 0.2548296
        %v6720 = vadd.f32 %v6717, 0.2548296
        %v6721 = vadd.f32 %v6718, 0.2548296
        %v6722 = vmul.f32 %v6719, %v6693
        %v6723 = vmul.f32 %v6720, %v6695
        %v6724 = vmul.f32 %v6721, %v6697
        %v6725 = vsub.f32 0.0, %v6683
        %v6726 = vsub.f32 0.0, %v6684
        %v6727 = vsub.f32 0.0, %v6685
        %v6728 = vmul.f32 %v6725, %v6683
        %v6729 = vmul.f32 %v6726, %v6684
        %v6730 = vmul.f32 %v6727, %v6685
        %v6731 = vmul.f32 %v6728, 1.442695
        %v6732 = vpow.pop %v6731
        %v6733 = vmul.f32 %v6729, 1.442695
        %v6734 = vpow.pop %v6733
        %v6735 = vmul.f32 %v6730, 1.442695
        %v6736 = vpow.pop %v6735
        %v6737 = vmul.f32 %v6722, %v6732
        %v6738 = vmul.f32 %v6723, %v6734
        %v6739 = vmul.f32 %v6724, %v6736
        %v6740 = vsub.f32 1.0, %v6737
        %v6741 = vsub.f32 1.0, %v6738
        %v6742 = vsub.f32 1.0, %v6739
        %v6743 = vmul.f32 %v6680, %v6740
        %v6744 = vmul.f32 %v6681, %v6741
        %v6745 = vmul.f32 %v6682, %v6742
        %v6746 = vadd.f32 %v6743, 1.0
        %v6747 = vadd.f32 %v6744, 1.0
        %v6748 = vadd.f32 %v6745, 1.0
        %v6749 = vmul.f32 %v6671, %v6746
        %v6750 = vmul.f32 %v6672, %v6747
        %v6751 = vmul.f32 %v6673, %v6748
        %6752 = vmatprep.subr.mxu0 0.0
        %6753 = vmatpush1.msra.mxu0 %v3788
        %6754 = vmatprep.subr.mxu0 0.0
        %6755 = vmatpush1.msra.mxu0 %v3787
        %6756 = vmatprep.subr.mxu0 0.0
        %6757 = vmatpush1.msra.mxu0 %v3786
        %6758 = vmatprep.subr.mxu0 0.0
        %6759 = vmatpush1.msra.mxu0 %v3785
        %6760 = vmatprep.subr.mxu0 0.0
        %6761 = vmatpush1.msra.mxu0 %v3784
        %6762 = vmatprep.subr.mxu0 0.0
        %6763 = vmatpush1.msra.mxu0 %v3783
        %6764 = vmatprep.subr.mxu0 0.0
        %6765 = vmatpush1.msra.mxu0 %v3782
        %6766 = vmatprep.subr.mxu0 0.0
        %6767 = vmatpush1.msra.mxu0 %v3781
        %6768 = vmatprep.subr.mxu0 0.0
        %6769 = vmatpush1.msra.mxu0 %v3780
        %6770 = vmatprep.subr.mxu0 0.0
        %6771 = vmatpush1.msra.mxu0 %v3779
        %6772 = vmatprep.subr.mxu0 0.0
        %6773 = vmatpush1.msra.mxu0 %v3778
        %6774 = vmatprep.subr.mxu0 0.0
        %6775 = vmatpush1.msra.mxu0 %v3777
        %6776 = vmatprep.subr.mxu0 0.0
        %6777 = vmatpush1.msra.mxu0 %v3776
        %6778 = vmatprep.subr.mxu0 0.0
        %6779 = vmatpush1.msra.mxu0 %v3775
        %6780 = vmatprep.subr.mxu0 0.0
        %6781 = vmatpush1.msra.mxu0 %v3774
        %6782 = vmatprep.subr.mxu0 0.0
        %6783 = vmatpush1.msra.mxu0 %v3773
        %6784 = vmatprep.subr.mxu0 0.0
        %6785 = vmatpush2.msra.mxu0 0.0
        %6786 = vmatprep.subr.mxu0 0.0
        %6787 = vmatpush2.msra.mxu0 0.0
        %6788 = vmatprep.subr.mxu0 0.0
        %6789 = vmatpush2.msra.mxu0 0.0
        %6790 = vmatprep.subr.mxu0 0.0
        %6791 = vmatpush2.msra.mxu0 0.0
        %6792 = vmatprep.subr.mxu0 0.0
        %6793 = vmatpush2.msra.mxu0 0.0
        %6794 = vmatprep.subr.mxu0 0.0
        %6795 = vmatpush2.msra.mxu0 0.0
        %6796 = vmatprep.subr.mxu0 0.0
        %6797 = vmatpush2.msra.mxu0 0.0
        %6798 = vmatprep.subr.mxu0 0.0
        %6799 = vmatpush2.msra.mxu0 0.0
        %6800 = vmatprep.subr.mxu0 0.0
        %6801 = vmatpush2.msra.mxu0 0.0
        %6802 = vmatprep.subr.mxu0 0.0
        %6803 = vmatpush2.msra.mxu0 0.0
        %6804 = vmatprep.subr.mxu0 0.0
        %6805 = vmatpush2.msra.mxu0 0.0
        %6806 = vmatprep.subr.mxu0 0.0
        %6807 = vmatpush2.msra.mxu0 0.0
        %6808 = vmatprep.subr.mxu0 0.0
        %6809 = vmatpush2.msra.mxu0 0.0
        %6810 = vmatprep.subr.mxu0 0.0
        %6811 = vmatpush2.msra.mxu0 0.0
        %6812 = vmatprep.subr.mxu0 0.0
        %6813 = vmatpush2.msra.mxu0 0.0
        %6814 = vmatprep.subr.mxu0 0.0
        %6815 = vmatpush2.msra.mxu0 0.0
        %6816 = vmatprep.mubr.f32.mxu0 0.0
        %6817 = vmatmul.mubr.f32.gmra.mxu0 %v6749
        %v6818 = vpop.f32.mrf.mxu0
        %v6819 = vadd.f32 %v4989, %v6818
        %v6820 = vpop.f32.mrf.mxu0
        %6821 = vmatprep.mubr.f32.mxu0 0.0
        %6822 = vmatmul.mubr.f32.gmra.mxu0 %v6750
        %v6823 = vpop.f32.mrf.mxu0
        %v6824 = vadd.f32 %v4989, %v6823
        %v6825 = vpop.f32.mrf.mxu0
        %6826 = vmatprep.mubr.f32.mxu0 0.0
        %6827 = vmatmul.mubr.f32.gmra.mxu0 %v6751
        %v6828 = vpop.f32.mrf.mxu0
        %v6829 = vadd.f32 %v4989, %v6828
        %v6830 = vpop.f32.mrf.mxu0
        %6831 = vdwg.mxu0
        %v6832 = vadd.f32 %v6819, %v6516
        %v6833 = vadd.f32 %v6824, %v6517
        %v6834 = vadd.f32 %v6829, %v6518
        %v6836 = vrot.slane %v6834, 7
        %v6838 = vsel %vm1622, 0.0, %v6836
        %v6839 = vmul.f32 %v6832, %v6832
        %v6840 = vsel %vm561, %v6839, 0.0
        %6841 = vadd.xlane.f32.xlu0 %v6840
        %v6842 = vpop.xlane.xlu0 %6841
        %v6843 = vrsqrt.pop %v6842
        %v6844 = vmul.f32 %v6842, %v6843
        %vm6845 = vcmp.eq.f32.partialorder %v6842, inf
        %v6846 = vsel %vm6845, %v6842, %v6844
        %vm6847 = vcmp.eq.f32.partialorder %v6842, 0.0
        %v6848 = vand.u32 %v6842, 2147483648
        %v6849 = vsel %vm6847, %v6848, %v6846
        %v6850 = vmax.f32 %v6849, 1e-12
        %v6851 = vrcp.pop %v6850
        %v6852 = vmul.f32 %v6832, %v6851
        %v6853 = vmul.f32 %v6852, 5.656854
        %v6854 = vmul.f32 %v6853, %v3637
        %v6855 = vmul.f32 %v6838, %v6838
        %v6856 = vsel %vm561, %v6855, 0.0
        %6857 = vadd.xlane.f32.xlu0 %v6856
        %v6858 = vpop.xlane.xlu0 %6857
        %v6859 = vrsqrt.pop %v6858
        %v6860 = vmul.f32 %v6858, %v6859
        %vm6861 = vcmp.eq.f32.partialorder %v6858, inf
        %v6862 = vsel %vm6861, %v6858, %v6860
        %vm6863 = vcmp.eq.f32.partialorder %v6858, 0.0
        %v6864 = vand.u32 %v6858, 2147483648
        %v6865 = vsel %vm6863, %v6864, %v6862
        %v6866 = vmax.f32 %v6865, 1e-12
        %v6867 = vrcp.pop %v6866
        %v6868 = vmul.f32 %v6838, %v6867
        %v6869 = vmul.f32 %v6868, 5.656854
        %v6870 = vmul.f32 %v6869, %v3637
        %6872 = vrot.lane.b32.xlu0 %v6870, 32
        %v6873 = vpop.permute.xlu0 %6872
        %v6875 = vsel %vm561, %v6854, %v6873
        %v6877 = vsel %vm3676, %v6875, 0
        %6879 = vmatprep.subr.mxu0 0.0
        %6880 = vmatpush1.msra.mxu0 0.0
        %6881 = vmatprep.subr.mxu0 0.0
        %6882 = vmatpush1.msra.mxu0 0.0
        %6883 = vmatprep.subr.mxu0 0.0
        %6884 = vmatpush1.msra.mxu0 0.0
        %6885 = vmatprep.subr.mxu0 0.0
        %6886 = vmatpush1.msra.mxu0 0.0
        %6887 = vmatprep.subr.mxu0 0.0
        %6888 = vmatpush1.msra.mxu0 0.0
        %6889 = vmatprep.subr.mxu0 0.0
        %6890 = vmatpush1.msra.mxu0 0.0
        %6891 = vmatprep.subr.mxu0 0.0
        %6892 = vmatpush1.msra.mxu0 0.0
        %6893 = vmatprep.subr.mxu0 0.0
        %6894 = vmatpush1.msra.mxu0 0.0
        %6895 = vmatprep.subr.mxu0 0.0
        %6896 = vmatpush1.msra.mxu0 %v3668
        %6897 = vmatprep.subr.mxu0 0.0
        %6898 = vmatpush1.msra.mxu0 %v3667
        %6899 = vmatprep.subr.mxu0 0.0
        %6900 = vmatpush1.msra.mxu0 %v3666
        %6901 = vmatprep.subr.mxu0 0.0
        %6902 = vmatpush1.msra.mxu0 %v3665
        %6903 = vmatprep.subr.mxu0 0.0
        %6904 = vmatpush1.msra.mxu0 %v3664
        %6905 = vmatprep.subr.mxu0 0.0
        %6906 = vmatpush1.msra.mxu0 %v3663
        %6907 = vmatprep.subr.mxu0 0.0
        %6908 = vmatpush1.msra.mxu0 %v3662
        %6909 = vmatprep.subr.mxu0 0.0
        %6910 = vmatpush1.msra.mxu0 %v3661
        %6911 = vmatprep.subr.mxu0 0.0
        %6912 = vmatpush2.msra.mxu0 0.0
        %6913 = vmatprep.subr.mxu0 0.0
        %6914 = vmatpush2.msra.mxu0 0.0
        %6915 = vmatprep.subr.mxu0 0.0
        %6916 = vmatpush2.msra.mxu0 0.0
        %6917 = vmatprep.subr.mxu0 0.0
        %6918 = vmatpush2.msra.mxu0 0.0
        %6919 = vmatprep.subr.mxu0 0.0
        %6920 = vmatpush2.msra.mxu0 0.0
        %6921 = vmatprep.subr.mxu0 0.0
        %6922 = vmatpush2.msra.mxu0 0.0
        %6923 = vmatprep.subr.mxu0 0.0
        %6924 = vmatpush2.msra.mxu0 0.0
        %6925 = vmatprep.subr.mxu0 0.0
        %6926 = vmatpush2.msra.mxu0 0.0
        %6927 = vmatprep.subr.mxu0 0.0
        %6928 = vmatpush2.msra.mxu0 0.0
        %6929 = vmatprep.subr.mxu0 0.0
        %6930 = vmatpush2.msra.mxu0 0.0
        %6931 = vmatprep.subr.mxu0 0.0
        %6932 = vmatpush2.msra.mxu0 0.0
        %6933 = vmatprep.subr.mxu0 0.0
        %6934 = vmatpush2.msra.mxu0 0.0
        %6935 = vmatprep.subr.mxu0 0.0
        %6936 = vmatpush2.msra.mxu0 0.0
        %6937 = vmatprep.subr.mxu0 0.0
        %6938 = vmatpush2.msra.mxu0 0.0
        %6939 = vmatprep.subr.mxu0 0.0
        %6940 = vmatpush2.msra.mxu0 0.0
        %6941 = vmatprep.subr.mxu0 0.0
        %6942 = vmatpush2.msra.mxu0 0.0
        %6943 = vmatprep.mubr.f32.mxu0 0.0
        %6944 = vmatmul.mubr.f32.gmra.mxu0 %v6877
        %v6945 = vpop.f32.mrf.mxu0
        %v6946 = vadd.f32 %v3674, %v6945
        %v6947 = vpop.f32.mrf.mxu0
        %6948 = vdwg.mxu0
        %v6949 = vadd.f32 %v6832, %v6946
        %v6950 = vld [vmem:[%s13] sm:$0x1]
        %v6951 = vmul.f32 %v6949, %v6949
        %v6952 = vmul.f32 %v6833, %v6833
        %v6953 = vmul.f32 %v6834, %v6834
        %v6954 = vsel %vm561, %v6951, 0.0
        %6955 = vadd.xlane.f32.xlu0 %v6954
        %v6956 = vpop.xlane.xlu0 %6955
        %v6957 = vsel %vm561, %v6952, 0.0
        %6958 = vadd.xlane.f32.xlu0 %v6957
        %v6959 = vpop.xlane.xlu0 %6958
        %v6960 = vsel %vm561, %v6953, 0.0
        %6961 = vadd.xlane.f32.xlu0 %v6960
        %v6962 = vpop.xlane.xlu0 %6961
        %v6963 = vrsqrt.pop %v6956
        %v6964 = vmul.f32 %v6956, %v6963
        %vm6965 = vcmp.eq.f32.partialorder %v6956, inf
        %v6966 = vsel %vm6965, %v6956, %v6964
        %vm6967 = vcmp.eq.f32.partialorder %v6956, 0.0
        %v6968 = vand.u32 %v6956, 2147483648
        %v6969 = vsel %vm6967, %v6968, %v6966
        %v6970 = vrsqrt.pop %v6959
        %v6971 = vmul.f32 %v6959, %v6970
        %vm6972 = vcmp.eq.f32.partialorder %v6959, inf
        %v6973 = vsel %vm6972, %v6959, %v6971
        %vm6974 = vcmp.eq.f32.partialorder %v6959, 0.0
        %v6975 = vand.u32 %v6959, 2147483648
        %v6976 = vsel %vm6974, %v6975, %v6973
        %v6977 = vrsqrt.pop %v6962
        %v6978 = vmul.f32 %v6962, %v6977
        %vm6979 = vcmp.eq.f32.partialorder %v6962, inf
        %v6980 = vsel %vm6979, %v6962, %v6978
        %vm6981 = vcmp.eq.f32.partialorder %v6962, 0.0
        %v6982 = vand.u32 %v6962, 2147483648
        %v6983 = vsel %vm6981, %v6982, %v6980
        %v6984 = vmax.f32 %v6969, 1e-12
        %v6985 = vmax.f32 %v6976, 1e-12
        %v6986 = vmax.f32 %v6983, 1e-12
        %v6987 = vrcp.pop %v6984
        %v6988 = vmul.f32 %v6949, %v6987
        %v6989 = vrcp.pop %v6985
        %v6990 = vmul.f32 %v6833, %v6989
        %v6991 = vrcp.pop %v6986
        %v6992 = vmul.f32 %v6834, %v6991
        %v6993 = vmul.f32 %v6988, 5.656854
        %v6994 = vmul.f32 %v6990, 5.656854
        %v6995 = vmul.f32 %v6992, 5.656854
        %v6997 = vlaneseq
        %v6998 = vshrl.u32 %v6997, 7
        %v6999 = vsub.s32 0, %v6998
        %v7000 = vrot.slane %v6950, %v6999
        %v7002 = vmul.f32 %v6993, %v7000
        %v7003 = vmul.f32 %v6994, %v7000
        %v7004 = vmul.f32 %v6995, %v7000
        %v7005 = vld [vmem:[%s14] sm:$0xff]
        %v7006 = vld [vmem:[%s14 + $0x8] sm:$0xff]
        %v7007 = vld [vmem:[%s14 + $0x10] sm:$0xff]
        %v7008 = vld [vmem:[%s14 + $0x18] sm:$0xff]
        %v7010 = vsel %vm561, %v7002, 0
        %v7013 = vsel %vm561, %v7003, 0
        %v7016 = vsel %vm561, %v7004, 0
        %7018 = vmatprep.subr.mxu0 0.0
        %7019 = vmatpush1.msra.mxu0 0.0
        %7020 = vmatprep.subr.mxu0 0.0
        %7021 = vmatpush1.msra.mxu0 0.0
        %7022 = vmatprep.subr.mxu0 0.0
        %7023 = vmatpush1.msra.mxu0 0.0
        %7024 = vmatprep.subr.mxu0 0.0
        %7025 = vmatpush1.msra.mxu0 0.0
        %7026 = vmatprep.subr.mxu0 0.0
        %7027 = vmatpush1.msra.mxu0 0.0
        %7028 = vmatprep.subr.mxu0 0.0
        %7029 = vmatpush1.msra.mxu0 0.0
        %7030 = vmatprep.subr.mxu0 0.0
        %7031 = vmatpush1.msra.mxu0 0.0
        %7032 = vmatprep.subr.mxu0 0.0
        %7033 = vmatpush1.msra.mxu0 0.0
        %7034 = vmatprep.subr.mxu0 0.0
        %7035 = vmatpush1.msra.mxu0 0.0
        %7036 = vmatprep.subr.mxu0 0.0
        %7037 = vmatpush1.msra.mxu0 0.0
        %7038 = vmatprep.subr.mxu0 0.0
        %7039 = vmatpush1.msra.mxu0 0.0
        %7040 = vmatprep.subr.mxu0 0.0
        %7041 = vmatpush1.msra.mxu0 0.0
        %7042 = vmatprep.subr.mxu0 0.0
        %7043 = vmatpush1.msra.mxu0 %v7008
        %7044 = vmatprep.subr.mxu0 0.0
        %7045 = vmatpush1.msra.mxu0 %v7007
        %7046 = vmatprep.subr.mxu0 0.0
        %7047 = vmatpush1.msra.mxu0 %v7006
        %7048 = vmatprep.subr.mxu0 0.0
        %7049 = vmatpush1.msra.mxu0 %v7005
        %7050 = vmatprep.subr.mxu0 0.0
        %7051 = vmatpush2.msra.mxu0 0.0
        %7052 = vmatprep.subr.mxu0 0.0
        %7053 = vmatpush2.msra.mxu0 0.0
        %7054 = vmatprep.subr.mxu0 0.0
        %7055 = vmatpush2.msra.mxu0 0.0
        %7056 = vmatprep.subr.mxu0 0.0
        %7057 = vmatpush2.msra.mxu0 0.0
        %7058 = vmatprep.subr.mxu0 0.0
        %7059 = vmatpush2.msra.mxu0 0.0
        %7060 = vmatprep.subr.mxu0 0.0
        %7061 = vmatpush2.msra.mxu0 0.0
        %7062 = vmatprep.subr.mxu0 0.0
        %7063 = vmatpush2.msra.mxu0 0.0
        %7064 = vmatprep.subr.mxu0 0.0
        %7065 = vmatpush2.msra.mxu0 0.0
        %7066 = vmatprep.subr.mxu0 0.0
        %7067 = vmatpush2.msra.mxu0 0.0
        %7068 = vmatprep.subr.mxu0 0.0
        %7069 = vmatpush2.msra.mxu0 0.0
        %7070 = vmatprep.subr.mxu0 0.0
        %7071 = vmatpush2.msra.mxu0 0.0
        %7072 = vmatprep.subr.mxu0 0.0
        %7073 = vmatpush2.msra.mxu0 0.0
        %7074 = vmatprep.subr.mxu0 0.0
        %7075 = vmatpush2.msra.mxu0 0.0
        %7076 = vmatprep.subr.mxu0 0.0
        %7077 = vmatpush2.msra.mxu0 0.0
        %7078 = vmatprep.subr.mxu0 0.0
        %7079 = vmatpush2.msra.mxu0 0.0
        %7080 = vmatprep.subr.mxu0 0.0
        %7081 = vmatpush2.msra.mxu0 0.0
        %7082 = vmatprep.mubr.f32.mxu0 0.0
        %7083 = vmatmul.mubr.f32.gmra.mxu0 %v7010
        %v7084 = vpop.f32.mrf.mxu0
        %v7085 = vadd.f32 0.0, %v7084
        %v7086 = vpop.f32.mrf.mxu0
        %7087 = vmatprep.mubr.f32.mxu0 0.0
        %7088 = vmatmul.mubr.f32.gmra.mxu0 %v7013
        %v7089 = vpop.f32.mrf.mxu0
        %v7090 = vadd.f32 0.0, %v7089
        %v7091 = vpop.f32.mrf.mxu0
        %7092 = vmatprep.mubr.f32.mxu0 0.0
        %7093 = vmatmul.mubr.f32.gmra.mxu0 %v7016
        %v7094 = vpop.f32.mrf.mxu0
        %v7095 = vadd.f32 0.0, %v7094
        %v7096 = vpop.f32.mrf.mxu0
        %7097 = vdwg.mxu0
        %7098 = vst [vmem:[%s485] sm:$0xff] %v7085
        %7099 = vst [vmem:[%s485 + $0x8] sm:$0xff] %v7090
        %7100 = vst [vmem:[%s485 + $0x10] sm:$0xff] %v7095
        %s7101 = sand.u32 %s357, 1
        %s7102 = scalar_lea.sflag [#allocation3], %s7101
        %s7103 = sand.u32 %s357, 1
        %s7104 = smul.addr %s7103, 24
        %s7105 = scalar_lea.vmem [#allocation2], %s7104
        // Predicated region
        $region81: #{pause_transformer_forward.1} parent=79 // pred_check
          %p7106 = pneg %p367
        $region82: #{pause_transformer_forward.1} parent=79 // pred_check_branch
          %7108 = sbr.rel (%p7106) target = $region84
        $region83: #{pause_transformer_forward.1} parent=79 // pred_region
          %s7110 = ssub.s32 384, 384
          %7111 = vsyncadd %s7102, %s7110
          %s7112 = smul.addr %s29, 3
          %s7113 = smul.addr %s7112, 128
          %s7114 = scalar_lea.hbm %s15, %s7113
          %s7115 = sshll.u32 %s7105, 4
          %s7116 = int_to_ptr.vmem [resolvable:$true] %s7115
          %7121 = dma.vmem_to_hbm [thread:$0]  %s7116, 384, %s7114, %s7102, 128, 128, 8
        $region84: #{pause_transformer_forward.1} parent=79 // pred_fallthru
          _
      $region80: #{pause_transformer_forward.1} parent=5 // pred_fallthru
        _
      %p7122 = scmp.le.s32.totalorder 2, %s24
      // Predicated region
      $region85: #{pause_transformer_forward.1} parent=5 // pred_check
        %p7123 = pneg %p7122
      $region86: #{pause_transformer_forward.1} parent=5 // pred_check_branch
        %7125 = sbr.rel (%p7123) target = $region88
      $region87: #{pause_transformer_forward.1} parent=5 // pred_region
        %s7126 = ssub.s32 %s24, 2
        // Predicated region
        $region89: #{pause_transformer_forward.1} parent=87 // pred_check
          %p7127 = pneg %p373
        $region90: #{pause_transformer_forward.1} parent=87 // pred_check_branch
          %7129 = sbr.rel (%p7127) target = $region92
        $region91: #{pause_transformer_forward.1} parent=87 // pred_region
          %s7130 = sand.u32 %s358, 1
          %s7131 = scalar_lea.sflag [#allocation3], %s7130
          %s7132 = sand.u32 %s358, 1
          %s7133 = smul.addr %s7132, 24
          %s7134 = scalar_lea.vmem [#allocation2], %s7133
          %7135 = dma.done %s7131, 384
        $region92: #{pause_transformer_forward.1} parent=87 // pred_fallthru
          _
      $region88: #{pause_transformer_forward.1} parent=5 // pred_fallthru
        _
    $region6: #{pause_transformer_forward.1} parent=1 // loop_footer
      %s28 = sadd.s32 1, %s24
    $region7: #{pause_transformer_forward.1} parent=1 // loop_footer_branch
      %23 = sbr.rel target = $region3
    $region8: #{pause_transformer_forward.1} parent=1 // loop_exit
      _
    %7136 = vsyncpa [#allocation3], 1
    %s7137 = scalar_lea.sflag [#allocation3], 1
    %7138 = vsyncpa %s7137, 1

</llo_original>
